<compile_context>
chip_gen: v5e
topology: v5e:2x2
jax: 0.10.0
libtpu: 0.0.40
codegen_flags: <defaults>
</compile_context>

<pallas_src>
import math
from functools import partial

import numpy as np
import jax
import jax.numpy as jnp
from jax.experimental import pallas as pl
from jax.experimental.pallas import tpu as pltpu

# ----------------------------- config (small) -------------------------------
ENC_IN, DEC_IN, C_OUT = 4, 4, 4
SEQ_LEN, LABEL_LEN, OUT_LEN = 12, 6, 4
DEC_LEN = LABEL_LEN + OUT_LEN                    # 10
D_MODEL, N_HEADS, D_FF = 32, 4, 64
E_LAYERS, D_LAYERS = 2, 1
FACTOR = 5
BATCH = 2
MAX_LEN = 64                                     # positional table length
D_HEAD = D_MODEL // N_HEADS
SCALE = 1.0 / math.sqrt(D_HEAD)
PROJ_PAD = 128                                   # lane-dense projection width


def _pool_out_len(L):                            # MaxPool1d(k=3, s=2, p=1)
    return (L - 1) // 2 + 1


ENC_LENS = [SEQ_LEN]
for _ in range(E_LAYERS - 1):
    ENC_LENS.append(_pool_out_len(ENC_LENS[-1]))
ENC_OUT_LEN = ENC_LENS[-1]                       # 6


def _prob_attn_equals_full(L):
    # u = min(factor * ceil(ln L), L);  equality <=> prob attention == full attn
    return min(FACTOR * int(math.ceil(math.log(L))), L) == L


# ------------------------- in-kernel math helpers ----------------------------
def _erf(x):
    # Abramowitz & Stegun 7.1.26 rational approximation (|abs err| < 1.5e-7),
    # built only from exp/mul/add/select so it lowers inside Mosaic (EUP/VPU).
    a1, a2, a3, a4, a5 = 0.254829592, -0.284496736, 1.421413741, -1.453152027, 1.061405429
    p = 0.3275911
    sgn = jnp.where(x >= 0.0, 1.0, -1.0)
    ax = jnp.abs(x)
    t = 1.0 / (1.0 + p * ax)
    poly = ((((a5 * t + a4) * t + a3) * t + a2) * t + a1) * t
    return sgn * (1.0 - poly * jnp.exp(-ax * ax))


def _gelu(x):
    # exact (erf-based) GELU, matching torch.nn.functional.gelu default
    return 0.5 * x * (1.0 + _erf(x * (1.0 / math.sqrt(2.0))))


def _layernorm(x, g, b):
    mu = jnp.mean(x, axis=-1, keepdims=True)
    var = jnp.mean(jnp.square(x - mu), axis=-1, keepdims=True)
    return (x - mu) * jax.lax.rsqrt(var + 1e-5) * g + b


def _softmax(s):
    s = s - jnp.max(s, axis=-1, keepdims=True)
    p = jnp.exp(s)
    return p / jnp.sum(p, axis=-1, keepdims=True)


def _roll_matrix(L, shift):
    # (L, L) one-hot matrix P with  P @ x == roll(x, shift, axis=0)  (|shift| < L).
    row = jax.lax.broadcasted_iota(jnp.int32, (L, L), 0)
    col = jax.lax.broadcasted_iota(jnp.int32, (L, L), 1)
    d = col - row + shift
    return jnp.where((d == 0) | (d == L) | (d == -L), 1.0, 0.0)


def _circular_conv3(x, wp, wc, wn, b):
    # Conv1d(kernel=3, padding=1, padding_mode='circular') along the sequence dim.
    # The circular row shifts are realized as one-hot permutation matmuls (MXU)
    # instead of in-register roll/concat relayouts.
    L = x.shape[0]
    x_prev = jnp.dot(_roll_matrix(L, 1), x, preferred_element_type=jnp.float32)
    x_next = jnp.dot(_roll_matrix(L, -1), x, preferred_element_type=jnp.float32)
    return (jnp.dot(x_prev, wp, preferred_element_type=jnp.float32)
            + jnp.dot(x, wc, preferred_element_type=jnp.float32)
            + jnp.dot(x_next, wn, preferred_element_type=jnp.float32)
            + b)


def _maxpool3_s2(y):
    # MaxPool1d(kernel=3, stride=2, padding=1) along rows via one-hot row-gather
    # matmuls; out-of-range window taps are masked to a large negative value.
    L, d = y.shape
    lo = (L - 1) // 2 + 1
    row = jax.lax.broadcasted_iota(jnp.int32, (lo, L), 0)
    col = jax.lax.broadcasted_iota(jnp.int32, (lo, L), 1)
    rr = jax.lax.broadcasted_iota(jnp.int32, (lo, d), 0)
    out = None
    for t in (-1, 0, 1):
        sel = jnp.where(col == 2 * row + t, 1.0, 0.0)
        g = jnp.dot(sel, y, preferred_element_type=jnp.float32)
        tgt = 2 * rr + t
        g = jnp.where((tgt >= 0) & (tgt < L), g, -3.0e38)
        out = g if out is None else jnp.maximum(out, g)
    return out


def _heads_softmax_ctx(q_all, k_all, v_all, mask):
    # per-head softmax attention; returns the merged-head context (Lq, D_MODEL).
    ctxs = []
    for h in range(N_HEADS):
        sl = slice(h * D_HEAD, (h + 1) * D_HEAD)
        q, k, v = q_all[:, sl], k_all[:, sl], v_all[:, sl]
        s = jax.lax.dot_general(q, k, (((1,), (1,)), ((), ())),
                                preferred_element_type=jnp.float32)
        if mask is not None:
            s = jnp.where(mask, -1e30, s)                     # large finite, NaN-safe
        ctxs.append(jnp.dot(_softmax(s), v, preferred_element_type=jnp.float32))
    return jnp.concatenate(ctxs, axis=-1)                     # head merge (lane concat)


def _mha_self(x, w_qkv, b_qkv, w_o, b_o, mask):
    # fused QKV projection (scale pre-folded into the Q slice) + merged out-proj
    qkv = jnp.dot(x, w_qkv, preferred_element_type=jnp.float32) + b_qkv       # (L, 3D)
    ctx = _heads_softmax_ctx(qkv[:, :D_MODEL], qkv[:, D_MODEL:2 * D_MODEL],
                             qkv[:, 2 * D_MODEL:], mask)
    return jnp.dot(ctx, w_o, preferred_element_type=jnp.float32) + b_o


def _mha_cross(x_q, x_kv, w_q, b_q, w_kv, b_kv, w_o, b_o):
    q_all = jnp.dot(x_q, w_q, preferred_element_type=jnp.float32) + b_q       # (Lq, D)
    kv = jnp.dot(x_kv, w_kv, preferred_element_type=jnp.float32) + b_kv       # (Lk, 2D)
    ctx = _heads_softmax_ctx(q_all, kv[:, :D_MODEL], kv[:, D_MODEL:], None)
    return jnp.dot(ctx, w_o, preferred_element_type=jnp.float32) + b_o


def _dec_self_attn_mix(x, w_qkv, b_qkv, w_o, b_o, causal):
    # Decoder causal self-attention with Informer's mix=True quirk: the (H, L, Dh)
    # context is .view()-ed as (L, H*Dh) WITHOUT the usual head transpose.  Column
    # block k of that view gathers row (N_HEADS*l + k) of the head-stacked context;
    # the gather is realized as tiny one-hot matmuls folded into the out-projection.
    L = x.shape[0]
    qkv = jnp.dot(x, w_qkv, preferred_element_type=jnp.float32) + b_qkv
    ctxs = []
    for h in range(N_HEADS):
        q = qkv[:, h * D_HEAD:(h + 1) * D_HEAD]
        k = qkv[:, D_MODEL + h * D_HEAD:D_MODEL + (h + 1) * D_HEAD]
        v = qkv[:, 2 * D_MODEL + h * D_HEAD:2 * D_MODEL + (h + 1) * D_HEAD]
        s = jax.lax.dot_general(q, k, (((1,), (1,)), ((), ())),
                                preferred_element_type=jnp.float32)
        s = jnp.where(causal, -1e30, s)
        ctxs.append(jnp.dot(_softmax(s), v, preferred_element_type=jnp.float32))
    row = jax.lax.broadcasted_iota(jnp.int32, (L, L), 0)
    col = jax.lax.broadcasted_iota(jnp.int32, (L, L), 1)
    out = None
    for k in range(N_HEADS):
        blk = None
        for h in range(N_HEADS):
            sel = jnp.where(col == N_HEADS * row + (k - h * L), 1.0, 0.0)
            g = jnp.dot(sel, ctxs[h], preferred_element_type=jnp.float32)
            blk = g if blk is None else blk + g
        c = jnp.dot(blk, w_o[k * D_HEAD:(k + 1) * D_HEAD, :],
                    preferred_element_type=jnp.float32)
        out = c if out is None else out + c
    return out + b_o


# ----------------------------- slab weight access ----------------------------
def _slab_reader(slab_ref, idx):
    def read(name):
        off, r, c = idx[name]
        return slab_ref[off:off + r, :c]
    return read


def _encoder_layer(x, W, p):
    attn = _mha_self(x, W(p + 'wqkv'), W(p + 'bqkv'), W(p + 'wo'), W(p + 'bo'), None)
    y = _layernorm(x + attn, W(p + 'ln1g'), W(p + 'ln1b'))
    h = _gelu(jnp.dot(y, W(p + 'w1'), preferred_element_type=jnp.float32) + W(p + 'b1'))
    ff = jnp.dot(h, W(p + 'w2'), preferred_element_type=jnp.float32) + W(p + 'b2')
    return _layernorm(y + ff, W(p + 'ln2g'), W(p + 'ln2b'))


def _distil_conv(xs, W, p):
    # ConvLayer: circular Conv1d(k=3) + BatchNorm1d (training-mode batch statistics
    # over batch*length) + ELU + MaxPool1d(k=3, s=2, p=1).
    ys = [_circular_conv3(x, W(p + 'wp'), W(p + 'wc'), W(p + 'wn'), W(p + 'b')) for x in xs]
    n = float(sum(y.shape[0] for y in ys))
    mu = sum(jnp.sum(y, axis=0, keepdims=True) for y in ys) / n
    var = sum(jnp.sum(jnp.square(y - mu), axis=0, keepdims=True) for y in ys) / n
    scale = jax.lax.rsqrt(var + 1e-5) * W(p + 'bng')
    shift = W(p + 'bnb')
    out = []
    for y in ys:
        y = (y - mu) * scale + shift
        y = jnp.where(y > 0.0, y, jnp.exp(jnp.minimum(y, 0.0)) - 1.0)     # ELU(alpha=1)
        out.append(_maxpool3_s2(y))
    return out


# ------------------------------ Pallas kernels ------------------------------
def _make_encoder_kernel(idx):
    def kernel(x_ref, extra_ref, slab_ref, o_ref):
        W = _slab_reader(slab_ref, idx)
        # DataEmbedding: circular token conv + (positional + fixed temporal) add
        xs = []
        for b in range(BATCH):
            tok = _circular_conv3(x_ref[b], W('emb_wp'), W('emb_wc'), W('emb_wn'),
                                  W('emb_b'))
            xs.append(tok + extra_ref[b])                      # dropout p=0
        # Encoder: [EncoderLayer -> ConvLayer]* -> EncoderLayer -> LayerNorm
        for i in range(E_LAYERS - 1):
            xs = [_encoder_layer(x, W, f'e{i}_') for x in xs]
            xs = _distil_conv(xs, W, f'dc{i}_')
        xs = [_encoder_layer(x, W, f'e{E_LAYERS - 1}_') for x in xs]
        for b in range(BATCH):
            o_ref[b] = _layernorm(xs[b], W('enorm_g'), W('enorm_b'))
    return kernel


def _make_decoder_kernel(idx):
    def kernel(x_ref, extra_ref, cross_ref, slab_ref, o_ref):
        W = _slab_reader(slab_ref, idx)
        x = _circular_conv3(x_ref[0], W('emb_wp'), W('emb_wc'), W('emb_wn'),
                            W('emb_b')) + extra_ref[0]
        cross = cross_ref[0]
        L = x.shape[0]
        row = jax.lax.broadcasted_iota(jnp.int32, (L, L), 0)
        col = jax.lax.broadcasted_iota(jnp.int32, (L, L), 1)
        causal = col > row                                     # hoisted, head-invariant
        for i in range(D_LAYERS):
            p = f'd{i}_'
            self_out = _dec_self_attn_mix(x, W(p + 'swqkv'), W(p + 'sbqkv'),
                                          W(p + 'swo'), W(p + 'sbo'), causal)
            y = _layernorm(x + self_out, W(p + 'ln1g'), W(p + 'ln1b'))
            cross_out = _mha_cross(y, cross, W(p + 'cwq'), W(p + 'cbq'),
                                   W(p + 'cwkv'), W(p + 'cbkv'),
                                   W(p + 'cwo'), W(p + 'cbo'))
            y = _layernorm(y + cross_out, W(p + 'ln2g'), W(p + 'ln2b'))
            h = _gelu(jnp.dot(y, W(p + 'w1'), preferred_element_type=jnp.float32)
                      + W(p + 'b1'))
            ff = jnp.dot(h, W(p + 'w2'), preferred_element_type=jnp.float32) + W(p + 'b2')
            x = _layernorm(y + ff, W(p + 'ln3g'), W(p + 'ln3b'))
        # decoder-final LayerNorm fused with the (lane-dense, 128-wide) projection
        y = _layernorm(x, W('dnorm_g'), W('dnorm_b'))
        o_ref[0] = jnp.dot(y, W('proj_w'), preferred_element_type=jnp.float32) + W('proj_b')
    return kernel


# ------------------------------ kernel wrappers ------------------------------
def _full_spec(shape):
    nd = len(shape)
    return pl.BlockSpec(shape, lambda i, _n=nd: (0,) * _n)


def run_encoder(x_enc, extra_enc, enc_slab, enc_idx):
    out_shape = (BATCH, ENC_OUT_LEN, D_MODEL)
    return pl.pallas_call(
        _make_encoder_kernel(enc_idx),
        grid=(1,),
        in_specs=[_full_spec(x_enc.shape), _full_spec(extra_enc.shape),
                  _full_spec(enc_slab.shape)],
        out_specs=_full_spec(out_shape),
        out_shape=jax.ShapeDtypeStruct(out_shape, jnp.float32),
        compiler_params=pltpu.CompilerParams(dimension_semantics=("arbitrary",)),
    )(x_enc, extra_enc, enc_slab)


def run_decoder(x_dec, extra_dec, cross, dec_slab, dec_idx):
    out_shape = (BATCH, DEC_LEN, PROJ_PAD)
    return pl.pallas_call(
        _make_decoder_kernel(dec_idx),
        grid=(BATCH,),
        in_specs=[pl.BlockSpec((1, DEC_LEN, DEC_IN), lambda b: (b, 0, 0)),
                  pl.BlockSpec((1, DEC_LEN, D_MODEL), lambda b: (b, 0, 0)),
                  pl.BlockSpec((1, ENC_OUT_LEN, D_MODEL), lambda b: (b, 0, 0)),
                  pl.BlockSpec(dec_slab.shape, lambda b: (0, 0))],
        out_specs=pl.BlockSpec((1, DEC_LEN, PROJ_PAD), lambda b: (b, 0, 0)),
        out_shape=jax.ShapeDtypeStruct(out_shape, jnp.float32),
        compiler_params=pltpu.CompilerParams(dimension_semantics=("parallel",)),
    )(x_dec, extra_dec, cross, dec_slab)


# ------------------------------- model glue ---------------------------------
def sinusoid_table(n, d):
    pos = np.arange(n, dtype=np.float32)[:, None]
    div = np.exp(np.arange(0, d, 2, dtype=np.float32) * -(math.log(10000.0) / d))
    tab = np.zeros((n, d), dtype=np.float32)
    tab[:, 0::2] = np.sin(pos * div)
    tab[:, 1::2] = np.cos(pos * div)
    return jnp.asarray(tab)


def _pos_temporal(tables, x_mark, L):
    # TODO(synk): positional + fixed temporal embedding table gathers stay in XLA
    # (data-dependent gathers have no cheap Pallas equivalent at this size).
    m = x_mark.astype(jnp.int32)
    return (tables['pe'][:L][None]
            + tables['month'][m[..., 0]] + tables['day'][m[..., 1]]
            + tables['weekday'][m[..., 2]] + tables['hour'][m[..., 3]])


def informer_forward(params, x_enc, x_mark_enc, x_dec, x_mark_dec, *, enc_idx, dec_idx):
    tables = params['tables']
    extra_enc = _pos_temporal(tables, x_mark_enc, SEQ_LEN)
    extra_dec = _pos_temporal(tables, x_mark_dec, DEC_LEN)
    enc_out = run_encoder(x_enc, extra_enc, params['enc_slab'], enc_idx)
    dec_out = run_decoder(x_dec, extra_dec, enc_out, params['dec_slab'], dec_idx)
    return dec_out[:, -OUT_LEN:, :C_OUT]


# ------------------------------ parameter init ------------------------------
class KeyGen:
    def __init__(self, key):
        self.key = key

    def __call__(self):
        self.key, sub = jax.random.split(self.key)
        return sub


def _pack(entries):
    """Pack (name, array) pairs into one 128-lane-wide fp32 slab (8-row aligned)."""
    blocks, idx, off = [], {}, 0
    for name, arr in entries:
        a = np.asarray(arr, np.float32)
        if a.ndim == 1:
            a = a[None, :]
        r, c = a.shape
        rp = ((r + 7) // 8) * 8
        blk = np.zeros((rp, 128), np.float32)
        blk[:r, :c] = a
        blocks.append(blk)
        idx[name] = (off, r, c)
        off += rp
    return jnp.asarray(np.concatenate(blocks, axis=0)), idx


def build_params(seed=0):
    kg = KeyGen(jax.random.PRNGKey(seed))

    def dense(din, dout):
        w = jax.random.normal(kg(), (din, dout), jnp.float32) / math.sqrt(din)
        b = jax.random.normal(kg(), (1, dout), jnp.float32) * 0.02
        return w, b

    def conv_taps(cin, cout):
        taps = [jax.random.normal(kg(), (cin, cout), jnp.float32) / math.sqrt(3 * cin)
                for _ in range(3)]
        b = jax.random.normal(kg(), (1, cout), jnp.float32) * 0.02
        return taps, b

    def qkv_fused():
        # fused QKV projection with the 1/sqrt(Dh) attention scale folded into Q
        wq, bq = dense(D_MODEL, D_MODEL)
        wk, bk = dense(D_MODEL, D_MODEL)
        wv, bv = dense(D_MODEL, D_MODEL)
        return (jnp.concatenate([wq * SCALE, wk, wv], axis=1),
                jnp.concatenate([bq * SCALE, bk, bv], axis=1))

    ones = np.ones((1, D_MODEL), np.float32)
    zeros = np.zeros((1, D_MODEL), np.float32)

    # ---------------- encoder slab ----------------
    enc_entries = []
    taps, b = conv_taps(ENC_IN, D_MODEL)
    enc_entries += [('emb_wp', taps[0]), ('emb_wc', taps[1]), ('emb_wn', taps[2]),
                    ('emb_b', b)]
    for i in range(E_LAYERS):
        p = f'e{i}_'
        wqkv, bqkv = qkv_fused()
        wo, bo = dense(D_MODEL, D_MODEL)
        w1, b1 = dense(D_MODEL, D_FF)
        w2, b2 = dense(D_FF, D_MODEL)
        enc_entries += [(p + 'wqkv', wqkv), (p + 'bqkv', bqkv),
                        (p + 'wo', wo), (p + 'bo', bo),
                        (p + 'ln1g', ones), (p + 'ln1b', zeros),
                        (p + 'w1', w1), (p + 'b1', b1), (p + 'w2', w2), (p + 'b2', b2),
                        (p + 'ln2g', ones), (p + 'ln2b', zeros)]
        if i < E_LAYERS - 1:
            dtaps, db = conv_taps(D_MODEL, D_MODEL)
            q = f'dc{i}_'
            enc_entries += [(q + 'wp', dtaps[0]), (q + 'wc', dtaps[1]), (q + 'wn', dtaps[2]),
                            (q + 'b', db), (q + 'bng', ones), (q + 'bnb', zeros)]
    enc_entries += [('enorm_g', ones), ('enorm_b', zeros)]
    enc_slab, enc_idx = _pack(enc_entries)

    # ---------------- decoder slab ----------------
    dec_entries = []
    taps, b = conv_taps(DEC_IN, D_MODEL)
    dec_entries += [('emb_wp', taps[0]), ('emb_wc', taps[1]), ('emb_wn', taps[2]),
                    ('emb_b', b)]
    for i in range(D_LAYERS):
        p = f'd{i}_'
        swqkv, sbqkv = qkv_fused()
        swo, sbo = dense(D_MODEL, D_MODEL)
        cwq, cbq = dense(D_MODEL, D_MODEL)
        cwk, cbk = dense(D_MODEL, D_MODEL)
        cwv, cbv = dense(D_MODEL, D_MODEL)
        cwo, cbo = dense(D_MODEL, D_MODEL)
        w1, b1 = dense(D_MODEL, D_FF)
        w2, b2 = dense(D_FF, D_MODEL)
        dec_entries += [
            (p + 'swqkv', swqkv), (p + 'sbqkv', sbqkv), (p + 'swo', swo), (p + 'sbo', sbo),
            (p + 'ln1g', ones), (p + 'ln1b', zeros),
            (p + 'cwq', cwq * SCALE), (p + 'cbq', cbq * SCALE),
            (p + 'cwkv', jnp.concatenate([cwk, cwv], axis=1)),
            (p + 'cbkv', jnp.concatenate([cbk, cbv], axis=1)),
            (p + 'cwo', cwo), (p + 'cbo', cbo),
            (p + 'ln2g', ones), (p + 'ln2b', zeros),
            (p + 'w1', w1), (p + 'b1', b1), (p + 'w2', w2), (p + 'b2', b2),
            (p + 'ln3g', ones), (p + 'ln3b', zeros)]
    dec_entries += [('dnorm_g', ones), ('dnorm_b', zeros)]
    pw, pb = dense(D_MODEL, C_OUT)
    proj_w = np.zeros((D_MODEL, PROJ_PAD), np.float32)
    proj_w[:, :C_OUT] = np.asarray(pw)
    proj_b = np.zeros((1, PROJ_PAD), np.float32)
    proj_b[:, :C_OUT] = np.asarray(pb)
    dec_entries += [('proj_w', proj_w), ('proj_b', proj_b)]
    dec_slab, dec_idx = _pack(dec_entries)

    tables = dict(pe=sinusoid_table(MAX_LEN, D_MODEL),
                  month=sinusoid_table(13, D_MODEL),
                  day=sinusoid_table(32, D_MODEL),
                  weekday=sinusoid_table(7, D_MODEL),
                  hour=sinusoid_table(24, D_MODEL))

    params = dict(enc_slab=enc_slab, dec_slab=dec_slab, tables=tables)
    return params, enc_idx, dec_idx


# ----------------------------------- main ------------------------------------
if __name__ == "__main__":
    for _L in set([SEQ_LEN, DEC_LEN] + ENC_LENS):
        assert _prob_attn_equals_full(_L), _L    # ProbAttention == full attention here

    params, enc_idx, dec_idx = build_params(0)

    key = jax.random.PRNGKey(0)
    keys = jax.random.split(key, 10)
    x_enc = jax.random.normal(keys[0], (BATCH, SEQ_LEN, ENC_IN), jnp.float32)
    x_dec = jax.random.normal(keys[1], (BATCH, DEC_LEN, DEC_IN), jnp.float32)

    def make_mark(km, kd, kw, kh, L):
        month = jax.random.randint(km, (BATCH, L, 1), 0, 13)
        day = jax.random.randint(kd, (BATCH, L, 1), 0, 32)
        weekday = jax.random.randint(kw, (BATCH, L, 1), 0, 7)
        hour = jax.random.randint(kh, (BATCH, L, 1), 0, 24)
        return jnp.concatenate([month, day, weekday, hour], axis=-1).astype(jnp.float32)

    x_mark_enc = make_mark(keys[2], keys[3], keys[4], keys[5], SEQ_LEN)
    x_mark_dec = make_mark(keys[6], keys[7], keys[8], keys[9], DEC_LEN)

    fwd = jax.jit(partial(informer_forward, enc_idx=enc_idx, dec_idx=dec_idx))
    out = jax.block_until_ready(fwd(params, x_enc, x_mark_enc, x_dec, x_mark_dec))

    assert out.shape == (BATCH, OUT_LEN, C_OUT), out.shape
    assert bool(jnp.all(jnp.isfinite(out)))
    print("KERNEL_OK")
</pallas_src>

<mosaic_0001>
module attributes {stable_mosaic.version = 11 : i64} {
  func.func @kernel(%arg0: i32, %arg1: memref<2x12x4xf32, #tpu.memory_space<vmem>>, %arg2: memref<2x12x32xf32, #tpu.memory_space<vmem>>, %arg3: memref<616x128xf32, #tpu.memory_space<vmem>>, %arg4: memref<2x6x32xf32, #tpu.memory_space<vmem>>) attributes {dimension_semantics = [#tpu.dimension_semantics<arbitrary>], iteration_bounds = array<i64: 1>, scalar_prefetch = 0 : i64, scratch_operands = 0 : i64, tpu.core_type = #tpu.core_type<tc>, window_params = [{pipeline_mode = #tpu.pipeline_mode<synchronous>, transform_indices = @transform_0, window_bounds = array<i64: 2, 12, 4>}, {pipeline_mode = #tpu.pipeline_mode<synchronous>, transform_indices = @transform_1, window_bounds = array<i64: 2, 12, 32>}, {pipeline_mode = #tpu.pipeline_mode<synchronous>, transform_indices = @transform_2, window_bounds = array<i64: 616, 128>}, {pipeline_mode = #tpu.pipeline_mode<synchronous>, transform_indices = @transform_3, window_bounds = array<i64: 2, 6, 32>}]} {
    %c0 = arith.constant 0 : index
    %c0_0 = arith.constant 0 : index
    %c0_1 = arith.constant 0 : index
    %0 = vector.load %arg1[%c0, %c0_0, %c0_1] : memref<2x12x4xf32, #tpu.memory_space<vmem>>, vector<1x12x4xf32>
    %1 = vector.shape_cast %0 : vector<1x12x4xf32> to vector<12x4xf32>
    %c0_2 = arith.constant 0 : index
    %c0_3 = arith.constant 0 : index
    %2 = vector.load %arg3[%c0_2, %c0_3] : memref<616x128xf32, #tpu.memory_space<vmem>>, vector<4x32xf32>
    %c8 = arith.constant 8 : index
    %c0_4 = arith.constant 0 : index
    %3 = vector.load %arg3[%c8, %c0_4] : memref<616x128xf32, #tpu.memory_space<vmem>>, vector<4x32xf32>
    %c16 = arith.constant 16 : index
    %c0_5 = arith.constant 0 : index
    %4 = vector.load %arg3[%c16, %c0_5] : memref<616x128xf32, #tpu.memory_space<vmem>>, vector<4x32xf32>
    %c24 = arith.constant 24 : index
    %c0_6 = arith.constant 0 : index
    %5 = vector.load %arg3[%c24, %c0_6] : memref<616x128xf32, #tpu.memory_space<vmem>>, vector<1x32xf32>
    %6 = tpu.iota {dimensions = array<i32: 0>} : vector<12x12xi32>
    %7 = tpu.iota {dimensions = array<i32: 1>} : vector<12x12xi32>
    %8 = arith.subi %7, %6 : vector<12x12xi32>
    %c1_i32 = arith.constant 1 : i32
    %9 = vector.broadcast %c1_i32 : i32 to vector<12x12xi32>
    %10 = arith.addi %8, %9 : vector<12x12xi32>
    %c0_i32 = arith.constant 0 : i32
    %11 = vector.broadcast %c0_i32 : i32 to vector<12x12xi32>
    %12 = arith.cmpi eq, %10, %11 : vector<12x12xi32>
    %c12_i32 = arith.constant 12 : i32
    %13 = vector.broadcast %c12_i32 : i32 to vector<12x12xi32>
    %14 = arith.cmpi eq, %10, %13 : vector<12x12xi32>
    %15 = arith.ori %12, %14 : vector<12x12xi1>
    %c-12_i32 = arith.constant -12 : i32
    %16 = vector.broadcast %c-12_i32 : i32 to vector<12x12xi32>
    %17 = arith.cmpi eq, %10, %16 : vector<12x12xi32>
    %18 = arith.ori %15, %17 : vector<12x12xi1>
    %cst = arith.constant 1.000000e+00 : f32
    %cst_7 = arith.constant 0.000000e+00 : f32
    %19 = vector.broadcast %cst : f32 to vector<12x12xf32>
    %20 = vector.broadcast %cst_7 : f32 to vector<12x12xf32>
    %21 = arith.select %18, %19, %20 : vector<12x12xi1>, vector<12x12xf32>
    %cst_8 = arith.constant dense<0.000000e+00> : vector<12x4xf32>
    %22 = tpu.matmul %21, %1, %cst_8 {dimension_numbers = #tpu.dot_dimension_numbers<[1], [0], [0], [1], [0, 0, 1, 1], [], []>} : vector<12x12xf32>, vector<12x4xf32>, vector<12x4xf32> -> vector<12x4xf32>
    %23 = tpu.iota {dimensions = array<i32: 0>} : vector<12x12xi32>
    %24 = tpu.iota {dimensions = array<i32: 1>} : vector<12x12xi32>
    %25 = arith.subi %24, %23 : vector<12x12xi32>
    %c-1_i32 = arith.constant -1 : i32
    %26 = vector.broadcast %c-1_i32 : i32 to vector<12x12xi32>
    %27 = arith.addi %25, %26 : vector<12x12xi32>
    %c0_i32_9 = arith.constant 0 : i32
    %28 = vector.broadcast %c0_i32_9 : i32 to vector<12x12xi32>
    %29 = arith.cmpi eq, %27, %28 : vector<12x12xi32>
    %c12_i32_10 = arith.constant 12 : i32
    %30 = vector.broadcast %c12_i32_10 : i32 to vector<12x12xi32>
    %31 = arith.cmpi eq, %27, %30 : vector<12x12xi32>
    %32 = arith.ori %29, %31 : vector<12x12xi1>
    %c-12_i32_11 = arith.constant -12 : i32
    %33 = vector.broadcast %c-12_i32_11 : i32 to vector<12x12xi32>
    %34 = arith.cmpi eq, %27, %33 : vector<12x12xi32>
    %35 = arith.ori %32, %34 : vector<12x12xi1>
    %cst_12 = arith.constant 1.000000e+00 : f32
    %cst_13 = arith.constant 0.000000e+00 : f32
    %36 = vector.broadcast %cst_12 : f32 to vector<12x12xf32>
    %37 = vector.broadcast %cst_13 : f32 to vector<12x12xf32>
    %38 = arith.select %35, %36, %37 : vector<12x12xi1>, vector<12x12xf32>
    %cst_14 = arith.constant dense<0.000000e+00> : vector<12x4xf32>
    %39 = tpu.matmul %38, %1, %cst_14 {dimension_numbers = #tpu.dot_dimension_numbers<[1], [0], [0], [1], [0, 0, 1, 1], [], []>} : vector<12x12xf32>, vector<12x4xf32>, vector<12x4xf32> -> vector<12x4xf32>
    %cst_15 = arith.constant dense<0.000000e+00> : vector<12x32xf32>
    %40 = tpu.matmul %22, %2, %cst_15 {dimension_numbers = #tpu.dot_dimension_numbers<[1], [0], [0], [1], [0, 0, 1, 1], [], []>} : vector<12x4xf32>, vector<4x32xf32>, vector<12x32xf32> -> vector<12x32xf32>
    %cst_16 = arith.constant dense<0.000000e+00> : vector<12x32xf32>
    %41 = tpu.matmul %1, %3, %cst_16 {dimension_numbers = #tpu.dot_dimension_numbers<[1], [0], [0], [1], [0, 0, 1, 1], [], []>} : vector<12x4xf32>, vector<4x32xf32>, vector<12x32xf32> -> vector<12x32xf32>
    %42 = arith.addf %40, %41 : vector<12x32xf32>
    %cst_17 = arith.constant dense<0.000000e+00> : vector<12x32xf32>
    %43 = tpu.matmul %39, %4, %cst_17 {dimension_numbers = #tpu.dot_dimension_numbers<[1], [0], [0], [1], [0, 0, 1, 1], [], []>} : vector<12x4xf32>, vector<4x32xf32>, vector<12x32xf32> -> vector<12x32xf32>
    %44 = arith.addf %42, %43 : vector<12x32xf32>
    %45 = vector.broadcast %5 : vector<1x32xf32> to vector<12x32xf32>
    %46 = arith.addf %44, %45 : vector<12x32xf32>
    %c0_18 = arith.constant 0 : index
    %c0_19 = arith.constant 0 : index
    %c0_20 = arith.constant 0 : index
    %47 = vector.load %arg2[%c0_18, %c0_19, %c0_20] : memref<2x12x32xf32, #tpu.memory_space<vmem>>, vector<1x12x32xf32>
    %48 = vector.shape_cast %47 : vector<1x12x32xf32> to vector<12x32xf32>
    %49 = arith.addf %46, %48 : vector<12x32xf32>
    %c1 = arith.constant 1 : index
    %c0_21 = arith.constant 0 : index
    %c0_22 = arith.constant 0 : index
    %50 = vector.load %arg1[%c1, %c0_21, %c0_22] : memref<2x12x4xf32, #tpu.memory_space<vmem>>, vector<1x12x4xf32>
    %51 = vector.shape_cast %50 : vector<1x12x4xf32> to vector<12x4xf32>
    %c0_23 = arith.constant 0 : index
    %c0_24 = arith.constant 0 : index
    %52 = vector.load %arg3[%c0_23, %c0_24] : memref<616x128xf32, #tpu.memory_space<vmem>>, vector<4x32xf32>
    %c8_25 = arith.constant 8 : index
    %c0_26 = arith.constant 0 : index
    %53 = vector.load %arg3[%c8_25, %c0_26] : memref<616x128xf32, #tpu.memory_space<vmem>>, vector<4x32xf32>
    %c16_27 = arith.constant 16 : index
    %c0_28 = arith.constant 0 : index
    %54 = vector.load %arg3[%c16_27, %c0_28] : memref<616x128xf32, #tpu.memory_space<vmem>>, vector<4x32xf32>
    %c24_29 = arith.constant 24 : index
    %c0_30 = arith.constant 0 : index
    %55 = vector.load %arg3[%c24_29, %c0_30] : memref<616x128xf32, #tpu.memory_space<vmem>>, vector<1x32xf32>
    %56 = tpu.iota {dimensions = array<i32: 0>} : vector<12x12xi32>
    %57 = tpu.iota {dimensions = array<i32: 1>} : vector<12x12xi32>
    %58 = arith.subi %57, %56 : vector<12x12xi32>
    %c1_i32_31 = arith.constant 1 : i32
    %59 = vector.broadcast %c1_i32_31 : i32 to vector<12x12xi32>
    %60 = arith.addi %58, %59 : vector<12x12xi32>
    %c0_i32_32 = arith.constant 0 : i32
    %61 = vector.broadcast %c0_i32_32 : i32 to vector<12x12xi32>
    %62 = arith.cmpi eq, %60, %61 : vector<12x12xi32>
    %c12_i32_33 = arith.constant 12 : i32
    %63 = vector.broadcast %c12_i32_33 : i32 to vector<12x12xi32>
    %64 = arith.cmpi eq, %60, %63 : vector<12x12xi32>
    %65 = arith.ori %62, %64 : vector<12x12xi1>
    %c-12_i32_34 = arith.constant -12 : i32
    %66 = vector.broadcast %c-12_i32_34 : i32 to vector<12x12xi32>
    %67 = arith.cmpi eq, %60, %66 : vector<12x12xi32>
    %68 = arith.ori %65, %67 : vector<12x12xi1>
    %cst_35 = arith.constant 1.000000e+00 : f32
    %cst_36 = arith.constant 0.000000e+00 : f32
    %69 = vector.broadcast %cst_35 : f32 to vector<12x12xf32>
    %70 = vector.broadcast %cst_36 : f32 to vector<12x12xf32>
    %71 = arith.select %68, %69, %70 : vector<12x12xi1>, vector<12x12xf32>
    %cst_37 = arith.constant dense<0.000000e+00> : vector<12x4xf32>
    %72 = tpu.matmul %71, %51, %cst_37 {dimension_numbers = #tpu.dot_dimension_numbers<[1], [0], [0], [1], [0, 0, 1, 1], [], []>} : vector<12x12xf32>, vector<12x4xf32>, vector<12x4xf32> -> vector<12x4xf32>
    %73 = tpu.iota {dimensions = array<i32: 0>} : vector<12x12xi32>
    %74 = tpu.iota {dimensions = array<i32: 1>} : vector<12x12xi32>
    %75 = arith.subi %74, %73 : vector<12x12xi32>
    %c-1_i32_38 = arith.constant -1 : i32
    %76 = vector.broadcast %c-1_i32_38 : i32 to vector<12x12xi32>
    %77 = arith.addi %75, %76 : vector<12x12xi32>
    %c0_i32_39 = arith.constant 0 : i32
    %78 = vector.broadcast %c0_i32_39 : i32 to vector<12x12xi32>
    %79 = arith.cmpi eq, %77, %78 : vector<12x12xi32>
    %c12_i32_40 = arith.constant 12 : i32
    %80 = vector.broadcast %c12_i32_40 : i32 to vector<12x12xi32>
    %81 = arith.cmpi eq, %77, %80 : vector<12x12xi32>
    %82 = arith.ori %79, %81 : vector<12x12xi1>
    %c-12_i32_41 = arith.constant -12 : i32
    %83 = vector.broadcast %c-12_i32_41 : i32 to vector<12x12xi32>
    %84 = arith.cmpi eq, %77, %83 : vector<12x12xi32>
    %85 = arith.ori %82, %84 : vector<12x12xi1>
    %cst_42 = arith.constant 1.000000e+00 : f32
    %cst_43 = arith.constant 0.000000e+00 : f32
    %86 = vector.broadcast %cst_42 : f32 to vector<12x12xf32>
    %87 = vector.broadcast %cst_43 : f32 to vector<12x12xf32>
    %88 = arith.select %85, %86, %87 : vector<12x12xi1>, vector<12x12xf32>
    %cst_44 = arith.constant dense<0.000000e+00> : vector<12x4xf32>
    %89 = tpu.matmul %88, %51, %cst_44 {dimension_numbers = #tpu.dot_dimension_numbers<[1], [0], [0], [1], [0, 0, 1, 1], [], []>} : vector<12x12xf32>, vector<12x4xf32>, vector<12x4xf32> -> vector<12x4xf32>
    %cst_45 = arith.constant dense<0.000000e+00> : vector<12x32xf32>
    %90 = tpu.matmul %72, %52, %cst_45 {dimension_numbers = #tpu.dot_dimension_numbers<[1], [0], [0], [1], [0, 0, 1, 1], [], []>} : vector<12x4xf32>, vector<4x32xf32>, vector<12x32xf32> -> vector<12x32xf32>
    %cst_46 = arith.constant dense<0.000000e+00> : vector<12x32xf32>
    %91 = tpu.matmul %51, %53, %cst_46 {dimension_numbers = #tpu.dot_dimension_numbers<[1], [0], [0], [1], [0, 0, 1, 1], [], []>} : vector<12x4xf32>, vector<4x32xf32>, vector<12x32xf32> -> vector<12x32xf32>
    %92 = arith.addf %90, %91 : vector<12x32xf32>
    %cst_47 = arith.constant dense<0.000000e+00> : vector<12x32xf32>
    %93 = tpu.matmul %89, %54, %cst_47 {dimension_numbers = #tpu.dot_dimension_numbers<[1], [0], [0], [1], [0, 0, 1, 1], [], []>} : vector<12x4xf32>, vector<4x32xf32>, vector<12x32xf32> -> vector<12x32xf32>
    %94 = arith.addf %92, %93 : vector<12x32xf32>
    %95 = vector.broadcast %55 : vector<1x32xf32> to vector<12x32xf32>
    %96 = arith.addf %94, %95 : vector<12x32xf32>
    %c1_48 = arith.constant 1 : index
    %c0_49 = arith.constant 0 : index
    %c0_50 = arith.constant 0 : index
    %97 = vector.load %arg2[%c1_48, %c0_49, %c0_50] : memref<2x12x32xf32, #tpu.memory_space<vmem>>, vector<1x12x32xf32>
    %98 = vector.shape_cast %97 : vector<1x12x32xf32> to vector<12x32xf32>
    %99 = arith.addf %96, %98 : vector<12x32xf32>
    %c32 = arith.constant 32 : index
    %c0_51 = arith.constant 0 : index
    %100 = vector.load %arg3[%c32, %c0_51] : memref<616x128xf32, #tpu.memory_space<vmem>>, vector<32x96xf32>
    %c64 = arith.constant 64 : index
    %c0_52 = arith.constant 0 : index
    %101 = vector.load %arg3[%c64, %c0_52] : memref<616x128xf32, #tpu.memory_space<vmem>>, vector<1x96xf32>
    %c72 = arith.constant 72 : index
    %c0_53 = arith.constant 0 : index
    %102 = vector.load %arg3[%c72, %c0_53] : memref<616x128xf32, #tpu.memory_space<vmem>>, vector<32x32xf32>
    %c104 = arith.constant 104 : index
    %c0_54 = arith.constant 0 : index
    %103 = vector.load %arg3[%c104, %c0_54] : memref<616x128xf32, #tpu.memory_space<vmem>>, vector<1x32xf32>
    %cst_55 = arith.constant dense<0.000000e+00> : vector<12x96xf32>
    %104 = tpu.matmul %49, %100, %cst_55 {dimension_numbers = #tpu.dot_dimension_numbers<[1], [0], [0], [1], [0, 0, 1, 1], [], []>} : vector<12x32xf32>, vector<32x96xf32>, vector<12x96xf32> -> vector<12x96xf32>
    %105 = vector.broadcast %101 : vector<1x96xf32> to vector<12x96xf32>
    %106 = arith.addf %104, %105 : vector<12x96xf32>
    %107 = vector.extract_strided_slice %106 {offsets = [0, 0], sizes = [12, 32], strides = [1, 1]} : vector<12x96xf32> to vector<12x32xf32>
    %108 = vector.extract_strided_slice %106 {offsets = [0, 32], sizes = [12, 32], strides = [1, 1]} : vector<12x96xf32> to vector<12x32xf32>
    %109 = vector.extract_strided_slice %106 {offsets = [0, 64], sizes = [12, 32], strides = [1, 1]} : vector<12x96xf32> to vector<12x32xf32>
    %110 = vector.extract_strided_slice %107 {offsets = [0, 0], sizes = [12, 8], strides = [1, 1]} : vector<12x32xf32> to vector<12x8xf32>
    %111 = vector.extract_strided_slice %108 {offsets = [0, 0], sizes = [12, 8], strides = [1, 1]} : vector<12x32xf32> to vector<12x8xf32>
    %112 = vector.extract_strided_slice %109 {offsets = [0, 0], sizes = [12, 8], strides = [1, 1]} : vector<12x32xf32> to vector<12x8xf32>
    %cst_56 = arith.constant dense<0.000000e+00> : vector<12x12xf32>
    %113 = tpu.matmul %110, %111, %cst_56 {dimension_numbers = #tpu.dot_dimension_numbers<[1], [1], [0], [0], [0, 0, 1, 0], [], []>} : vector<12x8xf32>, vector<12x8xf32>, vector<12x12xf32> -> vector<12x12xf32>
    %cst_57 = arith.constant dense<0xFF800000> : vector<12xf32>
    %114 = vector.multi_reduction <maximumf>, %113, %cst_57 [1] : vector<12x12xf32> to vector<12xf32>
    %115 = vector.shape_cast %114 : vector<12xf32> to vector<12x1xf32>
    %116 = vector.broadcast %115 : vector<12x1xf32> to vector<12x12xf32>
    %117 = arith.subf %113, %116 : vector<12x12xf32>
    %118 = math.exp %117 : vector<12x12xf32>
    %cst_58 = arith.constant dense<0.000000e+00> : vector<12xf32>
    %119 = vector.multi_reduction <add>, %118, %cst_58 [1] : vector<12x12xf32> to vector<12xf32>
    %120 = vector.shape_cast %119 : vector<12xf32> to vector<12x1xf32>
    %121 = vector.broadcast %120 : vector<12x1xf32> to vector<12x12xf32>
    %122 = arith.divf %118, %121 : vector<12x12xf32>
    %cst_59 = arith.constant dense<0.000000e+00> : vector<12x8xf32>
    %123 = tpu.matmul %122, %112, %cst_59 {dimension_numbers = #tpu.dot_dimension_numbers<[1], [0], [0], [1], [0, 0, 1, 1], [], []>} : vector<12x12xf32>, vector<12x8xf32>, vector<12x8xf32> -> vector<12x8xf32>
    %124 = vector.extract_strided_slice %107 {offsets = [0, 8], sizes = [12, 8], strides = [1, 1]} : vector<12x32xf32> to vector<12x8xf32>
    %125 = vector.extract_strided_slice %108 {offsets = [0, 8], sizes = [12, 8], strides = [1, 1]} : vector<12x32xf32> to vector<12x8xf32>
    %126 = vector.extract_strided_slice %109 {offsets = [0, 8], sizes = [12, 8], strides = [1, 1]} : vector<12x32xf32> to vector<12x8xf32>
    %cst_60 = arith.constant dense<0.000000e+00> : vector<12x12xf32>
    %127 = tpu.matmul %124, %125, %cst_60 {dimension_numbers = #tpu.dot_dimension_numbers<[1], [1], [0], [0], [0, 0, 1, 0], [], []>} : vector<12x8xf32>, vector<12x8xf32>, vector<12x12xf32> -> vector<12x12xf32>
    %cst_61 = arith.constant dense<0xFF800000> : vector<12xf32>
    %128 = vector.multi_reduction <maximumf>, %127, %cst_61 [1] : vector<12x12xf32> to vector<12xf32>
    %129 = vector.shape_cast %128 : vector<12xf32> to vector<12x1xf32>
    %130 = vector.broadcast %129 : vector<12x1xf32> to vector<12x12xf32>
    %131 = arith.subf %127, %130 : vector<12x12xf32>
    %132 = math.exp %131 : vector<12x12xf32>
    %cst_62 = arith.constant dense<0.000000e+00> : vector<12xf32>
    %133 = vector.multi_reduction <add>, %132, %cst_62 [1] : vector<12x12xf32> to vector<12xf32>
    %134 = vector.shape_cast %133 : vector<12xf32> to vector<12x1xf32>
    %135 = vector.broadcast %134 : vector<12x1xf32> to vector<12x12xf32>
    %136 = arith.divf %132, %135 : vector<12x12xf32>
    %cst_63 = arith.constant dense<0.000000e+00> : vector<12x8xf32>
    %137 = tpu.matmul %136, %126, %cst_63 {dimension_numbers = #tpu.dot_dimension_numbers<[1], [0], [0], [1], [0, 0, 1, 1], [], []>} : vector<12x12xf32>, vector<12x8xf32>, vector<12x8xf32> -> vector<12x8xf32>
    %138 = vector.extract_strided_slice %107 {offsets = [0, 16], sizes = [12, 8], strides = [1, 1]} : vector<12x32xf32> to vector<12x8xf32>
    %139 = vector.extract_strided_slice %108 {offsets = [0, 16], sizes = [12, 8], strides = [1, 1]} : vector<12x32xf32> to vector<12x8xf32>
    %140 = vector.extract_strided_slice %109 {offsets = [0, 16], sizes = [12, 8], strides = [1, 1]} : vector<12x32xf32> to vector<12x8xf32>
    %cst_64 = arith.constant dense<0.000000e+00> : vector<12x12xf32>
    %141 = tpu.matmul %138, %139, %cst_64 {dimension_numbers = #tpu.dot_dimension_numbers<[1], [1], [0], [0], [0, 0, 1, 0], [], []>} : vector<12x8xf32>, vector<12x8xf32>, vector<12x12xf32> -> vector<12x12xf32>
    %cst_65 = arith.constant dense<0xFF800000> : vector<12xf32>
    %142 = vector.multi_reduction <maximumf>, %141, %cst_65 [1] : vector<12x12xf32> to vector<12xf32>
    %143 = vector.shape_cast %142 : vector<12xf32> to vector<12x1xf32>
    %144 = vector.broadcast %143 : vector<12x1xf32> to vector<12x12xf32>
    %145 = arith.subf %141, %144 : vector<12x12xf32>
    %146 = math.exp %145 : vector<12x12xf32>
    %cst_66 = arith.constant dense<0.000000e+00> : vector<12xf32>
    %147 = vector.multi_reduction <add>, %146, %cst_66 [1] : vector<12x12xf32> to vector<12xf32>
    %148 = vector.shape_cast %147 : vector<12xf32> to vector<12x1xf32>
    %149 = vector.broadcast %148 : vector<12x1xf32> to vector<12x12xf32>
    %150 = arith.divf %146, %149 : vector<12x12xf32>
    %cst_67 = arith.constant dense<0.000000e+00> : vector<12x8xf32>
    %151 = tpu.matmul %150, %140, %cst_67 {dimension_numbers = #tpu.dot_dimension_numbers<[1], [0], [0], [1], [0, 0, 1, 1], [], []>} : vector<12x12xf32>, vector<12x8xf32>, vector<12x8xf32> -> vector<12x8xf32>
    %152 = vector.extract_strided_slice %107 {offsets = [0, 24], sizes = [12, 8], strides = [1, 1]} : vector<12x32xf32> to vector<12x8xf32>
    %153 = vector.extract_strided_slice %108 {offsets = [0, 24], sizes = [12, 8], strides = [1, 1]} : vector<12x32xf32> to vector<12x8xf32>
    %154 = vector.extract_strided_slice %109 {offsets = [0, 24], sizes = [12, 8], strides = [1, 1]} : vector<12x32xf32> to vector<12x8xf32>
    %cst_68 = arith.constant dense<0.000000e+00> : vector<12x12xf32>
    %155 = tpu.matmul %152, %153, %cst_68 {dimension_numbers = #tpu.dot_dimension_numbers<[1], [1], [0], [0], [0, 0, 1, 0], [], []>} : vector<12x8xf32>, vector<12x8xf32>, vector<12x12xf32> -> vector<12x12xf32>
    %cst_69 = arith.constant dense<0xFF800000> : vector<12xf32>
    %156 = vector.multi_reduction <maximumf>, %155, %cst_69 [1] : vector<12x12xf32> to vector<12xf32>
    %157 = vector.shape_cast %156 : vector<12xf32> to vector<12x1xf32>
    %158 = vector.broadcast %157 : vector<12x1xf32> to vector<12x12xf32>
    %159 = arith.subf %155, %158 : vector<12x12xf32>
    %160 = math.exp %159 : vector<12x12xf32>
    %cst_70 = arith.constant dense<0.000000e+00> : vector<12xf32>
    %161 = vector.multi_reduction <add>, %160, %cst_70 [1] : vector<12x12xf32> to vector<12xf32>
    %162 = vector.shape_cast %161 : vector<12xf32> to vector<12x1xf32>
    %163 = vector.broadcast %162 : vector<12x1xf32> to vector<12x12xf32>
    %164 = arith.divf %160, %163 : vector<12x12xf32>
    %cst_71 = arith.constant dense<0.000000e+00> : vector<12x8xf32>
    %165 = tpu.matmul %164, %154, %cst_71 {dimension_numbers = #tpu.dot_dimension_numbers<[1], [0], [0], [1], [0, 0, 1, 1], [], []>} : vector<12x12xf32>, vector<12x8xf32>, vector<12x8xf32> -> vector<12x8xf32>
    %166 = tpu.concatenate %123, %137, %151, %165 in 1 : vector<12x8xf32>, vector<12x8xf32>, vector<12x8xf32>, vector<12x8xf32> -> vector<12x32xf32>
    %cst_72 = arith.constant dense<0.000000e+00> : vector<12x32xf32>
    %167 = tpu.matmul %166, %102, %cst_72 {dimension_numbers = #tpu.dot_dimension_numbers<[1], [0], [0], [1], [0, 0, 1, 1], [], []>} : vector<12x32xf32>, vector<32x32xf32>, vector<12x32xf32> -> vector<12x32xf32>
    %168 = vector.broadcast %103 : vector<1x32xf32> to vector<12x32xf32>
    %169 = arith.addf %167, %168 : vector<12x32xf32>
    %170 = arith.addf %49, %169 : vector<12x32xf32>
    %c112 = arith.constant 112 : index
    %c0_73 = arith.constant 0 : index
    %171 = vector.load %arg3[%c112, %c0_73] : memref<616x128xf32, #tpu.memory_space<vmem>>, vector<1x32xf32>
    %c120 = arith.constant 120 : index
    %c0_74 = arith.constant 0 : index
    %172 = vector.load %arg3[%c120, %c0_74] : memref<616x128xf32, #tpu.memory_space<vmem>>, vector<1x32xf32>
    %cst_75 = arith.constant dense<0.000000e+00> : vector<12xf32>
    %173 = vector.multi_reduction <add>, %170, %cst_75 [1] : vector<12x32xf32> to vector<12xf32>
    %174 = vector.shape_cast %173 : vector<12xf32> to vector<12x1xf32>
    %cst_76 = arith.constant 3.200000e+01 : f32
    %175 = vector.broadcast %cst_76 : f32 to vector<12x1xf32>
    %176 = arith.divf %174, %175 : vector<12x1xf32>
    %177 = vector.broadcast %176 : vector<12x1xf32> to vector<12x32xf32>
    %178 = arith.subf %170, %177 : vector<12x32xf32>
    %179 = arith.mulf %178, %178 : vector<12x32xf32>
    %cst_77 = arith.constant dense<0.000000e+00> : vector<12xf32>
    %180 = vector.multi_reduction <add>, %179, %cst_77 [1] : vector<12x32xf32> to vector<12xf32>
    %181 = vector.shape_cast %180 : vector<12xf32> to vector<12x1xf32>
    %cst_78 = arith.constant 3.200000e+01 : f32
    %182 = vector.broadcast %cst_78 : f32 to vector<12x1xf32>
    %183 = arith.divf %181, %182 : vector<12x1xf32>
    %184 = vector.broadcast %176 : vector<12x1xf32> to vector<12x32xf32>
    %185 = arith.subf %170, %184 : vector<12x32xf32>
    %cst_79 = arith.constant 9.99999974E-6 : f32
    %186 = vector.broadcast %cst_79 : f32 to vector<12x1xf32>
    %187 = arith.addf %183, %186 : vector<12x1xf32>
    %188 = math.rsqrt %187 : vector<12x1xf32>
    %189 = vector.broadcast %188 : vector<12x1xf32> to vector<12x32xf32>
    %190 = arith.mulf %185, %189 : vector<12x32xf32>
    %191 = vector.broadcast %171 : vector<1x32xf32> to vector<12x32xf32>
    %192 = arith.mulf %190, %191 : vector<12x32xf32>
    %193 = vector.broadcast %172 : vector<1x32xf32> to vector<12x32xf32>
    %194 = arith.addf %192, %193 : vector<12x32xf32>
    %c128 = arith.constant 128 : index
    %c0_80 = arith.constant 0 : index
    %195 = vector.load %arg3[%c128, %c0_80] : memref<616x128xf32, #tpu.memory_space<vmem>>, vector<32x64xf32>
    %cst_81 = arith.constant dense<0.000000e+00> : vector<12x64xf32>
    %196 = tpu.matmul %194, %195, %cst_81 {dimension_numbers = #tpu.dot_dimension_numbers<[1], [0], [0], [1], [0, 0, 1, 1], [], []>} : vector<12x32xf32>, vector<32x64xf32>, vector<12x64xf32> -> vector<12x64xf32>
    %c160 = arith.constant 160 : index
    %c0_82 = arith.constant 0 : index
    %197 = vector.load %arg3[%c160, %c0_82] : memref<616x128xf32, #tpu.memory_space<vmem>>, vector<1x64xf32>
    %198 = vector.broadcast %197 : vector<1x64xf32> to vector<12x64xf32>
    %199 = arith.addf %196, %198 : vector<12x64xf32>
    %cst_83 = arith.constant 5.000000e-01 : f32
    %200 = vector.broadcast %cst_83 : f32 to vector<12x64xf32>
    %201 = arith.mulf %200, %199 : vector<12x64xf32>
    %cst_84 = arith.constant 0.707106769 : f32
    %202 = vector.broadcast %cst_84 : f32 to vector<12x64xf32>
    %203 = arith.mulf %199, %202 : vector<12x64xf32>
    %cst_85 = arith.constant 0.000000e+00 : f32
    %204 = vector.broadcast %cst_85 : f32 to vector<12x64xf32>
    %205 = arith.cmpf oge, %203, %204 : vector<12x64xf32>
    %cst_86 = arith.constant 1.000000e+00 : f32
    %cst_87 = arith.constant -1.000000e+00 : f32
    %206 = vector.broadcast %cst_86 : f32 to vector<12x64xf32>
    %207 = vector.broadcast %cst_87 : f32 to vector<12x64xf32>
    %208 = arith.select %205, %206, %207 : vector<12x64xi1>, vector<12x64xf32>
    %209 = math.absf %203 : vector<12x64xf32>
    %cst_88 = arith.constant 0.327591091 : f32
    %210 = vector.broadcast %cst_88 : f32 to vector<12x64xf32>
    %211 = arith.mulf %210, %209 : vector<12x64xf32>
    %cst_89 = arith.constant 1.000000e+00 : f32
    %212 = vector.broadcast %cst_89 : f32 to vector<12x64xf32>
    %213 = arith.addf %212, %211 : vector<12x64xf32>
    %cst_90 = arith.constant 1.000000e+00 : f32
    %214 = vector.broadcast %cst_90 : f32 to vector<12x64xf32>
    %215 = arith.divf %214, %213 : vector<12x64xf32>
    %cst_91 = arith.constant 1.06140542 : f32
    %216 = vector.broadcast %cst_91 : f32 to vector<12x64xf32>
    %217 = arith.mulf %216, %215 : vector<12x64xf32>
    %cst_92 = arith.constant -1.45315206 : f32
    %218 = vector.broadcast %cst_92 : f32 to vector<12x64xf32>
    %219 = arith.addf %217, %218 : vector<12x64xf32>
    %220 = arith.mulf %219, %215 : vector<12x64xf32>
    %cst_93 = arith.constant 1.42141378 : f32
    %221 = vector.broadcast %cst_93 : f32 to vector<12x64xf32>
    %222 = arith.addf %220, %221 : vector<12x64xf32>
    %223 = arith.mulf %222, %215 : vector<12x64xf32>
    %cst_94 = arith.constant -0.284496725 : f32
    %224 = vector.broadcast %cst_94 : f32 to vector<12x64xf32>
    %225 = arith.addf %223, %224 : vector<12x64xf32>
    %226 = arith.mulf %225, %215 : vector<12x64xf32>
    %cst_95 = arith.constant 0.254829586 : f32
    %227 = vector.broadcast %cst_95 : f32 to vector<12x64xf32>
    %228 = arith.addf %226, %227 : vector<12x64xf32>
    %229 = arith.mulf %228, %215 : vector<12x64xf32>
    %cst_96 = arith.constant 0.000000e+00 : f32
    %230 = vector.broadcast %cst_96 : f32 to vector<12x64xf32>
    %231 = arith.subf %230, %209 : vector<12x64xf32>
    %232 = arith.mulf %231, %209 : vector<12x64xf32>
    %233 = math.exp %232 : vector<12x64xf32>
    %234 = arith.mulf %229, %233 : vector<12x64xf32>
    %cst_97 = arith.constant 1.000000e+00 : f32
    %235 = vector.broadcast %cst_97 : f32 to vector<12x64xf32>
    %236 = arith.subf %235, %234 : vector<12x64xf32>
    %237 = arith.mulf %208, %236 : vector<12x64xf32>
    %cst_98 = arith.constant 1.000000e+00 : f32
    %238 = vector.broadcast %cst_98 : f32 to vector<12x64xf32>
    %239 = arith.addf %238, %237 : vector<12x64xf32>
    %240 = arith.mulf %201, %239 : vector<12x64xf32>
    %c168 = arith.constant 168 : index
    %c0_99 = arith.constant 0 : index
    %241 = vector.load %arg3[%c168, %c0_99] : memref<616x128xf32, #tpu.memory_space<vmem>>, vector<64x32xf32>
    %cst_100 = arith.constant dense<0.000000e+00> : vector<12x32xf32>
    %242 = tpu.matmul %240, %241, %cst_100 {dimension_numbers = #tpu.dot_dimension_numbers<[1], [0], [0], [1], [0, 0, 1, 1], [], []>} : vector<12x64xf32>, vector<64x32xf32>, vector<12x32xf32> -> vector<12x32xf32>
    %c232 = arith.constant 232 : index
    %c0_101 = arith.constant 0 : index
    %243 = vector.load %arg3[%c232, %c0_101] : memref<616x128xf32, #tpu.memory_space<vmem>>, vector<1x32xf32>
    %244 = vector.broadcast %243 : vector<1x32xf32> to vector<12x32xf32>
    %245 = arith.addf %242, %244 : vector<12x32xf32>
    %246 = arith.addf %194, %245 : vector<12x32xf32>
    %c240 = arith.constant 240 : index
    %c0_102 = arith.constant 0 : index
    %247 = vector.load %arg3[%c240, %c0_102] : memref<616x128xf32, #tpu.memory_space<vmem>>, vector<1x32xf32>
    %c248 = arith.constant 248 : index
    %c0_103 = arith.constant 0 : index
    %248 = vector.load %arg3[%c248, %c0_103] : memref<616x128xf32, #tpu.memory_space<vmem>>, vector<1x32xf32>
    %cst_104 = arith.constant dense<0.000000e+00> : vector<12xf32>
    %249 = vector.multi_reduction <add>, %246, %cst_104 [1] : vector<12x32xf32> to vector<12xf32>
    %250 = vector.shape_cast %249 : vector<12xf32> to vector<12x1xf32>
    %cst_105 = arith.constant 3.200000e+01 : f32
    %251 = vector.broadcast %cst_105 : f32 to vector<12x1xf32>
    %252 = arith.divf %250, %251 : vector<12x1xf32>
    %253 = vector.broadcast %252 : vector<12x1xf32> to vector<12x32xf32>
    %254 = arith.subf %246, %253 : vector<12x32xf32>
    %255 = arith.mulf %254, %254 : vector<12x32xf32>
    %cst_106 = arith.constant dense<0.000000e+00> : vector<12xf32>
    %256 = vector.multi_reduction <add>, %255, %cst_106 [1] : vector<12x32xf32> to vector<12xf32>
    %257 = vector.shape_cast %256 : vector<12xf32> to vector<12x1xf32>
    %cst_107 = arith.constant 3.200000e+01 : f32
    %258 = vector.broadcast %cst_107 : f32 to vector<12x1xf32>
    %259 = arith.divf %257, %258 : vector<12x1xf32>
    %260 = vector.broadcast %252 : vector<12x1xf32> to vector<12x32xf32>
    %261 = arith.subf %246, %260 : vector<12x32xf32>
    %cst_108 = arith.constant 9.99999974E-6 : f32
    %262 = vector.broadcast %cst_108 : f32 to vector<12x1xf32>
    %263 = arith.addf %259, %262 : vector<12x1xf32>
    %264 = math.rsqrt %263 : vector<12x1xf32>
    %265 = vector.broadcast %264 : vector<12x1xf32> to vector<12x32xf32>
    %266 = arith.mulf %261, %265 : vector<12x32xf32>
    %267 = vector.broadcast %247 : vector<1x32xf32> to vector<12x32xf32>
    %268 = arith.mulf %266, %267 : vector<12x32xf32>
    %269 = vector.broadcast %248 : vector<1x32xf32> to vector<12x32xf32>
    %270 = arith.addf %268, %269 : vector<12x32xf32>
    %c32_109 = arith.constant 32 : index
    %c0_110 = arith.constant 0 : index
    %271 = vector.load %arg3[%c32_109, %c0_110] : memref<616x128xf32, #tpu.memory_space<vmem>>, vector<32x96xf32>
    %c64_111 = arith.constant 64 : index
    %c0_112 = arith.constant 0 : index
    %272 = vector.load %arg3[%c64_111, %c0_112] : memref<616x128xf32, #tpu.memory_space<vmem>>, vector<1x96xf32>
    %c72_113 = arith.constant 72 : index
    %c0_114 = arith.constant 0 : index
    %273 = vector.load %arg3[%c72_113, %c0_114] : memref<616x128xf32, #tpu.memory_space<vmem>>, vector<32x32xf32>
    %c104_115 = arith.constant 104 : index
    %c0_116 = arith.constant 0 : index
    %274 = vector.load %arg3[%c104_115, %c0_116] : memref<616x128xf32, #tpu.memory_space<vmem>>, vector<1x32xf32>
    %cst_117 = arith.constant dense<0.000000e+00> : vector<12x96xf32>
    %275 = tpu.matmul %99, %271, %cst_117 {dimension_numbers = #tpu.dot_dimension_numbers<[1], [0], [0], [1], [0, 0, 1, 1], [], []>} : vector<12x32xf32>, vector<32x96xf32>, vector<12x96xf32> -> vector<12x96xf32>
    %276 = vector.broadcast %272 : vector<1x96xf32> to vector<12x96xf32>
    %277 = arith.addf %275, %276 : vector<12x96xf32>
    %278 = vector.extract_strided_slice %277 {offsets = [0, 0], sizes = [12, 32], strides = [1, 1]} : vector<12x96xf32> to vector<12x32xf32>
    %279 = vector.extract_strided_slice %277 {offsets = [0, 32], sizes = [12, 32], strides = [1, 1]} : vector<12x96xf32> to vector<12x32xf32>
    %280 = vector.extract_strided_slice %277 {offsets = [0, 64], sizes = [12, 32], strides = [1, 1]} : vector<12x96xf32> to vector<12x32xf32>
    %281 = vector.extract_strided_slice %278 {offsets = [0, 0], sizes = [12, 8], strides = [1, 1]} : vector<12x32xf32> to vector<12x8xf32>
    %282 = vector.extract_strided_slice %279 {offsets = [0, 0], sizes = [12, 8], strides = [1, 1]} : vector<12x32xf32> to vector<12x8xf32>
    %283 = vector.extract_strided_slice %280 {offsets = [0, 0], sizes = [12, 8], strides = [1, 1]} : vector<12x32xf32> to vector<12x8xf32>
    %cst_118 = arith.constant dense<0.000000e+00> : vector<12x12xf32>
    %284 = tpu.matmul %281, %282, %cst_118 {dimension_numbers = #tpu.dot_dimension_numbers<[1], [1], [0], [0], [0, 0, 1, 0], [], []>} : vector<12x8xf32>, vector<12x8xf32>, vector<12x12xf32> -> vector<12x12xf32>
    %cst_119 = arith.constant dense<0xFF800000> : vector<12xf32>
    %285 = vector.multi_reduction <maximumf>, %284, %cst_119 [1] : vector<12x12xf32> to vector<12xf32>
    %286 = vector.shape_cast %285 : vector<12xf32> to vector<12x1xf32>
    %287 = vector.broadcast %286 : vector<12x1xf32> to vector<12x12xf32>
    %288 = arith.subf %284, %287 : vector<12x12xf32>
    %289 = math.exp %288 : vector<12x12xf32>
    %cst_120 = arith.constant dense<0.000000e+00> : vector<12xf32>
    %290 = vector.multi_reduction <add>, %289, %cst_120 [1] : vector<12x12xf32> to vector<12xf32>
    %291 = vector.shape_cast %290 : vector<12xf32> to vector<12x1xf32>
    %292 = vector.broadcast %291 : vector<12x1xf32> to vector<12x12xf32>
    %293 = arith.divf %289, %292 : vector<12x12xf32>
    %cst_121 = arith.constant dense<0.000000e+00> : vector<12x8xf32>
    %294 = tpu.matmul %293, %283, %cst_121 {dimension_numbers = #tpu.dot_dimension_numbers<[1], [0], [0], [1], [0, 0, 1, 1], [], []>} : vector<12x12xf32>, vector<12x8xf32>, vector<12x8xf32> -> vector<12x8xf32>
    %295 = vector.extract_strided_slice %278 {offsets = [0, 8], sizes = [12, 8], strides = [1, 1]} : vector<12x32xf32> to vector<12x8xf32>
    %296 = vector.extract_strided_slice %279 {offsets = [0, 8], sizes = [12, 8], strides = [1, 1]} : vector<12x32xf32> to vector<12x8xf32>
    %297 = vector.extract_strided_slice %280 {offsets = [0, 8], sizes = [12, 8], strides = [1, 1]} : vector<12x32xf32> to vector<12x8xf32>
    %cst_122 = arith.constant dense<0.000000e+00> : vector<12x12xf32>
    %298 = tpu.matmul %295, %296, %cst_122 {dimension_numbers = #tpu.dot_dimension_numbers<[1], [1], [0], [0], [0, 0, 1, 0], [], []>} : vector<12x8xf32>, vector<12x8xf32>, vector<12x12xf32> -> vector<12x12xf32>
    %cst_123 = arith.constant dense<0xFF800000> : vector<12xf32>
    %299 = vector.multi_reduction <maximumf>, %298, %cst_123 [1] : vector<12x12xf32> to vector<12xf32>
    %300 = vector.shape_cast %299 : vector<12xf32> to vector<12x1xf32>
    %301 = vector.broadcast %300 : vector<12x1xf32> to vector<12x12xf32>
    %302 = arith.subf %298, %301 : vector<12x12xf32>
    %303 = math.exp %302 : vector<12x12xf32>
    %cst_124 = arith.constant dense<0.000000e+00> : vector<12xf32>
    %304 = vector.multi_reduction <add>, %303, %cst_124 [1] : vector<12x12xf32> to vector<12xf32>
    %305 = vector.shape_cast %304 : vector<12xf32> to vector<12x1xf32>
    %306 = vector.broadcast %305 : vector<12x1xf32> to vector<12x12xf32>
    %307 = arith.divf %303, %306 : vector<12x12xf32>
    %cst_125 = arith.constant dense<0.000000e+00> : vector<12x8xf32>
    %308 = tpu.matmul %307, %297, %cst_125 {dimension_numbers = #tpu.dot_dimension_numbers<[1], [0], [0], [1], [0, 0, 1, 1], [], []>} : vector<12x12xf32>, vector<12x8xf32>, vector<12x8xf32> -> vector<12x8xf32>
    %309 = vector.extract_strided_slice %278 {offsets = [0, 16], sizes = [12, 8], strides = [1, 1]} : vector<12x32xf32> to vector<12x8xf32>
    %310 = vector.extract_strided_slice %279 {offsets = [0, 16], sizes = [12, 8], strides = [1, 1]} : vector<12x32xf32> to vector<12x8xf32>
    %311 = vector.extract_strided_slice %280 {offsets = [0, 16], sizes = [12, 8], strides = [1, 1]} : vector<12x32xf32> to vector<12x8xf32>
    %cst_126 = arith.constant dense<0.000000e+00> : vector<12x12xf32>
    %312 = tpu.matmul %309, %310, %cst_126 {dimension_numbers = #tpu.dot_dimension_numbers<[1], [1], [0], [0], [0, 0, 1, 0], [], []>} : vector<12x8xf32>, vector<12x8xf32>, vector<12x12xf32> -> vector<12x12xf32>
    %cst_127 = arith.constant dense<0xFF800000> : vector<12xf32>
    %313 = vector.multi_reduction <maximumf>, %312, %cst_127 [1] : vector<12x12xf32> to vector<12xf32>
    %314 = vector.shape_cast %313 : vector<12xf32> to vector<12x1xf32>
    %315 = vector.broadcast %314 : vector<12x1xf32> to vector<12x12xf32>
    %316 = arith.subf %312, %315 : vector<12x12xf32>
    %317 = math.exp %316 : vector<12x12xf32>
    %cst_128 = arith.constant dense<0.000000e+00> : vector<12xf32>
    %318 = vector.multi_reduction <add>, %317, %cst_128 [1] : vector<12x12xf32> to vector<12xf32>
    %319 = vector.shape_cast %318 : vector<12xf32> to vector<12x1xf32>
    %320 = vector.broadcast %319 : vector<12x1xf32> to vector<12x12xf32>
    %321 = arith.divf %317, %320 : vector<12x12xf32>
    %cst_129 = arith.constant dense<0.000000e+00> : vector<12x8xf32>
    %322 = tpu.matmul %321, %311, %cst_129 {dimension_numbers = #tpu.dot_dimension_numbers<[1], [0], [0], [1], [0, 0, 1, 1], [], []>} : vector<12x12xf32>, vector<12x8xf32>, vector<12x8xf32> -> vector<12x8xf32>
    %323 = vector.extract_strided_slice %278 {offsets = [0, 24], sizes = [12, 8], strides = [1, 1]} : vector<12x32xf32> to vector<12x8xf32>
    %324 = vector.extract_strided_slice %279 {offsets = [0, 24], sizes = [12, 8], strides = [1, 1]} : vector<12x32xf32> to vector<12x8xf32>
    %325 = vector.extract_strided_slice %280 {offsets = [0, 24], sizes = [12, 8], strides = [1, 1]} : vector<12x32xf32> to vector<12x8xf32>
    %cst_130 = arith.constant dense<0.000000e+00> : vector<12x12xf32>
    %326 = tpu.matmul %323, %324, %cst_130 {dimension_numbers = #tpu.dot_dimension_numbers<[1], [1], [0], [0], [0, 0, 1, 0], [], []>} : vector<12x8xf32>, vector<12x8xf32>, vector<12x12xf32> -> vector<12x12xf32>
    %cst_131 = arith.constant dense<0xFF800000> : vector<12xf32>
    %327 = vector.multi_reduction <maximumf>, %326, %cst_131 [1] : vector<12x12xf32> to vector<12xf32>
    %328 = vector.shape_cast %327 : vector<12xf32> to vector<12x1xf32>
    %329 = vector.broadcast %328 : vector<12x1xf32> to vector<12x12xf32>
    %330 = arith.subf %326, %329 : vector<12x12xf32>
    %331 = math.exp %330 : vector<12x12xf32>
    %cst_132 = arith.constant dense<0.000000e+00> : vector<12xf32>
    %332 = vector.multi_reduction <add>, %331, %cst_132 [1] : vector<12x12xf32> to vector<12xf32>
    %333 = vector.shape_cast %332 : vector<12xf32> to vector<12x1xf32>
    %334 = vector.broadcast %333 : vector<12x1xf32> to vector<12x12xf32>
    %335 = arith.divf %331, %334 : vector<12x12xf32>
    %cst_133 = arith.constant dense<0.000000e+00> : vector<12x8xf32>
    %336 = tpu.matmul %335, %325, %cst_133 {dimension_numbers = #tpu.dot_dimension_numbers<[1], [0], [0], [1], [0, 0, 1, 1], [], []>} : vector<12x12xf32>, vector<12x8xf32>, vector<12x8xf32> -> vector<12x8xf32>
    %337 = tpu.concatenate %294, %308, %322, %336 in 1 : vector<12x8xf32>, vector<12x8xf32>, vector<12x8xf32>, vector<12x8xf32> -> vector<12x32xf32>
    %cst_134 = arith.constant dense<0.000000e+00> : vector<12x32xf32>
    %338 = tpu.matmul %337, %273, %cst_134 {dimension_numbers = #tpu.dot_dimension_numbers<[1], [0], [0], [1], [0, 0, 1, 1], [], []>} : vector<12x32xf32>, vector<32x32xf32>, vector<12x32xf32> -> vector<12x32xf32>
    %339 = vector.broadcast %274 : vector<1x32xf32> to vector<12x32xf32>
    %340 = arith.addf %338, %339 : vector<12x32xf32>
    %341 = arith.addf %99, %340 : vector<12x32xf32>
    %c112_135 = arith.constant 112 : index
    %c0_136 = arith.constant 0 : index
    %342 = vector.load %arg3[%c112_135, %c0_136] : memref<616x128xf32, #tpu.memory_space<vmem>>, vector<1x32xf32>
    %c120_137 = arith.constant 120 : index
    %c0_138 = arith.constant 0 : index
    %343 = vector.load %arg3[%c120_137, %c0_138] : memref<616x128xf32, #tpu.memory_space<vmem>>, vector<1x32xf32>
    %cst_139 = arith.constant dense<0.000000e+00> : vector<12xf32>
    %344 = vector.multi_reduction <add>, %341, %cst_139 [1] : vector<12x32xf32> to vector<12xf32>
    %345 = vector.shape_cast %344 : vector<12xf32> to vector<12x1xf32>
    %cst_140 = arith.constant 3.200000e+01 : f32
    %346 = vector.broadcast %cst_140 : f32 to vector<12x1xf32>
    %347 = arith.divf %345, %346 : vector<12x1xf32>
    %348 = vector.broadcast %347 : vector<12x1xf32> to vector<12x32xf32>
    %349 = arith.subf %341, %348 : vector<12x32xf32>
    %350 = arith.mulf %349, %349 : vector<12x32xf32>
    %cst_141 = arith.constant dense<0.000000e+00> : vector<12xf32>
    %351 = vector.multi_reduction <add>, %350, %cst_141 [1] : vector<12x32xf32> to vector<12xf32>
    %352 = vector.shape_cast %351 : vector<12xf32> to vector<12x1xf32>
    %cst_142 = arith.constant 3.200000e+01 : f32
    %353 = vector.broadcast %cst_142 : f32 to vector<12x1xf32>
    %354 = arith.divf %352, %353 : vector<12x1xf32>
    %355 = vector.broadcast %347 : vector<12x1xf32> to vector<12x32xf32>
    %356 = arith.subf %341, %355 : vector<12x32xf32>
    %cst_143 = arith.constant 9.99999974E-6 : f32
    %357 = vector.broadcast %cst_143 : f32 to vector<12x1xf32>
    %358 = arith.addf %354, %357 : vector<12x1xf32>
    %359 = math.rsqrt %358 : vector<12x1xf32>
    %360 = vector.broadcast %359 : vector<12x1xf32> to vector<12x32xf32>
    %361 = arith.mulf %356, %360 : vector<12x32xf32>
    %362 = vector.broadcast %342 : vector<1x32xf32> to vector<12x32xf32>
    %363 = arith.mulf %361, %362 : vector<12x32xf32>
    %364 = vector.broadcast %343 : vector<1x32xf32> to vector<12x32xf32>
    %365 = arith.addf %363, %364 : vector<12x32xf32>
    %c128_144 = arith.constant 128 : index
    %c0_145 = arith.constant 0 : index
    %366 = vector.load %arg3[%c128_144, %c0_145] : memref<616x128xf32, #tpu.memory_space<vmem>>, vector<32x64xf32>
    %cst_146 = arith.constant dense<0.000000e+00> : vector<12x64xf32>
    %367 = tpu.matmul %365, %366, %cst_146 {dimension_numbers = #tpu.dot_dimension_numbers<[1], [0], [0], [1], [0, 0, 1, 1], [], []>} : vector<12x32xf32>, vector<32x64xf32>, vector<12x64xf32> -> vector<12x64xf32>
    %c160_147 = arith.constant 160 : index
    %c0_148 = arith.constant 0 : index
    %368 = vector.load %arg3[%c160_147, %c0_148] : memref<616x128xf32, #tpu.memory_space<vmem>>, vector<1x64xf32>
    %369 = vector.broadcast %368 : vector<1x64xf32> to vector<12x64xf32>
    %370 = arith.addf %367, %369 : vector<12x64xf32>
    %cst_149 = arith.constant 5.000000e-01 : f32
    %371 = vector.broadcast %cst_149 : f32 to vector<12x64xf32>
    %372 = arith.mulf %371, %370 : vector<12x64xf32>
    %cst_150 = arith.constant 0.707106769 : f32
    %373 = vector.broadcast %cst_150 : f32 to vector<12x64xf32>
    %374 = arith.mulf %370, %373 : vector<12x64xf32>
    %cst_151 = arith.constant 0.000000e+00 : f32
    %375 = vector.broadcast %cst_151 : f32 to vector<12x64xf32>
    %376 = arith.cmpf oge, %374, %375 : vector<12x64xf32>
    %cst_152 = arith.constant 1.000000e+00 : f32
    %cst_153 = arith.constant -1.000000e+00 : f32
    %377 = vector.broadcast %cst_152 : f32 to vector<12x64xf32>
    %378 = vector.broadcast %cst_153 : f32 to vector<12x64xf32>
    %379 = arith.select %376, %377, %378 : vector<12x64xi1>, vector<12x64xf32>
    %380 = math.absf %374 : vector<12x64xf32>
    %cst_154 = arith.constant 0.327591091 : f32
    %381 = vector.broadcast %cst_154 : f32 to vector<12x64xf32>
    %382 = arith.mulf %381, %380 : vector<12x64xf32>
    %cst_155 = arith.constant 1.000000e+00 : f32
    %383 = vector.broadcast %cst_155 : f32 to vector<12x64xf32>
    %384 = arith.addf %383, %382 : vector<12x64xf32>
    %cst_156 = arith.constant 1.000000e+00 : f32
    %385 = vector.broadcast %cst_156 : f32 to vector<12x64xf32>
    %386 = arith.divf %385, %384 : vector<12x64xf32>
    %cst_157 = arith.constant 1.06140542 : f32
    %387 = vector.broadcast %cst_157 : f32 to vector<12x64xf32>
    %388 = arith.mulf %387, %386 : vector<12x64xf32>
    %cst_158 = arith.constant -1.45315206 : f32
    %389 = vector.broadcast %cst_158 : f32 to vector<12x64xf32>
    %390 = arith.addf %388, %389 : vector<12x64xf32>
    %391 = arith.mulf %390, %386 : vector<12x64xf32>
    %cst_159 = arith.constant 1.42141378 : f32
    %392 = vector.broadcast %cst_159 : f32 to vector<12x64xf32>
    %393 = arith.addf %391, %392 : vector<12x64xf32>
    %394 = arith.mulf %393, %386 : vector<12x64xf32>
    %cst_160 = arith.constant -0.284496725 : f32
    %395 = vector.broadcast %cst_160 : f32 to vector<12x64xf32>
    %396 = arith.addf %394, %395 : vector<12x64xf32>
    %397 = arith.mulf %396, %386 : vector<12x64xf32>
    %cst_161 = arith.constant 0.254829586 : f32
    %398 = vector.broadcast %cst_161 : f32 to vector<12x64xf32>
    %399 = arith.addf %397, %398 : vector<12x64xf32>
    %400 = arith.mulf %399, %386 : vector<12x64xf32>
    %cst_162 = arith.constant 0.000000e+00 : f32
    %401 = vector.broadcast %cst_162 : f32 to vector<12x64xf32>
    %402 = arith.subf %401, %380 : vector<12x64xf32>
    %403 = arith.mulf %402, %380 : vector<12x64xf32>
    %404 = math.exp %403 : vector<12x64xf32>
    %405 = arith.mulf %400, %404 : vector<12x64xf32>
    %cst_163 = arith.constant 1.000000e+00 : f32
    %406 = vector.broadcast %cst_163 : f32 to vector<12x64xf32>
    %407 = arith.subf %406, %405 : vector<12x64xf32>
    %408 = arith.mulf %379, %407 : vector<12x64xf32>
    %cst_164 = arith.constant 1.000000e+00 : f32
    %409 = vector.broadcast %cst_164 : f32 to vector<12x64xf32>
    %410 = arith.addf %409, %408 : vector<12x64xf32>
    %411 = arith.mulf %372, %410 : vector<12x64xf32>
    %c168_165 = arith.constant 168 : index
    %c0_166 = arith.constant 0 : index
    %412 = vector.load %arg3[%c168_165, %c0_166] : memref<616x128xf32, #tpu.memory_space<vmem>>, vector<64x32xf32>
    %cst_167 = arith.constant dense<0.000000e+00> : vector<12x32xf32>
    %413 = tpu.matmul %411, %412, %cst_167 {dimension_numbers = #tpu.dot_dimension_numbers<[1], [0], [0], [1], [0, 0, 1, 1], [], []>} : vector<12x64xf32>, vector<64x32xf32>, vector<12x32xf32> -> vector<12x32xf32>
    %c232_168 = arith.constant 232 : index
    %c0_169 = arith.constant 0 : index
    %414 = vector.load %arg3[%c232_168, %c0_169] : memref<616x128xf32, #tpu.memory_space<vmem>>, vector<1x32xf32>
    %415 = vector.broadcast %414 : vector<1x32xf32> to vector<12x32xf32>
    %416 = arith.addf %413, %415 : vector<12x32xf32>
    %417 = arith.addf %365, %416 : vector<12x32xf32>
    %c240_170 = arith.constant 240 : index
    %c0_171 = arith.constant 0 : index
    %418 = vector.load %arg3[%c240_170, %c0_171] : memref<616x128xf32, #tpu.memory_space<vmem>>, vector<1x32xf32>
    %c248_172 = arith.constant 248 : index
    %c0_173 = arith.constant 0 : index
    %419 = vector.load %arg3[%c248_172, %c0_173] : memref<616x128xf32, #tpu.memory_space<vmem>>, vector<1x32xf32>
    %cst_174 = arith.constant dense<0.000000e+00> : vector<12xf32>
    %420 = vector.multi_reduction <add>, %417, %cst_174 [1] : vector<12x32xf32> to vector<12xf32>
    %421 = vector.shape_cast %420 : vector<12xf32> to vector<12x1xf32>
    %cst_175 = arith.constant 3.200000e+01 : f32
    %422 = vector.broadcast %cst_175 : f32 to vector<12x1xf32>
    %423 = arith.divf %421, %422 : vector<12x1xf32>
    %424 = vector.broadcast %423 : vector<12x1xf32> to vector<12x32xf32>
    %425 = arith.subf %417, %424 : vector<12x32xf32>
    %426 = arith.mulf %425, %425 : vector<12x32xf32>
    %cst_176 = arith.constant dense<0.000000e+00> : vector<12xf32>
    %427 = vector.multi_reduction <add>, %426, %cst_176 [1] : vector<12x32xf32> to vector<12xf32>
    %428 = vector.shape_cast %427 : vector<12xf32> to vector<12x1xf32>
    %cst_177 = arith.constant 3.200000e+01 : f32
    %429 = vector.broadcast %cst_177 : f32 to vector<12x1xf32>
    %430 = arith.divf %428, %429 : vector<12x1xf32>
    %431 = vector.broadcast %423 : vector<12x1xf32> to vector<12x32xf32>
    %432 = arith.subf %417, %431 : vector<12x32xf32>
    %cst_178 = arith.constant 9.99999974E-6 : f32
    %433 = vector.broadcast %cst_178 : f32 to vector<12x1xf32>
    %434 = arith.addf %430, %433 : vector<12x1xf32>
    %435 = math.rsqrt %434 : vector<12x1xf32>
    %436 = vector.broadcast %435 : vector<12x1xf32> to vector<12x32xf32>
    %437 = arith.mulf %432, %436 : vector<12x32xf32>
    %438 = vector.broadcast %418 : vector<1x32xf32> to vector<12x32xf32>
    %439 = arith.mulf %437, %438 : vector<12x32xf32>
    %440 = vector.broadcast %419 : vector<1x32xf32> to vector<12x32xf32>
    %441 = arith.addf %439, %440 : vector<12x32xf32>
    %c256 = arith.constant 256 : index
    %c0_179 = arith.constant 0 : index
    %442 = vector.load %arg3[%c256, %c0_179] : memref<616x128xf32, #tpu.memory_space<vmem>>, vector<32x32xf32>
    %c288 = arith.constant 288 : index
    %c0_180 = arith.constant 0 : index
    %443 = vector.load %arg3[%c288, %c0_180] : memref<616x128xf32, #tpu.memory_space<vmem>>, vector<32x32xf32>
    %c320 = arith.constant 320 : index
    %c0_181 = arith.constant 0 : index
    %444 = vector.load %arg3[%c320, %c0_181] : memref<616x128xf32, #tpu.memory_space<vmem>>, vector<32x32xf32>
    %c352 = arith.constant 352 : index
    %c0_182 = arith.constant 0 : index
    %445 = vector.load %arg3[%c352, %c0_182] : memref<616x128xf32, #tpu.memory_space<vmem>>, vector<1x32xf32>
    %446 = tpu.iota {dimensions = array<i32: 0>} : vector<12x12xi32>
    %447 = tpu.iota {dimensions = array<i32: 1>} : vector<12x12xi32>
    %448 = arith.subi %447, %446 : vector<12x12xi32>
    %c1_i32_183 = arith.constant 1 : i32
    %449 = vector.broadcast %c1_i32_183 : i32 to vector<12x12xi32>
    %450 = arith.addi %448, %449 : vector<12x12xi32>
    %c0_i32_184 = arith.constant 0 : i32
    %451 = vector.broadcast %c0_i32_184 : i32 to vector<12x12xi32>
    %452 = arith.cmpi eq, %450, %451 : vector<12x12xi32>
    %c12_i32_185 = arith.constant 12 : i32
    %453 = vector.broadcast %c12_i32_185 : i32 to vector<12x12xi32>
    %454 = arith.cmpi eq, %450, %453 : vector<12x12xi32>
    %455 = arith.ori %452, %454 : vector<12x12xi1>
    %c-12_i32_186 = arith.constant -12 : i32
    %456 = vector.broadcast %c-12_i32_186 : i32 to vector<12x12xi32>
    %457 = arith.cmpi eq, %450, %456 : vector<12x12xi32>
    %458 = arith.ori %455, %457 : vector<12x12xi1>
    %cst_187 = arith.constant 1.000000e+00 : f32
    %cst_188 = arith.constant 0.000000e+00 : f32
    %459 = vector.broadcast %cst_187 : f32 to vector<12x12xf32>
    %460 = vector.broadcast %cst_188 : f32 to vector<12x12xf32>
    %461 = arith.select %458, %459, %460 : vector<12x12xi1>, vector<12x12xf32>
    %cst_189 = arith.constant dense<0.000000e+00> : vector<12x32xf32>
    %462 = tpu.matmul %461, %270, %cst_189 {dimension_numbers = #tpu.dot_dimension_numbers<[1], [0], [0], [1], [0, 0, 1, 1], [], []>} : vector<12x12xf32>, vector<12x32xf32>, vector<12x32xf32> -> vector<12x32xf32>
    %463 = tpu.iota {dimensions = array<i32: 0>} : vector<12x12xi32>
    %464 = tpu.iota {dimensions = array<i32: 1>} : vector<12x12xi32>
    %465 = arith.subi %464, %463 : vector<12x12xi32>
    %c-1_i32_190 = arith.constant -1 : i32
    %466 = vector.broadcast %c-1_i32_190 : i32 to vector<12x12xi32>
    %467 = arith.addi %465, %466 : vector<12x12xi32>
    %c0_i32_191 = arith.constant 0 : i32
    %468 = vector.broadcast %c0_i32_191 : i32 to vector<12x12xi32>
    %469 = arith.cmpi eq, %467, %468 : vector<12x12xi32>
    %c12_i32_192 = arith.constant 12 : i32
    %470 = vector.broadcast %c12_i32_192 : i32 to vector<12x12xi32>
    %471 = arith.cmpi eq, %467, %470 : vector<12x12xi32>
    %472 = arith.ori %469, %471 : vector<12x12xi1>
    %c-12_i32_193 = arith.constant -12 : i32
    %473 = vector.broadcast %c-12_i32_193 : i32 to vector<12x12xi32>
    %474 = arith.cmpi eq, %467, %473 : vector<12x12xi32>
    %475 = arith.ori %472, %474 : vector<12x12xi1>
    %cst_194 = arith.constant 1.000000e+00 : f32
    %cst_195 = arith.constant 0.000000e+00 : f32
    %476 = vector.broadcast %cst_194 : f32 to vector<12x12xf32>
    %477 = vector.broadcast %cst_195 : f32 to vector<12x12xf32>
    %478 = arith.select %475, %476, %477 : vector<12x12xi1>, vector<12x12xf32>
    %cst_196 = arith.constant dense<0.000000e+00> : vector<12x32xf32>
    %479 = tpu.matmul %478, %270, %cst_196 {dimension_numbers = #tpu.dot_dimension_numbers<[1], [0], [0], [1], [0, 0, 1, 1], [], []>} : vector<12x12xf32>, vector<12x32xf32>, vector<12x32xf32> -> vector<12x32xf32>
    %cst_197 = arith.constant dense<0.000000e+00> : vector<12x32xf32>
    %480 = tpu.matmul %462, %442, %cst_197 {dimension_numbers = #tpu.dot_dimension_numbers<[1], [0], [0], [1], [0, 0, 1, 1], [], []>} : vector<12x32xf32>, vector<32x32xf32>, vector<12x32xf32> -> vector<12x32xf32>
    %cst_198 = arith.constant dense<0.000000e+00> : vector<12x32xf32>
    %481 = tpu.matmul %270, %443, %cst_198 {dimension_numbers = #tpu.dot_dimension_numbers<[1], [0], [0], [1], [0, 0, 1, 1], [], []>} : vector<12x32xf32>, vector<32x32xf32>, vector<12x32xf32> -> vector<12x32xf32>
    %482 = arith.addf %480, %481 : vector<12x32xf32>
    %cst_199 = arith.constant dense<0.000000e+00> : vector<12x32xf32>
    %483 = tpu.matmul %479, %444, %cst_199 {dimension_numbers = #tpu.dot_dimension_numbers<[1], [0], [0], [1], [0, 0, 1, 1], [], []>} : vector<12x32xf32>, vector<32x32xf32>, vector<12x32xf32> -> vector<12x32xf32>
    %484 = arith.addf %482, %483 : vector<12x32xf32>
    %485 = vector.broadcast %445 : vector<1x32xf32> to vector<12x32xf32>
    %486 = arith.addf %484, %485 : vector<12x32xf32>
    %c256_200 = arith.constant 256 : index
    %c0_201 = arith.constant 0 : index
    %487 = vector.load %arg3[%c256_200, %c0_201] : memref<616x128xf32, #tpu.memory_space<vmem>>, vector<32x32xf32>
    %c288_202 = arith.constant 288 : index
    %c0_203 = arith.constant 0 : index
    %488 = vector.load %arg3[%c288_202, %c0_203] : memref<616x128xf32, #tpu.memory_space<vmem>>, vector<32x32xf32>
    %c320_204 = arith.constant 320 : index
    %c0_205 = arith.constant 0 : index
    %489 = vector.load %arg3[%c320_204, %c0_205] : memref<616x128xf32, #tpu.memory_space<vmem>>, vector<32x32xf32>
    %c352_206 = arith.constant 352 : index
    %c0_207 = arith.constant 0 : index
    %490 = vector.load %arg3[%c352_206, %c0_207] : memref<616x128xf32, #tpu.memory_space<vmem>>, vector<1x32xf32>
    %491 = tpu.iota {dimensions = array<i32: 0>} : vector<12x12xi32>
    %492 = tpu.iota {dimensions = array<i32: 1>} : vector<12x12xi32>
    %493 = arith.subi %492, %491 : vector<12x12xi32>
    %c1_i32_208 = arith.constant 1 : i32
    %494 = vector.broadcast %c1_i32_208 : i32 to vector<12x12xi32>
    %495 = arith.addi %493, %494 : vector<12x12xi32>
    %c0_i32_209 = arith.constant 0 : i32
    %496 = vector.broadcast %c0_i32_209 : i32 to vector<12x12xi32>
    %497 = arith.cmpi eq, %495, %496 : vector<12x12xi32>
    %c12_i32_210 = arith.constant 12 : i32
    %498 = vector.broadcast %c12_i32_210 : i32 to vector<12x12xi32>
    %499 = arith.cmpi eq, %495, %498 : vector<12x12xi32>
    %500 = arith.ori %497, %499 : vector<12x12xi1>
    %c-12_i32_211 = arith.constant -12 : i32
    %501 = vector.broadcast %c-12_i32_211 : i32 to vector<12x12xi32>
    %502 = arith.cmpi eq, %495, %501 : vector<12x12xi32>
    %503 = arith.ori %500, %502 : vector<12x12xi1>
    %cst_212 = arith.constant 1.000000e+00 : f32
    %cst_213 = arith.constant 0.000000e+00 : f32
    %504 = vector.broadcast %cst_212 : f32 to vector<12x12xf32>
    %505 = vector.broadcast %cst_213 : f32 to vector<12x12xf32>
    %506 = arith.select %503, %504, %505 : vector<12x12xi1>, vector<12x12xf32>
    %cst_214 = arith.constant dense<0.000000e+00> : vector<12x32xf32>
    %507 = tpu.matmul %506, %441, %cst_214 {dimension_numbers = #tpu.dot_dimension_numbers<[1], [0], [0], [1], [0, 0, 1, 1], [], []>} : vector<12x12xf32>, vector<12x32xf32>, vector<12x32xf32> -> vector<12x32xf32>
    %508 = tpu.iota {dimensions = array<i32: 0>} : vector<12x12xi32>
    %509 = tpu.iota {dimensions = array<i32: 1>} : vector<12x12xi32>
    %510 = arith.subi %509, %508 : vector<12x12xi32>
    %c-1_i32_215 = arith.constant -1 : i32
    %511 = vector.broadcast %c-1_i32_215 : i32 to vector<12x12xi32>
    %512 = arith.addi %510, %511 : vector<12x12xi32>
    %c0_i32_216 = arith.constant 0 : i32
    %513 = vector.broadcast %c0_i32_216 : i32 to vector<12x12xi32>
    %514 = arith.cmpi eq, %512, %513 : vector<12x12xi32>
    %c12_i32_217 = arith.constant 12 : i32
    %515 = vector.broadcast %c12_i32_217 : i32 to vector<12x12xi32>
    %516 = arith.cmpi eq, %512, %515 : vector<12x12xi32>
    %517 = arith.ori %514, %516 : vector<12x12xi1>
    %c-12_i32_218 = arith.constant -12 : i32
    %518 = vector.broadcast %c-12_i32_218 : i32 to vector<12x12xi32>
    %519 = arith.cmpi eq, %512, %518 : vector<12x12xi32>
    %520 = arith.ori %517, %519 : vector<12x12xi1>
    %cst_219 = arith.constant 1.000000e+00 : f32
    %cst_220 = arith.constant 0.000000e+00 : f32
    %521 = vector.broadcast %cst_219 : f32 to vector<12x12xf32>
    %522 = vector.broadcast %cst_220 : f32 to vector<12x12xf32>
    %523 = arith.select %520, %521, %522 : vector<12x12xi1>, vector<12x12xf32>
    %cst_221 = arith.constant dense<0.000000e+00> : vector<12x32xf32>
    %524 = tpu.matmul %523, %441, %cst_221 {dimension_numbers = #tpu.dot_dimension_numbers<[1], [0], [0], [1], [0, 0, 1, 1], [], []>} : vector<12x12xf32>, vector<12x32xf32>, vector<12x32xf32> -> vector<12x32xf32>
    %cst_222 = arith.constant dense<0.000000e+00> : vector<12x32xf32>
    %525 = tpu.matmul %507, %487, %cst_222 {dimension_numbers = #tpu.dot_dimension_numbers<[1], [0], [0], [1], [0, 0, 1, 1], [], []>} : vector<12x32xf32>, vector<32x32xf32>, vector<12x32xf32> -> vector<12x32xf32>
    %cst_223 = arith.constant dense<0.000000e+00> : vector<12x32xf32>
    %526 = tpu.matmul %441, %488, %cst_223 {dimension_numbers = #tpu.dot_dimension_numbers<[1], [0], [0], [1], [0, 0, 1, 1], [], []>} : vector<12x32xf32>, vector<32x32xf32>, vector<12x32xf32> -> vector<12x32xf32>
    %527 = arith.addf %525, %526 : vector<12x32xf32>
    %cst_224 = arith.constant dense<0.000000e+00> : vector<12x32xf32>
    %528 = tpu.matmul %524, %489, %cst_224 {dimension_numbers = #tpu.dot_dimension_numbers<[1], [0], [0], [1], [0, 0, 1, 1], [], []>} : vector<12x32xf32>, vector<32x32xf32>, vector<12x32xf32> -> vector<12x32xf32>
    %529 = arith.addf %527, %528 : vector<12x32xf32>
    %530 = vector.broadcast %490 : vector<1x32xf32> to vector<12x32xf32>
    %531 = arith.addf %529, %530 : vector<12x32xf32>
    %cst_225 = arith.constant dense<0.000000e+00> : vector<32xf32>
    %532 = vector.multi_reduction <add>, %486, %cst_225 [0] : vector<12x32xf32> to vector<32xf32>
    %533 = vector.shape_cast %532 : vector<32xf32> to vector<1x32xf32>
    %cst_226 = arith.constant 0.000000e+00 : f32
    %534 = vector.broadcast %cst_226 : f32 to vector<1x32xf32>
    %535 = arith.addf %534, %533 : vector<1x32xf32>
    %cst_227 = arith.constant dense<0.000000e+00> : vector<32xf32>
    %536 = vector.multi_reduction <add>, %531, %cst_227 [0] : vector<12x32xf32> to vector<32xf32>
    %537 = vector.shape_cast %536 : vector<32xf32> to vector<1x32xf32>
    %538 = arith.addf %535, %537 : vector<1x32xf32>
    %cst_228 = arith.constant 2.400000e+01 : f32
    %539 = vector.broadcast %cst_228 : f32 to vector<1x32xf32>
    %540 = arith.divf %538, %539 : vector<1x32xf32>
    %541 = vector.broadcast %540 : vector<1x32xf32> to vector<12x32xf32>
    %542 = arith.subf %486, %541 : vector<12x32xf32>
    %543 = arith.mulf %542, %542 : vector<12x32xf32>
    %cst_229 = arith.constant dense<0.000000e+00> : vector<32xf32>
    %544 = vector.multi_reduction <add>, %543, %cst_229 [0] : vector<12x32xf32> to vector<32xf32>
    %545 = vector.shape_cast %544 : vector<32xf32> to vector<1x32xf32>
    %cst_230 = arith.constant 0.000000e+00 : f32
    %546 = vector.broadcast %cst_230 : f32 to vector<1x32xf32>
    %547 = arith.addf %546, %545 : vector<1x32xf32>
    %548 = vector.broadcast %540 : vector<1x32xf32> to vector<12x32xf32>
    %549 = arith.subf %531, %548 : vector<12x32xf32>
    %550 = arith.mulf %549, %549 : vector<12x32xf32>
    %cst_231 = arith.constant dense<0.000000e+00> : vector<32xf32>
    %551 = vector.multi_reduction <add>, %550, %cst_231 [0] : vector<12x32xf32> to vector<32xf32>
    %552 = vector.shape_cast %551 : vector<32xf32> to vector<1x32xf32>
    %553 = arith.addf %547, %552 : vector<1x32xf32>
    %cst_232 = arith.constant 2.400000e+01 : f32
    %554 = vector.broadcast %cst_232 : f32 to vector<1x32xf32>
    %555 = arith.divf %553, %554 : vector<1x32xf32>
    %cst_233 = arith.constant 9.99999974E-6 : f32
    %556 = vector.broadcast %cst_233 : f32 to vector<1x32xf32>
    %557 = arith.addf %555, %556 : vector<1x32xf32>
    %558 = math.rsqrt %557 : vector<1x32xf32>
    %c360 = arith.constant 360 : index
    %c0_234 = arith.constant 0 : index
    %559 = vector.load %arg3[%c360, %c0_234] : memref<616x128xf32, #tpu.memory_space<vmem>>, vector<1x32xf32>
    %560 = arith.mulf %558, %559 : vector<1x32xf32>
    %c368 = arith.constant 368 : index
    %c0_235 = arith.constant 0 : index
    %561 = vector.load %arg3[%c368, %c0_235] : memref<616x128xf32, #tpu.memory_space<vmem>>, vector<1x32xf32>
    %562 = vector.broadcast %540 : vector<1x32xf32> to vector<12x32xf32>
    %563 = arith.subf %486, %562 : vector<12x32xf32>
    %564 = vector.broadcast %560 : vector<1x32xf32> to vector<12x32xf32>
    %565 = arith.mulf %563, %564 : vector<12x32xf32>
    %566 = vector.broadcast %561 : vector<1x32xf32> to vector<12x32xf32>
    %567 = arith.addf %565, %566 : vector<12x32xf32>
    %cst_236 = arith.constant 0.000000e+00 : f32
    %568 = vector.broadcast %cst_236 : f32 to vector<12x32xf32>
    %569 = arith.cmpf ogt, %567, %568 : vector<12x32xf32>
    %cst_237 = arith.constant 0.000000e+00 : f32
    %570 = vector.broadcast %cst_237 : f32 to vector<12x32xf32>
    %571 = arith.minimumf %567, %570 : vector<12x32xf32>
    %572 = math.exp %571 : vector<12x32xf32>
    %cst_238 = arith.constant 1.000000e+00 : f32
    %573 = vector.broadcast %cst_238 : f32 to vector<12x32xf32>
    %574 = arith.subf %572, %573 : vector<12x32xf32>
    %575 = arith.select %569, %567, %574 : vector<12x32xi1>, vector<12x32xf32>
    %576 = tpu.iota {dimensions = array<i32: 0>} : vector<6x12xi32>
    %577 = tpu.iota {dimensions = array<i32: 1>} : vector<6x12xi32>
    %578 = tpu.iota {dimensions = array<i32: 0>} : vector<6x32xi32>
    %c2_i32 = arith.constant 2 : i32
    %579 = vector.broadcast %c2_i32 : i32 to vector<6x12xi32>
    %580 = arith.muli %579, %576 : vector<6x12xi32>
    %c-1_i32_239 = arith.constant -1 : i32
    %581 = vector.broadcast %c-1_i32_239 : i32 to vector<6x12xi32>
    %582 = arith.addi %580, %581 : vector<6x12xi32>
    %583 = arith.cmpi eq, %577, %582 : vector<6x12xi32>
    %cst_240 = arith.constant 1.000000e+00 : f32
    %cst_241 = arith.constant 0.000000e+00 : f32
    %584 = vector.broadcast %cst_240 : f32 to vector<6x12xf32>
    %585 = vector.broadcast %cst_241 : f32 to vector<6x12xf32>
    %586 = arith.select %583, %584, %585 : vector<6x12xi1>, vector<6x12xf32>
    %cst_242 = arith.constant dense<0.000000e+00> : vector<6x32xf32>
    %587 = tpu.matmul %586, %575, %cst_242 {dimension_numbers = #tpu.dot_dimension_numbers<[1], [0], [0], [1], [0, 0, 1, 1], [], []>} : vector<6x12xf32>, vector<12x32xf32>, vector<6x32xf32> -> vector<6x32xf32>
    %c2_i32_243 = arith.constant 2 : i32
    %588 = vector.broadcast %c2_i32_243 : i32 to vector<6x32xi32>
    %589 = arith.muli %588, %578 : vector<6x32xi32>
    %c-1_i32_244 = arith.constant -1 : i32
    %590 = vector.broadcast %c-1_i32_244 : i32 to vector<6x32xi32>
    %591 = arith.addi %589, %590 : vector<6x32xi32>
    %c0_i32_245 = arith.constant 0 : i32
    %592 = vector.broadcast %c0_i32_245 : i32 to vector<6x32xi32>
    %593 = arith.cmpi sge, %591, %592 : vector<6x32xi32>
    %c12_i32_246 = arith.constant 12 : i32
    %594 = vector.broadcast %c12_i32_246 : i32 to vector<6x32xi32>
    %595 = arith.cmpi slt, %591, %594 : vector<6x32xi32>
    %596 = arith.andi %593, %595 : vector<6x32xi1>
    %cst_247 = arith.constant -3.000000e+38 : f32
    %597 = vector.broadcast %cst_247 : f32 to vector<6x32xf32>
    %598 = arith.select %596, %587, %597 : vector<6x32xi1>, vector<6x32xf32>
    %c2_i32_248 = arith.constant 2 : i32
    %599 = vector.broadcast %c2_i32_248 : i32 to vector<6x12xi32>
    %600 = arith.muli %599, %576 : vector<6x12xi32>
    %c0_i32_249 = arith.constant 0 : i32
    %601 = vector.broadcast %c0_i32_249 : i32 to vector<6x12xi32>
    %602 = arith.addi %600, %601 : vector<6x12xi32>
    %603 = arith.cmpi eq, %577, %602 : vector<6x12xi32>
    %cst_250 = arith.constant 1.000000e+00 : f32
    %cst_251 = arith.constant 0.000000e+00 : f32
    %604 = vector.broadcast %cst_250 : f32 to vector<6x12xf32>
    %605 = vector.broadcast %cst_251 : f32 to vector<6x12xf32>
    %606 = arith.select %603, %604, %605 : vector<6x12xi1>, vector<6x12xf32>
    %cst_252 = arith.constant dense<0.000000e+00> : vector<6x32xf32>
    %607 = tpu.matmul %606, %575, %cst_252 {dimension_numbers = #tpu.dot_dimension_numbers<[1], [0], [0], [1], [0, 0, 1, 1], [], []>} : vector<6x12xf32>, vector<12x32xf32>, vector<6x32xf32> -> vector<6x32xf32>
    %c2_i32_253 = arith.constant 2 : i32
    %608 = vector.broadcast %c2_i32_253 : i32 to vector<6x32xi32>
    %609 = arith.muli %608, %578 : vector<6x32xi32>
    %c0_i32_254 = arith.constant 0 : i32
    %610 = vector.broadcast %c0_i32_254 : i32 to vector<6x32xi32>
    %611 = arith.addi %609, %610 : vector<6x32xi32>
    %c0_i32_255 = arith.constant 0 : i32
    %612 = vector.broadcast %c0_i32_255 : i32 to vector<6x32xi32>
    %613 = arith.cmpi sge, %611, %612 : vector<6x32xi32>
    %c12_i32_256 = arith.constant 12 : i32
    %614 = vector.broadcast %c12_i32_256 : i32 to vector<6x32xi32>
    %615 = arith.cmpi slt, %611, %614 : vector<6x32xi32>
    %616 = arith.andi %613, %615 : vector<6x32xi1>
    %cst_257 = arith.constant -3.000000e+38 : f32
    %617 = vector.broadcast %cst_257 : f32 to vector<6x32xf32>
    %618 = arith.select %616, %607, %617 : vector<6x32xi1>, vector<6x32xf32>
    %619 = arith.maximumf %598, %618 : vector<6x32xf32>
    %c2_i32_258 = arith.constant 2 : i32
    %620 = vector.broadcast %c2_i32_258 : i32 to vector<6x12xi32>
    %621 = arith.muli %620, %576 : vector<6x12xi32>
    %c1_i32_259 = arith.constant 1 : i32
    %622 = vector.broadcast %c1_i32_259 : i32 to vector<6x12xi32>
    %623 = arith.addi %621, %622 : vector<6x12xi32>
    %624 = arith.cmpi eq, %577, %623 : vector<6x12xi32>
    %cst_260 = arith.constant 1.000000e+00 : f32
    %cst_261 = arith.constant 0.000000e+00 : f32
    %625 = vector.broadcast %cst_260 : f32 to vector<6x12xf32>
    %626 = vector.broadcast %cst_261 : f32 to vector<6x12xf32>
    %627 = arith.select %624, %625, %626 : vector<6x12xi1>, vector<6x12xf32>
    %cst_262 = arith.constant dense<0.000000e+00> : vector<6x32xf32>
    %628 = tpu.matmul %627, %575, %cst_262 {dimension_numbers = #tpu.dot_dimension_numbers<[1], [0], [0], [1], [0, 0, 1, 1], [], []>} : vector<6x12xf32>, vector<12x32xf32>, vector<6x32xf32> -> vector<6x32xf32>
    %c2_i32_263 = arith.constant 2 : i32
    %629 = vector.broadcast %c2_i32_263 : i32 to vector<6x32xi32>
    %630 = arith.muli %629, %578 : vector<6x32xi32>
    %c1_i32_264 = arith.constant 1 : i32
    %631 = vector.broadcast %c1_i32_264 : i32 to vector<6x32xi32>
    %632 = arith.addi %630, %631 : vector<6x32xi32>
    %c0_i32_265 = arith.constant 0 : i32
    %633 = vector.broadcast %c0_i32_265 : i32 to vector<6x32xi32>
    %634 = arith.cmpi sge, %632, %633 : vector<6x32xi32>
    %c12_i32_266 = arith.constant 12 : i32
    %635 = vector.broadcast %c12_i32_266 : i32 to vector<6x32xi32>
    %636 = arith.cmpi slt, %632, %635 : vector<6x32xi32>
    %637 = arith.andi %634, %636 : vector<6x32xi1>
    %cst_267 = arith.constant -3.000000e+38 : f32
    %638 = vector.broadcast %cst_267 : f32 to vector<6x32xf32>
    %639 = arith.select %637, %628, %638 : vector<6x32xi1>, vector<6x32xf32>
    %640 = arith.maximumf %619, %639 : vector<6x32xf32>
    %641 = vector.broadcast %540 : vector<1x32xf32> to vector<12x32xf32>
    %642 = arith.subf %531, %641 : vector<12x32xf32>
    %643 = vector.broadcast %560 : vector<1x32xf32> to vector<12x32xf32>
    %644 = arith.mulf %642, %643 : vector<12x32xf32>
    %645 = vector.broadcast %561 : vector<1x32xf32> to vector<12x32xf32>
    %646 = arith.addf %644, %645 : vector<12x32xf32>
    %cst_268 = arith.constant 0.000000e+00 : f32
    %647 = vector.broadcast %cst_268 : f32 to vector<12x32xf32>
    %648 = arith.cmpf ogt, %646, %647 : vector<12x32xf32>
    %cst_269 = arith.constant 0.000000e+00 : f32
    %649 = vector.broadcast %cst_269 : f32 to vector<12x32xf32>
    %650 = arith.minimumf %646, %649 : vector<12x32xf32>
    %651 = math.exp %650 : vector<12x32xf32>
    %cst_270 = arith.constant 1.000000e+00 : f32
    %652 = vector.broadcast %cst_270 : f32 to vector<12x32xf32>
    %653 = arith.subf %651, %652 : vector<12x32xf32>
    %654 = arith.select %648, %646, %653 : vector<12x32xi1>, vector<12x32xf32>
    %655 = tpu.iota {dimensions = array<i32: 0>} : vector<6x12xi32>
    %656 = tpu.iota {dimensions = array<i32: 1>} : vector<6x12xi32>
    %657 = tpu.iota {dimensions = array<i32: 0>} : vector<6x32xi32>
    %c2_i32_271 = arith.constant 2 : i32
    %658 = vector.broadcast %c2_i32_271 : i32 to vector<6x12xi32>
    %659 = arith.muli %658, %655 : vector<6x12xi32>
    %c-1_i32_272 = arith.constant -1 : i32
    %660 = vector.broadcast %c-1_i32_272 : i32 to vector<6x12xi32>
    %661 = arith.addi %659, %660 : vector<6x12xi32>
    %662 = arith.cmpi eq, %656, %661 : vector<6x12xi32>
    %cst_273 = arith.constant 1.000000e+00 : f32
    %cst_274 = arith.constant 0.000000e+00 : f32
    %663 = vector.broadcast %cst_273 : f32 to vector<6x12xf32>
    %664 = vector.broadcast %cst_274 : f32 to vector<6x12xf32>
    %665 = arith.select %662, %663, %664 : vector<6x12xi1>, vector<6x12xf32>
    %cst_275 = arith.constant dense<0.000000e+00> : vector<6x32xf32>
    %666 = tpu.matmul %665, %654, %cst_275 {dimension_numbers = #tpu.dot_dimension_numbers<[1], [0], [0], [1], [0, 0, 1, 1], [], []>} : vector<6x12xf32>, vector<12x32xf32>, vector<6x32xf32> -> vector<6x32xf32>
    %c2_i32_276 = arith.constant 2 : i32
    %667 = vector.broadcast %c2_i32_276 : i32 to vector<6x32xi32>
    %668 = arith.muli %667, %657 : vector<6x32xi32>
    %c-1_i32_277 = arith.constant -1 : i32
    %669 = vector.broadcast %c-1_i32_277 : i32 to vector<6x32xi32>
    %670 = arith.addi %668, %669 : vector<6x32xi32>
    %c0_i32_278 = arith.constant 0 : i32
    %671 = vector.broadcast %c0_i32_278 : i32 to vector<6x32xi32>
    %672 = arith.cmpi sge, %670, %671 : vector<6x32xi32>
    %c12_i32_279 = arith.constant 12 : i32
    %673 = vector.broadcast %c12_i32_279 : i32 to vector<6x32xi32>
    %674 = arith.cmpi slt, %670, %673 : vector<6x32xi32>
    %675 = arith.andi %672, %674 : vector<6x32xi1>
    %cst_280 = arith.constant -3.000000e+38 : f32
    %676 = vector.broadcast %cst_280 : f32 to vector<6x32xf32>
    %677 = arith.select %675, %666, %676 : vector<6x32xi1>, vector<6x32xf32>
    %c2_i32_281 = arith.constant 2 : i32
    %678 = vector.broadcast %c2_i32_281 : i32 to vector<6x12xi32>
    %679 = arith.muli %678, %655 : vector<6x12xi32>
    %c0_i32_282 = arith.constant 0 : i32
    %680 = vector.broadcast %c0_i32_282 : i32 to vector<6x12xi32>
    %681 = arith.addi %679, %680 : vector<6x12xi32>
    %682 = arith.cmpi eq, %656, %681 : vector<6x12xi32>
    %cst_283 = arith.constant 1.000000e+00 : f32
    %cst_284 = arith.constant 0.000000e+00 : f32
    %683 = vector.broadcast %cst_283 : f32 to vector<6x12xf32>
    %684 = vector.broadcast %cst_284 : f32 to vector<6x12xf32>
    %685 = arith.select %682, %683, %684 : vector<6x12xi1>, vector<6x12xf32>
    %cst_285 = arith.constant dense<0.000000e+00> : vector<6x32xf32>
    %686 = tpu.matmul %685, %654, %cst_285 {dimension_numbers = #tpu.dot_dimension_numbers<[1], [0], [0], [1], [0, 0, 1, 1], [], []>} : vector<6x12xf32>, vector<12x32xf32>, vector<6x32xf32> -> vector<6x32xf32>
    %c2_i32_286 = arith.constant 2 : i32
    %687 = vector.broadcast %c2_i32_286 : i32 to vector<6x32xi32>
    %688 = arith.muli %687, %657 : vector<6x32xi32>
    %c0_i32_287 = arith.constant 0 : i32
    %689 = vector.broadcast %c0_i32_287 : i32 to vector<6x32xi32>
    %690 = arith.addi %688, %689 : vector<6x32xi32>
    %c0_i32_288 = arith.constant 0 : i32
    %691 = vector.broadcast %c0_i32_288 : i32 to vector<6x32xi32>
    %692 = arith.cmpi sge, %690, %691 : vector<6x32xi32>
    %c12_i32_289 = arith.constant 12 : i32
    %693 = vector.broadcast %c12_i32_289 : i32 to vector<6x32xi32>
    %694 = arith.cmpi slt, %690, %693 : vector<6x32xi32>
    %695 = arith.andi %692, %694 : vector<6x32xi1>
    %cst_290 = arith.constant -3.000000e+38 : f32
    %696 = vector.broadcast %cst_290 : f32 to vector<6x32xf32>
    %697 = arith.select %695, %686, %696 : vector<6x32xi1>, vector<6x32xf32>
    %698 = arith.maximumf %677, %697 : vector<6x32xf32>
    %c2_i32_291 = arith.constant 2 : i32
    %699 = vector.broadcast %c2_i32_291 : i32 to vector<6x12xi32>
    %700 = arith.muli %699, %655 : vector<6x12xi32>
    %c1_i32_292 = arith.constant 1 : i32
    %701 = vector.broadcast %c1_i32_292 : i32 to vector<6x12xi32>
    %702 = arith.addi %700, %701 : vector<6x12xi32>
    %703 = arith.cmpi eq, %656, %702 : vector<6x12xi32>
    %cst_293 = arith.constant 1.000000e+00 : f32
    %cst_294 = arith.constant 0.000000e+00 : f32
    %704 = vector.broadcast %cst_293 : f32 to vector<6x12xf32>
    %705 = vector.broadcast %cst_294 : f32 to vector<6x12xf32>
    %706 = arith.select %703, %704, %705 : vector<6x12xi1>, vector<6x12xf32>
    %cst_295 = arith.constant dense<0.000000e+00> : vector<6x32xf32>
    %707 = tpu.matmul %706, %654, %cst_295 {dimension_numbers = #tpu.dot_dimension_numbers<[1], [0], [0], [1], [0, 0, 1, 1], [], []>} : vector<6x12xf32>, vector<12x32xf32>, vector<6x32xf32> -> vector<6x32xf32>
    %c2_i32_296 = arith.constant 2 : i32
    %708 = vector.broadcast %c2_i32_296 : i32 to vector<6x32xi32>
    %709 = arith.muli %708, %657 : vector<6x32xi32>
    %c1_i32_297 = arith.constant 1 : i32
    %710 = vector.broadcast %c1_i32_297 : i32 to vector<6x32xi32>
    %711 = arith.addi %709, %710 : vector<6x32xi32>
    %c0_i32_298 = arith.constant 0 : i32
    %712 = vector.broadcast %c0_i32_298 : i32 to vector<6x32xi32>
    %713 = arith.cmpi sge, %711, %712 : vector<6x32xi32>
    %c12_i32_299 = arith.constant 12 : i32
    %714 = vector.broadcast %c12_i32_299 : i32 to vector<6x32xi32>
    %715 = arith.cmpi slt, %711, %714 : vector<6x32xi32>
    %716 = arith.andi %713, %715 : vector<6x32xi1>
    %cst_300 = arith.constant -3.000000e+38 : f32
    %717 = vector.broadcast %cst_300 : f32 to vector<6x32xf32>
    %718 = arith.select %716, %707, %717 : vector<6x32xi1>, vector<6x32xf32>
    %719 = arith.maximumf %698, %718 : vector<6x32xf32>
    %c376 = arith.constant 376 : index
    %c0_301 = arith.constant 0 : index
    %720 = vector.load %arg3[%c376, %c0_301] : memref<616x128xf32, #tpu.memory_space<vmem>>, vector<32x96xf32>
    %c408 = arith.constant 408 : index
    %c0_302 = arith.constant 0 : index
    %721 = vector.load %arg3[%c408, %c0_302] : memref<616x128xf32, #tpu.memory_space<vmem>>, vector<1x96xf32>
    %c416 = arith.constant 416 : index
    %c0_303 = arith.constant 0 : index
    %722 = vector.load %arg3[%c416, %c0_303] : memref<616x128xf32, #tpu.memory_space<vmem>>, vector<32x32xf32>
    %c448 = arith.constant 448 : index
    %c0_304 = arith.constant 0 : index
    %723 = vector.load %arg3[%c448, %c0_304] : memref<616x128xf32, #tpu.memory_space<vmem>>, vector<1x32xf32>
    %cst_305 = arith.constant dense<0.000000e+00> : vector<6x96xf32>
    %724 = tpu.matmul %640, %720, %cst_305 {dimension_numbers = #tpu.dot_dimension_numbers<[1], [0], [0], [1], [0, 0, 1, 1], [], []>} : vector<6x32xf32>, vector<32x96xf32>, vector<6x96xf32> -> vector<6x96xf32>
    %725 = vector.broadcast %721 : vector<1x96xf32> to vector<6x96xf32>
    %726 = arith.addf %724, %725 : vector<6x96xf32>
    %727 = vector.extract_strided_slice %726 {offsets = [0, 0], sizes = [6, 32], strides = [1, 1]} : vector<6x96xf32> to vector<6x32xf32>
    %728 = vector.extract_strided_slice %726 {offsets = [0, 32], sizes = [6, 32], strides = [1, 1]} : vector<6x96xf32> to vector<6x32xf32>
    %729 = vector.extract_strided_slice %726 {offsets = [0, 64], sizes = [6, 32], strides = [1, 1]} : vector<6x96xf32> to vector<6x32xf32>
    %730 = vector.extract_strided_slice %727 {offsets = [0, 0], sizes = [6, 8], strides = [1, 1]} : vector<6x32xf32> to vector<6x8xf32>
    %731 = vector.extract_strided_slice %728 {offsets = [0, 0], sizes = [6, 8], strides = [1, 1]} : vector<6x32xf32> to vector<6x8xf32>
    %732 = vector.extract_strided_slice %729 {offsets = [0, 0], sizes = [6, 8], strides = [1, 1]} : vector<6x32xf32> to vector<6x8xf32>
    %cst_306 = arith.constant dense<0.000000e+00> : vector<6x6xf32>
    %733 = tpu.matmul %730, %731, %cst_306 {dimension_numbers = #tpu.dot_dimension_numbers<[1], [1], [0], [0], [0, 0, 1, 0], [], []>} : vector<6x8xf32>, vector<6x8xf32>, vector<6x6xf32> -> vector<6x6xf32>
    %cst_307 = arith.constant dense<0xFF800000> : vector<6xf32>
    %734 = vector.multi_reduction <maximumf>, %733, %cst_307 [1] : vector<6x6xf32> to vector<6xf32>
    %735 = vector.shape_cast %734 : vector<6xf32> to vector<6x1xf32>
    %736 = vector.broadcast %735 : vector<6x1xf32> to vector<6x6xf32>
    %737 = arith.subf %733, %736 : vector<6x6xf32>
    %738 = math.exp %737 : vector<6x6xf32>
    %cst_308 = arith.constant dense<0.000000e+00> : vector<6xf32>
    %739 = vector.multi_reduction <add>, %738, %cst_308 [1] : vector<6x6xf32> to vector<6xf32>
    %740 = vector.shape_cast %739 : vector<6xf32> to vector<6x1xf32>
    %741 = vector.broadcast %740 : vector<6x1xf32> to vector<6x6xf32>
    %742 = arith.divf %738, %741 : vector<6x6xf32>
    %cst_309 = arith.constant dense<0.000000e+00> : vector<6x8xf32>
    %743 = tpu.matmul %742, %732, %cst_309 {dimension_numbers = #tpu.dot_dimension_numbers<[1], [0], [0], [1], [0, 0, 1, 1], [], []>} : vector<6x6xf32>, vector<6x8xf32>, vector<6x8xf32> -> vector<6x8xf32>
    %744 = vector.extract_strided_slice %727 {offsets = [0, 8], sizes = [6, 8], strides = [1, 1]} : vector<6x32xf32> to vector<6x8xf32>
    %745 = vector.extract_strided_slice %728 {offsets = [0, 8], sizes = [6, 8], strides = [1, 1]} : vector<6x32xf32> to vector<6x8xf32>
    %746 = vector.extract_strided_slice %729 {offsets = [0, 8], sizes = [6, 8], strides = [1, 1]} : vector<6x32xf32> to vector<6x8xf32>
    %cst_310 = arith.constant dense<0.000000e+00> : vector<6x6xf32>
    %747 = tpu.matmul %744, %745, %cst_310 {dimension_numbers = #tpu.dot_dimension_numbers<[1], [1], [0], [0], [0, 0, 1, 0], [], []>} : vector<6x8xf32>, vector<6x8xf32>, vector<6x6xf32> -> vector<6x6xf32>
    %cst_311 = arith.constant dense<0xFF800000> : vector<6xf32>
    %748 = vector.multi_reduction <maximumf>, %747, %cst_311 [1] : vector<6x6xf32> to vector<6xf32>
    %749 = vector.shape_cast %748 : vector<6xf32> to vector<6x1xf32>
    %750 = vector.broadcast %749 : vector<6x1xf32> to vector<6x6xf32>
    %751 = arith.subf %747, %750 : vector<6x6xf32>
    %752 = math.exp %751 : vector<6x6xf32>
    %cst_312 = arith.constant dense<0.000000e+00> : vector<6xf32>
    %753 = vector.multi_reduction <add>, %752, %cst_312 [1] : vector<6x6xf32> to vector<6xf32>
    %754 = vector.shape_cast %753 : vector<6xf32> to vector<6x1xf32>
    %755 = vector.broadcast %754 : vector<6x1xf32> to vector<6x6xf32>
    %756 = arith.divf %752, %755 : vector<6x6xf32>
    %cst_313 = arith.constant dense<0.000000e+00> : vector<6x8xf32>
    %757 = tpu.matmul %756, %746, %cst_313 {dimension_numbers = #tpu.dot_dimension_numbers<[1], [0], [0], [1], [0, 0, 1, 1], [], []>} : vector<6x6xf32>, vector<6x8xf32>, vector<6x8xf32> -> vector<6x8xf32>
    %758 = vector.extract_strided_slice %727 {offsets = [0, 16], sizes = [6, 8], strides = [1, 1]} : vector<6x32xf32> to vector<6x8xf32>
    %759 = vector.extract_strided_slice %728 {offsets = [0, 16], sizes = [6, 8], strides = [1, 1]} : vector<6x32xf32> to vector<6x8xf32>
    %760 = vector.extract_strided_slice %729 {offsets = [0, 16], sizes = [6, 8], strides = [1, 1]} : vector<6x32xf32> to vector<6x8xf32>
    %cst_314 = arith.constant dense<0.000000e+00> : vector<6x6xf32>
    %761 = tpu.matmul %758, %759, %cst_314 {dimension_numbers = #tpu.dot_dimension_numbers<[1], [1], [0], [0], [0, 0, 1, 0], [], []>} : vector<6x8xf32>, vector<6x8xf32>, vector<6x6xf32> -> vector<6x6xf32>
    %cst_315 = arith.constant dense<0xFF800000> : vector<6xf32>
    %762 = vector.multi_reduction <maximumf>, %761, %cst_315 [1] : vector<6x6xf32> to vector<6xf32>
    %763 = vector.shape_cast %762 : vector<6xf32> to vector<6x1xf32>
    %764 = vector.broadcast %763 : vector<6x1xf32> to vector<6x6xf32>
    %765 = arith.subf %761, %764 : vector<6x6xf32>
    %766 = math.exp %765 : vector<6x6xf32>
    %cst_316 = arith.constant dense<0.000000e+00> : vector<6xf32>
    %767 = vector.multi_reduction <add>, %766, %cst_316 [1] : vector<6x6xf32> to vector<6xf32>
    %768 = vector.shape_cast %767 : vector<6xf32> to vector<6x1xf32>
    %769 = vector.broadcast %768 : vector<6x1xf32> to vector<6x6xf32>
    %770 = arith.divf %766, %769 : vector<6x6xf32>
    %cst_317 = arith.constant dense<0.000000e+00> : vector<6x8xf32>
    %771 = tpu.matmul %770, %760, %cst_317 {dimension_numbers = #tpu.dot_dimension_numbers<[1], [0], [0], [1], [0, 0, 1, 1], [], []>} : vector<6x6xf32>, vector<6x8xf32>, vector<6x8xf32> -> vector<6x8xf32>
    %772 = vector.extract_strided_slice %727 {offsets = [0, 24], sizes = [6, 8], strides = [1, 1]} : vector<6x32xf32> to vector<6x8xf32>
    %773 = vector.extract_strided_slice %728 {offsets = [0, 24], sizes = [6, 8], strides = [1, 1]} : vector<6x32xf32> to vector<6x8xf32>
    %774 = vector.extract_strided_slice %729 {offsets = [0, 24], sizes = [6, 8], strides = [1, 1]} : vector<6x32xf32> to vector<6x8xf32>
    %cst_318 = arith.constant dense<0.000000e+00> : vector<6x6xf32>
    %775 = tpu.matmul %772, %773, %cst_318 {dimension_numbers = #tpu.dot_dimension_numbers<[1], [1], [0], [0], [0, 0, 1, 0], [], []>} : vector<6x8xf32>, vector<6x8xf32>, vector<6x6xf32> -> vector<6x6xf32>
    %cst_319 = arith.constant dense<0xFF800000> : vector<6xf32>
    %776 = vector.multi_reduction <maximumf>, %775, %cst_319 [1] : vector<6x6xf32> to vector<6xf32>
    %777 = vector.shape_cast %776 : vector<6xf32> to vector<6x1xf32>
    %778 = vector.broadcast %777 : vector<6x1xf32> to vector<6x6xf32>
    %779 = arith.subf %775, %778 : vector<6x6xf32>
    %780 = math.exp %779 : vector<6x6xf32>
    %cst_320 = arith.constant dense<0.000000e+00> : vector<6xf32>
    %781 = vector.multi_reduction <add>, %780, %cst_320 [1] : vector<6x6xf32> to vector<6xf32>
    %782 = vector.shape_cast %781 : vector<6xf32> to vector<6x1xf32>
    %783 = vector.broadcast %782 : vector<6x1xf32> to vector<6x6xf32>
    %784 = arith.divf %780, %783 : vector<6x6xf32>
    %cst_321 = arith.constant dense<0.000000e+00> : vector<6x8xf32>
    %785 = tpu.matmul %784, %774, %cst_321 {dimension_numbers = #tpu.dot_dimension_numbers<[1], [0], [0], [1], [0, 0, 1, 1], [], []>} : vector<6x6xf32>, vector<6x8xf32>, vector<6x8xf32> -> vector<6x8xf32>
    %786 = tpu.concatenate %743, %757, %771, %785 in 1 : vector<6x8xf32>, vector<6x8xf32>, vector<6x8xf32>, vector<6x8xf32> -> vector<6x32xf32>
    %cst_322 = arith.constant dense<0.000000e+00> : vector<6x32xf32>
    %787 = tpu.matmul %786, %722, %cst_322 {dimension_numbers = #tpu.dot_dimension_numbers<[1], [0], [0], [1], [0, 0, 1, 1], [], []>} : vector<6x32xf32>, vector<32x32xf32>, vector<6x32xf32> -> vector<6x32xf32>
    %788 = vector.broadcast %723 : vector<1x32xf32> to vector<6x32xf32>
    %789 = arith.addf %787, %788 : vector<6x32xf32>
    %790 = arith.addf %640, %789 : vector<6x32xf32>
    %c456 = arith.constant 456 : index
    %c0_323 = arith.constant 0 : index
    %791 = vector.load %arg3[%c456, %c0_323] : memref<616x128xf32, #tpu.memory_space<vmem>>, vector<1x32xf32>
    %c464 = arith.constant 464 : index
    %c0_324 = arith.constant 0 : index
    %792 = vector.load %arg3[%c464, %c0_324] : memref<616x128xf32, #tpu.memory_space<vmem>>, vector<1x32xf32>
    %cst_325 = arith.constant dense<0.000000e+00> : vector<6xf32>
    %793 = vector.multi_reduction <add>, %790, %cst_325 [1] : vector<6x32xf32> to vector<6xf32>
    %794 = vector.shape_cast %793 : vector<6xf32> to vector<6x1xf32>
    %cst_326 = arith.constant 3.200000e+01 : f32
    %795 = vector.broadcast %cst_326 : f32 to vector<6x1xf32>
    %796 = arith.divf %794, %795 : vector<6x1xf32>
    %797 = vector.broadcast %796 : vector<6x1xf32> to vector<6x32xf32>
    %798 = arith.subf %790, %797 : vector<6x32xf32>
    %799 = arith.mulf %798, %798 : vector<6x32xf32>
    %cst_327 = arith.constant dense<0.000000e+00> : vector<6xf32>
    %800 = vector.multi_reduction <add>, %799, %cst_327 [1] : vector<6x32xf32> to vector<6xf32>
    %801 = vector.shape_cast %800 : vector<6xf32> to vector<6x1xf32>
    %cst_328 = arith.constant 3.200000e+01 : f32
    %802 = vector.broadcast %cst_328 : f32 to vector<6x1xf32>
    %803 = arith.divf %801, %802 : vector<6x1xf32>
    %804 = vector.broadcast %796 : vector<6x1xf32> to vector<6x32xf32>
    %805 = arith.subf %790, %804 : vector<6x32xf32>
    %cst_329 = arith.constant 9.99999974E-6 : f32
    %806 = vector.broadcast %cst_329 : f32 to vector<6x1xf32>
    %807 = arith.addf %803, %806 : vector<6x1xf32>
    %808 = math.rsqrt %807 : vector<6x1xf32>
    %809 = vector.broadcast %808 : vector<6x1xf32> to vector<6x32xf32>
    %810 = arith.mulf %805, %809 : vector<6x32xf32>
    %811 = vector.broadcast %791 : vector<1x32xf32> to vector<6x32xf32>
    %812 = arith.mulf %810, %811 : vector<6x32xf32>
    %813 = vector.broadcast %792 : vector<1x32xf32> to vector<6x32xf32>
    %814 = arith.addf %812, %813 : vector<6x32xf32>
    %c472 = arith.constant 472 : index
    %c0_330 = arith.constant 0 : index
    %815 = vector.load %arg3[%c472, %c0_330] : memref<616x128xf32, #tpu.memory_space<vmem>>, vector<32x64xf32>
    %cst_331 = arith.constant dense<0.000000e+00> : vector<6x64xf32>
    %816 = tpu.matmul %814, %815, %cst_331 {dimension_numbers = #tpu.dot_dimension_numbers<[1], [0], [0], [1], [0, 0, 1, 1], [], []>} : vector<6x32xf32>, vector<32x64xf32>, vector<6x64xf32> -> vector<6x64xf32>
    %c504 = arith.constant 504 : index
    %c0_332 = arith.constant 0 : index
    %817 = vector.load %arg3[%c504, %c0_332] : memref<616x128xf32, #tpu.memory_space<vmem>>, vector<1x64xf32>
    %818 = vector.broadcast %817 : vector<1x64xf32> to vector<6x64xf32>
    %819 = arith.addf %816, %818 : vector<6x64xf32>
    %cst_333 = arith.constant 5.000000e-01 : f32
    %820 = vector.broadcast %cst_333 : f32 to vector<6x64xf32>
    %821 = arith.mulf %820, %819 : vector<6x64xf32>
    %cst_334 = arith.constant 0.707106769 : f32
    %822 = vector.broadcast %cst_334 : f32 to vector<6x64xf32>
    %823 = arith.mulf %819, %822 : vector<6x64xf32>
    %cst_335 = arith.constant 0.000000e+00 : f32
    %824 = vector.broadcast %cst_335 : f32 to vector<6x64xf32>
    %825 = arith.cmpf oge, %823, %824 : vector<6x64xf32>
    %cst_336 = arith.constant 1.000000e+00 : f32
    %cst_337 = arith.constant -1.000000e+00 : f32
    %826 = vector.broadcast %cst_336 : f32 to vector<6x64xf32>
    %827 = vector.broadcast %cst_337 : f32 to vector<6x64xf32>
    %828 = arith.select %825, %826, %827 : vector<6x64xi1>, vector<6x64xf32>
    %829 = math.absf %823 : vector<6x64xf32>
    %cst_338 = arith.constant 0.327591091 : f32
    %830 = vector.broadcast %cst_338 : f32 to vector<6x64xf32>
    %831 = arith.mulf %830, %829 : vector<6x64xf32>
    %cst_339 = arith.constant 1.000000e+00 : f32
    %832 = vector.broadcast %cst_339 : f32 to vector<6x64xf32>
    %833 = arith.addf %832, %831 : vector<6x64xf32>
    %cst_340 = arith.constant 1.000000e+00 : f32
    %834 = vector.broadcast %cst_340 : f32 to vector<6x64xf32>
    %835 = arith.divf %834, %833 : vector<6x64xf32>
    %cst_341 = arith.constant 1.06140542 : f32
    %836 = vector.broadcast %cst_341 : f32 to vector<6x64xf32>
    %837 = arith.mulf %836, %835 : vector<6x64xf32>
    %cst_342 = arith.constant -1.45315206 : f32
    %838 = vector.broadcast %cst_342 : f32 to vector<6x64xf32>
    %839 = arith.addf %837, %838 : vector<6x64xf32>
    %840 = arith.mulf %839, %835 : vector<6x64xf32>
    %cst_343 = arith.constant 1.42141378 : f32
    %841 = vector.broadcast %cst_343 : f32 to vector<6x64xf32>
    %842 = arith.addf %840, %841 : vector<6x64xf32>
    %843 = arith.mulf %842, %835 : vector<6x64xf32>
    %cst_344 = arith.constant -0.284496725 : f32
    %844 = vector.broadcast %cst_344 : f32 to vector<6x64xf32>
    %845 = arith.addf %843, %844 : vector<6x64xf32>
    %846 = arith.mulf %845, %835 : vector<6x64xf32>
    %cst_345 = arith.constant 0.254829586 : f32
    %847 = vector.broadcast %cst_345 : f32 to vector<6x64xf32>
    %848 = arith.addf %846, %847 : vector<6x64xf32>
    %849 = arith.mulf %848, %835 : vector<6x64xf32>
    %cst_346 = arith.constant 0.000000e+00 : f32
    %850 = vector.broadcast %cst_346 : f32 to vector<6x64xf32>
    %851 = arith.subf %850, %829 : vector<6x64xf32>
    %852 = arith.mulf %851, %829 : vector<6x64xf32>
    %853 = math.exp %852 : vector<6x64xf32>
    %854 = arith.mulf %849, %853 : vector<6x64xf32>
    %cst_347 = arith.constant 1.000000e+00 : f32
    %855 = vector.broadcast %cst_347 : f32 to vector<6x64xf32>
    %856 = arith.subf %855, %854 : vector<6x64xf32>
    %857 = arith.mulf %828, %856 : vector<6x64xf32>
    %cst_348 = arith.constant 1.000000e+00 : f32
    %858 = vector.broadcast %cst_348 : f32 to vector<6x64xf32>
    %859 = arith.addf %858, %857 : vector<6x64xf32>
    %860 = arith.mulf %821, %859 : vector<6x64xf32>
    %c512 = arith.constant 512 : index
    %c0_349 = arith.constant 0 : index
    %861 = vector.load %arg3[%c512, %c0_349] : memref<616x128xf32, #tpu.memory_space<vmem>>, vector<64x32xf32>
    %cst_350 = arith.constant dense<0.000000e+00> : vector<6x32xf32>
    %862 = tpu.matmul %860, %861, %cst_350 {dimension_numbers = #tpu.dot_dimension_numbers<[1], [0], [0], [1], [0, 0, 1, 1], [], []>} : vector<6x64xf32>, vector<64x32xf32>, vector<6x32xf32> -> vector<6x32xf32>
    %c576 = arith.constant 576 : index
    %c0_351 = arith.constant 0 : index
    %863 = vector.load %arg3[%c576, %c0_351] : memref<616x128xf32, #tpu.memory_space<vmem>>, vector<1x32xf32>
    %864 = vector.broadcast %863 : vector<1x32xf32> to vector<6x32xf32>
    %865 = arith.addf %862, %864 : vector<6x32xf32>
    %866 = arith.addf %814, %865 : vector<6x32xf32>
    %c584 = arith.constant 584 : index
    %c0_352 = arith.constant 0 : index
    %867 = vector.load %arg3[%c584, %c0_352] : memref<616x128xf32, #tpu.memory_space<vmem>>, vector<1x32xf32>
    %c592 = arith.constant 592 : index
    %c0_353 = arith.constant 0 : index
    %868 = vector.load %arg3[%c592, %c0_353] : memref<616x128xf32, #tpu.memory_space<vmem>>, vector<1x32xf32>
    %cst_354 = arith.constant dense<0.000000e+00> : vector<6xf32>
    %869 = vector.multi_reduction <add>, %866, %cst_354 [1] : vector<6x32xf32> to vector<6xf32>
    %870 = vector.shape_cast %869 : vector<6xf32> to vector<6x1xf32>
    %cst_355 = arith.constant 3.200000e+01 : f32
    %871 = vector.broadcast %cst_355 : f32 to vector<6x1xf32>
    %872 = arith.divf %870, %871 : vector<6x1xf32>
    %873 = vector.broadcast %872 : vector<6x1xf32> to vector<6x32xf32>
    %874 = arith.subf %866, %873 : vector<6x32xf32>
    %875 = arith.mulf %874, %874 : vector<6x32xf32>
    %cst_356 = arith.constant dense<0.000000e+00> : vector<6xf32>
    %876 = vector.multi_reduction <add>, %875, %cst_356 [1] : vector<6x32xf32> to vector<6xf32>
    %877 = vector.shape_cast %876 : vector<6xf32> to vector<6x1xf32>
    %cst_357 = arith.constant 3.200000e+01 : f32
    %878 = vector.broadcast %cst_357 : f32 to vector<6x1xf32>
    %879 = arith.divf %877, %878 : vector<6x1xf32>
    %880 = vector.broadcast %872 : vector<6x1xf32> to vector<6x32xf32>
    %881 = arith.subf %866, %880 : vector<6x32xf32>
    %cst_358 = arith.constant 9.99999974E-6 : f32
    %882 = vector.broadcast %cst_358 : f32 to vector<6x1xf32>
    %883 = arith.addf %879, %882 : vector<6x1xf32>
    %884 = math.rsqrt %883 : vector<6x1xf32>
    %885 = vector.broadcast %884 : vector<6x1xf32> to vector<6x32xf32>
    %886 = arith.mulf %881, %885 : vector<6x32xf32>
    %887 = vector.broadcast %867 : vector<1x32xf32> to vector<6x32xf32>
    %888 = arith.mulf %886, %887 : vector<6x32xf32>
    %889 = vector.broadcast %868 : vector<1x32xf32> to vector<6x32xf32>
    %890 = arith.addf %888, %889 : vector<6x32xf32>
    %c376_359 = arith.constant 376 : index
    %c0_360 = arith.constant 0 : index
    %891 = vector.load %arg3[%c376_359, %c0_360] : memref<616x128xf32, #tpu.memory_space<vmem>>, vector<32x96xf32>
    %c408_361 = arith.constant 408 : index
    %c0_362 = arith.constant 0 : index
    %892 = vector.load %arg3[%c408_361, %c0_362] : memref<616x128xf32, #tpu.memory_space<vmem>>, vector<1x96xf32>
    %c416_363 = arith.constant 416 : index
    %c0_364 = arith.constant 0 : index
    %893 = vector.load %arg3[%c416_363, %c0_364] : memref<616x128xf32, #tpu.memory_space<vmem>>, vector<32x32xf32>
    %c448_365 = arith.constant 448 : index
    %c0_366 = arith.constant 0 : index
    %894 = vector.load %arg3[%c448_365, %c0_366] : memref<616x128xf32, #tpu.memory_space<vmem>>, vector<1x32xf32>
    %cst_367 = arith.constant dense<0.000000e+00> : vector<6x96xf32>
    %895 = tpu.matmul %719, %891, %cst_367 {dimension_numbers = #tpu.dot_dimension_numbers<[1], [0], [0], [1], [0, 0, 1, 1], [], []>} : vector<6x32xf32>, vector<32x96xf32>, vector<6x96xf32> -> vector<6x96xf32>
    %896 = vector.broadcast %892 : vector<1x96xf32> to vector<6x96xf32>
    %897 = arith.addf %895, %896 : vector<6x96xf32>
    %898 = vector.extract_strided_slice %897 {offsets = [0, 0], sizes = [6, 32], strides = [1, 1]} : vector<6x96xf32> to vector<6x32xf32>
    %899 = vector.extract_strided_slice %897 {offsets = [0, 32], sizes = [6, 32], strides = [1, 1]} : vector<6x96xf32> to vector<6x32xf32>
    %900 = vector.extract_strided_slice %897 {offsets = [0, 64], sizes = [6, 32], strides = [1, 1]} : vector<6x96xf32> to vector<6x32xf32>
    %901 = vector.extract_strided_slice %898 {offsets = [0, 0], sizes = [6, 8], strides = [1, 1]} : vector<6x32xf32> to vector<6x8xf32>
    %902 = vector.extract_strided_slice %899 {offsets = [0, 0], sizes = [6, 8], strides = [1, 1]} : vector<6x32xf32> to vector<6x8xf32>
    %903 = vector.extract_strided_slice %900 {offsets = [0, 0], sizes = [6, 8], strides = [1, 1]} : vector<6x32xf32> to vector<6x8xf32>
    %cst_368 = arith.constant dense<0.000000e+00> : vector<6x6xf32>
    %904 = tpu.matmul %901, %902, %cst_368 {dimension_numbers = #tpu.dot_dimension_numbers<[1], [1], [0], [0], [0, 0, 1, 0], [], []>} : vector<6x8xf32>, vector<6x8xf32>, vector<6x6xf32> -> vector<6x6xf32>
    %cst_369 = arith.constant dense<0xFF800000> : vector<6xf32>
    %905 = vector.multi_reduction <maximumf>, %904, %cst_369 [1] : vector<6x6xf32> to vector<6xf32>
    %906 = vector.shape_cast %905 : vector<6xf32> to vector<6x1xf32>
    %907 = vector.broadcast %906 : vector<6x1xf32> to vector<6x6xf32>
    %908 = arith.subf %904, %907 : vector<6x6xf32>
    %909 = math.exp %908 : vector<6x6xf32>
    %cst_370 = arith.constant dense<0.000000e+00> : vector<6xf32>
    %910 = vector.multi_reduction <add>, %909, %cst_370 [1] : vector<6x6xf32> to vector<6xf32>
    %911 = vector.shape_cast %910 : vector<6xf32> to vector<6x1xf32>
    %912 = vector.broadcast %911 : vector<6x1xf32> to vector<6x6xf32>
    %913 = arith.divf %909, %912 : vector<6x6xf32>
    %cst_371 = arith.constant dense<0.000000e+00> : vector<6x8xf32>
    %914 = tpu.matmul %913, %903, %cst_371 {dimension_numbers = #tpu.dot_dimension_numbers<[1], [0], [0], [1], [0, 0, 1, 1], [], []>} : vector<6x6xf32>, vector<6x8xf32>, vector<6x8xf32> -> vector<6x8xf32>
    %915 = vector.extract_strided_slice %898 {offsets = [0, 8], sizes = [6, 8], strides = [1, 1]} : vector<6x32xf32> to vector<6x8xf32>
    %916 = vector.extract_strided_slice %899 {offsets = [0, 8], sizes = [6, 8], strides = [1, 1]} : vector<6x32xf32> to vector<6x8xf32>
    %917 = vector.extract_strided_slice %900 {offsets = [0, 8], sizes = [6, 8], strides = [1, 1]} : vector<6x32xf32> to vector<6x8xf32>
    %cst_372 = arith.constant dense<0.000000e+00> : vector<6x6xf32>
    %918 = tpu.matmul %915, %916, %cst_372 {dimension_numbers = #tpu.dot_dimension_numbers<[1], [1], [0], [0], [0, 0, 1, 0], [], []>} : vector<6x8xf32>, vector<6x8xf32>, vector<6x6xf32> -> vector<6x6xf32>
    %cst_373 = arith.constant dense<0xFF800000> : vector<6xf32>
    %919 = vector.multi_reduction <maximumf>, %918, %cst_373 [1] : vector<6x6xf32> to vector<6xf32>
    %920 = vector.shape_cast %919 : vector<6xf32> to vector<6x1xf32>
    %921 = vector.broadcast %920 : vector<6x1xf32> to vector<6x6xf32>
    %922 = arith.subf %918, %921 : vector<6x6xf32>
    %923 = math.exp %922 : vector<6x6xf32>
    %cst_374 = arith.constant dense<0.000000e+00> : vector<6xf32>
    %924 = vector.multi_reduction <add>, %923, %cst_374 [1] : vector<6x6xf32> to vector<6xf32>
    %925 = vector.shape_cast %924 : vector<6xf32> to vector<6x1xf32>
    %926 = vector.broadcast %925 : vector<6x1xf32> to vector<6x6xf32>
    %927 = arith.divf %923, %926 : vector<6x6xf32>
    %cst_375 = arith.constant dense<0.000000e+00> : vector<6x8xf32>
    %928 = tpu.matmul %927, %917, %cst_375 {dimension_numbers = #tpu.dot_dimension_numbers<[1], [0], [0], [1], [0, 0, 1, 1], [], []>} : vector<6x6xf32>, vector<6x8xf32>, vector<6x8xf32> -> vector<6x8xf32>
    %929 = vector.extract_strided_slice %898 {offsets = [0, 16], sizes = [6, 8], strides = [1, 1]} : vector<6x32xf32> to vector<6x8xf32>
    %930 = vector.extract_strided_slice %899 {offsets = [0, 16], sizes = [6, 8], strides = [1, 1]} : vector<6x32xf32> to vector<6x8xf32>
    %931 = vector.extract_strided_slice %900 {offsets = [0, 16], sizes = [6, 8], strides = [1, 1]} : vector<6x32xf32> to vector<6x8xf32>
    %cst_376 = arith.constant dense<0.000000e+00> : vector<6x6xf32>
    %932 = tpu.matmul %929, %930, %cst_376 {dimension_numbers = #tpu.dot_dimension_numbers<[1], [1], [0], [0], [0, 0, 1, 0], [], []>} : vector<6x8xf32>, vector<6x8xf32>, vector<6x6xf32> -> vector<6x6xf32>
    %cst_377 = arith.constant dense<0xFF800000> : vector<6xf32>
    %933 = vector.multi_reduction <maximumf>, %932, %cst_377 [1] : vector<6x6xf32> to vector<6xf32>
    %934 = vector.shape_cast %933 : vector<6xf32> to vector<6x1xf32>
    %935 = vector.broadcast %934 : vector<6x1xf32> to vector<6x6xf32>
    %936 = arith.subf %932, %935 : vector<6x6xf32>
    %937 = math.exp %936 : vector<6x6xf32>
    %cst_378 = arith.constant dense<0.000000e+00> : vector<6xf32>
    %938 = vector.multi_reduction <add>, %937, %cst_378 [1] : vector<6x6xf32> to vector<6xf32>
    %939 = vector.shape_cast %938 : vector<6xf32> to vector<6x1xf32>
    %940 = vector.broadcast %939 : vector<6x1xf32> to vector<6x6xf32>
    %941 = arith.divf %937, %940 : vector<6x6xf32>
    %cst_379 = arith.constant dense<0.000000e+00> : vector<6x8xf32>
    %942 = tpu.matmul %941, %931, %cst_379 {dimension_numbers = #tpu.dot_dimension_numbers<[1], [0], [0], [1], [0, 0, 1, 1], [], []>} : vector<6x6xf32>, vector<6x8xf32>, vector<6x8xf32> -> vector<6x8xf32>
    %943 = vector.extract_strided_slice %898 {offsets = [0, 24], sizes = [6, 8], strides = [1, 1]} : vector<6x32xf32> to vector<6x8xf32>
    %944 = vector.extract_strided_slice %899 {offsets = [0, 24], sizes = [6, 8], strides = [1, 1]} : vector<6x32xf32> to vector<6x8xf32>
    %945 = vector.extract_strided_slice %900 {offsets = [0, 24], sizes = [6, 8], strides = [1, 1]} : vector<6x32xf32> to vector<6x8xf32>
    %cst_380 = arith.constant dense<0.000000e+00> : vector<6x6xf32>
    %946 = tpu.matmul %943, %944, %cst_380 {dimension_numbers = #tpu.dot_dimension_numbers<[1], [1], [0], [0], [0, 0, 1, 0], [], []>} : vector<6x8xf32>, vector<6x8xf32>, vector<6x6xf32> -> vector<6x6xf32>
    %cst_381 = arith.constant dense<0xFF800000> : vector<6xf32>
    %947 = vector.multi_reduction <maximumf>, %946, %cst_381 [1] : vector<6x6xf32> to vector<6xf32>
    %948 = vector.shape_cast %947 : vector<6xf32> to vector<6x1xf32>
    %949 = vector.broadcast %948 : vector<6x1xf32> to vector<6x6xf32>
    %950 = arith.subf %946, %949 : vector<6x6xf32>
    %951 = math.exp %950 : vector<6x6xf32>
    %cst_382 = arith.constant dense<0.000000e+00> : vector<6xf32>
    %952 = vector.multi_reduction <add>, %951, %cst_382 [1] : vector<6x6xf32> to vector<6xf32>
    %953 = vector.shape_cast %952 : vector<6xf32> to vector<6x1xf32>
    %954 = vector.broadcast %953 : vector<6x1xf32> to vector<6x6xf32>
    %955 = arith.divf %951, %954 : vector<6x6xf32>
    %cst_383 = arith.constant dense<0.000000e+00> : vector<6x8xf32>
    %956 = tpu.matmul %955, %945, %cst_383 {dimension_numbers = #tpu.dot_dimension_numbers<[1], [0], [0], [1], [0, 0, 1, 1], [], []>} : vector<6x6xf32>, vector<6x8xf32>, vector<6x8xf32> -> vector<6x8xf32>
    %957 = tpu.concatenate %914, %928, %942, %956 in 1 : vector<6x8xf32>, vector<6x8xf32>, vector<6x8xf32>, vector<6x8xf32> -> vector<6x32xf32>
    %cst_384 = arith.constant dense<0.000000e+00> : vector<6x32xf32>
    %958 = tpu.matmul %957, %893, %cst_384 {dimension_numbers = #tpu.dot_dimension_numbers<[1], [0], [0], [1], [0, 0, 1, 1], [], []>} : vector<6x32xf32>, vector<32x32xf32>, vector<6x32xf32> -> vector<6x32xf32>
    %959 = vector.broadcast %894 : vector<1x32xf32> to vector<6x32xf32>
    %960 = arith.addf %958, %959 : vector<6x32xf32>
    %961 = arith.addf %719, %960 : vector<6x32xf32>
    %c456_385 = arith.constant 456 : index
    %c0_386 = arith.constant 0 : index
    %962 = vector.load %arg3[%c456_385, %c0_386] : memref<616x128xf32, #tpu.memory_space<vmem>>, vector<1x32xf32>
    %c464_387 = arith.constant 464 : index
    %c0_388 = arith.constant 0 : index
    %963 = vector.load %arg3[%c464_387, %c0_388] : memref<616x128xf32, #tpu.memory_space<vmem>>, vector<1x32xf32>
    %cst_389 = arith.constant dense<0.000000e+00> : vector<6xf32>
    %964 = vector.multi_reduction <add>, %961, %cst_389 [1] : vector<6x32xf32> to vector<6xf32>
    %965 = vector.shape_cast %964 : vector<6xf32> to vector<6x1xf32>
    %cst_390 = arith.constant 3.200000e+01 : f32
    %966 = vector.broadcast %cst_390 : f32 to vector<6x1xf32>
    %967 = arith.divf %965, %966 : vector<6x1xf32>
    %968 = vector.broadcast %967 : vector<6x1xf32> to vector<6x32xf32>
    %969 = arith.subf %961, %968 : vector<6x32xf32>
    %970 = arith.mulf %969, %969 : vector<6x32xf32>
    %cst_391 = arith.constant dense<0.000000e+00> : vector<6xf32>
    %971 = vector.multi_reduction <add>, %970, %cst_391 [1] : vector<6x32xf32> to vector<6xf32>
    %972 = vector.shape_cast %971 : vector<6xf32> to vector<6x1xf32>
    %cst_392 = arith.constant 3.200000e+01 : f32
    %973 = vector.broadcast %cst_392 : f32 to vector<6x1xf32>
    %974 = arith.divf %972, %973 : vector<6x1xf32>
    %975 = vector.broadcast %967 : vector<6x1xf32> to vector<6x32xf32>
    %976 = arith.subf %961, %975 : vector<6x32xf32>
    %cst_393 = arith.constant 9.99999974E-6 : f32
    %977 = vector.broadcast %cst_393 : f32 to vector<6x1xf32>
    %978 = arith.addf %974, %977 : vector<6x1xf32>
    %979 = math.rsqrt %978 : vector<6x1xf32>
    %980 = vector.broadcast %979 : vector<6x1xf32> to vector<6x32xf32>
    %981 = arith.mulf %976, %980 : vector<6x32xf32>
    %982 = vector.broadcast %962 : vector<1x32xf32> to vector<6x32xf32>
    %983 = arith.mulf %981, %982 : vector<6x32xf32>
    %984 = vector.broadcast %963 : vector<1x32xf32> to vector<6x32xf32>
    %985 = arith.addf %983, %984 : vector<6x32xf32>
    %c472_394 = arith.constant 472 : index
    %c0_395 = arith.constant 0 : index
    %986 = vector.load %arg3[%c472_394, %c0_395] : memref<616x128xf32, #tpu.memory_space<vmem>>, vector<32x64xf32>
    %cst_396 = arith.constant dense<0.000000e+00> : vector<6x64xf32>
    %987 = tpu.matmul %985, %986, %cst_396 {dimension_numbers = #tpu.dot_dimension_numbers<[1], [0], [0], [1], [0, 0, 1, 1], [], []>} : vector<6x32xf32>, vector<32x64xf32>, vector<6x64xf32> -> vector<6x64xf32>
    %c504_397 = arith.constant 504 : index
    %c0_398 = arith.constant 0 : index
    %988 = vector.load %arg3[%c504_397, %c0_398] : memref<616x128xf32, #tpu.memory_space<vmem>>, vector<1x64xf32>
    %989 = vector.broadcast %988 : vector<1x64xf32> to vector<6x64xf32>
    %990 = arith.addf %987, %989 : vector<6x64xf32>
    %cst_399 = arith.constant 5.000000e-01 : f32
    %991 = vector.broadcast %cst_399 : f32 to vector<6x64xf32>
    %992 = arith.mulf %991, %990 : vector<6x64xf32>
    %cst_400 = arith.constant 0.707106769 : f32
    %993 = vector.broadcast %cst_400 : f32 to vector<6x64xf32>
    %994 = arith.mulf %990, %993 : vector<6x64xf32>
    %cst_401 = arith.constant 0.000000e+00 : f32
    %995 = vector.broadcast %cst_401 : f32 to vector<6x64xf32>
    %996 = arith.cmpf oge, %994, %995 : vector<6x64xf32>
    %cst_402 = arith.constant 1.000000e+00 : f32
    %cst_403 = arith.constant -1.000000e+00 : f32
    %997 = vector.broadcast %cst_402 : f32 to vector<6x64xf32>
    %998 = vector.broadcast %cst_403 : f32 to vector<6x64xf32>
    %999 = arith.select %996, %997, %998 : vector<6x64xi1>, vector<6x64xf32>
    %1000 = math.absf %994 : vector<6x64xf32>
    %cst_404 = arith.constant 0.327591091 : f32
    %1001 = vector.broadcast %cst_404 : f32 to vector<6x64xf32>
    %1002 = arith.mulf %1001, %1000 : vector<6x64xf32>
    %cst_405 = arith.constant 1.000000e+00 : f32
    %1003 = vector.broadcast %cst_405 : f32 to vector<6x64xf32>
    %1004 = arith.addf %1003, %1002 : vector<6x64xf32>
    %cst_406 = arith.constant 1.000000e+00 : f32
    %1005 = vector.broadcast %cst_406 : f32 to vector<6x64xf32>
    %1006 = arith.divf %1005, %1004 : vector<6x64xf32>
    %cst_407 = arith.constant 1.06140542 : f32
    %1007 = vector.broadcast %cst_407 : f32 to vector<6x64xf32>
    %1008 = arith.mulf %1007, %1006 : vector<6x64xf32>
    %cst_408 = arith.constant -1.45315206 : f32
    %1009 = vector.broadcast %cst_408 : f32 to vector<6x64xf32>
    %1010 = arith.addf %1008, %1009 : vector<6x64xf32>
    %1011 = arith.mulf %1010, %1006 : vector<6x64xf32>
    %cst_409 = arith.constant 1.42141378 : f32
    %1012 = vector.broadcast %cst_409 : f32 to vector<6x64xf32>
    %1013 = arith.addf %1011, %1012 : vector<6x64xf32>
    %1014 = arith.mulf %1013, %1006 : vector<6x64xf32>
    %cst_410 = arith.constant -0.284496725 : f32
    %1015 = vector.broadcast %cst_410 : f32 to vector<6x64xf32>
    %1016 = arith.addf %1014, %1015 : vector<6x64xf32>
    %1017 = arith.mulf %1016, %1006 : vector<6x64xf32>
    %cst_411 = arith.constant 0.254829586 : f32
    %1018 = vector.broadcast %cst_411 : f32 to vector<6x64xf32>
    %1019 = arith.addf %1017, %1018 : vector<6x64xf32>
    %1020 = arith.mulf %1019, %1006 : vector<6x64xf32>
    %cst_412 = arith.constant 0.000000e+00 : f32
    %1021 = vector.broadcast %cst_412 : f32 to vector<6x64xf32>
    %1022 = arith.subf %1021, %1000 : vector<6x64xf32>
    %1023 = arith.mulf %1022, %1000 : vector<6x64xf32>
    %1024 = math.exp %1023 : vector<6x64xf32>
    %1025 = arith.mulf %1020, %1024 : vector<6x64xf32>
    %cst_413 = arith.constant 1.000000e+00 : f32
    %1026 = vector.broadcast %cst_413 : f32 to vector<6x64xf32>
    %1027 = arith.subf %1026, %1025 : vector<6x64xf32>
    %1028 = arith.mulf %999, %1027 : vector<6x64xf32>
    %cst_414 = arith.constant 1.000000e+00 : f32
    %1029 = vector.broadcast %cst_414 : f32 to vector<6x64xf32>
    %1030 = arith.addf %1029, %1028 : vector<6x64xf32>
    %1031 = arith.mulf %992, %1030 : vector<6x64xf32>
    %c512_415 = arith.constant 512 : index
    %c0_416 = arith.constant 0 : index
    %1032 = vector.load %arg3[%c512_415, %c0_416] : memref<616x128xf32, #tpu.memory_space<vmem>>, vector<64x32xf32>
    %cst_417 = arith.constant dense<0.000000e+00> : vector<6x32xf32>
    %1033 = tpu.matmul %1031, %1032, %cst_417 {dimension_numbers = #tpu.dot_dimension_numbers<[1], [0], [0], [1], [0, 0, 1, 1], [], []>} : vector<6x64xf32>, vector<64x32xf32>, vector<6x32xf32> -> vector<6x32xf32>
    %c576_418 = arith.constant 576 : index
    %c0_419 = arith.constant 0 : index
    %1034 = vector.load %arg3[%c576_418, %c0_419] : memref<616x128xf32, #tpu.memory_space<vmem>>, vector<1x32xf32>
    %1035 = vector.broadcast %1034 : vector<1x32xf32> to vector<6x32xf32>
    %1036 = arith.addf %1033, %1035 : vector<6x32xf32>
    %1037 = arith.addf %985, %1036 : vector<6x32xf32>
    %c584_420 = arith.constant 584 : index
    %c0_421 = arith.constant 0 : index
    %1038 = vector.load %arg3[%c584_420, %c0_421] : memref<616x128xf32, #tpu.memory_space<vmem>>, vector<1x32xf32>
    %c592_422 = arith.constant 592 : index
    %c0_423 = arith.constant 0 : index
    %1039 = vector.load %arg3[%c592_422, %c0_423] : memref<616x128xf32, #tpu.memory_space<vmem>>, vector<1x32xf32>
    %cst_424 = arith.constant dense<0.000000e+00> : vector<6xf32>
    %1040 = vector.multi_reduction <add>, %1037, %cst_424 [1] : vector<6x32xf32> to vector<6xf32>
    %1041 = vector.shape_cast %1040 : vector<6xf32> to vector<6x1xf32>
    %cst_425 = arith.constant 3.200000e+01 : f32
    %1042 = vector.broadcast %cst_425 : f32 to vector<6x1xf32>
    %1043 = arith.divf %1041, %1042 : vector<6x1xf32>
    %1044 = vector.broadcast %1043 : vector<6x1xf32> to vector<6x32xf32>
    %1045 = arith.subf %1037, %1044 : vector<6x32xf32>
    %1046 = arith.mulf %1045, %1045 : vector<6x32xf32>
    %cst_426 = arith.constant dense<0.000000e+00> : vector<6xf32>
    %1047 = vector.multi_reduction <add>, %1046, %cst_426 [1] : vector<6x32xf32> to vector<6xf32>
    %1048 = vector.shape_cast %1047 : vector<6xf32> to vector<6x1xf32>
    %cst_427 = arith.constant 3.200000e+01 : f32
    %1049 = vector.broadcast %cst_427 : f32 to vector<6x1xf32>
    %1050 = arith.divf %1048, %1049 : vector<6x1xf32>
    %1051 = vector.broadcast %1043 : vector<6x1xf32> to vector<6x32xf32>
    %1052 = arith.subf %1037, %1051 : vector<6x32xf32>
    %cst_428 = arith.constant 9.99999974E-6 : f32
    %1053 = vector.broadcast %cst_428 : f32 to vector<6x1xf32>
    %1054 = arith.addf %1050, %1053 : vector<6x1xf32>
    %1055 = math.rsqrt %1054 : vector<6x1xf32>
    %1056 = vector.broadcast %1055 : vector<6x1xf32> to vector<6x32xf32>
    %1057 = arith.mulf %1052, %1056 : vector<6x32xf32>
    %1058 = vector.broadcast %1038 : vector<1x32xf32> to vector<6x32xf32>
    %1059 = arith.mulf %1057, %1058 : vector<6x32xf32>
    %1060 = vector.broadcast %1039 : vector<1x32xf32> to vector<6x32xf32>
    %1061 = arith.addf %1059, %1060 : vector<6x32xf32>
    %c600 = arith.constant 600 : index
    %c0_429 = arith.constant 0 : index
    %1062 = vector.load %arg3[%c600, %c0_429] : memref<616x128xf32, #tpu.memory_space<vmem>>, vector<1x32xf32>
    %c608 = arith.constant 608 : index
    %c0_430 = arith.constant 0 : index
    %1063 = vector.load %arg3[%c608, %c0_430] : memref<616x128xf32, #tpu.memory_space<vmem>>, vector<1x32xf32>
    %cst_431 = arith.constant dense<0.000000e+00> : vector<6xf32>
    %1064 = vector.multi_reduction <add>, %890, %cst_431 [1] : vector<6x32xf32> to vector<6xf32>
    %1065 = vector.shape_cast %1064 : vector<6xf32> to vector<6x1xf32>
    %cst_432 = arith.constant 3.200000e+01 : f32
    %1066 = vector.broadcast %cst_432 : f32 to vector<6x1xf32>
    %1067 = arith.divf %1065, %1066 : vector<6x1xf32>
    %1068 = vector.broadcast %1067 : vector<6x1xf32> to vector<6x32xf32>
    %1069 = arith.subf %890, %1068 : vector<6x32xf32>
    %1070 = arith.mulf %1069, %1069 : vector<6x32xf32>
    %cst_433 = arith.constant dense<0.000000e+00> : vector<6xf32>
    %1071 = vector.multi_reduction <add>, %1070, %cst_433 [1] : vector<6x32xf32> to vector<6xf32>
    %1072 = vector.shape_cast %1071 : vector<6xf32> to vector<6x1xf32>
    %cst_434 = arith.constant 3.200000e+01 : f32
    %1073 = vector.broadcast %cst_434 : f32 to vector<6x1xf32>
    %1074 = arith.divf %1072, %1073 : vector<6x1xf32>
    %1075 = vector.broadcast %1067 : vector<6x1xf32> to vector<6x32xf32>
    %1076 = arith.subf %890, %1075 : vector<6x32xf32>
    %cst_435 = arith.constant 9.99999974E-6 : f32
    %1077 = vector.broadcast %cst_435 : f32 to vector<6x1xf32>
    %1078 = arith.addf %1074, %1077 : vector<6x1xf32>
    %1079 = math.rsqrt %1078 : vector<6x1xf32>
    %1080 = vector.broadcast %1079 : vector<6x1xf32> to vector<6x32xf32>
    %1081 = arith.mulf %1076, %1080 : vector<6x32xf32>
    %1082 = vector.broadcast %1062 : vector<1x32xf32> to vector<6x32xf32>
    %1083 = arith.mulf %1081, %1082 : vector<6x32xf32>
    %1084 = vector.broadcast %1063 : vector<1x32xf32> to vector<6x32xf32>
    %1085 = arith.addf %1083, %1084 : vector<6x32xf32>
    %c0_436 = arith.constant 0 : index
    %c0_437 = arith.constant 0 : index
    %c0_438 = arith.constant 0 : index
    %1086 = vector.load %arg4[%c0_436, %c0_437, %c0_438] : memref<2x6x32xf32, #tpu.memory_space<vmem>>, vector<1x6x32xf32>
    %1087 = vector.shape_cast %1086 : vector<1x6x32xf32> to vector<6x32xf32>
    %1088 = vector.shape_cast %1085 : vector<6x32xf32> to vector<1x6x32xf32>
    tpu.vector_store %arg4[%c0_436, %c0_437, %c0_438], %1088 {strides = array<i32>} : memref<2x6x32xf32, #tpu.memory_space<vmem>>, vector<1x6x32xf32>,
    %c600_439 = arith.constant 600 : index
    %c0_440 = arith.constant 0 : index
    %1089 = vector.load %arg3[%c600_439, %c0_440] : memref<616x128xf32, #tpu.memory_space<vmem>>, vector<1x32xf32>
    %c608_441 = arith.constant 608 : index
    %c0_442 = arith.constant 0 : index
    %1090 = vector.load %arg3[%c608_441, %c0_442] : memref<616x128xf32, #tpu.memory_space<vmem>>, vector<1x32xf32>
    %cst_443 = arith.constant dense<0.000000e+00> : vector<6xf32>
    %1091 = vector.multi_reduction <add>, %1061, %cst_443 [1] : vector<6x32xf32> to vector<6xf32>
    %1092 = vector.shape_cast %1091 : vector<6xf32> to vector<6x1xf32>
    %cst_444 = arith.constant 3.200000e+01 : f32
    %1093 = vector.broadcast %cst_444 : f32 to vector<6x1xf32>
    %1094 = arith.divf %1092, %1093 : vector<6x1xf32>
    %1095 = vector.broadcast %1094 : vector<6x1xf32> to vector<6x32xf32>
    %1096 = arith.subf %1061, %1095 : vector<6x32xf32>
    %1097 = arith.mulf %1096, %1096 : vector<6x32xf32>
    %cst_445 = arith.constant dense<0.000000e+00> : vector<6xf32>
    %1098 = vector.multi_reduction <add>, %1097, %cst_445 [1] : vector<6x32xf32> to vector<6xf32>
    %1099 = vector.shape_cast %1098 : vector<6xf32> to vector<6x1xf32>
    %cst_446 = arith.constant 3.200000e+01 : f32
    %1100 = vector.broadcast %cst_446 : f32 to vector<6x1xf32>
    %1101 = arith.divf %1099, %1100 : vector<6x1xf32>
    %1102 = vector.broadcast %1094 : vector<6x1xf32> to vector<6x32xf32>
    %1103 = arith.subf %1061, %1102 : vector<6x32xf32>
    %cst_447 = arith.constant 9.99999974E-6 : f32
    %1104 = vector.broadcast %cst_447 : f32 to vector<6x1xf32>
    %1105 = arith.addf %1101, %1104 : vector<6x1xf32>
    %1106 = math.rsqrt %1105 : vector<6x1xf32>
    %1107 = vector.broadcast %1106 : vector<6x1xf32> to vector<6x32xf32>
    %1108 = arith.mulf %1103, %1107 : vector<6x32xf32>
    %1109 = vector.broadcast %1089 : vector<1x32xf32> to vector<6x32xf32>
    %1110 = arith.mulf %1108, %1109 : vector<6x32xf32>
    %1111 = vector.broadcast %1090 : vector<1x32xf32> to vector<6x32xf32>
    %1112 = arith.addf %1110, %1111 : vector<6x32xf32>
    %c1_448 = arith.constant 1 : index
    %c0_449 = arith.constant 0 : index
    %c0_450 = arith.constant 0 : index
    %1113 = vector.load %arg4[%c1_448, %c0_449, %c0_450] : memref<2x6x32xf32, #tpu.memory_space<vmem>>, vector<1x6x32xf32>
    %1114 = vector.shape_cast %1113 : vector<1x6x32xf32> to vector<6x32xf32>
    %1115 = vector.shape_cast %1112 : vector<6x32xf32> to vector<1x6x32xf32>
    tpu.vector_store %arg4[%c1_448, %c0_449, %c0_450], %1115 {strides = array<i32>} : memref<2x6x32xf32, #tpu.memory_space<vmem>>, vector<1x6x32xf32>,
    return
  }
  func.func @transform_0(%arg0: i32) -> (i32, i32, i32) {
    %c0_i32 = arith.constant 0 : i32
    %c0_i32_0 = arith.constant 0 : i32
    %c0_i32_1 = arith.constant 0 : i32
    %c0_i32_2 = arith.constant 0 : i32
    return %c0_i32, %c0_i32_0, %c0_i32_1 : i32, i32, i32
  }
  func.func @transform_1(%arg0: i32) -> (i32, i32, i32) {
    %c0_i32 = arith.constant 0 : i32
    %c0_i32_0 = arith.constant 0 : i32
    %c0_i32_1 = arith.constant 0 : i32
    %c0_i32_2 = arith.constant 0 : i32
    return %c0_i32, %c0_i32_0, %c0_i32_1 : i32, i32, i32
  }
  func.func @transform_2(%arg0: i32) -> (i32, i32) {
    %c0_i32 = arith.constant 0 : i32
    %c0_i32_0 = arith.constant 0 : i32
    %c0_i32_1 = arith.constant 0 : i32
    return %c0_i32, %c0_i32_0 : i32, i32
  }
  func.func @transform_3(%arg0: i32) -> (i32, i32, i32) {
    %c0_i32 = arith.constant 0 : i32
    %c0_i32_0 = arith.constant 0 : i32
    %c0_i32_1 = arith.constant 0 : i32
    %c0_i32_2 = arith.constant 0 : i32
    return %c0_i32, %c0_i32_0, %c0_i32_1 : i32, i32, i32
  }
}

module attributes {stable_mosaic.version = 11 : i64} {
  func.func @kernel(%arg0: i32, %arg1: memref<1x10x4xf32, #tpu.memory_space<vmem>>, %arg2: memref<1x10x32xf32, #tpu.memory_space<vmem>>, %arg3: memref<1x6x32xf32, #tpu.memory_space<vmem>>, %arg4: memref<448x128xf32, #tpu.memory_space<vmem>>, %arg5: memref<1x10x128xf32, #tpu.memory_space<vmem>>) attributes {dimension_semantics = [#tpu.dimension_semantics<parallel>], iteration_bounds = array<i64: 2>, scalar_prefetch = 0 : i64, scratch_operands = 0 : i64, tpu.core_type = #tpu.core_type<tc>, window_params = [{transform_indices = @transform_0, window_bounds = array<i64: 1, 10, 4>}, {transform_indices = @transform_1, window_bounds = array<i64: 1, 10, 32>}, {transform_indices = @transform_2, window_bounds = array<i64: 1, 6, 32>}, {pipeline_mode = #tpu.pipeline_mode<synchronous>, transform_indices = @transform_3, window_bounds = array<i64: 448, 128>}, {transform_indices = @transform_4, window_bounds = array<i64: 1, 10, 128>}]} {
    %c0 = arith.constant 0 : index
    %c0_0 = arith.constant 0 : index
    %c0_1 = arith.constant 0 : index
    %0 = vector.load %arg1[%c0, %c0_0, %c0_1] : memref<1x10x4xf32, #tpu.memory_space<vmem>>, vector<1x10x4xf32>
    %1 = vector.shape_cast %0 : vector<1x10x4xf32> to vector<10x4xf32>
    %c0_2 = arith.constant 0 : index
    %c0_3 = arith.constant 0 : index
    %2 = vector.load %arg4[%c0_2, %c0_3] : memref<448x128xf32, #tpu.memory_space<vmem>>, vector<4x32xf32>
    %c8 = arith.constant 8 : index
    %c0_4 = arith.constant 0 : index
    %3 = vector.load %arg4[%c8, %c0_4] : memref<448x128xf32, #tpu.memory_space<vmem>>, vector<4x32xf32>
    %c16 = arith.constant 16 : index
    %c0_5 = arith.constant 0 : index
    %4 = vector.load %arg4[%c16, %c0_5] : memref<448x128xf32, #tpu.memory_space<vmem>>, vector<4x32xf32>
    %c24 = arith.constant 24 : index
    %c0_6 = arith.constant 0 : index
    %5 = vector.load %arg4[%c24, %c0_6] : memref<448x128xf32, #tpu.memory_space<vmem>>, vector<1x32xf32>
    %6 = tpu.iota {dimensions = array<i32: 0>} : vector<10x10xi32>
    %7 = tpu.iota {dimensions = array<i32: 1>} : vector<10x10xi32>
    %8 = arith.subi %7, %6 : vector<10x10xi32>
    %c1_i32 = arith.constant 1 : i32
    %9 = vector.broadcast %c1_i32 : i32 to vector<10x10xi32>
    %10 = arith.addi %8, %9 : vector<10x10xi32>
    %c0_i32 = arith.constant 0 : i32
    %11 = vector.broadcast %c0_i32 : i32 to vector<10x10xi32>
    %12 = arith.cmpi eq, %10, %11 : vector<10x10xi32>
    %c10_i32 = arith.constant 10 : i32
    %13 = vector.broadcast %c10_i32 : i32 to vector<10x10xi32>
    %14 = arith.cmpi eq, %10, %13 : vector<10x10xi32>
    %15 = arith.ori %12, %14 : vector<10x10xi1>
    %c-10_i32 = arith.constant -10 : i32
    %16 = vector.broadcast %c-10_i32 : i32 to vector<10x10xi32>
    %17 = arith.cmpi eq, %10, %16 : vector<10x10xi32>
    %18 = arith.ori %15, %17 : vector<10x10xi1>
    %cst = arith.constant 1.000000e+00 : f32
    %cst_7 = arith.constant 0.000000e+00 : f32
    %19 = vector.broadcast %cst : f32 to vector<10x10xf32>
    %20 = vector.broadcast %cst_7 : f32 to vector<10x10xf32>
    %21 = arith.select %18, %19, %20 : vector<10x10xi1>, vector<10x10xf32>
    %cst_8 = arith.constant dense<0.000000e+00> : vector<10x4xf32>
    %22 = tpu.matmul %21, %1, %cst_8 {dimension_numbers = #tpu.dot_dimension_numbers<[1], [0], [0], [1], [0, 0, 1, 1], [], []>} : vector<10x10xf32>, vector<10x4xf32>, vector<10x4xf32> -> vector<10x4xf32>
    %23 = tpu.iota {dimensions = array<i32: 0>} : vector<10x10xi32>
    %24 = tpu.iota {dimensions = array<i32: 1>} : vector<10x10xi32>
    %25 = arith.subi %24, %23 : vector<10x10xi32>
    %c-1_i32 = arith.constant -1 : i32
    %26 = vector.broadcast %c-1_i32 : i32 to vector<10x10xi32>
    %27 = arith.addi %25, %26 : vector<10x10xi32>
    %c0_i32_9 = arith.constant 0 : i32
    %28 = vector.broadcast %c0_i32_9 : i32 to vector<10x10xi32>
    %29 = arith.cmpi eq, %27, %28 : vector<10x10xi32>
    %c10_i32_10 = arith.constant 10 : i32
    %30 = vector.broadcast %c10_i32_10 : i32 to vector<10x10xi32>
    %31 = arith.cmpi eq, %27, %30 : vector<10x10xi32>
    %32 = arith.ori %29, %31 : vector<10x10xi1>
    %c-10_i32_11 = arith.constant -10 : i32
    %33 = vector.broadcast %c-10_i32_11 : i32 to vector<10x10xi32>
    %34 = arith.cmpi eq, %27, %33 : vector<10x10xi32>
    %35 = arith.ori %32, %34 : vector<10x10xi1>
    %cst_12 = arith.constant 1.000000e+00 : f32
    %cst_13 = arith.constant 0.000000e+00 : f32
    %36 = vector.broadcast %cst_12 : f32 to vector<10x10xf32>
    %37 = vector.broadcast %cst_13 : f32 to vector<10x10xf32>
    %38 = arith.select %35, %36, %37 : vector<10x10xi1>, vector<10x10xf32>
    %cst_14 = arith.constant dense<0.000000e+00> : vector<10x4xf32>
    %39 = tpu.matmul %38, %1, %cst_14 {dimension_numbers = #tpu.dot_dimension_numbers<[1], [0], [0], [1], [0, 0, 1, 1], [], []>} : vector<10x10xf32>, vector<10x4xf32>, vector<10x4xf32> -> vector<10x4xf32>
    %cst_15 = arith.constant dense<0.000000e+00> : vector<10x32xf32>
    %40 = tpu.matmul %22, %2, %cst_15 {dimension_numbers = #tpu.dot_dimension_numbers<[1], [0], [0], [1], [0, 0, 1, 1], [], []>} : vector<10x4xf32>, vector<4x32xf32>, vector<10x32xf32> -> vector<10x32xf32>
    %cst_16 = arith.constant dense<0.000000e+00> : vector<10x32xf32>
    %41 = tpu.matmul %1, %3, %cst_16 {dimension_numbers = #tpu.dot_dimension_numbers<[1], [0], [0], [1], [0, 0, 1, 1], [], []>} : vector<10x4xf32>, vector<4x32xf32>, vector<10x32xf32> -> vector<10x32xf32>
    %42 = arith.addf %40, %41 : vector<10x32xf32>
    %cst_17 = arith.constant dense<0.000000e+00> : vector<10x32xf32>
    %43 = tpu.matmul %39, %4, %cst_17 {dimension_numbers = #tpu.dot_dimension_numbers<[1], [0], [0], [1], [0, 0, 1, 1], [], []>} : vector<10x4xf32>, vector<4x32xf32>, vector<10x32xf32> -> vector<10x32xf32>
    %44 = arith.addf %42, %43 : vector<10x32xf32>
    %45 = vector.broadcast %5 : vector<1x32xf32> to vector<10x32xf32>
    %46 = arith.addf %44, %45 : vector<10x32xf32>
    %c0_18 = arith.constant 0 : index
    %c0_19 = arith.constant 0 : index
    %c0_20 = arith.constant 0 : index
    %47 = vector.load %arg2[%c0_18, %c0_19, %c0_20] : memref<1x10x32xf32, #tpu.memory_space<vmem>>, vector<1x10x32xf32>
    %48 = vector.shape_cast %47 : vector<1x10x32xf32> to vector<10x32xf32>
    %49 = arith.addf %46, %48 : vector<10x32xf32>
    %c0_21 = arith.constant 0 : index
    %c0_22 = arith.constant 0 : index
    %c0_23 = arith.constant 0 : index
    %50 = vector.load %arg3[%c0_21, %c0_22, %c0_23] : memref<1x6x32xf32, #tpu.memory_space<vmem>>, vector<1x6x32xf32>
    %51 = vector.shape_cast %50 : vector<1x6x32xf32> to vector<6x32xf32>
    %52 = tpu.iota {dimensions = array<i32: 0>} : vector<10x10xi32>
    %53 = tpu.iota {dimensions = array<i32: 1>} : vector<10x10xi32>
    %54 = arith.cmpi sgt, %53, %52 : vector<10x10xi32>
    %c32 = arith.constant 32 : index
    %c0_24 = arith.constant 0 : index
    %55 = vector.load %arg4[%c32, %c0_24] : memref<448x128xf32, #tpu.memory_space<vmem>>, vector<32x96xf32>
    %c64 = arith.constant 64 : index
    %c0_25 = arith.constant 0 : index
    %56 = vector.load %arg4[%c64, %c0_25] : memref<448x128xf32, #tpu.memory_space<vmem>>, vector<1x96xf32>
    %c72 = arith.constant 72 : index
    %c0_26 = arith.constant 0 : index
    %57 = vector.load %arg4[%c72, %c0_26] : memref<448x128xf32, #tpu.memory_space<vmem>>, vector<32x32xf32>
    %c104 = arith.constant 104 : index
    %c0_27 = arith.constant 0 : index
    %58 = vector.load %arg4[%c104, %c0_27] : memref<448x128xf32, #tpu.memory_space<vmem>>, vector<1x32xf32>
    %cst_28 = arith.constant dense<0.000000e+00> : vector<10x96xf32>
    %59 = tpu.matmul %49, %55, %cst_28 {dimension_numbers = #tpu.dot_dimension_numbers<[1], [0], [0], [1], [0, 0, 1, 1], [], []>} : vector<10x32xf32>, vector<32x96xf32>, vector<10x96xf32> -> vector<10x96xf32>
    %60 = vector.broadcast %56 : vector<1x96xf32> to vector<10x96xf32>
    %61 = arith.addf %59, %60 : vector<10x96xf32>
    %62 = vector.extract_strided_slice %61 {offsets = [0, 0], sizes = [10, 8], strides = [1, 1]} : vector<10x96xf32> to vector<10x8xf32>
    %63 = vector.extract_strided_slice %61 {offsets = [0, 32], sizes = [10, 8], strides = [1, 1]} : vector<10x96xf32> to vector<10x8xf32>
    %64 = vector.extract_strided_slice %61 {offsets = [0, 64], sizes = [10, 8], strides = [1, 1]} : vector<10x96xf32> to vector<10x8xf32>
    %cst_29 = arith.constant dense<0.000000e+00> : vector<10x10xf32>
    %65 = tpu.matmul %62, %63, %cst_29 {dimension_numbers = #tpu.dot_dimension_numbers<[1], [1], [0], [0], [0, 0, 1, 0], [], []>} : vector<10x8xf32>, vector<10x8xf32>, vector<10x10xf32> -> vector<10x10xf32>
    %cst_30 = arith.constant -1.000000e+30 : f32
    %66 = vector.broadcast %cst_30 : f32 to vector<10x10xf32>
    %67 = arith.select %54, %66, %65 : vector<10x10xi1>, vector<10x10xf32>
    %cst_31 = arith.constant dense<0xFF800000> : vector<10xf32>
    %68 = vector.multi_reduction <maximumf>, %67, %cst_31 [1] : vector<10x10xf32> to vector<10xf32>
    %69 = vector.shape_cast %68 : vector<10xf32> to vector<10x1xf32>
    %70 = vector.broadcast %69 : vector<10x1xf32> to vector<10x10xf32>
    %71 = arith.subf %67, %70 : vector<10x10xf32>
    %72 = math.exp %71 : vector<10x10xf32>
    %cst_32 = arith.constant dense<0.000000e+00> : vector<10xf32>
    %73 = vector.multi_reduction <add>, %72, %cst_32 [1] : vector<10x10xf32> to vector<10xf32>
    %74 = vector.shape_cast %73 : vector<10xf32> to vector<10x1xf32>
    %75 = vector.broadcast %74 : vector<10x1xf32> to vector<10x10xf32>
    %76 = arith.divf %72, %75 : vector<10x10xf32>
    %cst_33 = arith.constant dense<0.000000e+00> : vector<10x8xf32>
    %77 = tpu.matmul %76, %64, %cst_33 {dimension_numbers = #tpu.dot_dimension_numbers<[1], [0], [0], [1], [0, 0, 1, 1], [], []>} : vector<10x10xf32>, vector<10x8xf32>, vector<10x8xf32> -> vector<10x8xf32>
    %78 = vector.extract_strided_slice %61 {offsets = [0, 8], sizes = [10, 8], strides = [1, 1]} : vector<10x96xf32> to vector<10x8xf32>
    %79 = vector.extract_strided_slice %61 {offsets = [0, 40], sizes = [10, 8], strides = [1, 1]} : vector<10x96xf32> to vector<10x8xf32>
    %80 = vector.extract_strided_slice %61 {offsets = [0, 72], sizes = [10, 8], strides = [1, 1]} : vector<10x96xf32> to vector<10x8xf32>
    %cst_34 = arith.constant dense<0.000000e+00> : vector<10x10xf32>
    %81 = tpu.matmul %78, %79, %cst_34 {dimension_numbers = #tpu.dot_dimension_numbers<[1], [1], [0], [0], [0, 0, 1, 0], [], []>} : vector<10x8xf32>, vector<10x8xf32>, vector<10x10xf32> -> vector<10x10xf32>
    %cst_35 = arith.constant -1.000000e+30 : f32
    %82 = vector.broadcast %cst_35 : f32 to vector<10x10xf32>
    %83 = arith.select %54, %82, %81 : vector<10x10xi1>, vector<10x10xf32>
    %cst_36 = arith.constant dense<0xFF800000> : vector<10xf32>
    %84 = vector.multi_reduction <maximumf>, %83, %cst_36 [1] : vector<10x10xf32> to vector<10xf32>
    %85 = vector.shape_cast %84 : vector<10xf32> to vector<10x1xf32>
    %86 = vector.broadcast %85 : vector<10x1xf32> to vector<10x10xf32>
    %87 = arith.subf %83, %86 : vector<10x10xf32>
    %88 = math.exp %87 : vector<10x10xf32>
    %cst_37 = arith.constant dense<0.000000e+00> : vector<10xf32>
    %89 = vector.multi_reduction <add>, %88, %cst_37 [1] : vector<10x10xf32> to vector<10xf32>
    %90 = vector.shape_cast %89 : vector<10xf32> to vector<10x1xf32>
    %91 = vector.broadcast %90 : vector<10x1xf32> to vector<10x10xf32>
    %92 = arith.divf %88, %91 : vector<10x10xf32>
    %cst_38 = arith.constant dense<0.000000e+00> : vector<10x8xf32>
    %93 = tpu.matmul %92, %80, %cst_38 {dimension_numbers = #tpu.dot_dimension_numbers<[1], [0], [0], [1], [0, 0, 1, 1], [], []>} : vector<10x10xf32>, vector<10x8xf32>, vector<10x8xf32> -> vector<10x8xf32>
    %94 = vector.extract_strided_slice %61 {offsets = [0, 16], sizes = [10, 8], strides = [1, 1]} : vector<10x96xf32> to vector<10x8xf32>
    %95 = vector.extract_strided_slice %61 {offsets = [0, 48], sizes = [10, 8], strides = [1, 1]} : vector<10x96xf32> to vector<10x8xf32>
    %96 = vector.extract_strided_slice %61 {offsets = [0, 80], sizes = [10, 8], strides = [1, 1]} : vector<10x96xf32> to vector<10x8xf32>
    %cst_39 = arith.constant dense<0.000000e+00> : vector<10x10xf32>
    %97 = tpu.matmul %94, %95, %cst_39 {dimension_numbers = #tpu.dot_dimension_numbers<[1], [1], [0], [0], [0, 0, 1, 0], [], []>} : vector<10x8xf32>, vector<10x8xf32>, vector<10x10xf32> -> vector<10x10xf32>
    %cst_40 = arith.constant -1.000000e+30 : f32
    %98 = vector.broadcast %cst_40 : f32 to vector<10x10xf32>
    %99 = arith.select %54, %98, %97 : vector<10x10xi1>, vector<10x10xf32>
    %cst_41 = arith.constant dense<0xFF800000> : vector<10xf32>
    %100 = vector.multi_reduction <maximumf>, %99, %cst_41 [1] : vector<10x10xf32> to vector<10xf32>
    %101 = vector.shape_cast %100 : vector<10xf32> to vector<10x1xf32>
    %102 = vector.broadcast %101 : vector<10x1xf32> to vector<10x10xf32>
    %103 = arith.subf %99, %102 : vector<10x10xf32>
    %104 = math.exp %103 : vector<10x10xf32>
    %cst_42 = arith.constant dense<0.000000e+00> : vector<10xf32>
    %105 = vector.multi_reduction <add>, %104, %cst_42 [1] : vector<10x10xf32> to vector<10xf32>
    %106 = vector.shape_cast %105 : vector<10xf32> to vector<10x1xf32>
    %107 = vector.broadcast %106 : vector<10x1xf32> to vector<10x10xf32>
    %108 = arith.divf %104, %107 : vector<10x10xf32>
    %cst_43 = arith.constant dense<0.000000e+00> : vector<10x8xf32>
    %109 = tpu.matmul %108, %96, %cst_43 {dimension_numbers = #tpu.dot_dimension_numbers<[1], [0], [0], [1], [0, 0, 1, 1], [], []>} : vector<10x10xf32>, vector<10x8xf32>, vector<10x8xf32> -> vector<10x8xf32>
    %110 = vector.extract_strided_slice %61 {offsets = [0, 24], sizes = [10, 8], strides = [1, 1]} : vector<10x96xf32> to vector<10x8xf32>
    %111 = vector.extract_strided_slice %61 {offsets = [0, 56], sizes = [10, 8], strides = [1, 1]} : vector<10x96xf32> to vector<10x8xf32>
    %112 = vector.extract_strided_slice %61 {offsets = [0, 88], sizes = [10, 8], strides = [1, 1]} : vector<10x96xf32> to vector<10x8xf32>
    %cst_44 = arith.constant dense<0.000000e+00> : vector<10x10xf32>
    %113 = tpu.matmul %110, %111, %cst_44 {dimension_numbers = #tpu.dot_dimension_numbers<[1], [1], [0], [0], [0, 0, 1, 0], [], []>} : vector<10x8xf32>, vector<10x8xf32>, vector<10x10xf32> -> vector<10x10xf32>
    %cst_45 = arith.constant -1.000000e+30 : f32
    %114 = vector.broadcast %cst_45 : f32 to vector<10x10xf32>
    %115 = arith.select %54, %114, %113 : vector<10x10xi1>, vector<10x10xf32>
    %cst_46 = arith.constant dense<0xFF800000> : vector<10xf32>
    %116 = vector.multi_reduction <maximumf>, %115, %cst_46 [1] : vector<10x10xf32> to vector<10xf32>
    %117 = vector.shape_cast %116 : vector<10xf32> to vector<10x1xf32>
    %118 = vector.broadcast %117 : vector<10x1xf32> to vector<10x10xf32>
    %119 = arith.subf %115, %118 : vector<10x10xf32>
    %120 = math.exp %119 : vector<10x10xf32>
    %cst_47 = arith.constant dense<0.000000e+00> : vector<10xf32>
    %121 = vector.multi_reduction <add>, %120, %cst_47 [1] : vector<10x10xf32> to vector<10xf32>
    %122 = vector.shape_cast %121 : vector<10xf32> to vector<10x1xf32>
    %123 = vector.broadcast %122 : vector<10x1xf32> to vector<10x10xf32>
    %124 = arith.divf %120, %123 : vector<10x10xf32>
    %cst_48 = arith.constant dense<0.000000e+00> : vector<10x8xf32>
    %125 = tpu.matmul %124, %112, %cst_48 {dimension_numbers = #tpu.dot_dimension_numbers<[1], [0], [0], [1], [0, 0, 1, 1], [], []>} : vector<10x10xf32>, vector<10x8xf32>, vector<10x8xf32> -> vector<10x8xf32>
    %126 = tpu.iota {dimensions = array<i32: 0>} : vector<10x10xi32>
    %127 = tpu.iota {dimensions = array<i32: 1>} : vector<10x10xi32>
    %c4_i32 = arith.constant 4 : i32
    %128 = vector.broadcast %c4_i32 : i32 to vector<10x10xi32>
    %129 = arith.muli %128, %126 : vector<10x10xi32>
    %c0_i32_49 = arith.constant 0 : i32
    %130 = vector.broadcast %c0_i32_49 : i32 to vector<10x10xi32>
    %131 = arith.addi %129, %130 : vector<10x10xi32>
    %132 = arith.cmpi eq, %127, %131 : vector<10x10xi32>
    %cst_50 = arith.constant 1.000000e+00 : f32
    %cst_51 = arith.constant 0.000000e+00 : f32
    %133 = vector.broadcast %cst_50 : f32 to vector<10x10xf32>
    %134 = vector.broadcast %cst_51 : f32 to vector<10x10xf32>
    %135 = arith.select %132, %133, %134 : vector<10x10xi1>, vector<10x10xf32>
    %cst_52 = arith.constant dense<0.000000e+00> : vector<10x8xf32>
    %136 = tpu.matmul %135, %77, %cst_52 {dimension_numbers = #tpu.dot_dimension_numbers<[1], [0], [0], [1], [0, 0, 1, 1], [], []>} : vector<10x10xf32>, vector<10x8xf32>, vector<10x8xf32> -> vector<10x8xf32>
    %c4_i32_53 = arith.constant 4 : i32
    %137 = vector.broadcast %c4_i32_53 : i32 to vector<10x10xi32>
    %138 = arith.muli %137, %126 : vector<10x10xi32>
    %c-10_i32_54 = arith.constant -10 : i32
    %139 = vector.broadcast %c-10_i32_54 : i32 to vector<10x10xi32>
    %140 = arith.addi %138, %139 : vector<10x10xi32>
    %141 = arith.cmpi eq, %127, %140 : vector<10x10xi32>
    %cst_55 = arith.constant 1.000000e+00 : f32
    %cst_56 = arith.constant 0.000000e+00 : f32
    %142 = vector.broadcast %cst_55 : f32 to vector<10x10xf32>
    %143 = vector.broadcast %cst_56 : f32 to vector<10x10xf32>
    %144 = arith.select %141, %142, %143 : vector<10x10xi1>, vector<10x10xf32>
    %cst_57 = arith.constant dense<0.000000e+00> : vector<10x8xf32>
    %145 = tpu.matmul %144, %93, %cst_57 {dimension_numbers = #tpu.dot_dimension_numbers<[1], [0], [0], [1], [0, 0, 1, 1], [], []>} : vector<10x10xf32>, vector<10x8xf32>, vector<10x8xf32> -> vector<10x8xf32>
    %146 = arith.addf %136, %145 : vector<10x8xf32>
    %c4_i32_58 = arith.constant 4 : i32
    %147 = vector.broadcast %c4_i32_58 : i32 to vector<10x10xi32>
    %148 = arith.muli %147, %126 : vector<10x10xi32>
    %c-20_i32 = arith.constant -20 : i32
    %149 = vector.broadcast %c-20_i32 : i32 to vector<10x10xi32>
    %150 = arith.addi %148, %149 : vector<10x10xi32>
    %151 = arith.cmpi eq, %127, %150 : vector<10x10xi32>
    %cst_59 = arith.constant 1.000000e+00 : f32
    %cst_60 = arith.constant 0.000000e+00 : f32
    %152 = vector.broadcast %cst_59 : f32 to vector<10x10xf32>
    %153 = vector.broadcast %cst_60 : f32 to vector<10x10xf32>
    %154 = arith.select %151, %152, %153 : vector<10x10xi1>, vector<10x10xf32>
    %cst_61 = arith.constant dense<0.000000e+00> : vector<10x8xf32>
    %155 = tpu.matmul %154, %109, %cst_61 {dimension_numbers = #tpu.dot_dimension_numbers<[1], [0], [0], [1], [0, 0, 1, 1], [], []>} : vector<10x10xf32>, vector<10x8xf32>, vector<10x8xf32> -> vector<10x8xf32>
    %156 = arith.addf %146, %155 : vector<10x8xf32>
    %c4_i32_62 = arith.constant 4 : i32
    %157 = vector.broadcast %c4_i32_62 : i32 to vector<10x10xi32>
    %158 = arith.muli %157, %126 : vector<10x10xi32>
    %c-30_i32 = arith.constant -30 : i32
    %159 = vector.broadcast %c-30_i32 : i32 to vector<10x10xi32>
    %160 = arith.addi %158, %159 : vector<10x10xi32>
    %161 = arith.cmpi eq, %127, %160 : vector<10x10xi32>
    %cst_63 = arith.constant 1.000000e+00 : f32
    %cst_64 = arith.constant 0.000000e+00 : f32
    %162 = vector.broadcast %cst_63 : f32 to vector<10x10xf32>
    %163 = vector.broadcast %cst_64 : f32 to vector<10x10xf32>
    %164 = arith.select %161, %162, %163 : vector<10x10xi1>, vector<10x10xf32>
    %cst_65 = arith.constant dense<0.000000e+00> : vector<10x8xf32>
    %165 = tpu.matmul %164, %125, %cst_65 {dimension_numbers = #tpu.dot_dimension_numbers<[1], [0], [0], [1], [0, 0, 1, 1], [], []>} : vector<10x10xf32>, vector<10x8xf32>, vector<10x8xf32> -> vector<10x8xf32>
    %166 = arith.addf %156, %165 : vector<10x8xf32>
    %167 = vector.extract_strided_slice %57 {offsets = [0, 0], sizes = [8, 32], strides = [1, 1]} : vector<32x32xf32> to vector<8x32xf32>
    %cst_66 = arith.constant dense<0.000000e+00> : vector<10x32xf32>
    %168 = tpu.matmul %166, %167, %cst_66 {dimension_numbers = #tpu.dot_dimension_numbers<[1], [0], [0], [1], [0, 0, 1, 1], [], []>} : vector<10x8xf32>, vector<8x32xf32>, vector<10x32xf32> -> vector<10x32xf32>
    %c4_i32_67 = arith.constant 4 : i32
    %169 = vector.broadcast %c4_i32_67 : i32 to vector<10x10xi32>
    %170 = arith.muli %169, %126 : vector<10x10xi32>
    %c1_i32_68 = arith.constant 1 : i32
    %171 = vector.broadcast %c1_i32_68 : i32 to vector<10x10xi32>
    %172 = arith.addi %170, %171 : vector<10x10xi32>
    %173 = arith.cmpi eq, %127, %172 : vector<10x10xi32>
    %cst_69 = arith.constant 1.000000e+00 : f32
    %cst_70 = arith.constant 0.000000e+00 : f32
    %174 = vector.broadcast %cst_69 : f32 to vector<10x10xf32>
    %175 = vector.broadcast %cst_70 : f32 to vector<10x10xf32>
    %176 = arith.select %173, %174, %175 : vector<10x10xi1>, vector<10x10xf32>
    %cst_71 = arith.constant dense<0.000000e+00> : vector<10x8xf32>
    %177 = tpu.matmul %176, %77, %cst_71 {dimension_numbers = #tpu.dot_dimension_numbers<[1], [0], [0], [1], [0, 0, 1, 1], [], []>} : vector<10x10xf32>, vector<10x8xf32>, vector<10x8xf32> -> vector<10x8xf32>
    %c4_i32_72 = arith.constant 4 : i32
    %178 = vector.broadcast %c4_i32_72 : i32 to vector<10x10xi32>
    %179 = arith.muli %178, %126 : vector<10x10xi32>
    %c-9_i32 = arith.constant -9 : i32
    %180 = vector.broadcast %c-9_i32 : i32 to vector<10x10xi32>
    %181 = arith.addi %179, %180 : vector<10x10xi32>
    %182 = arith.cmpi eq, %127, %181 : vector<10x10xi32>
    %cst_73 = arith.constant 1.000000e+00 : f32
    %cst_74 = arith.constant 0.000000e+00 : f32
    %183 = vector.broadcast %cst_73 : f32 to vector<10x10xf32>
    %184 = vector.broadcast %cst_74 : f32 to vector<10x10xf32>
    %185 = arith.select %182, %183, %184 : vector<10x10xi1>, vector<10x10xf32>
    %cst_75 = arith.constant dense<0.000000e+00> : vector<10x8xf32>
    %186 = tpu.matmul %185, %93, %cst_75 {dimension_numbers = #tpu.dot_dimension_numbers<[1], [0], [0], [1], [0, 0, 1, 1], [], []>} : vector<10x10xf32>, vector<10x8xf32>, vector<10x8xf32> -> vector<10x8xf32>
    %187 = arith.addf %177, %186 : vector<10x8xf32>
    %c4_i32_76 = arith.constant 4 : i32
    %188 = vector.broadcast %c4_i32_76 : i32 to vector<10x10xi32>
    %189 = arith.muli %188, %126 : vector<10x10xi32>
    %c-19_i32 = arith.constant -19 : i32
    %190 = vector.broadcast %c-19_i32 : i32 to vector<10x10xi32>
    %191 = arith.addi %189, %190 : vector<10x10xi32>
    %192 = arith.cmpi eq, %127, %191 : vector<10x10xi32>
    %cst_77 = arith.constant 1.000000e+00 : f32
    %cst_78 = arith.constant 0.000000e+00 : f32
    %193 = vector.broadcast %cst_77 : f32 to vector<10x10xf32>
    %194 = vector.broadcast %cst_78 : f32 to vector<10x10xf32>
    %195 = arith.select %192, %193, %194 : vector<10x10xi1>, vector<10x10xf32>
    %cst_79 = arith.constant dense<0.000000e+00> : vector<10x8xf32>
    %196 = tpu.matmul %195, %109, %cst_79 {dimension_numbers = #tpu.dot_dimension_numbers<[1], [0], [0], [1], [0, 0, 1, 1], [], []>} : vector<10x10xf32>, vector<10x8xf32>, vector<10x8xf32> -> vector<10x8xf32>
    %197 = arith.addf %187, %196 : vector<10x8xf32>
    %c4_i32_80 = arith.constant 4 : i32
    %198 = vector.broadcast %c4_i32_80 : i32 to vector<10x10xi32>
    %199 = arith.muli %198, %126 : vector<10x10xi32>
    %c-29_i32 = arith.constant -29 : i32
    %200 = vector.broadcast %c-29_i32 : i32 to vector<10x10xi32>
    %201 = arith.addi %199, %200 : vector<10x10xi32>
    %202 = arith.cmpi eq, %127, %201 : vector<10x10xi32>
    %cst_81 = arith.constant 1.000000e+00 : f32
    %cst_82 = arith.constant 0.000000e+00 : f32
    %203 = vector.broadcast %cst_81 : f32 to vector<10x10xf32>
    %204 = vector.broadcast %cst_82 : f32 to vector<10x10xf32>
    %205 = arith.select %202, %203, %204 : vector<10x10xi1>, vector<10x10xf32>
    %cst_83 = arith.constant dense<0.000000e+00> : vector<10x8xf32>
    %206 = tpu.matmul %205, %125, %cst_83 {dimension_numbers = #tpu.dot_dimension_numbers<[1], [0], [0], [1], [0, 0, 1, 1], [], []>} : vector<10x10xf32>, vector<10x8xf32>, vector<10x8xf32> -> vector<10x8xf32>
    %207 = arith.addf %197, %206 : vector<10x8xf32>
    %208 = vector.extract_strided_slice %57 {offsets = [8, 0], sizes = [8, 32], strides = [1, 1]} : vector<32x32xf32> to vector<8x32xf32>
    %cst_84 = arith.constant dense<0.000000e+00> : vector<10x32xf32>
    %209 = tpu.matmul %207, %208, %cst_84 {dimension_numbers = #tpu.dot_dimension_numbers<[1], [0], [0], [1], [0, 0, 1, 1], [], []>} : vector<10x8xf32>, vector<8x32xf32>, vector<10x32xf32> -> vector<10x32xf32>
    %210 = arith.addf %168, %209 : vector<10x32xf32>
    %c4_i32_85 = arith.constant 4 : i32
    %211 = vector.broadcast %c4_i32_85 : i32 to vector<10x10xi32>
    %212 = arith.muli %211, %126 : vector<10x10xi32>
    %c2_i32 = arith.constant 2 : i32
    %213 = vector.broadcast %c2_i32 : i32 to vector<10x10xi32>
    %214 = arith.addi %212, %213 : vector<10x10xi32>
    %215 = arith.cmpi eq, %127, %214 : vector<10x10xi32>
    %cst_86 = arith.constant 1.000000e+00 : f32
    %cst_87 = arith.constant 0.000000e+00 : f32
    %216 = vector.broadcast %cst_86 : f32 to vector<10x10xf32>
    %217 = vector.broadcast %cst_87 : f32 to vector<10x10xf32>
    %218 = arith.select %215, %216, %217 : vector<10x10xi1>, vector<10x10xf32>
    %cst_88 = arith.constant dense<0.000000e+00> : vector<10x8xf32>
    %219 = tpu.matmul %218, %77, %cst_88 {dimension_numbers = #tpu.dot_dimension_numbers<[1], [0], [0], [1], [0, 0, 1, 1], [], []>} : vector<10x10xf32>, vector<10x8xf32>, vector<10x8xf32> -> vector<10x8xf32>
    %c4_i32_89 = arith.constant 4 : i32
    %220 = vector.broadcast %c4_i32_89 : i32 to vector<10x10xi32>
    %221 = arith.muli %220, %126 : vector<10x10xi32>
    %c-8_i32 = arith.constant -8 : i32
    %222 = vector.broadcast %c-8_i32 : i32 to vector<10x10xi32>
    %223 = arith.addi %221, %222 : vector<10x10xi32>
    %224 = arith.cmpi eq, %127, %223 : vector<10x10xi32>
    %cst_90 = arith.constant 1.000000e+00 : f32
    %cst_91 = arith.constant 0.000000e+00 : f32
    %225 = vector.broadcast %cst_90 : f32 to vector<10x10xf32>
    %226 = vector.broadcast %cst_91 : f32 to vector<10x10xf32>
    %227 = arith.select %224, %225, %226 : vector<10x10xi1>, vector<10x10xf32>
    %cst_92 = arith.constant dense<0.000000e+00> : vector<10x8xf32>
    %228 = tpu.matmul %227, %93, %cst_92 {dimension_numbers = #tpu.dot_dimension_numbers<[1], [0], [0], [1], [0, 0, 1, 1], [], []>} : vector<10x10xf32>, vector<10x8xf32>, vector<10x8xf32> -> vector<10x8xf32>
    %229 = arith.addf %219, %228 : vector<10x8xf32>
    %c4_i32_93 = arith.constant 4 : i32
    %230 = vector.broadcast %c4_i32_93 : i32 to vector<10x10xi32>
    %231 = arith.muli %230, %126 : vector<10x10xi32>
    %c-18_i32 = arith.constant -18 : i32
    %232 = vector.broadcast %c-18_i32 : i32 to vector<10x10xi32>
    %233 = arith.addi %231, %232 : vector<10x10xi32>
    %234 = arith.cmpi eq, %127, %233 : vector<10x10xi32>
    %cst_94 = arith.constant 1.000000e+00 : f32
    %cst_95 = arith.constant 0.000000e+00 : f32
    %235 = vector.broadcast %cst_94 : f32 to vector<10x10xf32>
    %236 = vector.broadcast %cst_95 : f32 to vector<10x10xf32>
    %237 = arith.select %234, %235, %236 : vector<10x10xi1>, vector<10x10xf32>
    %cst_96 = arith.constant dense<0.000000e+00> : vector<10x8xf32>
    %238 = tpu.matmul %237, %109, %cst_96 {dimension_numbers = #tpu.dot_dimension_numbers<[1], [0], [0], [1], [0, 0, 1, 1], [], []>} : vector<10x10xf32>, vector<10x8xf32>, vector<10x8xf32> -> vector<10x8xf32>
    %239 = arith.addf %229, %238 : vector<10x8xf32>
    %c4_i32_97 = arith.constant 4 : i32
    %240 = vector.broadcast %c4_i32_97 : i32 to vector<10x10xi32>
    %241 = arith.muli %240, %126 : vector<10x10xi32>
    %c-28_i32 = arith.constant -28 : i32
    %242 = vector.broadcast %c-28_i32 : i32 to vector<10x10xi32>
    %243 = arith.addi %241, %242 : vector<10x10xi32>
    %244 = arith.cmpi eq, %127, %243 : vector<10x10xi32>
    %cst_98 = arith.constant 1.000000e+00 : f32
    %cst_99 = arith.constant 0.000000e+00 : f32
    %245 = vector.broadcast %cst_98 : f32 to vector<10x10xf32>
    %246 = vector.broadcast %cst_99 : f32 to vector<10x10xf32>
    %247 = arith.select %244, %245, %246 : vector<10x10xi1>, vector<10x10xf32>
    %cst_100 = arith.constant dense<0.000000e+00> : vector<10x8xf32>
    %248 = tpu.matmul %247, %125, %cst_100 {dimension_numbers = #tpu.dot_dimension_numbers<[1], [0], [0], [1], [0, 0, 1, 1], [], []>} : vector<10x10xf32>, vector<10x8xf32>, vector<10x8xf32> -> vector<10x8xf32>
    %249 = arith.addf %239, %248 : vector<10x8xf32>
    %250 = vector.extract_strided_slice %57 {offsets = [16, 0], sizes = [8, 32], strides = [1, 1]} : vector<32x32xf32> to vector<8x32xf32>
    %cst_101 = arith.constant dense<0.000000e+00> : vector<10x32xf32>
    %251 = tpu.matmul %249, %250, %cst_101 {dimension_numbers = #tpu.dot_dimension_numbers<[1], [0], [0], [1], [0, 0, 1, 1], [], []>} : vector<10x8xf32>, vector<8x32xf32>, vector<10x32xf32> -> vector<10x32xf32>
    %252 = arith.addf %210, %251 : vector<10x32xf32>
    %c4_i32_102 = arith.constant 4 : i32
    %253 = vector.broadcast %c4_i32_102 : i32 to vector<10x10xi32>
    %254 = arith.muli %253, %126 : vector<10x10xi32>
    %c3_i32 = arith.constant 3 : i32
    %255 = vector.broadcast %c3_i32 : i32 to vector<10x10xi32>
    %256 = arith.addi %254, %255 : vector<10x10xi32>
    %257 = arith.cmpi eq, %127, %256 : vector<10x10xi32>
    %cst_103 = arith.constant 1.000000e+00 : f32
    %cst_104 = arith.constant 0.000000e+00 : f32
    %258 = vector.broadcast %cst_103 : f32 to vector<10x10xf32>
    %259 = vector.broadcast %cst_104 : f32 to vector<10x10xf32>
    %260 = arith.select %257, %258, %259 : vector<10x10xi1>, vector<10x10xf32>
    %cst_105 = arith.constant dense<0.000000e+00> : vector<10x8xf32>
    %261 = tpu.matmul %260, %77, %cst_105 {dimension_numbers = #tpu.dot_dimension_numbers<[1], [0], [0], [1], [0, 0, 1, 1], [], []>} : vector<10x10xf32>, vector<10x8xf32>, vector<10x8xf32> -> vector<10x8xf32>
    %c4_i32_106 = arith.constant 4 : i32
    %262 = vector.broadcast %c4_i32_106 : i32 to vector<10x10xi32>
    %263 = arith.muli %262, %126 : vector<10x10xi32>
    %c-7_i32 = arith.constant -7 : i32
    %264 = vector.broadcast %c-7_i32 : i32 to vector<10x10xi32>
    %265 = arith.addi %263, %264 : vector<10x10xi32>
    %266 = arith.cmpi eq, %127, %265 : vector<10x10xi32>
    %cst_107 = arith.constant 1.000000e+00 : f32
    %cst_108 = arith.constant 0.000000e+00 : f32
    %267 = vector.broadcast %cst_107 : f32 to vector<10x10xf32>
    %268 = vector.broadcast %cst_108 : f32 to vector<10x10xf32>
    %269 = arith.select %266, %267, %268 : vector<10x10xi1>, vector<10x10xf32>
    %cst_109 = arith.constant dense<0.000000e+00> : vector<10x8xf32>
    %270 = tpu.matmul %269, %93, %cst_109 {dimension_numbers = #tpu.dot_dimension_numbers<[1], [0], [0], [1], [0, 0, 1, 1], [], []>} : vector<10x10xf32>, vector<10x8xf32>, vector<10x8xf32> -> vector<10x8xf32>
    %271 = arith.addf %261, %270 : vector<10x8xf32>
    %c4_i32_110 = arith.constant 4 : i32
    %272 = vector.broadcast %c4_i32_110 : i32 to vector<10x10xi32>
    %273 = arith.muli %272, %126 : vector<10x10xi32>
    %c-17_i32 = arith.constant -17 : i32
    %274 = vector.broadcast %c-17_i32 : i32 to vector<10x10xi32>
    %275 = arith.addi %273, %274 : vector<10x10xi32>
    %276 = arith.cmpi eq, %127, %275 : vector<10x10xi32>
    %cst_111 = arith.constant 1.000000e+00 : f32
    %cst_112 = arith.constant 0.000000e+00 : f32
    %277 = vector.broadcast %cst_111 : f32 to vector<10x10xf32>
    %278 = vector.broadcast %cst_112 : f32 to vector<10x10xf32>
    %279 = arith.select %276, %277, %278 : vector<10x10xi1>, vector<10x10xf32>
    %cst_113 = arith.constant dense<0.000000e+00> : vector<10x8xf32>
    %280 = tpu.matmul %279, %109, %cst_113 {dimension_numbers = #tpu.dot_dimension_numbers<[1], [0], [0], [1], [0, 0, 1, 1], [], []>} : vector<10x10xf32>, vector<10x8xf32>, vector<10x8xf32> -> vector<10x8xf32>
    %281 = arith.addf %271, %280 : vector<10x8xf32>
    %c4_i32_114 = arith.constant 4 : i32
    %282 = vector.broadcast %c4_i32_114 : i32 to vector<10x10xi32>
    %283 = arith.muli %282, %126 : vector<10x10xi32>
    %c-27_i32 = arith.constant -27 : i32
    %284 = vector.broadcast %c-27_i32 : i32 to vector<10x10xi32>
    %285 = arith.addi %283, %284 : vector<10x10xi32>
    %286 = arith.cmpi eq, %127, %285 : vector<10x10xi32>
    %cst_115 = arith.constant 1.000000e+00 : f32
    %cst_116 = arith.constant 0.000000e+00 : f32
    %287 = vector.broadcast %cst_115 : f32 to vector<10x10xf32>
    %288 = vector.broadcast %cst_116 : f32 to vector<10x10xf32>
    %289 = arith.select %286, %287, %288 : vector<10x10xi1>, vector<10x10xf32>
    %cst_117 = arith.constant dense<0.000000e+00> : vector<10x8xf32>
    %290 = tpu.matmul %289, %125, %cst_117 {dimension_numbers = #tpu.dot_dimension_numbers<[1], [0], [0], [1], [0, 0, 1, 1], [], []>} : vector<10x10xf32>, vector<10x8xf32>, vector<10x8xf32> -> vector<10x8xf32>
    %291 = arith.addf %281, %290 : vector<10x8xf32>
    %292 = vector.extract_strided_slice %57 {offsets = [24, 0], sizes = [8, 32], strides = [1, 1]} : vector<32x32xf32> to vector<8x32xf32>
    %cst_118 = arith.constant dense<0.000000e+00> : vector<10x32xf32>
    %293 = tpu.matmul %291, %292, %cst_118 {dimension_numbers = #tpu.dot_dimension_numbers<[1], [0], [0], [1], [0, 0, 1, 1], [], []>} : vector<10x8xf32>, vector<8x32xf32>, vector<10x32xf32> -> vector<10x32xf32>
    %294 = arith.addf %252, %293 : vector<10x32xf32>
    %295 = vector.broadcast %58 : vector<1x32xf32> to vector<10x32xf32>
    %296 = arith.addf %294, %295 : vector<10x32xf32>
    %297 = arith.addf %49, %296 : vector<10x32xf32>
    %c112 = arith.constant 112 : index
    %c0_119 = arith.constant 0 : index
    %298 = vector.load %arg4[%c112, %c0_119] : memref<448x128xf32, #tpu.memory_space<vmem>>, vector<1x32xf32>
    %c120 = arith.constant 120 : index
    %c0_120 = arith.constant 0 : index
    %299 = vector.load %arg4[%c120, %c0_120] : memref<448x128xf32, #tpu.memory_space<vmem>>, vector<1x32xf32>
    %cst_121 = arith.constant dense<0.000000e+00> : vector<10xf32>
    %300 = vector.multi_reduction <add>, %297, %cst_121 [1] : vector<10x32xf32> to vector<10xf32>
    %301 = vector.shape_cast %300 : vector<10xf32> to vector<10x1xf32>
    %cst_122 = arith.constant 3.200000e+01 : f32
    %302 = vector.broadcast %cst_122 : f32 to vector<10x1xf32>
    %303 = arith.divf %301, %302 : vector<10x1xf32>
    %304 = vector.broadcast %303 : vector<10x1xf32> to vector<10x32xf32>
    %305 = arith.subf %297, %304 : vector<10x32xf32>
    %306 = arith.mulf %305, %305 : vector<10x32xf32>
    %cst_123 = arith.constant dense<0.000000e+00> : vector<10xf32>
    %307 = vector.multi_reduction <add>, %306, %cst_123 [1] : vector<10x32xf32> to vector<10xf32>
    %308 = vector.shape_cast %307 : vector<10xf32> to vector<10x1xf32>
    %cst_124 = arith.constant 3.200000e+01 : f32
    %309 = vector.broadcast %cst_124 : f32 to vector<10x1xf32>
    %310 = arith.divf %308, %309 : vector<10x1xf32>
    %311 = vector.broadcast %303 : vector<10x1xf32> to vector<10x32xf32>
    %312 = arith.subf %297, %311 : vector<10x32xf32>
    %cst_125 = arith.constant 9.99999974E-6 : f32
    %313 = vector.broadcast %cst_125 : f32 to vector<10x1xf32>
    %314 = arith.addf %310, %313 : vector<10x1xf32>
    %315 = math.rsqrt %314 : vector<10x1xf32>
    %316 = vector.broadcast %315 : vector<10x1xf32> to vector<10x32xf32>
    %317 = arith.mulf %312, %316 : vector<10x32xf32>
    %318 = vector.broadcast %298 : vector<1x32xf32> to vector<10x32xf32>
    %319 = arith.mulf %317, %318 : vector<10x32xf32>
    %320 = vector.broadcast %299 : vector<1x32xf32> to vector<10x32xf32>
    %321 = arith.addf %319, %320 : vector<10x32xf32>
    %c128 = arith.constant 128 : index
    %c0_126 = arith.constant 0 : index
    %322 = vector.load %arg4[%c128, %c0_126] : memref<448x128xf32, #tpu.memory_space<vmem>>, vector<32x32xf32>
    %c160 = arith.constant 160 : index
    %c0_127 = arith.constant 0 : index
    %323 = vector.load %arg4[%c160, %c0_127] : memref<448x128xf32, #tpu.memory_space<vmem>>, vector<1x32xf32>
    %c168 = arith.constant 168 : index
    %c0_128 = arith.constant 0 : index
    %324 = vector.load %arg4[%c168, %c0_128] : memref<448x128xf32, #tpu.memory_space<vmem>>, vector<32x64xf32>
    %c200 = arith.constant 200 : index
    %c0_129 = arith.constant 0 : index
    %325 = vector.load %arg4[%c200, %c0_129] : memref<448x128xf32, #tpu.memory_space<vmem>>, vector<1x64xf32>
    %c208 = arith.constant 208 : index
    %c0_130 = arith.constant 0 : index
    %326 = vector.load %arg4[%c208, %c0_130] : memref<448x128xf32, #tpu.memory_space<vmem>>, vector<32x32xf32>
    %c240 = arith.constant 240 : index
    %c0_131 = arith.constant 0 : index
    %327 = vector.load %arg4[%c240, %c0_131] : memref<448x128xf32, #tpu.memory_space<vmem>>, vector<1x32xf32>
    %cst_132 = arith.constant dense<0.000000e+00> : vector<10x32xf32>
    %328 = tpu.matmul %321, %322, %cst_132 {dimension_numbers = #tpu.dot_dimension_numbers<[1], [0], [0], [1], [0, 0, 1, 1], [], []>} : vector<10x32xf32>, vector<32x32xf32>, vector<10x32xf32> -> vector<10x32xf32>
    %329 = vector.broadcast %323 : vector<1x32xf32> to vector<10x32xf32>
    %330 = arith.addf %328, %329 : vector<10x32xf32>
    %cst_133 = arith.constant dense<0.000000e+00> : vector<6x64xf32>
    %331 = tpu.matmul %51, %324, %cst_133 {dimension_numbers = #tpu.dot_dimension_numbers<[1], [0], [0], [1], [0, 0, 1, 1], [], []>} : vector<6x32xf32>, vector<32x64xf32>, vector<6x64xf32> -> vector<6x64xf32>
    %332 = vector.broadcast %325 : vector<1x64xf32> to vector<6x64xf32>
    %333 = arith.addf %331, %332 : vector<6x64xf32>
    %334 = vector.extract_strided_slice %333 {offsets = [0, 0], sizes = [6, 32], strides = [1, 1]} : vector<6x64xf32> to vector<6x32xf32>
    %335 = vector.extract_strided_slice %333 {offsets = [0, 32], sizes = [6, 32], strides = [1, 1]} : vector<6x64xf32> to vector<6x32xf32>
    %336 = vector.extract_strided_slice %330 {offsets = [0, 0], sizes = [10, 8], strides = [1, 1]} : vector<10x32xf32> to vector<10x8xf32>
    %337 = vector.extract_strided_slice %334 {offsets = [0, 0], sizes = [6, 8], strides = [1, 1]} : vector<6x32xf32> to vector<6x8xf32>
    %338 = vector.extract_strided_slice %335 {offsets = [0, 0], sizes = [6, 8], strides = [1, 1]} : vector<6x32xf32> to vector<6x8xf32>
    %cst_134 = arith.constant dense<0.000000e+00> : vector<10x6xf32>
    %339 = tpu.matmul %336, %337, %cst_134 {dimension_numbers = #tpu.dot_dimension_numbers<[1], [1], [0], [0], [0, 0, 1, 0], [], []>} : vector<10x8xf32>, vector<6x8xf32>, vector<10x6xf32> -> vector<10x6xf32>
    %cst_135 = arith.constant dense<0xFF800000> : vector<10xf32>
    %340 = vector.multi_reduction <maximumf>, %339, %cst_135 [1] : vector<10x6xf32> to vector<10xf32>
    %341 = vector.shape_cast %340 : vector<10xf32> to vector<10x1xf32>
    %342 = vector.broadcast %341 : vector<10x1xf32> to vector<10x6xf32>
    %343 = arith.subf %339, %342 : vector<10x6xf32>
    %344 = math.exp %343 : vector<10x6xf32>
    %cst_136 = arith.constant dense<0.000000e+00> : vector<10xf32>
    %345 = vector.multi_reduction <add>, %344, %cst_136 [1] : vector<10x6xf32> to vector<10xf32>
    %346 = vector.shape_cast %345 : vector<10xf32> to vector<10x1xf32>
    %347 = vector.broadcast %346 : vector<10x1xf32> to vector<10x6xf32>
    %348 = arith.divf %344, %347 : vector<10x6xf32>
    %cst_137 = arith.constant dense<0.000000e+00> : vector<10x8xf32>
    %349 = tpu.matmul %348, %338, %cst_137 {dimension_numbers = #tpu.dot_dimension_numbers<[1], [0], [0], [1], [0, 0, 1, 1], [], []>} : vector<10x6xf32>, vector<6x8xf32>, vector<10x8xf32> -> vector<10x8xf32>
    %350 = vector.extract_strided_slice %330 {offsets = [0, 8], sizes = [10, 8], strides = [1, 1]} : vector<10x32xf32> to vector<10x8xf32>
    %351 = vector.extract_strided_slice %334 {offsets = [0, 8], sizes = [6, 8], strides = [1, 1]} : vector<6x32xf32> to vector<6x8xf32>
    %352 = vector.extract_strided_slice %335 {offsets = [0, 8], sizes = [6, 8], strides = [1, 1]} : vector<6x32xf32> to vector<6x8xf32>
    %cst_138 = arith.constant dense<0.000000e+00> : vector<10x6xf32>
    %353 = tpu.matmul %350, %351, %cst_138 {dimension_numbers = #tpu.dot_dimension_numbers<[1], [1], [0], [0], [0, 0, 1, 0], [], []>} : vector<10x8xf32>, vector<6x8xf32>, vector<10x6xf32> -> vector<10x6xf32>
    %cst_139 = arith.constant dense<0xFF800000> : vector<10xf32>
    %354 = vector.multi_reduction <maximumf>, %353, %cst_139 [1] : vector<10x6xf32> to vector<10xf32>
    %355 = vector.shape_cast %354 : vector<10xf32> to vector<10x1xf32>
    %356 = vector.broadcast %355 : vector<10x1xf32> to vector<10x6xf32>
    %357 = arith.subf %353, %356 : vector<10x6xf32>
    %358 = math.exp %357 : vector<10x6xf32>
    %cst_140 = arith.constant dense<0.000000e+00> : vector<10xf32>
    %359 = vector.multi_reduction <add>, %358, %cst_140 [1] : vector<10x6xf32> to vector<10xf32>
    %360 = vector.shape_cast %359 : vector<10xf32> to vector<10x1xf32>
    %361 = vector.broadcast %360 : vector<10x1xf32> to vector<10x6xf32>
    %362 = arith.divf %358, %361 : vector<10x6xf32>
    %cst_141 = arith.constant dense<0.000000e+00> : vector<10x8xf32>
    %363 = tpu.matmul %362, %352, %cst_141 {dimension_numbers = #tpu.dot_dimension_numbers<[1], [0], [0], [1], [0, 0, 1, 1], [], []>} : vector<10x6xf32>, vector<6x8xf32>, vector<10x8xf32> -> vector<10x8xf32>
    %364 = vector.extract_strided_slice %330 {offsets = [0, 16], sizes = [10, 8], strides = [1, 1]} : vector<10x32xf32> to vector<10x8xf32>
    %365 = vector.extract_strided_slice %334 {offsets = [0, 16], sizes = [6, 8], strides = [1, 1]} : vector<6x32xf32> to vector<6x8xf32>
    %366 = vector.extract_strided_slice %335 {offsets = [0, 16], sizes = [6, 8], strides = [1, 1]} : vector<6x32xf32> to vector<6x8xf32>
    %cst_142 = arith.constant dense<0.000000e+00> : vector<10x6xf32>
    %367 = tpu.matmul %364, %365, %cst_142 {dimension_numbers = #tpu.dot_dimension_numbers<[1], [1], [0], [0], [0, 0, 1, 0], [], []>} : vector<10x8xf32>, vector<6x8xf32>, vector<10x6xf32> -> vector<10x6xf32>
    %cst_143 = arith.constant dense<0xFF800000> : vector<10xf32>
    %368 = vector.multi_reduction <maximumf>, %367, %cst_143 [1] : vector<10x6xf32> to vector<10xf32>
    %369 = vector.shape_cast %368 : vector<10xf32> to vector<10x1xf32>
    %370 = vector.broadcast %369 : vector<10x1xf32> to vector<10x6xf32>
    %371 = arith.subf %367, %370 : vector<10x6xf32>
    %372 = math.exp %371 : vector<10x6xf32>
    %cst_144 = arith.constant dense<0.000000e+00> : vector<10xf32>
    %373 = vector.multi_reduction <add>, %372, %cst_144 [1] : vector<10x6xf32> to vector<10xf32>
    %374 = vector.shape_cast %373 : vector<10xf32> to vector<10x1xf32>
    %375 = vector.broadcast %374 : vector<10x1xf32> to vector<10x6xf32>
    %376 = arith.divf %372, %375 : vector<10x6xf32>
    %cst_145 = arith.constant dense<0.000000e+00> : vector<10x8xf32>
    %377 = tpu.matmul %376, %366, %cst_145 {dimension_numbers = #tpu.dot_dimension_numbers<[1], [0], [0], [1], [0, 0, 1, 1], [], []>} : vector<10x6xf32>, vector<6x8xf32>, vector<10x8xf32> -> vector<10x8xf32>
    %378 = vector.extract_strided_slice %330 {offsets = [0, 24], sizes = [10, 8], strides = [1, 1]} : vector<10x32xf32> to vector<10x8xf32>
    %379 = vector.extract_strided_slice %334 {offsets = [0, 24], sizes = [6, 8], strides = [1, 1]} : vector<6x32xf32> to vector<6x8xf32>
    %380 = vector.extract_strided_slice %335 {offsets = [0, 24], sizes = [6, 8], strides = [1, 1]} : vector<6x32xf32> to vector<6x8xf32>
    %cst_146 = arith.constant dense<0.000000e+00> : vector<10x6xf32>
    %381 = tpu.matmul %378, %379, %cst_146 {dimension_numbers = #tpu.dot_dimension_numbers<[1], [1], [0], [0], [0, 0, 1, 0], [], []>} : vector<10x8xf32>, vector<6x8xf32>, vector<10x6xf32> -> vector<10x6xf32>
    %cst_147 = arith.constant dense<0xFF800000> : vector<10xf32>
    %382 = vector.multi_reduction <maximumf>, %381, %cst_147 [1] : vector<10x6xf32> to vector<10xf32>
    %383 = vector.shape_cast %382 : vector<10xf32> to vector<10x1xf32>
    %384 = vector.broadcast %383 : vector<10x1xf32> to vector<10x6xf32>
    %385 = arith.subf %381, %384 : vector<10x6xf32>
    %386 = math.exp %385 : vector<10x6xf32>
    %cst_148 = arith.constant dense<0.000000e+00> : vector<10xf32>
    %387 = vector.multi_reduction <add>, %386, %cst_148 [1] : vector<10x6xf32> to vector<10xf32>
    %388 = vector.shape_cast %387 : vector<10xf32> to vector<10x1xf32>
    %389 = vector.broadcast %388 : vector<10x1xf32> to vector<10x6xf32>
    %390 = arith.divf %386, %389 : vector<10x6xf32>
    %cst_149 = arith.constant dense<0.000000e+00> : vector<10x8xf32>
    %391 = tpu.matmul %390, %380, %cst_149 {dimension_numbers = #tpu.dot_dimension_numbers<[1], [0], [0], [1], [0, 0, 1, 1], [], []>} : vector<10x6xf32>, vector<6x8xf32>, vector<10x8xf32> -> vector<10x8xf32>
    %392 = tpu.concatenate %349, %363, %377, %391 in 1 : vector<10x8xf32>, vector<10x8xf32>, vector<10x8xf32>, vector<10x8xf32> -> vector<10x32xf32>
    %cst_150 = arith.constant dense<0.000000e+00> : vector<10x32xf32>
    %393 = tpu.matmul %392, %326, %cst_150 {dimension_numbers = #tpu.dot_dimension_numbers<[1], [0], [0], [1], [0, 0, 1, 1], [], []>} : vector<10x32xf32>, vector<32x32xf32>, vector<10x32xf32> -> vector<10x32xf32>
    %394 = vector.broadcast %327 : vector<1x32xf32> to vector<10x32xf32>
    %395 = arith.addf %393, %394 : vector<10x32xf32>
    %396 = arith.addf %321, %395 : vector<10x32xf32>
    %c248 = arith.constant 248 : index
    %c0_151 = arith.constant 0 : index
    %397 = vector.load %arg4[%c248, %c0_151] : memref<448x128xf32, #tpu.memory_space<vmem>>, vector<1x32xf32>
    %c256 = arith.constant 256 : index
    %c0_152 = arith.constant 0 : index
    %398 = vector.load %arg4[%c256, %c0_152] : memref<448x128xf32, #tpu.memory_space<vmem>>, vector<1x32xf32>
    %cst_153 = arith.constant dense<0.000000e+00> : vector<10xf32>
    %399 = vector.multi_reduction <add>, %396, %cst_153 [1] : vector<10x32xf32> to vector<10xf32>
    %400 = vector.shape_cast %399 : vector<10xf32> to vector<10x1xf32>
    %cst_154 = arith.constant 3.200000e+01 : f32
    %401 = vector.broadcast %cst_154 : f32 to vector<10x1xf32>
    %402 = arith.divf %400, %401 : vector<10x1xf32>
    %403 = vector.broadcast %402 : vector<10x1xf32> to vector<10x32xf32>
    %404 = arith.subf %396, %403 : vector<10x32xf32>
    %405 = arith.mulf %404, %404 : vector<10x32xf32>
    %cst_155 = arith.constant dense<0.000000e+00> : vector<10xf32>
    %406 = vector.multi_reduction <add>, %405, %cst_155 [1] : vector<10x32xf32> to vector<10xf32>
    %407 = vector.shape_cast %406 : vector<10xf32> to vector<10x1xf32>
    %cst_156 = arith.constant 3.200000e+01 : f32
    %408 = vector.broadcast %cst_156 : f32 to vector<10x1xf32>
    %409 = arith.divf %407, %408 : vector<10x1xf32>
    %410 = vector.broadcast %402 : vector<10x1xf32> to vector<10x32xf32>
    %411 = arith.subf %396, %410 : vector<10x32xf32>
    %cst_157 = arith.constant 9.99999974E-6 : f32
    %412 = vector.broadcast %cst_157 : f32 to vector<10x1xf32>
    %413 = arith.addf %409, %412 : vector<10x1xf32>
    %414 = math.rsqrt %413 : vector<10x1xf32>
    %415 = vector.broadcast %414 : vector<10x1xf32> to vector<10x32xf32>
    %416 = arith.mulf %411, %415 : vector<10x32xf32>
    %417 = vector.broadcast %397 : vector<1x32xf32> to vector<10x32xf32>
    %418 = arith.mulf %416, %417 : vector<10x32xf32>
    %419 = vector.broadcast %398 : vector<1x32xf32> to vector<10x32xf32>
    %420 = arith.addf %418, %419 : vector<10x32xf32>
    %c264 = arith.constant 264 : index
    %c0_158 = arith.constant 0 : index
    %421 = vector.load %arg4[%c264, %c0_158] : memref<448x128xf32, #tpu.memory_space<vmem>>, vector<32x64xf32>
    %cst_159 = arith.constant dense<0.000000e+00> : vector<10x64xf32>
    %422 = tpu.matmul %420, %421, %cst_159 {dimension_numbers = #tpu.dot_dimension_numbers<[1], [0], [0], [1], [0, 0, 1, 1], [], []>} : vector<10x32xf32>, vector<32x64xf32>, vector<10x64xf32> -> vector<10x64xf32>
    %c296 = arith.constant 296 : index
    %c0_160 = arith.constant 0 : index
    %423 = vector.load %arg4[%c296, %c0_160] : memref<448x128xf32, #tpu.memory_space<vmem>>, vector<1x64xf32>
    %424 = vector.broadcast %423 : vector<1x64xf32> to vector<10x64xf32>
    %425 = arith.addf %422, %424 : vector<10x64xf32>
    %cst_161 = arith.constant 5.000000e-01 : f32
    %426 = vector.broadcast %cst_161 : f32 to vector<10x64xf32>
    %427 = arith.mulf %426, %425 : vector<10x64xf32>
    %cst_162 = arith.constant 0.707106769 : f32
    %428 = vector.broadcast %cst_162 : f32 to vector<10x64xf32>
    %429 = arith.mulf %425, %428 : vector<10x64xf32>
    %cst_163 = arith.constant 0.000000e+00 : f32
    %430 = vector.broadcast %cst_163 : f32 to vector<10x64xf32>
    %431 = arith.cmpf oge, %429, %430 : vector<10x64xf32>
    %cst_164 = arith.constant 1.000000e+00 : f32
    %cst_165 = arith.constant -1.000000e+00 : f32
    %432 = vector.broadcast %cst_164 : f32 to vector<10x64xf32>
    %433 = vector.broadcast %cst_165 : f32 to vector<10x64xf32>
    %434 = arith.select %431, %432, %433 : vector<10x64xi1>, vector<10x64xf32>
    %435 = math.absf %429 : vector<10x64xf32>
    %cst_166 = arith.constant 0.327591091 : f32
    %436 = vector.broadcast %cst_166 : f32 to vector<10x64xf32>
    %437 = arith.mulf %436, %435 : vector<10x64xf32>
    %cst_167 = arith.constant 1.000000e+00 : f32
    %438 = vector.broadcast %cst_167 : f32 to vector<10x64xf32>
    %439 = arith.addf %438, %437 : vector<10x64xf32>
    %cst_168 = arith.constant 1.000000e+00 : f32
    %440 = vector.broadcast %cst_168 : f32 to vector<10x64xf32>
    %441 = arith.divf %440, %439 : vector<10x64xf32>
    %cst_169 = arith.constant 1.06140542 : f32
    %442 = vector.broadcast %cst_169 : f32 to vector<10x64xf32>
    %443 = arith.mulf %442, %441 : vector<10x64xf32>
    %cst_170 = arith.constant -1.45315206 : f32
    %444 = vector.broadcast %cst_170 : f32 to vector<10x64xf32>
    %445 = arith.addf %443, %444 : vector<10x64xf32>
    %446 = arith.mulf %445, %441 : vector<10x64xf32>
    %cst_171 = arith.constant 1.42141378 : f32
    %447 = vector.broadcast %cst_171 : f32 to vector<10x64xf32>
    %448 = arith.addf %446, %447 : vector<10x64xf32>
    %449 = arith.mulf %448, %441 : vector<10x64xf32>
    %cst_172 = arith.constant -0.284496725 : f32
    %450 = vector.broadcast %cst_172 : f32 to vector<10x64xf32>
    %451 = arith.addf %449, %450 : vector<10x64xf32>
    %452 = arith.mulf %451, %441 : vector<10x64xf32>
    %cst_173 = arith.constant 0.254829586 : f32
    %453 = vector.broadcast %cst_173 : f32 to vector<10x64xf32>
    %454 = arith.addf %452, %453 : vector<10x64xf32>
    %455 = arith.mulf %454, %441 : vector<10x64xf32>
    %cst_174 = arith.constant 0.000000e+00 : f32
    %456 = vector.broadcast %cst_174 : f32 to vector<10x64xf32>
    %457 = arith.subf %456, %435 : vector<10x64xf32>
    %458 = arith.mulf %457, %435 : vector<10x64xf32>
    %459 = math.exp %458 : vector<10x64xf32>
    %460 = arith.mulf %455, %459 : vector<10x64xf32>
    %cst_175 = arith.constant 1.000000e+00 : f32
    %461 = vector.broadcast %cst_175 : f32 to vector<10x64xf32>
    %462 = arith.subf %461, %460 : vector<10x64xf32>
    %463 = arith.mulf %434, %462 : vector<10x64xf32>
    %cst_176 = arith.constant 1.000000e+00 : f32
    %464 = vector.broadcast %cst_176 : f32 to vector<10x64xf32>
    %465 = arith.addf %464, %463 : vector<10x64xf32>
    %466 = arith.mulf %427, %465 : vector<10x64xf32>
    %c304 = arith.constant 304 : index
    %c0_177 = arith.constant 0 : index
    %467 = vector.load %arg4[%c304, %c0_177] : memref<448x128xf32, #tpu.memory_space<vmem>>, vector<64x32xf32>
    %cst_178 = arith.constant dense<0.000000e+00> : vector<10x32xf32>
    %468 = tpu.matmul %466, %467, %cst_178 {dimension_numbers = #tpu.dot_dimension_numbers<[1], [0], [0], [1], [0, 0, 1, 1], [], []>} : vector<10x64xf32>, vector<64x32xf32>, vector<10x32xf32> -> vector<10x32xf32>
    %c368 = arith.constant 368 : index
    %c0_179 = arith.constant 0 : index
    %469 = vector.load %arg4[%c368, %c0_179] : memref<448x128xf32, #tpu.memory_space<vmem>>, vector<1x32xf32>
    %470 = vector.broadcast %469 : vector<1x32xf32> to vector<10x32xf32>
    %471 = arith.addf %468, %470 : vector<10x32xf32>
    %472 = arith.addf %420, %471 : vector<10x32xf32>
    %c376 = arith.constant 376 : index
    %c0_180 = arith.constant 0 : index
    %473 = vector.load %arg4[%c376, %c0_180] : memref<448x128xf32, #tpu.memory_space<vmem>>, vector<1x32xf32>
    %c384 = arith.constant 384 : index
    %c0_181 = arith.constant 0 : index
    %474 = vector.load %arg4[%c384, %c0_181] : memref<448x128xf32, #tpu.memory_space<vmem>>, vector<1x32xf32>
    %cst_182 = arith.constant dense<0.000000e+00> : vector<10xf32>
    %475 = vector.multi_reduction <add>, %472, %cst_182 [1] : vector<10x32xf32> to vector<10xf32>
    %476 = vector.shape_cast %475 : vector<10xf32> to vector<10x1xf32>
    %cst_183 = arith.constant 3.200000e+01 : f32
    %477 = vector.broadcast %cst_183 : f32 to vector<10x1xf32>
    %478 = arith.divf %476, %477 : vector<10x1xf32>
    %479 = vector.broadcast %478 : vector<10x1xf32> to vector<10x32xf32>
    %480 = arith.subf %472, %479 : vector<10x32xf32>
    %481 = arith.mulf %480, %480 : vector<10x32xf32>
    %cst_184 = arith.constant dense<0.000000e+00> : vector<10xf32>
    %482 = vector.multi_reduction <add>, %481, %cst_184 [1] : vector<10x32xf32> to vector<10xf32>
    %483 = vector.shape_cast %482 : vector<10xf32> to vector<10x1xf32>
    %cst_185 = arith.constant 3.200000e+01 : f32
    %484 = vector.broadcast %cst_185 : f32 to vector<10x1xf32>
    %485 = arith.divf %483, %484 : vector<10x1xf32>
    %486 = vector.broadcast %478 : vector<10x1xf32> to vector<10x32xf32>
    %487 = arith.subf %472, %486 : vector<10x32xf32>
    %cst_186 = arith.constant 9.99999974E-6 : f32
    %488 = vector.broadcast %cst_186 : f32 to vector<10x1xf32>
    %489 = arith.addf %485, %488 : vector<10x1xf32>
    %490 = math.rsqrt %489 : vector<10x1xf32>
    %491 = vector.broadcast %490 : vector<10x1xf32> to vector<10x32xf32>
    %492 = arith.mulf %487, %491 : vector<10x32xf32>
    %493 = vector.broadcast %473 : vector<1x32xf32> to vector<10x32xf32>
    %494 = arith.mulf %492, %493 : vector<10x32xf32>
    %495 = vector.broadcast %474 : vector<1x32xf32> to vector<10x32xf32>
    %496 = arith.addf %494, %495 : vector<10x32xf32>
    %c392 = arith.constant 392 : index
    %c0_187 = arith.constant 0 : index
    %497 = vector.load %arg4[%c392, %c0_187] : memref<448x128xf32, #tpu.memory_space<vmem>>, vector<1x32xf32>
    %c400 = arith.constant 400 : index
    %c0_188 = arith.constant 0 : index
    %498 = vector.load %arg4[%c400, %c0_188] : memref<448x128xf32, #tpu.memory_space<vmem>>, vector<1x32xf32>
    %cst_189 = arith.constant dense<0.000000e+00> : vector<10xf32>
    %499 = vector.multi_reduction <add>, %496, %cst_189 [1] : vector<10x32xf32> to vector<10xf32>
    %500 = vector.shape_cast %499 : vector<10xf32> to vector<10x1xf32>
    %cst_190 = arith.constant 3.200000e+01 : f32
    %501 = vector.broadcast %cst_190 : f32 to vector<10x1xf32>
    %502 = arith.divf %500, %501 : vector<10x1xf32>
    %503 = vector.broadcast %502 : vector<10x1xf32> to vector<10x32xf32>
    %504 = arith.subf %496, %503 : vector<10x32xf32>
    %505 = arith.mulf %504, %504 : vector<10x32xf32>
    %cst_191 = arith.constant dense<0.000000e+00> : vector<10xf32>
    %506 = vector.multi_reduction <add>, %505, %cst_191 [1] : vector<10x32xf32> to vector<10xf32>
    %507 = vector.shape_cast %506 : vector<10xf32> to vector<10x1xf32>
    %cst_192 = arith.constant 3.200000e+01 : f32
    %508 = vector.broadcast %cst_192 : f32 to vector<10x1xf32>
    %509 = arith.divf %507, %508 : vector<10x1xf32>
    %510 = vector.broadcast %502 : vector<10x1xf32> to vector<10x32xf32>
    %511 = arith.subf %496, %510 : vector<10x32xf32>
    %cst_193 = arith.constant 9.99999974E-6 : f32
    %512 = vector.broadcast %cst_193 : f32 to vector<10x1xf32>
    %513 = arith.addf %509, %512 : vector<10x1xf32>
    %514 = math.rsqrt %513 : vector<10x1xf32>
    %515 = vector.broadcast %514 : vector<10x1xf32> to vector<10x32xf32>
    %516 = arith.mulf %511, %515 : vector<10x32xf32>
    %517 = vector.broadcast %497 : vector<1x32xf32> to vector<10x32xf32>
    %518 = arith.mulf %516, %517 : vector<10x32xf32>
    %519 = vector.broadcast %498 : vector<1x32xf32> to vector<10x32xf32>
    %520 = arith.addf %518, %519 : vector<10x32xf32>
    %c408 = arith.constant 408 : index
    %c0_194 = arith.constant 0 : index
    %521 = vector.load %arg4[%c408, %c0_194] : memref<448x128xf32, #tpu.memory_space<vmem>>, vector<32x128xf32>
    %cst_195 = arith.constant dense<0.000000e+00> : vector<10x128xf32>
    %522 = tpu.matmul %520, %521, %cst_195 {dimension_numbers = #tpu.dot_dimension_numbers<[1], [0], [0], [1], [0, 0, 1, 1], [], []>} : vector<10x32xf32>, vector<32x128xf32>, vector<10x128xf32> -> vector<10x128xf32>
    %c440 = arith.constant 440 : index
    %c0_196 = arith.constant 0 : index
    %523 = vector.load %arg4[%c440, %c0_196] : memref<448x128xf32, #tpu.memory_space<vmem>>, vector<1x128xf32>
    %524 = vector.broadcast %523 : vector<1x128xf32> to vector<10x128xf32>
    %525 = arith.addf %522, %524 : vector<10x128xf32>
    %c0_197 = arith.constant 0 : index
    %c0_198 = arith.constant 0 : index
    %c0_199 = arith.constant 0 : index
    %526 = vector.load %arg5[%c0_197, %c0_198, %c0_199] : memref<1x10x128xf32, #tpu.memory_space<vmem>>, vector<1x10x128xf32>
    %527 = vector.shape_cast %526 : vector<1x10x128xf32> to vector<10x128xf32>
    %528 = vector.shape_cast %525 : vector<10x128xf32> to vector<1x10x128xf32>
    tpu.vector_store %arg5[%c0_197, %c0_198, %c0_199], %528 {strides = array<i32>} : memref<1x10x128xf32, #tpu.memory_space<vmem>>, vector<1x10x128xf32>,
    return
  }
  func.func @transform_0(%arg0: i32) -> (i32, i32, i32) {
    %c0_i32 = arith.constant 0 : i32
    %c0_i32_0 = arith.constant 0 : i32
    %c0_i32_1 = arith.constant 0 : i32
    return %arg0, %c0_i32, %c0_i32_0 : i32, i32, i32
  }
  func.func @transform_1(%arg0: i32) -> (i32, i32, i32) {
    %c0_i32 = arith.constant 0 : i32
    %c0_i32_0 = arith.constant 0 : i32
    %c0_i32_1 = arith.constant 0 : i32
    return %arg0, %c0_i32, %c0_i32_0 : i32, i32, i32
  }
  func.func @transform_2(%arg0: i32) -> (i32, i32, i32) {
    %c0_i32 = arith.constant 0 : i32
    %c0_i32_0 = arith.constant 0 : i32
    %c0_i32_1 = arith.constant 0 : i32
    return %arg0, %c0_i32, %c0_i32_0 : i32, i32, i32
  }
  func.func @transform_3(%arg0: i32) -> (i32, i32) {
    %c0_i32 = arith.constant 0 : i32
    %c0_i32_0 = arith.constant 0 : i32
    %c0_i32_1 = arith.constant 0 : i32
    return %c0_i32, %c0_i32_0 : i32, i32
  }
  func.func @transform_4(%arg0: i32) -> (i32, i32, i32) {
    %c0_i32 = arith.constant 0 : i32
    %c0_i32_0 = arith.constant 0 : i32
    %c0_i32_1 = arith.constant 0 : i32
    return %arg0, %c0_i32, %c0_i32_0 : i32, i32, i32
  }
}

</mosaic_0001>

<llo_original>
// kernel: informer_forward.3
$region0: #{informer_forward.3}
  #allocation0 [shape = 'u32[]', space=smem, size = 0x4, offset = 0x4, fixed_abs, tag = 'smem constant byte address 0x4 - core index']
  #allocation1 [shape = 'u32[72,128]{1,0:T(1,128)}', space=vmem, size = 0x9000, scoped, tag = 'internal scratch']
  %s0 = inlined_call_operand.vmem [shape: f32[2,10,4], index: 0, kind: input, shape index: {}]
  %s1 = inlined_call_operand.vmem [shape: f32[2,10,32], index: 1, kind: input, shape index: {}]
  %s2 = inlined_call_operand.vmem [shape: f32[2,6,32], index: 2, kind: input, shape index: {}]
  %s3 = inlined_call_operand.vmem [shape: f32[448,128], index: 3, kind: input, shape index: {}]
  %s4 = inlined_call_operand.vmem [shape: f32[2,10,128], index: 4, kind: output, shape index: {}]
  %s5 = sld [smem:[#allocation0]]
  $region49: #{informer_forward.3} parent=0
    _
  %s7 = ssub.s32 1, %s5
  %s8 = scalar_select 0, %s7, %s5
  loop: start=0, step=1, limit=4
  $region2: #{informer_forward.3} parent=0 // loop_pre_header
    _
  $region3: #{informer_forward.3} parent=0 // loop_header
    %s10 = sphi 0, %s14
    %p11 = scmp.ge.s32.totalorder %s10, 4
    %s20 = sphi 0, %s22
    %s23 = sphi 0, %s20
    %s24 = sphi 0, %s23
    %s40 = sphi 0, %s24
    %s46 = sphi 0, %s48
    %s49 = sphi 0, %s46
    %s50 = sphi 0, %s49
    %s66 = sphi 0, %s50
    %s72 = sphi 0, %s74
    %s75 = sphi 0, %s72
    %s76 = sphi 0, %s75
    %s92 = sphi 0, %s76
    %s96 = sphi 0, %s96
    %s98 = sphi 0, %s96
    %s99 = sphi 0, %s98
    %s113 = sphi 0, %s99
    %s119 = sphi 0, %s121
    %s122 = sphi 0, %s119
    %s123 = sphi 0, %s122
    %s139 = sphi 0, %s123
  $region4: #{informer_forward.3} parent=0 // loop_header_branch
    %13 = sbr.rel (%p11) target = $region8
  $region5: #{informer_forward.3} parent=0 // loop_body
    %s15 = ssub.s32 %s10, 1
    %s16 = ssub.s32 %s10, 2
    %s17 = sadd.s32 %s10, 1
    %s18 = ssub.s32 %s10, %s17
    %p19 = scmp.eq.s32.totalorder %s18, 0
    %s21 = sadd.s32 %s20, 1
    %s22 = scalar_select %p19, %s20, %s21
    %p25 = pneg %p19
    %p26 = scmp.eq.s32.totalorder %s10, 1
    %p27 = por %p25, %p26
    %p28 = scmp.ne.s32.totalorder %s20, %s23
    %p29 = scmp.eq.s32.totalorder %s10, 0
    %p30 = por %p28, %p29
    %p31 = scmp.ne.s32.totalorder %s20, %s23
    %p32 = scmp.eq.s32.totalorder %s15, 1
    %p33 = por %p31, %p32
    %p34 = scmp.ne.s32.totalorder %s23, %s24
    %p35 = scmp.eq.s32.totalorder %s15, 0
    %p36 = por %p34, %p35
    %p37 = scmp.ne.s32.totalorder %s23, %s24
    %p38 = scmp.eq.s32.totalorder %s16, 1
    %p39 = por %p37, %p38
    %p41 = scmp.ne.s32.totalorder %s24, %s40
    %p42 = scmp.eq.s32.totalorder %s16, 0
    %p43 = por %p41, %p42
    %s44 = ssub.s32 %s10, %s17
    %p45 = scmp.eq.s32.totalorder %s44, 0
    %s47 = sadd.s32 %s46, 1
    %s48 = scalar_select %p45, %s46, %s47
    %p51 = pneg %p45
    %p52 = scmp.eq.s32.totalorder %s10, 1
    %p53 = por %p51, %p52
    %p54 = scmp.ne.s32.totalorder %s46, %s49
    %p55 = scmp.eq.s32.totalorder %s10, 0
    %p56 = por %p54, %p55
    %p57 = scmp.ne.s32.totalorder %s46, %s49
    %p58 = scmp.eq.s32.totalorder %s15, 1
    %p59 = por %p57, %p58
    %p60 = scmp.ne.s32.totalorder %s49, %s50
    %p61 = scmp.eq.s32.totalorder %s15, 0
    %p62 = por %p60, %p61
    %p63 = scmp.ne.s32.totalorder %s49, %s50
    %p64 = scmp.eq.s32.totalorder %s16, 1
    %p65 = por %p63, %p64
    %p67 = scmp.ne.s32.totalorder %s50, %s66
    %p68 = scmp.eq.s32.totalorder %s16, 0
    %p69 = por %p67, %p68
    %s70 = ssub.s32 %s10, %s17
    %p71 = scmp.eq.s32.totalorder %s70, 0
    %s73 = sadd.s32 %s72, 1
    %s74 = scalar_select %p71, %s72, %s73
    %p77 = pneg %p71
    %p78 = scmp.eq.s32.totalorder %s10, 1
    %p79 = por %p77, %p78
    %p80 = scmp.ne.s32.totalorder %s72, %s75
    %p81 = scmp.eq.s32.totalorder %s10, 0
    %p82 = por %p80, %p81
    %p83 = scmp.ne.s32.totalorder %s72, %s75
    %p84 = scmp.eq.s32.totalorder %s15, 1
    %p85 = por %p83, %p84
    %p86 = scmp.ne.s32.totalorder %s75, %s76
    %p87 = scmp.eq.s32.totalorder %s15, 0
    %p88 = por %p86, %p87
    %p89 = scmp.ne.s32.totalorder %s75, %s76
    %p90 = scmp.eq.s32.totalorder %s16, 1
    %p91 = por %p89, %p90
    %p93 = scmp.ne.s32.totalorder %s76, %s92
    %p94 = scmp.eq.s32.totalorder %s16, 0
    %p95 = por %p93, %p94
    %s97 = sadd.s32 %s96, 1
    %p100 = scmp.eq.s32.totalorder %s10, 1
    %p101 = scmp.ne.s32.totalorder %s96, %s98
    %p102 = scmp.eq.s32.totalorder %s10, 0
    %p103 = por %p101, %p102
    %p104 = scmp.ne.s32.totalorder %s96, %s98
    %p105 = scmp.eq.s32.totalorder %s15, 1
    %p106 = por %p104, %p105
    %p107 = scmp.ne.s32.totalorder %s98, %s99
    %p108 = scmp.eq.s32.totalorder %s15, 0
    %p109 = por %p107, %p108
    %p110 = scmp.ne.s32.totalorder %s98, %s99
    %p111 = scmp.eq.s32.totalorder %s16, 1
    %p112 = por %p110, %p111
    %p114 = scmp.ne.s32.totalorder %s99, %s113
    %p115 = scmp.eq.s32.totalorder %s16, 0
    %p116 = por %p114, %p115
    %s117 = ssub.s32 %s10, %s17
    %p118 = scmp.eq.s32.totalorder %s117, 0
    %s120 = sadd.s32 %s119, 1
    %s121 = scalar_select %p118, %s119, %s120
    %p124 = pneg %p118
    %p125 = scmp.eq.s32.totalorder %s10, 1
    %p126 = por %p124, %p125
    %p127 = scmp.ne.s32.totalorder %s119, %s122
    %p128 = scmp.eq.s32.totalorder %s10, 0
    %p129 = por %p127, %p128
    %p130 = scmp.ne.s32.totalorder %s119, %s122
    %p131 = scmp.eq.s32.totalorder %s15, 1
    %p132 = por %p130, %p131
    %p133 = scmp.ne.s32.totalorder %s122, %s123
    %p134 = scmp.eq.s32.totalorder %s15, 0
    %p135 = por %p133, %p134
    %p136 = scmp.ne.s32.totalorder %s122, %s123
    %p137 = scmp.eq.s32.totalorder %s16, 1
    %p138 = por %p136, %p137
    %p140 = scmp.ne.s32.totalorder %s123, %s139
    %p141 = scmp.eq.s32.totalorder %s16, 0
    %p142 = por %p140, %p141
    %p143 = scmp.le.s32.totalorder 1, %s10
    %p144 = scmp.lt.s32.totalorder %s10, 3
    %p145 = pnand %p143, %p144
    %p146 = pneg %p145
    // Predicated region
    $region9: #{informer_forward.3} parent=5 // pred_check
      _
    $region10: #{informer_forward.3} parent=5 // pred_check_branch
      %148 = sbr.rel (%p145) target = $region12
    $region11: #{informer_forward.3} parent=5 // pred_region
      %s149 = ssub.s32 %s10, 1
      // Predicated region
      $region13: #{informer_forward.3} parent=11 // pred_check
        %p150 = pneg %p109
      $region14: #{informer_forward.3} parent=11 // pred_check_branch
        %152 = sbr.rel (%p150) target = $region16
      $region15: #{informer_forward.3} parent=11 // pred_region
        _
      $region16: #{informer_forward.3} parent=11 // pred_fallthru
        _
    $region12: #{informer_forward.3} parent=5 // pred_fallthru
      _
    %p153 = scmp.lt.s32.totalorder %s10, 2
    // Predicated region
    $region17: #{informer_forward.3} parent=5 // pred_check
      %p154 = pneg %p153
    $region18: #{informer_forward.3} parent=5 // pred_check_branch
      %156 = sbr.rel (%p154) target = $region20
    $region19: #{informer_forward.3} parent=5 // pred_region
      // Predicated region
      $region21: #{informer_forward.3} parent=19 // pred_check
        %p157 = pneg %p30
      $region22: #{informer_forward.3} parent=19 // pred_check_branch
        %159 = sbr.rel (%p157) target = $region24
      $region23: #{informer_forward.3} parent=19 // pred_region
        %p160 = scmp.lt.s32.totalorder %s10, 1
        %s161 = scalar_select %p160, %s10, 1
        %s162 = smul.addr %s161, 2
        %s163 = smul.addr %s162, 8
        %s164 = scalar_lea.vmem %s0, %s163
      $region24: #{informer_forward.3} parent=19 // pred_fallthru
        _
      // Predicated region
      $region25: #{informer_forward.3} parent=19 // pred_check
        %p165 = pneg %p56
      $region26: #{informer_forward.3} parent=19 // pred_check_branch
        %167 = sbr.rel (%p165) target = $region28
      $region27: #{informer_forward.3} parent=19 // pred_region
        %p168 = scmp.lt.s32.totalorder %s10, 1
        %s169 = scalar_select %p168, %s10, 1
        %s170 = smul.addr %s169, 2
        %s171 = smul.addr %s170, 8
        %s172 = scalar_lea.vmem %s1, %s171
      $region28: #{informer_forward.3} parent=19 // pred_fallthru
        _
      // Predicated region
      $region29: #{informer_forward.3} parent=19 // pred_check
        %p173 = pneg %p82
      $region30: #{informer_forward.3} parent=19 // pred_check_branch
        %175 = sbr.rel (%p173) target = $region32
      $region31: #{informer_forward.3} parent=19 // pred_region
        %p176 = scmp.lt.s32.totalorder %s10, 1
        %s177 = scalar_select %p176, %s10, 1
        %s178 = smul.addr %s177, 8
        %s179 = scalar_lea.vmem %s2, %s178
      $region32: #{informer_forward.3} parent=19 // pred_fallthru
        _
    $region20: #{informer_forward.3} parent=5 // pred_fallthru
      _
    %p180 = scmp.le.s32.totalorder 1, %s10
    %p181 = scmp.lt.s32.totalorder %s10, 3
    %p182 = pnand %p180, %p181
    %p183 = pneg %p182
    // Predicated region
    $region33: #{informer_forward.3} parent=5 // pred_check
      _
    $region34: #{informer_forward.3} parent=5 // pred_check_branch
      %185 = sbr.rel (%p182) target = $region36
    $region35: #{informer_forward.3} parent=5 // pred_region
      %s186 = ssub.s32 %s10, 1
      %p187 = scmp.lt.s32.totalorder %s15, 1
      %s188 = scalar_select %p187, %s15, 1
      %s189 = smul.addr %s188, 2
      %s190 = smul.addr %s189, 8
      %s191 = scalar_lea.vmem %s0, %s190
      %p192 = pneg %p36
      %p193 = pneg %p33
      %p194 = scmp.lt.s32.totalorder %s15, 1
      %s195 = scalar_select %p194, %s15, 1
      %s196 = smul.addr %s195, 2
      %s197 = smul.addr %s196, 8
      %s198 = scalar_lea.vmem %s1, %s197
      %p199 = pneg %p62
      %p200 = pneg %p59
      %p201 = scmp.lt.s32.totalorder %s15, 1
      %s202 = scalar_select %p201, %s15, 1
      %s203 = smul.addr %s202, 8
      %s204 = scalar_lea.vmem %s2, %s203
      %p205 = pneg %p88
      %p206 = pneg %p85
      %p207 = pneg %p109
      %p208 = pneg %p106
      %p209 = pneg %p135
      %p210 = pneg %p132
      %p211 = scmp.lt.s32.totalorder %s15, 1
      %s212 = scalar_select %p211, %s15, 1
      %s213 = smul.addr %s212, 2
      %s214 = smul.addr %s213, 8
      %s215 = scalar_lea.vmem %s4, %s214
      %p216 = scmp.lt.s32.totalorder %s15, 1
      %s217 = scalar_select %p216, %s15, 1
      %s218 = smul.addr %s217, 2
      %s219 = smul.addr %s218, 8
      %s220 = scalar_lea.vmem %s0, %s219
      %p221 = scmp.lt.s32.totalorder %s15, 1
      %s222 = scalar_select %p221, %s15, 1
      %s223 = smul.addr %s222, 2
      %s224 = smul.addr %s223, 8
      %s225 = scalar_lea.vmem %s1, %s224
      %p226 = scmp.lt.s32.totalorder %s15, 1
      %s227 = scalar_select %p226, %s15, 1
      %s228 = smul.addr %s227, 8
      %s229 = scalar_lea.vmem %s2, %s228
      %p230 = scmp.lt.s32.totalorder %s15, 1
      %s231 = scalar_select %p230, %s15, 1
      %s232 = smul.addr %s231, 2
      %s233 = smul.addr %s232, 8
      %s234 = scalar_lea.vmem %s4, %s233
      %v235 = vld [vmem:[%s220] sm:$0xff]
      %v236 = vld [vmem:[%s220 + $0x8] sm:$0x3]
      %v237 = vld [vmem:[%s3] sm:$0xf]
      %v238 = vld [vmem:[%s3 + $0x8] sm:$0xf]
      %v239 = vld [vmem:[%s3 + $0x10] sm:$0xf]
      %v240 = vld [vmem:[%s3 + $0x18] sm:$0x1]
      %v241 = vlaneseq
      %v242 = vshrl.u32 %v241, 7
      %v243 = vadd.s32 %v242, 8
      %v244 = vlaneseq
      %v245 = vand.u32 %v244, 127
      %v246 = vsub.s32 %v245, %v242
      %v247 = vsub.s32 %v245, %v243
      %v248 = vadd.s32 %v246, 1
      %v249 = vadd.s32 %v247, 1
      %vm250 = vcmp.eq.s32.totalorder %v248, 0
      %vm251 = vcmp.eq.s32.totalorder %v249, 0
      %vm252 = vcmp.eq.s32.totalorder %v248, 10
      %vm253 = vcmp.eq.s32.totalorder %v249, 10
      %vm254 = vmor %vm250, %vm252
      %vm255 = vmor %vm251, %vm253
      %vm256 = vcmp.eq.s32.totalorder %v248, 4294967286
      %vm257 = vcmp.eq.s32.totalorder %v249, 4294967286
      %vm258 = vmor %vm254, %vm256
      %vm259 = vmor %vm255, %vm257
      %v260 = vsel %vm258, 1.0, 0.0
      %v261 = vsel %vm259, 1.0, 0.0
      %vm262 = vcmask 80896
      %v264 = vsel %vm262, %v260, 0
      %v267 = vsel %vm262, %v261, 0
      %vm269 = vcmask 1041408
      %v271 = vsel %vm269, %v236, 0
      %273 = vmatpush.msra.mxu0 0.0
      %274 = vmatpush.msra.mxu0 0.0
      %275 = vmatpush.msra.mxu0 0.0
      %276 = vmatpush.msra.mxu0 0.0
      %277 = vmatpush.msra.mxu0 0.0
      %278 = vmatpush.msra.mxu0 0.0
      %279 = vmatpush.msra.mxu0 0.0
      %280 = vmatpush.msra.mxu0 0.0
      %281 = vmatpush.msra.mxu0 0.0
      %282 = vmatpush.msra.mxu0 0.0
      %283 = vmatpush.msra.mxu0 0.0
      %284 = vmatpush.msra.mxu0 0.0
      %285 = vmatpush.msra.mxu0 0.0
      %286 = vmatpush.msra.mxu0 0.0
      %287 = vmatpush.msra.mxu0 %v271
      %288 = vmatpush.msra.mxu0 %v235
      %289 = vmatmul.f32.gmra.mxu0 %v264
      %v290 = vpop.f32.mrf.mxu0
      %v291 = vadd.f32 0.0, %v290
      %292 = vmatmul.f32.gmra.mxu0 %v267
      %v293 = vpop.f32.mrf.mxu0
      %v294 = vadd.f32 0.0, %v293
      %295 = vdwg.mxu0
      %v296 = vadd.s32 %v246, 4294967295
      %v297 = vadd.s32 %v247, 4294967295
      %vm298 = vcmp.eq.s32.totalorder %v296, 0
      %vm299 = vcmp.eq.s32.totalorder %v297, 0
      %vm300 = vcmp.eq.s32.totalorder %v296, 10
      %vm301 = vcmp.eq.s32.totalorder %v297, 10
      %vm302 = vmor %vm298, %vm300
      %vm303 = vmor %vm299, %vm301
      %vm304 = vcmp.eq.s32.totalorder %v296, 4294967286
      %vm305 = vcmp.eq.s32.totalorder %v297, 4294967286
      %vm306 = vmor %vm302, %vm304
      %vm307 = vmor %vm303, %vm305
      %v308 = vsel %vm306, 1.0, 0.0
      %v309 = vsel %vm307, 1.0, 0.0
      %v311 = vsel %vm262, %v308, 0
      %v314 = vsel %vm262, %v309, 0
      %316 = vmatpush.msra.mxu0 0.0
      %317 = vmatpush.msra.mxu0 0.0
      %318 = vmatpush.msra.mxu0 0.0
      %319 = vmatpush.msra.mxu0 0.0
      %320 = vmatpush.msra.mxu0 0.0
      %321 = vmatpush.msra.mxu0 0.0
      %322 = vmatpush.msra.mxu0 0.0
      %323 = vmatpush.msra.mxu0 0.0
      %324 = vmatpush.msra.mxu0 0.0
      %325 = vmatpush.msra.mxu0 0.0
      %326 = vmatpush.msra.mxu0 0.0
      %327 = vmatpush.msra.mxu0 0.0
      %328 = vmatpush.msra.mxu0 0.0
      %329 = vmatpush.msra.mxu0 0.0
      %330 = vmatpush.msra.mxu0 %v271
      %331 = vmatpush.msra.mxu0 %v235
      %332 = vmatmul.f32.gmra.mxu0 %v311
      %v333 = vpop.f32.mrf.mxu0
      %v334 = vadd.f32 0.0, %v333
      %335 = vmatmul.f32.gmra.mxu0 %v314
      %v336 = vpop.f32.mrf.mxu0
      %v337 = vadd.f32 0.0, %v336
      %338 = vdwg.mxu0
      %vm339 = vcmask 31744
      %v341 = vsel %vm339, %v235, 0
      %v343 = vsel %vm339, %v236, 0
      %vm345 = vcmask 1043456
      %v347 = vsel %vm345, %v238, 0
      %349 = vmatpush.msra.mxu0 0.0
      %350 = vmatpush.msra.mxu0 0.0
      %351 = vmatpush.msra.mxu0 0.0
      %352 = vmatpush.msra.mxu0 0.0
      %353 = vmatpush.msra.mxu0 0.0
      %354 = vmatpush.msra.mxu0 0.0
      %355 = vmatpush.msra.mxu0 0.0
      %356 = vmatpush.msra.mxu0 0.0
      %357 = vmatpush.msra.mxu0 0.0
      %358 = vmatpush.msra.mxu0 0.0
      %359 = vmatpush.msra.mxu0 0.0
      %360 = vmatpush.msra.mxu0 0.0
      %361 = vmatpush.msra.mxu0 0.0
      %362 = vmatpush.msra.mxu0 0.0
      %363 = vmatpush.msra.mxu0 0.0
      %364 = vmatpush.msra.mxu0 %v347
      %365 = vmatmul.f32.gmra.mxu0 %v341
      %v366 = vpop.f32.mrf.mxu0
      %v367 = vadd.f32 0.0, %v366
      %368 = vmatmul.f32.gmra.mxu0 %v343
      %v369 = vpop.f32.mrf.mxu0
      %v370 = vadd.f32 0.0, %v369
      %371 = vdwg.mxu0
      %v373 = vsel %vm339, %v291, 0
      %v376 = vsel %vm339, %v294, 0
      %v379 = vsel %vm345, %v237, 0
      %381 = vmatpush.msra.mxu0 0.0
      %382 = vmatpush.msra.mxu0 0.0
      %383 = vmatpush.msra.mxu0 0.0
      %384 = vmatpush.msra.mxu0 0.0
      %385 = vmatpush.msra.mxu0 0.0
      %386 = vmatpush.msra.mxu0 0.0
      %387 = vmatpush.msra.mxu0 0.0
      %388 = vmatpush.msra.mxu0 0.0
      %389 = vmatpush.msra.mxu0 0.0
      %390 = vmatpush.msra.mxu0 0.0
      %391 = vmatpush.msra.mxu0 0.0
      %392 = vmatpush.msra.mxu0 0.0
      %393 = vmatpush.msra.mxu0 0.0
      %394 = vmatpush.msra.mxu0 0.0
      %395 = vmatpush.msra.mxu0 0.0
      %396 = vmatpush.msra.mxu0 %v379
      %397 = vmatmul.f32.gmra.mxu0 %v373
      %v398 = vpop.f32.mrf.mxu0
      %v399 = vadd.f32 %v367, %v398
      %400 = vmatmul.f32.gmra.mxu0 %v376
      %v401 = vpop.f32.mrf.mxu0
      %v402 = vadd.f32 %v370, %v401
      %403 = vdwg.mxu0
      %v405 = vsel %vm339, %v334, 0
      %v408 = vsel %vm339, %v337, 0
      %v411 = vsel %vm345, %v239, 0
      %413 = vmatpush.msra.mxu0 0.0
      %414 = vmatpush.msra.mxu0 0.0
      %415 = vmatpush.msra.mxu0 0.0
      %416 = vmatpush.msra.mxu0 0.0
      %417 = vmatpush.msra.mxu0 0.0
      %418 = vmatpush.msra.mxu0 0.0
      %419 = vmatpush.msra.mxu0 0.0
      %420 = vmatpush.msra.mxu0 0.0
      %421 = vmatpush.msra.mxu0 0.0
      %422 = vmatpush.msra.mxu0 0.0
      %423 = vmatpush.msra.mxu0 0.0
      %424 = vmatpush.msra.mxu0 0.0
      %425 = vmatpush.msra.mxu0 0.0
      %426 = vmatpush.msra.mxu0 0.0
      %427 = vmatpush.msra.mxu0 0.0
      %428 = vmatpush.msra.mxu0 %v411
      %429 = vmatmul.f32.gmra.mxu0 %v405
      %v430 = vpop.f32.mrf.mxu0
      %v431 = vadd.f32 0.0, %v430
      %432 = vmatmul.f32.gmra.mxu0 %v408
      %v433 = vpop.f32.mrf.mxu0
      %v434 = vadd.f32 0.0, %v433
      %435 = vdwg.mxu0
      %v436 = vadd.f32 %v399, %v431
      %v437 = vadd.f32 %v402, %v434
      %v438 = vperm.slane %v240, 0
      %v439 = vadd.f32 %v436, %v438
      %v440 = vadd.f32 %v437, %v438
      %v441 = vld [vmem:[%s225] sm:$0xff]
      %v442 = vld [vmem:[%s225 + $0x8] sm:$0x3]
      %v443 = vadd.f32 %v439, %v441
      %v444 = vadd.f32 %v440, %v442
      %v445 = vld [vmem:[%s229] sm:$0x3f]
      %vm446 = vcmp.gt.s32.totalorder %v245, %v242
      %vm447 = vcmp.gt.s32.totalorder %v245, %v243
      %v448 = vld [vmem:[%s3 + $0x20] sm:$0xff]
      %v449 = vld [vmem:[%s3 + $0x28] sm:$0xff]
      %v450 = vld [vmem:[%s3 + $0x30] sm:$0xff]
      %v451 = vld [vmem:[%s3 + $0x38] sm:$0xff]
      %v452 = vld [vmem:[%s3 + $0x40] sm:$0x1]
      %v453 = vld [vmem:[%s3 + $0x48] sm:$0xff]
      %v454 = vld [vmem:[%s3 + $0x50] sm:$0xff]
      %v455 = vld [vmem:[%s3 + $0x58] sm:$0xff]
      %v456 = vld [vmem:[%s3 + $0x60] sm:$0xff]
      %v457 = vld [vmem:[%s3 + $0x68] sm:$0x1]
      %v458 = vperm.slane %v452, 0
      %vm459 = vcmask 261120
      %v461 = vsel %vm459, %v443, 0
      %v464 = vsel %vm459, %v444, 0
      %466 = vmatpush.msra.mxu0 0.0
      %467 = vmatpush.msra.mxu0 0.0
      %468 = vmatpush.msra.mxu0 0.0
      %469 = vmatpush.msra.mxu0 0.0
      %470 = vmatpush.msra.mxu0 0.0
      %471 = vmatpush.msra.mxu0 0.0
      %472 = vmatpush.msra.mxu0 0.0
      %473 = vmatpush.msra.mxu0 0.0
      %474 = vmatpush.msra.mxu0 0.0
      %475 = vmatpush.msra.mxu0 0.0
      %476 = vmatpush.msra.mxu0 0.0
      %477 = vmatpush.msra.mxu0 0.0
      %478 = vmatpush.msra.mxu0 %v451
      %479 = vmatpush.msra.mxu0 %v450
      %480 = vmatpush.msra.mxu0 %v449
      %481 = vmatpush.msra.mxu0 %v448
      %482 = vmatmul.f32.gmra.mxu0 %v461
      %v483 = vpop.f32.mrf.mxu0
      %v484 = vadd.f32 %v458, %v483
      %485 = vmatmul.f32.gmra.mxu0 %v464
      %v486 = vpop.f32.mrf.mxu0
      %v487 = vadd.f32 %v458, %v486
      %488 = vdwg.mxu0
      %491 = vrot.lane.b32.xlu0 %v484, 96
      %v492 = vpop.permute.xlu0 %491
      %493 = vrot.lane.b32.xlu0 %v487, 96
      %v494 = vpop.permute.xlu0 %493
      %vm495 = vcmask 64512
      %v496 = vsel %vm495, %v484, 0
      %v498 = vsel %vm495, %v487, 0
      %v500 = vsel %vm495, %v492, 0
      %v502 = vsel %vm495, %v494, 0
      %504 = vmatpush.xpose.msra.mxu0 0.0
      %505 = vmatpush.xpose.msra.mxu0 0.0
      %506 = vmatpush.xpose.msra.mxu0 0.0
      %507 = vmatpush.xpose.msra.mxu0 0.0
      %508 = vmatpush.xpose.msra.mxu0 0.0
      %509 = vmatpush.xpose.msra.mxu0 0.0
      %510 = vmatpush.xpose.msra.mxu0 0.0
      %511 = vmatpush.xpose.msra.mxu0 0.0
      %512 = vmatpush.xpose.msra.mxu0 0.0
      %513 = vmatpush.xpose.msra.mxu0 0.0
      %514 = vmatpush.xpose.msra.mxu0 0.0
      %515 = vmatpush.xpose.msra.mxu0 0.0
      %516 = vmatpush.xpose.msra.mxu0 0.0
      %517 = vmatpush.xpose.msra.mxu0 0.0
      %518 = vmatpush.xpose.msra.mxu0 %v502
      %519 = vmatpush.xpose.msra.mxu0 %v500
      %520 = vmatmul.f32.gmra.mxu0 %v496
      %v521 = vpop.f32.mrf.mxu0
      %v522 = vadd.f32 0.0, %v521
      %523 = vmatmul.f32.gmra.mxu0 %v498
      %v524 = vpop.f32.mrf.mxu0
      %v525 = vadd.f32 0.0, %v524
      %526 = vdwg.mxu0
      %v527 = vsel %vm446, -1e+30, %v522
      %v528 = vsel %vm447, -1e+30, %v525
      %v529 = vsel %vm262, %v527, -inf
      %530 = vmax.xlane.f32.xlu0 %v529
      %v531 = vpop.xlane.xlu0 %530
      %vm532 = vcmask 74752
      %v533 = vsel %vm532, %v528, -inf
      %534 = vmax.xlane.f32.xlu0 %v533
      %v535 = vpop.xlane.xlu0 %534
      %v536 = vsub.f32 %v527, %v531
      %v537 = vsub.f32 %v528, %v535
      %v538 = vmul.f32 %v536, 1.442695
      %v539 = vpow.pop %v538
      %v540 = vmul.f32 %v537, 1.442695
      %v541 = vpow.pop %v540
      %v542 = vsel %vm262, %v539, 0.0
      %543 = vadd.xlane.f32.xlu0 %v542
      %v544 = vpop.xlane.xlu0 %543
      %v545 = vsel %vm532, %v541, 0.0
      %546 = vadd.xlane.f32.xlu0 %v545
      %v547 = vpop.xlane.xlu0 %546
      %v548 = vrcp.pop %v544
      %v549 = vmul.f32 %v544, %v548
      %v550 = vsub.f32 1.0, %v549
      %v551 = vmul.f32 %v548, %v550
      %v552 = vadd.f32 %v548, %v551
      %vm553 = vweird.f32 %v544
      %vm554 = vweird.f32 %v548
      %vm555 = vmor %vm553, %vm554
      %v556 = vsel %vm555, %v548, %v552
      %v557 = vand.u32 2147483647, %v544
      %vm558 = vcmp.eq.f32.partialorder %v557, 8.507059e+37
      %v559 = vand.u32 %v544, 2147483648
      %v560 = vor.u32 1.1754944e-38, %v559
      %v561 = vsel %vm558, %v560, %v556
      %v562 = vmul.f32 %v539, %v561
      %v563 = vrcp.pop %v547
      %v564 = vmul.f32 %v547, %v563
      %v565 = vsub.f32 1.0, %v564
      %v566 = vmul.f32 %v563, %v565
      %v567 = vadd.f32 %v563, %v566
      %vm568 = vweird.f32 %v547
      %vm569 = vweird.f32 %v563
      %vm570 = vmor %vm568, %vm569
      %v571 = vsel %vm570, %v563, %v567
      %v572 = vand.u32 2147483647, %v547
      %vm573 = vcmp.eq.f32.partialorder %v572, 8.507059e+37
      %v574 = vand.u32 %v547, 2147483648
      %v575 = vor.u32 1.1754944e-38, %v574
      %v576 = vsel %vm573, %v575, %v571
      %v577 = vmul.f32 %v541, %v576
      %578 = vrot.lane.b32.xlu0 %v484, 64
      %v579 = vpop.permute.xlu0 %578
      %580 = vrot.lane.b32.xlu0 %v487, 64
      %v581 = vpop.permute.xlu0 %580
      %v584 = vsel %vm262, %v562, 0
      %v587 = vsel %vm262, %v577, 0
      %v589 = vsel %vm269, %v581, 0
      %591 = vmatpush.msra.mxu0 0.0
      %592 = vmatpush.msra.mxu0 0.0
      %593 = vmatpush.msra.mxu0 0.0
      %594 = vmatpush.msra.mxu0 0.0
      %595 = vmatpush.msra.mxu0 0.0
      %596 = vmatpush.msra.mxu0 0.0
      %597 = vmatpush.msra.mxu0 0.0
      %598 = vmatpush.msra.mxu0 0.0
      %599 = vmatpush.msra.mxu0 0.0
      %600 = vmatpush.msra.mxu0 0.0
      %601 = vmatpush.msra.mxu0 0.0
      %602 = vmatpush.msra.mxu0 0.0
      %603 = vmatpush.msra.mxu0 0.0
      %604 = vmatpush.msra.mxu0 0.0
      %605 = vmatpush.msra.mxu0 %v589
      %606 = vmatpush.msra.mxu0 %v579
      %607 = vmatmul.f32.gmra.mxu0 %v584
      %v608 = vpop.f32.mrf.mxu0
      %v609 = vadd.f32 0.0, %v608
      %610 = vmatmul.f32.gmra.mxu0 %v587
      %v611 = vpop.f32.mrf.mxu0
      %v612 = vadd.f32 0.0, %v611
      %613 = vdwg.mxu0
      %614 = vrot.lane.b32.xlu0 %v484, 120
      %v615 = vpop.permute.xlu0 %614
      %616 = vrot.lane.b32.xlu0 %v487, 120
      %v617 = vpop.permute.xlu0 %616
      %618 = vrot.lane.b32.xlu0 %v484, 88
      %v619 = vpop.permute.xlu0 %618
      %620 = vrot.lane.b32.xlu0 %v487, 88
      %v621 = vpop.permute.xlu0 %620
      %v622 = vsel %vm495, %v615, 0
      %v624 = vsel %vm495, %v617, 0
      %v626 = vsel %vm495, %v619, 0
      %v628 = vsel %vm495, %v621, 0
      %630 = vmatpush.xpose.msra.mxu0 0.0
      %631 = vmatpush.xpose.msra.mxu0 0.0
      %632 = vmatpush.xpose.msra.mxu0 0.0
      %633 = vmatpush.xpose.msra.mxu0 0.0
      %634 = vmatpush.xpose.msra.mxu0 0.0
      %635 = vmatpush.xpose.msra.mxu0 0.0
      %636 = vmatpush.xpose.msra.mxu0 0.0
      %637 = vmatpush.xpose.msra.mxu0 0.0
      %638 = vmatpush.xpose.msra.mxu0 0.0
      %639 = vmatpush.xpose.msra.mxu0 0.0
      %640 = vmatpush.xpose.msra.mxu0 0.0
      %641 = vmatpush.xpose.msra.mxu0 0.0
      %642 = vmatpush.xpose.msra.mxu0 0.0
      %643 = vmatpush.xpose.msra.mxu0 0.0
      %644 = vmatpush.xpose.msra.mxu0 %v628
      %645 = vmatpush.xpose.msra.mxu0 %v626
      %646 = vmatmul.f32.gmra.mxu0 %v622
      %v647 = vpop.f32.mrf.mxu0
      %v648 = vadd.f32 0.0, %v647
      %649 = vmatmul.f32.gmra.mxu0 %v624
      %v650 = vpop.f32.mrf.mxu0
      %v651 = vadd.f32 0.0, %v650
      %652 = vdwg.mxu0
      %v653 = vsel %vm446, -1e+30, %v648
      %v654 = vsel %vm447, -1e+30, %v651
      %v655 = vsel %vm262, %v653, -inf
      %656 = vmax.xlane.f32.xlu0 %v655
      %v657 = vpop.xlane.xlu0 %656
      %v658 = vsel %vm532, %v654, -inf
      %659 = vmax.xlane.f32.xlu0 %v658
      %v660 = vpop.xlane.xlu0 %659
      %v661 = vsub.f32 %v653, %v657
      %v662 = vsub.f32 %v654, %v660
      %v663 = vmul.f32 %v661, 1.442695
      %v664 = vpow.pop %v663
      %v665 = vmul.f32 %v662, 1.442695
      %v666 = vpow.pop %v665
      %v667 = vsel %vm262, %v664, 0.0
      %668 = vadd.xlane.f32.xlu0 %v667
      %v669 = vpop.xlane.xlu0 %668
      %v670 = vsel %vm532, %v666, 0.0
      %671 = vadd.xlane.f32.xlu0 %v670
      %v672 = vpop.xlane.xlu0 %671
      %v673 = vrcp.pop %v669
      %v674 = vmul.f32 %v669, %v673
      %v675 = vsub.f32 1.0, %v674
      %v676 = vmul.f32 %v673, %v675
      %v677 = vadd.f32 %v673, %v676
      %vm678 = vweird.f32 %v669
      %vm679 = vweird.f32 %v673
      %vm680 = vmor %vm678, %vm679
      %v681 = vsel %vm680, %v673, %v677
      %v682 = vand.u32 2147483647, %v669
      %vm683 = vcmp.eq.f32.partialorder %v682, 8.507059e+37
      %v684 = vand.u32 %v669, 2147483648
      %v685 = vor.u32 1.1754944e-38, %v684
      %v686 = vsel %vm683, %v685, %v681
      %v687 = vmul.f32 %v664, %v686
      %v688 = vrcp.pop %v672
      %v689 = vmul.f32 %v672, %v688
      %v690 = vsub.f32 1.0, %v689
      %v691 = vmul.f32 %v688, %v690
      %v692 = vadd.f32 %v688, %v691
      %vm693 = vweird.f32 %v672
      %vm694 = vweird.f32 %v688
      %vm695 = vmor %vm693, %vm694
      %v696 = vsel %vm695, %v688, %v692
      %v697 = vand.u32 2147483647, %v672
      %vm698 = vcmp.eq.f32.partialorder %v697, 8.507059e+37
      %v699 = vand.u32 %v672, 2147483648
      %v700 = vor.u32 1.1754944e-38, %v699
      %v701 = vsel %vm698, %v700, %v696
      %v702 = vmul.f32 %v666, %v701
      %703 = vrot.lane.b32.xlu0 %v484, 56
      %v704 = vpop.permute.xlu0 %703
      %705 = vrot.lane.b32.xlu0 %v487, 56
      %v706 = vpop.permute.xlu0 %705
      %v709 = vsel %vm262, %v687, 0
      %v712 = vsel %vm262, %v702, 0
      %v714 = vsel %vm269, %v706, 0
      %716 = vmatpush.msra.mxu0 0.0
      %717 = vmatpush.msra.mxu0 0.0
      %718 = vmatpush.msra.mxu0 0.0
      %719 = vmatpush.msra.mxu0 0.0
      %720 = vmatpush.msra.mxu0 0.0
      %721 = vmatpush.msra.mxu0 0.0
      %722 = vmatpush.msra.mxu0 0.0
      %723 = vmatpush.msra.mxu0 0.0
      %724 = vmatpush.msra.mxu0 0.0
      %725 = vmatpush.msra.mxu0 0.0
      %726 = vmatpush.msra.mxu0 0.0
      %727 = vmatpush.msra.mxu0 0.0
      %728 = vmatpush.msra.mxu0 0.0
      %729 = vmatpush.msra.mxu0 0.0
      %730 = vmatpush.msra.mxu0 %v714
      %731 = vmatpush.msra.mxu0 %v704
      %732 = vmatmul.f32.gmra.mxu0 %v709
      %v733 = vpop.f32.mrf.mxu0
      %v734 = vadd.f32 0.0, %v733
      %735 = vmatmul.f32.gmra.mxu0 %v712
      %v736 = vpop.f32.mrf.mxu0
      %v737 = vadd.f32 0.0, %v736
      %738 = vdwg.mxu0
      %739 = vrot.lane.b32.xlu0 %v484, 112
      %v740 = vpop.permute.xlu0 %739
      %741 = vrot.lane.b32.xlu0 %v487, 112
      %v742 = vpop.permute.xlu0 %741
      %743 = vrot.lane.b32.xlu0 %v484, 80
      %v744 = vpop.permute.xlu0 %743
      %745 = vrot.lane.b32.xlu0 %v487, 80
      %v746 = vpop.permute.xlu0 %745
      %v747 = vsel %vm495, %v740, 0
      %v749 = vsel %vm495, %v742, 0
      %v751 = vsel %vm495, %v744, 0
      %v753 = vsel %vm495, %v746, 0
      %755 = vmatpush.xpose.msra.mxu0 0.0
      %756 = vmatpush.xpose.msra.mxu0 0.0
      %757 = vmatpush.xpose.msra.mxu0 0.0
      %758 = vmatpush.xpose.msra.mxu0 0.0
      %759 = vmatpush.xpose.msra.mxu0 0.0
      %760 = vmatpush.xpose.msra.mxu0 0.0
      %761 = vmatpush.xpose.msra.mxu0 0.0
      %762 = vmatpush.xpose.msra.mxu0 0.0
      %763 = vmatpush.xpose.msra.mxu0 0.0
      %764 = vmatpush.xpose.msra.mxu0 0.0
      %765 = vmatpush.xpose.msra.mxu0 0.0
      %766 = vmatpush.xpose.msra.mxu0 0.0
      %767 = vmatpush.xpose.msra.mxu0 0.0
      %768 = vmatpush.xpose.msra.mxu0 0.0
      %769 = vmatpush.xpose.msra.mxu0 %v753
      %770 = vmatpush.xpose.msra.mxu0 %v751
      %771 = vmatmul.f32.gmra.mxu0 %v747
      %v772 = vpop.f32.mrf.mxu0
      %v773 = vadd.f32 0.0, %v772
      %774 = vmatmul.f32.gmra.mxu0 %v749
      %v775 = vpop.f32.mrf.mxu0
      %v776 = vadd.f32 0.0, %v775
      %777 = vdwg.mxu0
      %v778 = vsel %vm446, -1e+30, %v773
      %v779 = vsel %vm447, -1e+30, %v776
      %v780 = vsel %vm262, %v778, -inf
      %781 = vmax.xlane.f32.xlu0 %v780
      %v782 = vpop.xlane.xlu0 %781
      %v783 = vsel %vm532, %v779, -inf
      %784 = vmax.xlane.f32.xlu0 %v783
      %v785 = vpop.xlane.xlu0 %784
      %v786 = vsub.f32 %v778, %v782
      %v787 = vsub.f32 %v779, %v785
      %v788 = vmul.f32 %v786, 1.442695
      %v789 = vpow.pop %v788
      %v790 = vmul.f32 %v787, 1.442695
      %v791 = vpow.pop %v790
      %v792 = vsel %vm262, %v789, 0.0
      %793 = vadd.xlane.f32.xlu0 %v792
      %v794 = vpop.xlane.xlu0 %793
      %v795 = vsel %vm532, %v791, 0.0
      %796 = vadd.xlane.f32.xlu0 %v795
      %v797 = vpop.xlane.xlu0 %796
      %v798 = vrcp.pop %v794
      %v799 = vmul.f32 %v794, %v798
      %v800 = vsub.f32 1.0, %v799
      %v801 = vmul.f32 %v798, %v800
      %v802 = vadd.f32 %v798, %v801
      %vm803 = vweird.f32 %v794
      %vm804 = vweird.f32 %v798
      %vm805 = vmor %vm803, %vm804
      %v806 = vsel %vm805, %v798, %v802
      %v807 = vand.u32 2147483647, %v794
      %vm808 = vcmp.eq.f32.partialorder %v807, 8.507059e+37
      %v809 = vand.u32 %v794, 2147483648
      %v810 = vor.u32 1.1754944e-38, %v809
      %v811 = vsel %vm808, %v810, %v806
      %v812 = vmul.f32 %v789, %v811
      %v813 = vrcp.pop %v797
      %v814 = vmul.f32 %v797, %v813
      %v815 = vsub.f32 1.0, %v814
      %v816 = vmul.f32 %v813, %v815
      %v817 = vadd.f32 %v813, %v816
      %vm818 = vweird.f32 %v797
      %vm819 = vweird.f32 %v813
      %vm820 = vmor %vm818, %vm819
      %v821 = vsel %vm820, %v813, %v817
      %v822 = vand.u32 2147483647, %v797
      %vm823 = vcmp.eq.f32.partialorder %v822, 8.507059e+37
      %v824 = vand.u32 %v797, 2147483648
      %v825 = vor.u32 1.1754944e-38, %v824
      %v826 = vsel %vm823, %v825, %v821
      %v827 = vmul.f32 %v791, %v826
      %828 = vrot.lane.b32.xlu0 %v484, 48
      %v829 = vpop.permute.xlu0 %828
      %830 = vrot.lane.b32.xlu0 %v487, 48
      %v831 = vpop.permute.xlu0 %830
      %v834 = vsel %vm262, %v812, 0
      %v837 = vsel %vm262, %v827, 0
      %v839 = vsel %vm269, %v831, 0
      %841 = vmatpush.msra.mxu0 0.0
      %842 = vmatpush.msra.mxu0 0.0
      %843 = vmatpush.msra.mxu0 0.0
      %844 = vmatpush.msra.mxu0 0.0
      %845 = vmatpush.msra.mxu0 0.0
      %846 = vmatpush.msra.mxu0 0.0
      %847 = vmatpush.msra.mxu0 0.0
      %848 = vmatpush.msra.mxu0 0.0
      %849 = vmatpush.msra.mxu0 0.0
      %850 = vmatpush.msra.mxu0 0.0
      %851 = vmatpush.msra.mxu0 0.0
      %852 = vmatpush.msra.mxu0 0.0
      %853 = vmatpush.msra.mxu0 0.0
      %854 = vmatpush.msra.mxu0 0.0
      %855 = vmatpush.msra.mxu0 %v839
      %856 = vmatpush.msra.mxu0 %v829
      %857 = vmatmul.f32.gmra.mxu0 %v834
      %v858 = vpop.f32.mrf.mxu0
      %v859 = vadd.f32 0.0, %v858
      %860 = vmatmul.f32.gmra.mxu0 %v837
      %v861 = vpop.f32.mrf.mxu0
      %v862 = vadd.f32 0.0, %v861
      %863 = vdwg.mxu0
      %864 = vrot.lane.b32.xlu0 %v484, 104
      %v865 = vpop.permute.xlu0 %864
      %866 = vrot.lane.b32.xlu0 %v487, 104
      %v867 = vpop.permute.xlu0 %866
      %868 = vrot.lane.b32.xlu0 %v484, 72
      %v869 = vpop.permute.xlu0 %868
      %870 = vrot.lane.b32.xlu0 %v487, 72
      %v871 = vpop.permute.xlu0 %870
      %v872 = vsel %vm495, %v865, 0
      %v874 = vsel %vm495, %v867, 0
      %v876 = vsel %vm495, %v869, 0
      %v878 = vsel %vm495, %v871, 0
      %880 = vmatpush.xpose.msra.mxu0 0.0
      %881 = vmatpush.xpose.msra.mxu0 0.0
      %882 = vmatpush.xpose.msra.mxu0 0.0
      %883 = vmatpush.xpose.msra.mxu0 0.0
      %884 = vmatpush.xpose.msra.mxu0 0.0
      %885 = vmatpush.xpose.msra.mxu0 0.0
      %886 = vmatpush.xpose.msra.mxu0 0.0
      %887 = vmatpush.xpose.msra.mxu0 0.0
      %888 = vmatpush.xpose.msra.mxu0 0.0
      %889 = vmatpush.xpose.msra.mxu0 0.0
      %890 = vmatpush.xpose.msra.mxu0 0.0
      %891 = vmatpush.xpose.msra.mxu0 0.0
      %892 = vmatpush.xpose.msra.mxu0 0.0
      %893 = vmatpush.xpose.msra.mxu0 0.0
      %894 = vmatpush.xpose.msra.mxu0 %v878
      %895 = vmatpush.xpose.msra.mxu0 %v876
      %896 = vmatmul.f32.gmra.mxu0 %v872
      %v897 = vpop.f32.mrf.mxu0
      %v898 = vadd.f32 0.0, %v897
      %899 = vmatmul.f32.gmra.mxu0 %v874
      %v900 = vpop.f32.mrf.mxu0
      %v901 = vadd.f32 0.0, %v900
      %902 = vdwg.mxu0
      %v903 = vsel %vm446, -1e+30, %v898
      %v904 = vsel %vm447, -1e+30, %v901
      %v905 = vsel %vm262, %v903, -inf
      %906 = vmax.xlane.f32.xlu0 %v905
      %v907 = vpop.xlane.xlu0 %906
      %v908 = vsel %vm532, %v904, -inf
      %909 = vmax.xlane.f32.xlu0 %v908
      %v910 = vpop.xlane.xlu0 %909
      %v911 = vsub.f32 %v903, %v907
      %v912 = vsub.f32 %v904, %v910
      %v913 = vmul.f32 %v911, 1.442695
      %v914 = vpow.pop %v913
      %v915 = vmul.f32 %v912, 1.442695
      %v916 = vpow.pop %v915
      %v917 = vsel %vm262, %v914, 0.0
      %918 = vadd.xlane.f32.xlu0 %v917
      %v919 = vpop.xlane.xlu0 %918
      %v920 = vsel %vm532, %v916, 0.0
      %921 = vadd.xlane.f32.xlu0 %v920
      %v922 = vpop.xlane.xlu0 %921
      %v923 = vrcp.pop %v919
      %v924 = vmul.f32 %v919, %v923
      %v925 = vsub.f32 1.0, %v924
      %v926 = vmul.f32 %v923, %v925
      %v927 = vadd.f32 %v923, %v926
      %vm928 = vweird.f32 %v919
      %vm929 = vweird.f32 %v923
      %vm930 = vmor %vm928, %vm929
      %v931 = vsel %vm930, %v923, %v927
      %v932 = vand.u32 2147483647, %v919
      %vm933 = vcmp.eq.f32.partialorder %v932, 8.507059e+37
      %v934 = vand.u32 %v919, 2147483648
      %v935 = vor.u32 1.1754944e-38, %v934
      %v936 = vsel %vm933, %v935, %v931
      %v937 = vmul.f32 %v914, %v936
      %v938 = vrcp.pop %v922
      %v939 = vmul.f32 %v922, %v938
      %v940 = vsub.f32 1.0, %v939
      %v941 = vmul.f32 %v938, %v940
      %v942 = vadd.f32 %v938, %v941
      %vm943 = vweird.f32 %v922
      %vm944 = vweird.f32 %v938
      %vm945 = vmor %vm943, %vm944
      %v946 = vsel %vm945, %v938, %v942
      %v947 = vand.u32 2147483647, %v922
      %vm948 = vcmp.eq.f32.partialorder %v947, 8.507059e+37
      %v949 = vand.u32 %v922, 2147483648
      %v950 = vor.u32 1.1754944e-38, %v949
      %v951 = vsel %vm948, %v950, %v946
      %v952 = vmul.f32 %v916, %v951
      %953 = vrot.lane.b32.xlu0 %v484, 40
      %v954 = vpop.permute.xlu0 %953
      %955 = vrot.lane.b32.xlu0 %v487, 40
      %v956 = vpop.permute.xlu0 %955
      %v959 = vsel %vm262, %v937, 0
      %v962 = vsel %vm262, %v952, 0
      %v964 = vsel %vm269, %v956, 0
      %966 = vmatpush.msra.mxu0 0.0
      %967 = vmatpush.msra.mxu0 0.0
      %968 = vmatpush.msra.mxu0 0.0
      %969 = vmatpush.msra.mxu0 0.0
      %970 = vmatpush.msra.mxu0 0.0
      %971 = vmatpush.msra.mxu0 0.0
      %972 = vmatpush.msra.mxu0 0.0
      %973 = vmatpush.msra.mxu0 0.0
      %974 = vmatpush.msra.mxu0 0.0
      %975 = vmatpush.msra.mxu0 0.0
      %976 = vmatpush.msra.mxu0 0.0
      %977 = vmatpush.msra.mxu0 0.0
      %978 = vmatpush.msra.mxu0 0.0
      %979 = vmatpush.msra.mxu0 0.0
      %980 = vmatpush.msra.mxu0 %v964
      %981 = vmatpush.msra.mxu0 %v954
      %982 = vmatmul.f32.gmra.mxu0 %v959
      %v983 = vpop.f32.mrf.mxu0
      %v984 = vadd.f32 0.0, %v983
      %985 = vmatmul.f32.gmra.mxu0 %v962
      %v986 = vpop.f32.mrf.mxu0
      %v987 = vadd.f32 0.0, %v986
      %988 = vdwg.mxu0
      %v989 = vmul.u32 %v242, 4
      %v990 = vmul.u32 %v243, 4
      %vm991 = vcmp.eq.s32.totalorder %v245, %v989
      %vm992 = vcmp.eq.s32.totalorder %v245, %v990
      %v993 = vsel %vm991, 1.0, 0.0
      %v994 = vsel %vm992, 1.0, 0.0
      %v995 = vadd.s32 %v989, 4294967286
      %v996 = vadd.s32 %v990, 4294967286
      %vm997 = vcmp.eq.s32.totalorder %v245, %v995
      %vm998 = vcmp.eq.s32.totalorder %v245, %v996
      %v999 = vsel %vm997, 1.0, 0.0
      %v1000 = vsel %vm998, 1.0, 0.0
      %v1002 = vsel %vm262, %v999, 0
      %v1005 = vsel %vm262, %v1000, 0
      %v1008 = vsel %vm269, %v737, 0
      %1010 = vmatpush.msra.mxu0 0.0
      %1011 = vmatpush.msra.mxu0 0.0
      %1012 = vmatpush.msra.mxu0 0.0
      %1013 = vmatpush.msra.mxu0 0.0
      %1014 = vmatpush.msra.mxu0 0.0
      %1015 = vmatpush.msra.mxu0 0.0
      %1016 = vmatpush.msra.mxu0 0.0
      %1017 = vmatpush.msra.mxu0 0.0
      %1018 = vmatpush.msra.mxu0 0.0
      %1019 = vmatpush.msra.mxu0 0.0
      %1020 = vmatpush.msra.mxu0 0.0
      %1021 = vmatpush.msra.mxu0 0.0
      %1022 = vmatpush.msra.mxu0 0.0
      %1023 = vmatpush.msra.mxu0 0.0
      %1024 = vmatpush.msra.mxu0 %v1008
      %1025 = vmatpush.msra.mxu0 %v734
      %1026 = vmatmul.f32.gmra.mxu0 %v1002
      %v1027 = vpop.f32.mrf.mxu0
      %v1028 = vadd.f32 0.0, %v1027
      %1029 = vmatmul.f32.gmra.mxu0 %v1005
      %v1030 = vpop.f32.mrf.mxu0
      %v1031 = vadd.f32 0.0, %v1030
      %1032 = vdwg.mxu0
      %v1034 = vsel %vm262, %v993, 0
      %v1037 = vsel %vm262, %v994, 0
      %v1040 = vsel %vm269, %v612, 0
      %1042 = vmatpush.msra.mxu0 0.0
      %1043 = vmatpush.msra.mxu0 0.0
      %1044 = vmatpush.msra.mxu0 0.0
      %1045 = vmatpush.msra.mxu0 0.0
      %1046 = vmatpush.msra.mxu0 0.0
      %1047 = vmatpush.msra.mxu0 0.0
      %1048 = vmatpush.msra.mxu0 0.0
      %1049 = vmatpush.msra.mxu0 0.0
      %1050 = vmatpush.msra.mxu0 0.0
      %1051 = vmatpush.msra.mxu0 0.0
      %1052 = vmatpush.msra.mxu0 0.0
      %1053 = vmatpush.msra.mxu0 0.0
      %1054 = vmatpush.msra.mxu0 0.0
      %1055 = vmatpush.msra.mxu0 0.0
      %1056 = vmatpush.msra.mxu0 %v1040
      %1057 = vmatpush.msra.mxu0 %v609
      %1058 = vmatmul.f32.gmra.mxu0 %v1034
      %v1059 = vpop.f32.mrf.mxu0
      %v1060 = vadd.f32 %v1028, %v1059
      %1061 = vmatmul.f32.gmra.mxu0 %v1037
      %v1062 = vpop.f32.mrf.mxu0
      %v1063 = vadd.f32 %v1031, %v1062
      %1064 = vdwg.mxu0
      %v1065 = vadd.s32 %v989, 4294967276
      %v1066 = vadd.s32 %v990, 4294967276
      %vm1067 = vcmp.eq.s32.totalorder %v245, %v1065
      %vm1068 = vcmp.eq.s32.totalorder %v245, %v1066
      %v1069 = vsel %vm1067, 1.0, 0.0
      %v1070 = vsel %vm1068, 1.0, 0.0
      %v1072 = vsel %vm262, %v1069, 0
      %v1075 = vsel %vm262, %v1070, 0
      %v1078 = vsel %vm269, %v862, 0
      %1080 = vmatpush.msra.mxu0 0.0
      %1081 = vmatpush.msra.mxu0 0.0
      %1082 = vmatpush.msra.mxu0 0.0
      %1083 = vmatpush.msra.mxu0 0.0
      %1084 = vmatpush.msra.mxu0 0.0
      %1085 = vmatpush.msra.mxu0 0.0
      %1086 = vmatpush.msra.mxu0 0.0
      %1087 = vmatpush.msra.mxu0 0.0
      %1088 = vmatpush.msra.mxu0 0.0
      %1089 = vmatpush.msra.mxu0 0.0
      %1090 = vmatpush.msra.mxu0 0.0
      %1091 = vmatpush.msra.mxu0 0.0
      %1092 = vmatpush.msra.mxu0 0.0
      %1093 = vmatpush.msra.mxu0 0.0
      %1094 = vmatpush.msra.mxu0 %v1078
      %1095 = vmatpush.msra.mxu0 %v859
      %1096 = vmatmul.f32.gmra.mxu0 %v1072
      %v1097 = vpop.f32.mrf.mxu0
      %v1098 = vadd.f32 0.0, %v1097
      %1099 = vmatmul.f32.gmra.mxu0 %v1075
      %v1100 = vpop.f32.mrf.mxu0
      %v1101 = vadd.f32 0.0, %v1100
      %1102 = vdwg.mxu0
      %v1103 = vadd.f32 %v1060, %v1098
      %v1104 = vadd.f32 %v1063, %v1101
      %v1105 = vadd.s32 %v989, 4294967266
      %v1106 = vadd.s32 %v990, 4294967266
      %vm1107 = vcmp.eq.s32.totalorder %v245, %v1105
      %vm1108 = vcmp.eq.s32.totalorder %v245, %v1106
      %v1109 = vsel %vm1107, 1.0, 0.0
      %v1110 = vsel %vm1108, 1.0, 0.0
      %v1112 = vsel %vm262, %v1109, 0
      %v1115 = vsel %vm262, %v1110, 0
      %v1118 = vsel %vm269, %v987, 0
      %1120 = vmatpush.msra.mxu0 0.0
      %1121 = vmatpush.msra.mxu0 0.0
      %1122 = vmatpush.msra.mxu0 0.0
      %1123 = vmatpush.msra.mxu0 0.0
      %1124 = vmatpush.msra.mxu0 0.0
      %1125 = vmatpush.msra.mxu0 0.0
      %1126 = vmatpush.msra.mxu0 0.0
      %1127 = vmatpush.msra.mxu0 0.0
      %1128 = vmatpush.msra.mxu0 0.0
      %1129 = vmatpush.msra.mxu0 0.0
      %1130 = vmatpush.msra.mxu0 0.0
      %1131 = vmatpush.msra.mxu0 0.0
      %1132 = vmatpush.msra.mxu0 0.0
      %1133 = vmatpush.msra.mxu0 0.0
      %1134 = vmatpush.msra.mxu0 %v1118
      %1135 = vmatpush.msra.mxu0 %v984
      %1136 = vmatmul.f32.gmra.mxu0 %v1112
      %v1137 = vpop.f32.mrf.mxu0
      %v1138 = vadd.f32 0.0, %v1137
      %1139 = vmatmul.f32.gmra.mxu0 %v1115
      %v1140 = vpop.f32.mrf.mxu0
      %v1141 = vadd.f32 0.0, %v1140
      %1142 = vdwg.mxu0
      %v1143 = vadd.f32 %v1103, %v1138
      %v1144 = vadd.f32 %v1104, %v1141
      %v1145 = vadd.s32 %v989, 1
      %v1146 = vadd.s32 %v990, 1
      %vm1147 = vcmp.eq.s32.totalorder %v245, %v1145
      %vm1148 = vcmp.eq.s32.totalorder %v245, %v1146
      %v1149 = vsel %vm1147, 1.0, 0.0
      %v1150 = vsel %vm1148, 1.0, 0.0
      %v1151 = vadd.s32 %v989, 4294967287
      %v1152 = vadd.s32 %v990, 4294967287
      %vm1153 = vcmp.eq.s32.totalorder %v245, %v1151
      %vm1154 = vcmp.eq.s32.totalorder %v245, %v1152
      %v1155 = vsel %vm1153, 1.0, 0.0
      %v1156 = vsel %vm1154, 1.0, 0.0
      %v1158 = vsel %vm262, %v1155, 0
      %v1161 = vsel %vm262, %v1156, 0
      %1163 = vmatpush.msra.mxu0 0.0
      %1164 = vmatpush.msra.mxu0 0.0
      %1165 = vmatpush.msra.mxu0 0.0
      %1166 = vmatpush.msra.mxu0 0.0
      %1167 = vmatpush.msra.mxu0 0.0
      %1168 = vmatpush.msra.mxu0 0.0
      %1169 = vmatpush.msra.mxu0 0.0
      %1170 = vmatpush.msra.mxu0 0.0
      %1171 = vmatpush.msra.mxu0 0.0
      %1172 = vmatpush.msra.mxu0 0.0
      %1173 = vmatpush.msra.mxu0 0.0
      %1174 = vmatpush.msra.mxu0 0.0
      %1175 = vmatpush.msra.mxu0 0.0
      %1176 = vmatpush.msra.mxu0 0.0
      %1177 = vmatpush.msra.mxu0 %v1008
      %1178 = vmatpush.msra.mxu0 %v734
      %1179 = vmatmul.f32.gmra.mxu0 %v1158
      %v1180 = vpop.f32.mrf.mxu0
      %v1181 = vadd.f32 0.0, %v1180
      %1182 = vmatmul.f32.gmra.mxu0 %v1161
      %v1183 = vpop.f32.mrf.mxu0
      %v1184 = vadd.f32 0.0, %v1183
      %1185 = vdwg.mxu0
      %v1187 = vsel %vm262, %v1149, 0
      %v1190 = vsel %vm262, %v1150, 0
      %1192 = vmatpush.msra.mxu0 0.0
      %1193 = vmatpush.msra.mxu0 0.0
      %1194 = vmatpush.msra.mxu0 0.0
      %1195 = vmatpush.msra.mxu0 0.0
      %1196 = vmatpush.msra.mxu0 0.0
      %1197 = vmatpush.msra.mxu0 0.0
      %1198 = vmatpush.msra.mxu0 0.0
      %1199 = vmatpush.msra.mxu0 0.0
      %1200 = vmatpush.msra.mxu0 0.0
      %1201 = vmatpush.msra.mxu0 0.0
      %1202 = vmatpush.msra.mxu0 0.0
      %1203 = vmatpush.msra.mxu0 0.0
      %1204 = vmatpush.msra.mxu0 0.0
      %1205 = vmatpush.msra.mxu0 0.0
      %1206 = vmatpush.msra.mxu0 %v1040
      %1207 = vmatpush.msra.mxu0 %v609
      %1208 = vmatmul.f32.gmra.mxu0 %v1187
      %v1209 = vpop.f32.mrf.mxu0
      %v1210 = vadd.f32 %v1181, %v1209
      %1211 = vmatmul.f32.gmra.mxu0 %v1190
      %v1212 = vpop.f32.mrf.mxu0
      %v1213 = vadd.f32 %v1184, %v1212
      %1214 = vdwg.mxu0
      %v1215 = vadd.s32 %v989, 4294967277
      %v1216 = vadd.s32 %v990, 4294967277
      %vm1217 = vcmp.eq.s32.totalorder %v245, %v1215
      %vm1218 = vcmp.eq.s32.totalorder %v245, %v1216
      %v1219 = vsel %vm1217, 1.0, 0.0
      %v1220 = vsel %vm1218, 1.0, 0.0
      %v1222 = vsel %vm262, %v1219, 0
      %v1225 = vsel %vm262, %v1220, 0
      %1227 = vmatpush.msra.mxu0 0.0
      %1228 = vmatpush.msra.mxu0 0.0
      %1229 = vmatpush.msra.mxu0 0.0
      %1230 = vmatpush.msra.mxu0 0.0
      %1231 = vmatpush.msra.mxu0 0.0
      %1232 = vmatpush.msra.mxu0 0.0
      %1233 = vmatpush.msra.mxu0 0.0
      %1234 = vmatpush.msra.mxu0 0.0
      %1235 = vmatpush.msra.mxu0 0.0
      %1236 = vmatpush.msra.mxu0 0.0
      %1237 = vmatpush.msra.mxu0 0.0
      %1238 = vmatpush.msra.mxu0 0.0
      %1239 = vmatpush.msra.mxu0 0.0
      %1240 = vmatpush.msra.mxu0 0.0
      %1241 = vmatpush.msra.mxu0 %v1078
      %1242 = vmatpush.msra.mxu0 %v859
      %1243 = vmatmul.f32.gmra.mxu0 %v1222
      %v1244 = vpop.f32.mrf.mxu0
      %v1245 = vadd.f32 0.0, %v1244
      %1246 = vmatmul.f32.gmra.mxu0 %v1225
      %v1247 = vpop.f32.mrf.mxu0
      %v1248 = vadd.f32 0.0, %v1247
      %1249 = vdwg.mxu0
      %v1250 = vadd.f32 %v1210, %v1245
      %v1251 = vadd.f32 %v1213, %v1248
      %v1252 = vadd.s32 %v989, 4294967267
      %v1253 = vadd.s32 %v990, 4294967267
      %vm1254 = vcmp.eq.s32.totalorder %v245, %v1252
      %vm1255 = vcmp.eq.s32.totalorder %v245, %v1253
      %v1256 = vsel %vm1254, 1.0, 0.0
      %v1257 = vsel %vm1255, 1.0, 0.0
      %v1259 = vsel %vm262, %v1256, 0
      %v1262 = vsel %vm262, %v1257, 0
      %1264 = vmatpush.msra.mxu0 0.0
      %1265 = vmatpush.msra.mxu0 0.0
      %1266 = vmatpush.msra.mxu0 0.0
      %1267 = vmatpush.msra.mxu0 0.0
      %1268 = vmatpush.msra.mxu0 0.0
      %1269 = vmatpush.msra.mxu0 0.0
      %1270 = vmatpush.msra.mxu0 0.0
      %1271 = vmatpush.msra.mxu0 0.0
      %1272 = vmatpush.msra.mxu0 0.0
      %1273 = vmatpush.msra.mxu0 0.0
      %1274 = vmatpush.msra.mxu0 0.0
      %1275 = vmatpush.msra.mxu0 0.0
      %1276 = vmatpush.msra.mxu0 0.0
      %1277 = vmatpush.msra.mxu0 0.0
      %1278 = vmatpush.msra.mxu0 %v1118
      %1279 = vmatpush.msra.mxu0 %v984
      %1280 = vmatmul.f32.gmra.mxu0 %v1259
      %v1281 = vpop.f32.mrf.mxu0
      %v1282 = vadd.f32 0.0, %v1281
      %1283 = vmatmul.f32.gmra.mxu0 %v1262
      %v1284 = vpop.f32.mrf.mxu0
      %v1285 = vadd.f32 0.0, %v1284
      %1286 = vdwg.mxu0
      %v1287 = vadd.f32 %v1250, %v1282
      %v1288 = vadd.f32 %v1251, %v1285
      %v1290 = vsel %vm495, %v1287, 0
      %v1293 = vsel %vm495, %v1288, 0
      %1295 = vmatpush.msra.mxu0 0.0
      %1296 = vmatpush.msra.mxu0 0.0
      %1297 = vmatpush.msra.mxu0 0.0
      %1298 = vmatpush.msra.mxu0 0.0
      %1299 = vmatpush.msra.mxu0 0.0
      %1300 = vmatpush.msra.mxu0 0.0
      %1301 = vmatpush.msra.mxu0 0.0
      %1302 = vmatpush.msra.mxu0 0.0
      %1303 = vmatpush.msra.mxu0 0.0
      %1304 = vmatpush.msra.mxu0 0.0
      %1305 = vmatpush.msra.mxu0 0.0
      %1306 = vmatpush.msra.mxu0 0.0
      %1307 = vmatpush.msra.mxu0 0.0
      %1308 = vmatpush.msra.mxu0 0.0
      %1309 = vmatpush.msra.mxu0 0.0
      %1310 = vmatpush.msra.mxu0 %v454
      %1311 = vmatmul.f32.gmra.mxu0 %v1290
      %v1312 = vpop.f32.mrf.mxu0
      %v1313 = vadd.f32 0.0, %v1312
      %1314 = vmatmul.f32.gmra.mxu0 %v1293
      %v1315 = vpop.f32.mrf.mxu0
      %v1316 = vadd.f32 0.0, %v1315
      %1317 = vdwg.mxu0
      %v1319 = vsel %vm495, %v1143, 0
      %v1322 = vsel %vm495, %v1144, 0
      %1324 = vmatpush.msra.mxu0 0.0
      %1325 = vmatpush.msra.mxu0 0.0
      %1326 = vmatpush.msra.mxu0 0.0
      %1327 = vmatpush.msra.mxu0 0.0
      %1328 = vmatpush.msra.mxu0 0.0
      %1329 = vmatpush.msra.mxu0 0.0
      %1330 = vmatpush.msra.mxu0 0.0
      %1331 = vmatpush.msra.mxu0 0.0
      %1332 = vmatpush.msra.mxu0 0.0
      %1333 = vmatpush.msra.mxu0 0.0
      %1334 = vmatpush.msra.mxu0 0.0
      %1335 = vmatpush.msra.mxu0 0.0
      %1336 = vmatpush.msra.mxu0 0.0
      %1337 = vmatpush.msra.mxu0 0.0
      %1338 = vmatpush.msra.mxu0 0.0
      %1339 = vmatpush.msra.mxu0 %v453
      %1340 = vmatmul.f32.gmra.mxu0 %v1319
      %v1341 = vpop.f32.mrf.mxu0
      %v1342 = vadd.f32 %v1313, %v1341
      %1343 = vmatmul.f32.gmra.mxu0 %v1322
      %v1344 = vpop.f32.mrf.mxu0
      %v1345 = vadd.f32 %v1316, %v1344
      %1346 = vdwg.mxu0
      %v1347 = vadd.s32 %v989, 2
      %v1348 = vadd.s32 %v990, 2
      %vm1349 = vcmp.eq.s32.totalorder %v245, %v1347
      %vm1350 = vcmp.eq.s32.totalorder %v245, %v1348
      %v1351 = vsel %vm1349, 1.0, 0.0
      %v1352 = vsel %vm1350, 1.0, 0.0
      %v1353 = vadd.s32 %v989, 4294967288
      %v1354 = vadd.s32 %v990, 4294967288
      %vm1355 = vcmp.eq.s32.totalorder %v245, %v1353
      %vm1356 = vcmp.eq.s32.totalorder %v245, %v1354
      %v1357 = vsel %vm1355, 1.0, 0.0
      %v1358 = vsel %vm1356, 1.0, 0.0
      %v1360 = vsel %vm262, %v1357, 0
      %v1363 = vsel %vm262, %v1358, 0
      %1365 = vmatpush.msra.mxu0 0.0
      %1366 = vmatpush.msra.mxu0 0.0
      %1367 = vmatpush.msra.mxu0 0.0
      %1368 = vmatpush.msra.mxu0 0.0
      %1369 = vmatpush.msra.mxu0 0.0
      %1370 = vmatpush.msra.mxu0 0.0
      %1371 = vmatpush.msra.mxu0 0.0
      %1372 = vmatpush.msra.mxu0 0.0
      %1373 = vmatpush.msra.mxu0 0.0
      %1374 = vmatpush.msra.mxu0 0.0
      %1375 = vmatpush.msra.mxu0 0.0
      %1376 = vmatpush.msra.mxu0 0.0
      %1377 = vmatpush.msra.mxu0 0.0
      %1378 = vmatpush.msra.mxu0 0.0
      %1379 = vmatpush.msra.mxu0 %v1008
      %1380 = vmatpush.msra.mxu0 %v734
      %1381 = vmatmul.f32.gmra.mxu0 %v1360
      %v1382 = vpop.f32.mrf.mxu0
      %v1383 = vadd.f32 0.0, %v1382
      %1384 = vmatmul.f32.gmra.mxu0 %v1363
      %v1385 = vpop.f32.mrf.mxu0
      %v1386 = vadd.f32 0.0, %v1385
      %1387 = vdwg.mxu0
      %v1389 = vsel %vm262, %v1351, 0
      %v1392 = vsel %vm262, %v1352, 0
      %1394 = vmatpush.msra.mxu0 0.0
      %1395 = vmatpush.msra.mxu0 0.0
      %1396 = vmatpush.msra.mxu0 0.0
      %1397 = vmatpush.msra.mxu0 0.0
      %1398 = vmatpush.msra.mxu0 0.0
      %1399 = vmatpush.msra.mxu0 0.0
      %1400 = vmatpush.msra.mxu0 0.0
      %1401 = vmatpush.msra.mxu0 0.0
      %1402 = vmatpush.msra.mxu0 0.0
      %1403 = vmatpush.msra.mxu0 0.0
      %1404 = vmatpush.msra.mxu0 0.0
      %1405 = vmatpush.msra.mxu0 0.0
      %1406 = vmatpush.msra.mxu0 0.0
      %1407 = vmatpush.msra.mxu0 0.0
      %1408 = vmatpush.msra.mxu0 %v1040
      %1409 = vmatpush.msra.mxu0 %v609
      %1410 = vmatmul.f32.gmra.mxu0 %v1389
      %v1411 = vpop.f32.mrf.mxu0
      %v1412 = vadd.f32 %v1383, %v1411
      %1413 = vmatmul.f32.gmra.mxu0 %v1392
      %v1414 = vpop.f32.mrf.mxu0
      %v1415 = vadd.f32 %v1386, %v1414
      %1416 = vdwg.mxu0
      %v1417 = vadd.s32 %v989, 4294967278
      %v1418 = vadd.s32 %v990, 4294967278
      %vm1419 = vcmp.eq.s32.totalorder %v245, %v1417
      %vm1420 = vcmp.eq.s32.totalorder %v245, %v1418
      %v1421 = vsel %vm1419, 1.0, 0.0
      %v1422 = vsel %vm1420, 1.0, 0.0
      %v1424 = vsel %vm262, %v1421, 0
      %v1427 = vsel %vm262, %v1422, 0
      %1429 = vmatpush.msra.mxu0 0.0
      %1430 = vmatpush.msra.mxu0 0.0
      %1431 = vmatpush.msra.mxu0 0.0
      %1432 = vmatpush.msra.mxu0 0.0
      %1433 = vmatpush.msra.mxu0 0.0
      %1434 = vmatpush.msra.mxu0 0.0
      %1435 = vmatpush.msra.mxu0 0.0
      %1436 = vmatpush.msra.mxu0 0.0
      %1437 = vmatpush.msra.mxu0 0.0
      %1438 = vmatpush.msra.mxu0 0.0
      %1439 = vmatpush.msra.mxu0 0.0
      %1440 = vmatpush.msra.mxu0 0.0
      %1441 = vmatpush.msra.mxu0 0.0
      %1442 = vmatpush.msra.mxu0 0.0
      %1443 = vmatpush.msra.mxu0 %v1078
      %1444 = vmatpush.msra.mxu0 %v859
      %1445 = vmatmul.f32.gmra.mxu0 %v1424
      %v1446 = vpop.f32.mrf.mxu0
      %v1447 = vadd.f32 0.0, %v1446
      %1448 = vmatmul.f32.gmra.mxu0 %v1427
      %v1449 = vpop.f32.mrf.mxu0
      %v1450 = vadd.f32 0.0, %v1449
      %1451 = vdwg.mxu0
      %v1452 = vadd.f32 %v1412, %v1447
      %v1453 = vadd.f32 %v1415, %v1450
      %v1454 = vadd.s32 %v989, 4294967268
      %v1455 = vadd.s32 %v990, 4294967268
      %vm1456 = vcmp.eq.s32.totalorder %v245, %v1454
      %vm1457 = vcmp.eq.s32.totalorder %v245, %v1455
      %v1458 = vsel %vm1456, 1.0, 0.0
      %v1459 = vsel %vm1457, 1.0, 0.0
      %v1461 = vsel %vm262, %v1458, 0
      %v1464 = vsel %vm262, %v1459, 0
      %1466 = vmatpush.msra.mxu0 0.0
      %1467 = vmatpush.msra.mxu0 0.0
      %1468 = vmatpush.msra.mxu0 0.0
      %1469 = vmatpush.msra.mxu0 0.0
      %1470 = vmatpush.msra.mxu0 0.0
      %1471 = vmatpush.msra.mxu0 0.0
      %1472 = vmatpush.msra.mxu0 0.0
      %1473 = vmatpush.msra.mxu0 0.0
      %1474 = vmatpush.msra.mxu0 0.0
      %1475 = vmatpush.msra.mxu0 0.0
      %1476 = vmatpush.msra.mxu0 0.0
      %1477 = vmatpush.msra.mxu0 0.0
      %1478 = vmatpush.msra.mxu0 0.0
      %1479 = vmatpush.msra.mxu0 0.0
      %1480 = vmatpush.msra.mxu0 %v1118
      %1481 = vmatpush.msra.mxu0 %v984
      %1482 = vmatmul.f32.gmra.mxu0 %v1461
      %v1483 = vpop.f32.mrf.mxu0
      %v1484 = vadd.f32 0.0, %v1483
      %1485 = vmatmul.f32.gmra.mxu0 %v1464
      %v1486 = vpop.f32.mrf.mxu0
      %v1487 = vadd.f32 0.0, %v1486
      %1488 = vdwg.mxu0
      %v1489 = vadd.f32 %v1452, %v1484
      %v1490 = vadd.f32 %v1453, %v1487
      %v1492 = vsel %vm495, %v1489, 0
      %v1495 = vsel %vm495, %v1490, 0
      %1497 = vmatpush.msra.mxu0 0.0
      %1498 = vmatpush.msra.mxu0 0.0
      %1499 = vmatpush.msra.mxu0 0.0
      %1500 = vmatpush.msra.mxu0 0.0
      %1501 = vmatpush.msra.mxu0 0.0
      %1502 = vmatpush.msra.mxu0 0.0
      %1503 = vmatpush.msra.mxu0 0.0
      %1504 = vmatpush.msra.mxu0 0.0
      %1505 = vmatpush.msra.mxu0 0.0
      %1506 = vmatpush.msra.mxu0 0.0
      %1507 = vmatpush.msra.mxu0 0.0
      %1508 = vmatpush.msra.mxu0 0.0
      %1509 = vmatpush.msra.mxu0 0.0
      %1510 = vmatpush.msra.mxu0 0.0
      %1511 = vmatpush.msra.mxu0 0.0
      %1512 = vmatpush.msra.mxu0 %v455
      %1513 = vmatmul.f32.gmra.mxu0 %v1492
      %v1514 = vpop.f32.mrf.mxu0
      %v1515 = vadd.f32 0.0, %v1514
      %1516 = vmatmul.f32.gmra.mxu0 %v1495
      %v1517 = vpop.f32.mrf.mxu0
      %v1518 = vadd.f32 0.0, %v1517
      %1519 = vdwg.mxu0
      %v1520 = vadd.f32 %v1342, %v1515
      %v1521 = vadd.f32 %v1345, %v1518
      %v1522 = vadd.s32 %v989, 3
      %v1523 = vadd.s32 %v990, 3
      %vm1524 = vcmp.eq.s32.totalorder %v245, %v1522
      %vm1525 = vcmp.eq.s32.totalorder %v245, %v1523
      %v1526 = vsel %vm1524, 1.0, 0.0
      %v1527 = vsel %vm1525, 1.0, 0.0
      %v1528 = vadd.s32 %v989, 4294967289
      %v1529 = vadd.s32 %v990, 4294967289
      %vm1530 = vcmp.eq.s32.totalorder %v245, %v1528
      %vm1531 = vcmp.eq.s32.totalorder %v245, %v1529
      %v1532 = vsel %vm1530, 1.0, 0.0
      %v1533 = vsel %vm1531, 1.0, 0.0
      %v1535 = vsel %vm262, %v1532, 0
      %v1538 = vsel %vm262, %v1533, 0
      %1540 = vmatpush.msra.mxu0 0.0
      %1541 = vmatpush.msra.mxu0 0.0
      %1542 = vmatpush.msra.mxu0 0.0
      %1543 = vmatpush.msra.mxu0 0.0
      %1544 = vmatpush.msra.mxu0 0.0
      %1545 = vmatpush.msra.mxu0 0.0
      %1546 = vmatpush.msra.mxu0 0.0
      %1547 = vmatpush.msra.mxu0 0.0
      %1548 = vmatpush.msra.mxu0 0.0
      %1549 = vmatpush.msra.mxu0 0.0
      %1550 = vmatpush.msra.mxu0 0.0
      %1551 = vmatpush.msra.mxu0 0.0
      %1552 = vmatpush.msra.mxu0 0.0
      %1553 = vmatpush.msra.mxu0 0.0
      %1554 = vmatpush.msra.mxu0 %v1008
      %1555 = vmatpush.msra.mxu0 %v734
      %1556 = vmatmul.f32.gmra.mxu0 %v1535
      %v1557 = vpop.f32.mrf.mxu0
      %v1558 = vadd.f32 0.0, %v1557
      %1559 = vmatmul.f32.gmra.mxu0 %v1538
      %v1560 = vpop.f32.mrf.mxu0
      %v1561 = vadd.f32 0.0, %v1560
      %1562 = vdwg.mxu0
      %v1564 = vsel %vm262, %v1526, 0
      %v1567 = vsel %vm262, %v1527, 0
      %1569 = vmatpush.msra.mxu0 0.0
      %1570 = vmatpush.msra.mxu0 0.0
      %1571 = vmatpush.msra.mxu0 0.0
      %1572 = vmatpush.msra.mxu0 0.0
      %1573 = vmatpush.msra.mxu0 0.0
      %1574 = vmatpush.msra.mxu0 0.0
      %1575 = vmatpush.msra.mxu0 0.0
      %1576 = vmatpush.msra.mxu0 0.0
      %1577 = vmatpush.msra.mxu0 0.0
      %1578 = vmatpush.msra.mxu0 0.0
      %1579 = vmatpush.msra.mxu0 0.0
      %1580 = vmatpush.msra.mxu0 0.0
      %1581 = vmatpush.msra.mxu0 0.0
      %1582 = vmatpush.msra.mxu0 0.0
      %1583 = vmatpush.msra.mxu0 %v1040
      %1584 = vmatpush.msra.mxu0 %v609
      %1585 = vmatmul.f32.gmra.mxu0 %v1564
      %v1586 = vpop.f32.mrf.mxu0
      %v1587 = vadd.f32 %v1558, %v1586
      %1588 = vmatmul.f32.gmra.mxu0 %v1567
      %v1589 = vpop.f32.mrf.mxu0
      %v1590 = vadd.f32 %v1561, %v1589
      %1591 = vdwg.mxu0
      %v1592 = vadd.s32 %v989, 4294967279
      %v1593 = vadd.s32 %v990, 4294967279
      %vm1594 = vcmp.eq.s32.totalorder %v245, %v1592
      %vm1595 = vcmp.eq.s32.totalorder %v245, %v1593
      %v1596 = vsel %vm1594, 1.0, 0.0
      %v1597 = vsel %vm1595, 1.0, 0.0
      %v1599 = vsel %vm262, %v1596, 0
      %v1602 = vsel %vm262, %v1597, 0
      %1604 = vmatpush.msra.mxu0 0.0
      %1605 = vmatpush.msra.mxu0 0.0
      %1606 = vmatpush.msra.mxu0 0.0
      %1607 = vmatpush.msra.mxu0 0.0
      %1608 = vmatpush.msra.mxu0 0.0
      %1609 = vmatpush.msra.mxu0 0.0
      %1610 = vmatpush.msra.mxu0 0.0
      %1611 = vmatpush.msra.mxu0 0.0
      %1612 = vmatpush.msra.mxu0 0.0
      %1613 = vmatpush.msra.mxu0 0.0
      %1614 = vmatpush.msra.mxu0 0.0
      %1615 = vmatpush.msra.mxu0 0.0
      %1616 = vmatpush.msra.mxu0 0.0
      %1617 = vmatpush.msra.mxu0 0.0
      %1618 = vmatpush.msra.mxu0 %v1078
      %1619 = vmatpush.msra.mxu0 %v859
      %1620 = vmatmul.f32.gmra.mxu0 %v1599
      %v1621 = vpop.f32.mrf.mxu0
      %v1622 = vadd.f32 0.0, %v1621
      %1623 = vmatmul.f32.gmra.mxu0 %v1602
      %v1624 = vpop.f32.mrf.mxu0
      %v1625 = vadd.f32 0.0, %v1624
      %1626 = vdwg.mxu0
      %v1627 = vadd.f32 %v1587, %v1622
      %v1628 = vadd.f32 %v1590, %v1625
      %v1629 = vadd.s32 %v989, 4294967269
      %v1630 = vadd.s32 %v990, 4294967269
      %vm1631 = vcmp.eq.s32.totalorder %v245, %v1629
      %vm1632 = vcmp.eq.s32.totalorder %v245, %v1630
      %v1633 = vsel %vm1631, 1.0, 0.0
      %v1634 = vsel %vm1632, 1.0, 0.0
      %v1636 = vsel %vm262, %v1633, 0
      %v1639 = vsel %vm262, %v1634, 0
      %1641 = vmatpush.msra.mxu0 0.0
      %1642 = vmatpush.msra.mxu0 0.0
      %1643 = vmatpush.msra.mxu0 0.0
      %1644 = vmatpush.msra.mxu0 0.0
      %1645 = vmatpush.msra.mxu0 0.0
      %1646 = vmatpush.msra.mxu0 0.0
      %1647 = vmatpush.msra.mxu0 0.0
      %1648 = vmatpush.msra.mxu0 0.0
      %1649 = vmatpush.msra.mxu0 0.0
      %1650 = vmatpush.msra.mxu0 0.0
      %1651 = vmatpush.msra.mxu0 0.0
      %1652 = vmatpush.msra.mxu0 0.0
      %1653 = vmatpush.msra.mxu0 0.0
      %1654 = vmatpush.msra.mxu0 0.0
      %1655 = vmatpush.msra.mxu0 %v1118
      %1656 = vmatpush.msra.mxu0 %v984
      %1657 = vmatmul.f32.gmra.mxu0 %v1636
      %v1658 = vpop.f32.mrf.mxu0
      %v1659 = vadd.f32 0.0, %v1658
      %1660 = vmatmul.f32.gmra.mxu0 %v1639
      %v1661 = vpop.f32.mrf.mxu0
      %v1662 = vadd.f32 0.0, %v1661
      %1663 = vdwg.mxu0
      %v1664 = vadd.f32 %v1627, %v1659
      %v1665 = vadd.f32 %v1628, %v1662
      %v1667 = vsel %vm495, %v1664, 0
      %v1670 = vsel %vm495, %v1665, 0
      %1672 = vmatpush.msra.mxu0 0.0
      %1673 = vmatpush.msra.mxu0 0.0
      %1674 = vmatpush.msra.mxu0 0.0
      %1675 = vmatpush.msra.mxu0 0.0
      %1676 = vmatpush.msra.mxu0 0.0
      %1677 = vmatpush.msra.mxu0 0.0
      %1678 = vmatpush.msra.mxu0 0.0
      %1679 = vmatpush.msra.mxu0 0.0
      %1680 = vmatpush.msra.mxu0 0.0
      %1681 = vmatpush.msra.mxu0 0.0
      %1682 = vmatpush.msra.mxu0 0.0
      %1683 = vmatpush.msra.mxu0 0.0
      %1684 = vmatpush.msra.mxu0 0.0
      %1685 = vmatpush.msra.mxu0 0.0
      %1686 = vmatpush.msra.mxu0 0.0
      %1687 = vmatpush.msra.mxu0 %v456
      %1688 = vmatmul.f32.gmra.mxu0 %v1667
      %v1689 = vpop.f32.mrf.mxu0
      %v1690 = vadd.f32 0.0, %v1689
      %1691 = vmatmul.f32.gmra.mxu0 %v1670
      %v1692 = vpop.f32.mrf.mxu0
      %v1693 = vadd.f32 0.0, %v1692
      %1694 = vdwg.mxu0
      %v1695 = vadd.f32 %v1520, %v1690
      %v1696 = vadd.f32 %v1521, %v1693
      %v1697 = vperm.slane %v457, 0
      %v1698 = vadd.f32 %v1695, %v1697
      %v1699 = vadd.f32 %v1696, %v1697
      %v1700 = vadd.f32 %v443, %v1698
      %v1701 = vadd.f32 %v444, %v1699
      %v1702 = vld [vmem:[%s3 + $0x70] sm:$0x1]
      %v1703 = vld [vmem:[%s3 + $0x78] sm:$0x1]
      %v1704 = vsel %vm459, %v1700, 0.0
      %1705 = vadd.xlane.f32.xlu0 %v1704
      %v1706 = vpop.xlane.xlu0 %1705
      %vm1707 = vcmask 254976
      %v1708 = vsel %vm1707, %v1701, 0.0
      %1709 = vadd.xlane.f32.xlu0 %v1708
      %v1710 = vpop.xlane.xlu0 %1709
      %v1711 = vrcp.pop 32.0
      %v1712 = vmul.f32 32.0, %v1711
      %v1713 = vsub.f32 1.0, %v1712
      %v1714 = vmul.f32 %v1711, %v1713
      %v1715 = vadd.f32 %v1711, %v1714
      %vm1716 = vweird.f32 %v1711
      %v1717 = vsel %vm1716, %v1711, %v1715
      %v1718 = vmul.f32 %v1706, %v1717
      %v1719 = vmul.f32 %v1710, %v1717
      %v1720 = vsub.f32 %v1700, %v1718
      %v1721 = vsub.f32 %v1701, %v1719
      %v1722 = vmul.f32 %v1720, %v1720
      %v1723 = vmul.f32 %v1721, %v1721
      %v1724 = vsel %vm459, %v1722, 0.0
      %1725 = vadd.xlane.f32.xlu0 %v1724
      %v1726 = vpop.xlane.xlu0 %1725
      %v1727 = vsel %vm1707, %v1723, 0.0
      %1728 = vadd.xlane.f32.xlu0 %v1727
      %v1729 = vpop.xlane.xlu0 %1728
      %v1730 = vmul.f32 %v1726, %v1717
      %v1731 = vmul.f32 %v1729, %v1717
      %v1732 = vadd.f32 %v1730, 1e-05
      %v1733 = vadd.f32 %v1731, 1e-05
      %v1734 = vrsqrt.pop %v1732
      %v1735 = vmul.f32 %v1734, %v1732
      %v1736 = vmul.f32 %v1735, %v1734
      %v1737 = vmul.f32 0.5, %v1736
      %v1738 = vsub.f32 1.5, %v1737
      %v1739 = vmul.f32 %v1734, %v1738
      %vm1740 = vweird.f32 %v1732
      %vm1741 = vweird.f32 %v1734
      %vm1742 = vmor %vm1740, %vm1741
      %v1743 = vsel %vm1742, %v1734, %v1739
      %v1744 = vrsqrt.pop %v1733
      %v1745 = vmul.f32 %v1744, %v1733
      %v1746 = vmul.f32 %v1745, %v1744
      %v1747 = vmul.f32 0.5, %v1746
      %v1748 = vsub.f32 1.5, %v1747
      %v1749 = vmul.f32 %v1744, %v1748
      %vm1750 = vweird.f32 %v1733
      %vm1751 = vweird.f32 %v1744
      %vm1752 = vmor %vm1750, %vm1751
      %v1753 = vsel %vm1752, %v1744, %v1749
      %v1754 = vmul.f32 %v1720, %v1743
      %v1755 = vmul.f32 %v1721, %v1753
      %v1756 = vperm.slane %v1702, 0
      %v1757 = vmul.f32 %v1754, %v1756
      %v1758 = vmul.f32 %v1755, %v1756
      %v1759 = vperm.slane %v1703, 0
      %v1760 = vadd.f32 %v1757, %v1759
      %v1761 = vadd.f32 %v1758, %v1759
      %v1762 = vld [vmem:[%s3 + $0x80] sm:$0xff]
      %v1763 = vld [vmem:[%s3 + $0x88] sm:$0xff]
      %v1764 = vld [vmem:[%s3 + $0x90] sm:$0xff]
      %v1765 = vld [vmem:[%s3 + $0x98] sm:$0xff]
      %v1766 = vld [vmem:[%s3 + $0xa0] sm:$0x1]
      %v1767 = vld [vmem:[%s3 + $0xa8] sm:$0xff]
      %v1768 = vld [vmem:[%s3 + $0xb0] sm:$0xff]
      %v1769 = vld [vmem:[%s3 + $0xb8] sm:$0xff]
      %v1770 = vld [vmem:[%s3 + $0xc0] sm:$0xff]
      %v1771 = vld [vmem:[%s3 + $0xc8] sm:$0x1]
      %v1772 = vld [vmem:[%s3 + $0xd0] sm:$0xff]
      %v1773 = vld [vmem:[%s3 + $0xd8] sm:$0xff]
      %v1774 = vld [vmem:[%s3 + $0xe0] sm:$0xff]
      %v1775 = vld [vmem:[%s3 + $0xe8] sm:$0xff]
      %v1776 = vld [vmem:[%s3 + $0xf0] sm:$0x1]
      %v1777 = vperm.slane %v1766, 0
      %v1779 = vsel %vm459, %v1760, 0
      %v1782 = vsel %vm459, %v1761, 0
      %1784 = vmatpush.msra.mxu0 0.0
      %1785 = vmatpush.msra.mxu0 0.0
      %1786 = vmatpush.msra.mxu0 0.0
      %1787 = vmatpush.msra.mxu0 0.0
      %1788 = vmatpush.msra.mxu0 0.0
      %1789 = vmatpush.msra.mxu0 0.0
      %1790 = vmatpush.msra.mxu0 0.0
      %1791 = vmatpush.msra.mxu0 0.0
      %1792 = vmatpush.msra.mxu0 0.0
      %1793 = vmatpush.msra.mxu0 0.0
      %1794 = vmatpush.msra.mxu0 0.0
      %1795 = vmatpush.msra.mxu0 0.0
      %1796 = vmatpush.msra.mxu0 %v1765
      %1797 = vmatpush.msra.mxu0 %v1764
      %1798 = vmatpush.msra.mxu0 %v1763
      %1799 = vmatpush.msra.mxu0 %v1762
      %1800 = vmatmul.f32.gmra.mxu0 %v1779
      %v1801 = vpop.f32.mrf.mxu0
      %v1802 = vadd.f32 %v1777, %v1801
      %1803 = vmatmul.f32.gmra.mxu0 %v1782
      %v1804 = vpop.f32.mrf.mxu0
      %v1805 = vadd.f32 %v1777, %v1804
      %1806 = vdwg.mxu0
      %v1807 = vperm.slane %v1771, 0
      %v1809 = vsel %vm459, %v445, 0
      %1811 = vmatpush.msra.mxu0 0.0
      %1812 = vmatpush.msra.mxu0 0.0
      %1813 = vmatpush.msra.mxu0 0.0
      %1814 = vmatpush.msra.mxu0 0.0
      %1815 = vmatpush.msra.mxu0 0.0
      %1816 = vmatpush.msra.mxu0 0.0
      %1817 = vmatpush.msra.mxu0 0.0
      %1818 = vmatpush.msra.mxu0 0.0
      %1819 = vmatpush.msra.mxu0 0.0
      %1820 = vmatpush.msra.mxu0 0.0
      %1821 = vmatpush.msra.mxu0 0.0
      %1822 = vmatpush.msra.mxu0 0.0
      %1823 = vmatpush.msra.mxu0 %v1770
      %1824 = vmatpush.msra.mxu0 %v1769
      %1825 = vmatpush.msra.mxu0 %v1768
      %1826 = vmatpush.msra.mxu0 %v1767
      %1827 = vmatmul.f32.gmra.mxu0 %v1809
      %v1828 = vpop.f32.mrf.mxu0
      %v1829 = vadd.f32 %v1807, %v1828
      %1830 = vdwg.mxu0
      %v1832 = vsel %vm495, %v1802, 0
      %v1835 = vsel %vm495, %v1805, 0
      %v1838 = vsel %vm495, %v1829, 0
      %1840 = vmatpush.xpose.msra.mxu0 0.0
      %1841 = vmatpush.xpose.msra.mxu0 0.0
      %1842 = vmatpush.xpose.msra.mxu0 0.0
      %1843 = vmatpush.xpose.msra.mxu0 0.0
      %1844 = vmatpush.xpose.msra.mxu0 0.0
      %1845 = vmatpush.xpose.msra.mxu0 0.0
      %1846 = vmatpush.xpose.msra.mxu0 0.0
      %1847 = vmatpush.xpose.msra.mxu0 0.0
      %1848 = vmatpush.xpose.msra.mxu0 0.0
      %1849 = vmatpush.xpose.msra.mxu0 0.0
      %1850 = vmatpush.xpose.msra.mxu0 0.0
      %1851 = vmatpush.xpose.msra.mxu0 0.0
      %1852 = vmatpush.xpose.msra.mxu0 0.0
      %1853 = vmatpush.xpose.msra.mxu0 0.0
      %1854 = vmatpush.xpose.msra.mxu0 0.0
      %1855 = vmatpush.xpose.msra.mxu0 %v1838
      %1856 = vmatmul.f32.gmra.mxu0 %v1832
      %v1857 = vpop.f32.mrf.mxu0
      %v1858 = vadd.f32 0.0, %v1857
      %1859 = vmatmul.f32.gmra.mxu0 %v1835
      %v1860 = vpop.f32.mrf.mxu0
      %v1861 = vadd.f32 0.0, %v1860
      %1862 = vdwg.mxu0
      %vm1863 = vcmask 48128
      %v1864 = vsel %vm1863, %v1858, -inf
      %1865 = vmax.xlane.f32.xlu0 %v1864
      %v1866 = vpop.xlane.xlu0 %1865
      %vm1867 = vcmask 41984
      %v1868 = vsel %vm1867, %v1861, -inf
      %1869 = vmax.xlane.f32.xlu0 %v1868
      %v1870 = vpop.xlane.xlu0 %1869
      %v1871 = vsub.f32 %v1858, %v1866
      %v1872 = vsub.f32 %v1861, %v1870
      %v1873 = vmul.f32 %v1871, 1.442695
      %v1874 = vpow.pop %v1873
      %v1875 = vmul.f32 %v1872, 1.442695
      %v1876 = vpow.pop %v1875
      %v1877 = vsel %vm1863, %v1874, 0.0
      %1878 = vadd.xlane.f32.xlu0 %v1877
      %v1879 = vpop.xlane.xlu0 %1878
      %v1880 = vsel %vm1867, %v1876, 0.0
      %1881 = vadd.xlane.f32.xlu0 %v1880
      %v1882 = vpop.xlane.xlu0 %1881
      %v1883 = vrcp.pop %v1879
      %v1884 = vmul.f32 %v1879, %v1883
      %v1885 = vsub.f32 1.0, %v1884
      %v1886 = vmul.f32 %v1883, %v1885
      %v1887 = vadd.f32 %v1883, %v1886
      %vm1888 = vweird.f32 %v1879
      %vm1889 = vweird.f32 %v1883
      %vm1890 = vmor %vm1888, %vm1889
      %v1891 = vsel %vm1890, %v1883, %v1887
      %v1892 = vand.u32 2147483647, %v1879
      %vm1893 = vcmp.eq.f32.partialorder %v1892, 8.507059e+37
      %v1894 = vand.u32 %v1879, 2147483648
      %v1895 = vor.u32 1.1754944e-38, %v1894
      %v1896 = vsel %vm1893, %v1895, %v1891
      %v1897 = vmul.f32 %v1874, %v1896
      %v1898 = vrcp.pop %v1882
      %v1899 = vmul.f32 %v1882, %v1898
      %v1900 = vsub.f32 1.0, %v1899
      %v1901 = vmul.f32 %v1898, %v1900
      %v1902 = vadd.f32 %v1898, %v1901
      %vm1903 = vweird.f32 %v1882
      %vm1904 = vweird.f32 %v1898
      %vm1905 = vmor %vm1903, %vm1904
      %v1906 = vsel %vm1905, %v1898, %v1902
      %v1907 = vand.u32 2147483647, %v1882
      %vm1908 = vcmp.eq.f32.partialorder %v1907, 8.507059e+37
      %v1909 = vand.u32 %v1882, 2147483648
      %v1910 = vor.u32 1.1754944e-38, %v1909
      %v1911 = vsel %vm1908, %v1910, %v1906
      %v1912 = vmul.f32 %v1876, %v1911
      %1913 = vrot.lane.b32.xlu0 %v1829, 96
      %v1914 = vpop.permute.xlu0 %1913
      %v1916 = vsel %vm1863, %v1897, 0
      %v1919 = vsel %vm1863, %v1912, 0
      %vm1921 = vcmask 1045504
      %v1922 = vsel %vm1921, %v1914, 0
      %1924 = vmatpush.msra.mxu0 0.0
      %1925 = vmatpush.msra.mxu0 0.0
      %1926 = vmatpush.msra.mxu0 0.0
      %1927 = vmatpush.msra.mxu0 0.0
      %1928 = vmatpush.msra.mxu0 0.0
      %1929 = vmatpush.msra.mxu0 0.0
      %1930 = vmatpush.msra.mxu0 0.0
      %1931 = vmatpush.msra.mxu0 0.0
      %1932 = vmatpush.msra.mxu0 0.0
      %1933 = vmatpush.msra.mxu0 0.0
      %1934 = vmatpush.msra.mxu0 0.0
      %1935 = vmatpush.msra.mxu0 0.0
      %1936 = vmatpush.msra.mxu0 0.0
      %1937 = vmatpush.msra.mxu0 0.0
      %1938 = vmatpush.msra.mxu0 0.0
      %1939 = vmatpush.msra.mxu0 %v1922
      %1940 = vmatmul.f32.gmra.mxu0 %v1916
      %v1941 = vpop.f32.mrf.mxu0
      %v1942 = vadd.f32 0.0, %v1941
      %1943 = vmatmul.f32.gmra.mxu0 %v1919
      %v1944 = vpop.f32.mrf.mxu0
      %v1945 = vadd.f32 0.0, %v1944
      %1946 = vdwg.mxu0
      %1947 = vrot.lane.b32.xlu0 %v1802, 120
      %v1948 = vpop.permute.xlu0 %1947
      %1949 = vrot.lane.b32.xlu0 %v1805, 120
      %v1950 = vpop.permute.xlu0 %1949
      %1951 = vrot.lane.b32.xlu0 %v1829, 120
      %v1952 = vpop.permute.xlu0 %1951
      %v1953 = vsel %vm495, %v1948, 0
      %v1955 = vsel %vm495, %v1950, 0
      %v1957 = vsel %vm495, %v1952, 0
      %1959 = vmatpush.xpose.msra.mxu0 0.0
      %1960 = vmatpush.xpose.msra.mxu0 0.0
      %1961 = vmatpush.xpose.msra.mxu0 0.0
      %1962 = vmatpush.xpose.msra.mxu0 0.0
      %1963 = vmatpush.xpose.msra.mxu0 0.0
      %1964 = vmatpush.xpose.msra.mxu0 0.0
      %1965 = vmatpush.xpose.msra.mxu0 0.0
      %1966 = vmatpush.xpose.msra.mxu0 0.0
      %1967 = vmatpush.xpose.msra.mxu0 0.0
      %1968 = vmatpush.xpose.msra.mxu0 0.0
      %1969 = vmatpush.xpose.msra.mxu0 0.0
      %1970 = vmatpush.xpose.msra.mxu0 0.0
      %1971 = vmatpush.xpose.msra.mxu0 0.0
      %1972 = vmatpush.xpose.msra.mxu0 0.0
      %1973 = vmatpush.xpose.msra.mxu0 0.0
      %1974 = vmatpush.xpose.msra.mxu0 %v1957
      %1975 = vmatmul.f32.gmra.mxu0 %v1953
      %v1976 = vpop.f32.mrf.mxu0
      %v1977 = vadd.f32 0.0, %v1976
      %1978 = vmatmul.f32.gmra.mxu0 %v1955
      %v1979 = vpop.f32.mrf.mxu0
      %v1980 = vadd.f32 0.0, %v1979
      %1981 = vdwg.mxu0
      %v1982 = vsel %vm1863, %v1977, -inf
      %1983 = vmax.xlane.f32.xlu0 %v1982
      %v1984 = vpop.xlane.xlu0 %1983
      %v1985 = vsel %vm1867, %v1980, -inf
      %1986 = vmax.xlane.f32.xlu0 %v1985
      %v1987 = vpop.xlane.xlu0 %1986
      %v1988 = vsub.f32 %v1977, %v1984
      %v1989 = vsub.f32 %v1980, %v1987
      %v1990 = vmul.f32 %v1988, 1.442695
      %v1991 = vpow.pop %v1990
      %v1992 = vmul.f32 %v1989, 1.442695
      %v1993 = vpow.pop %v1992
      %v1994 = vsel %vm1863, %v1991, 0.0
      %1995 = vadd.xlane.f32.xlu0 %v1994
      %v1996 = vpop.xlane.xlu0 %1995
      %v1997 = vsel %vm1867, %v1993, 0.0
      %1998 = vadd.xlane.f32.xlu0 %v1997
      %v1999 = vpop.xlane.xlu0 %1998
      %v2000 = vrcp.pop %v1996
      %v2001 = vmul.f32 %v1996, %v2000
      %v2002 = vsub.f32 1.0, %v2001
      %v2003 = vmul.f32 %v2000, %v2002
      %v2004 = vadd.f32 %v2000, %v2003
      %vm2005 = vweird.f32 %v1996
      %vm2006 = vweird.f32 %v2000
      %vm2007 = vmor %vm2005, %vm2006
      %v2008 = vsel %vm2007, %v2000, %v2004
      %v2009 = vand.u32 2147483647, %v1996
      %vm2010 = vcmp.eq.f32.partialorder %v2009, 8.507059e+37
      %v2011 = vand.u32 %v1996, 2147483648
      %v2012 = vor.u32 1.1754944e-38, %v2011
      %v2013 = vsel %vm2010, %v2012, %v2008
      %v2014 = vmul.f32 %v1991, %v2013
      %v2015 = vrcp.pop %v1999
      %v2016 = vmul.f32 %v1999, %v2015
      %v2017 = vsub.f32 1.0, %v2016
      %v2018 = vmul.f32 %v2015, %v2017
      %v2019 = vadd.f32 %v2015, %v2018
      %vm2020 = vweird.f32 %v1999
      %vm2021 = vweird.f32 %v2015
      %vm2022 = vmor %vm2020, %vm2021
      %v2023 = vsel %vm2022, %v2015, %v2019
      %v2024 = vand.u32 2147483647, %v1999
      %vm2025 = vcmp.eq.f32.partialorder %v2024, 8.507059e+37
      %v2026 = vand.u32 %v1999, 2147483648
      %v2027 = vor.u32 1.1754944e-38, %v2026
      %v2028 = vsel %vm2025, %v2027, %v2023
      %v2029 = vmul.f32 %v1993, %v2028
      %2030 = vrot.lane.b32.xlu0 %v1829, 88
      %v2031 = vpop.permute.xlu0 %2030
      %v2033 = vsel %vm1863, %v2014, 0
      %v2036 = vsel %vm1863, %v2029, 0
      %v2038 = vsel %vm1921, %v2031, 0
      %2040 = vmatpush.msra.mxu0 0.0
      %2041 = vmatpush.msra.mxu0 0.0
      %2042 = vmatpush.msra.mxu0 0.0
      %2043 = vmatpush.msra.mxu0 0.0
      %2044 = vmatpush.msra.mxu0 0.0
      %2045 = vmatpush.msra.mxu0 0.0
      %2046 = vmatpush.msra.mxu0 0.0
      %2047 = vmatpush.msra.mxu0 0.0
      %2048 = vmatpush.msra.mxu0 0.0
      %2049 = vmatpush.msra.mxu0 0.0
      %2050 = vmatpush.msra.mxu0 0.0
      %2051 = vmatpush.msra.mxu0 0.0
      %2052 = vmatpush.msra.mxu0 0.0
      %2053 = vmatpush.msra.mxu0 0.0
      %2054 = vmatpush.msra.mxu0 0.0
      %2055 = vmatpush.msra.mxu0 %v2038
      %2056 = vmatmul.f32.gmra.mxu0 %v2033
      %v2057 = vpop.f32.mrf.mxu0
      %v2058 = vadd.f32 0.0, %v2057
      %2059 = vmatmul.f32.gmra.mxu0 %v2036
      %v2060 = vpop.f32.mrf.mxu0
      %v2061 = vadd.f32 0.0, %v2060
      %2062 = vdwg.mxu0
      %2063 = vrot.lane.b32.xlu0 %v1802, 112
      %v2064 = vpop.permute.xlu0 %2063
      %2065 = vrot.lane.b32.xlu0 %v1805, 112
      %v2066 = vpop.permute.xlu0 %2065
      %2067 = vrot.lane.b32.xlu0 %v1829, 112
      %v2068 = vpop.permute.xlu0 %2067
      %v2069 = vsel %vm495, %v2064, 0
      %v2071 = vsel %vm495, %v2066, 0
      %v2073 = vsel %vm495, %v2068, 0
      %2075 = vmatpush.xpose.msra.mxu0 0.0
      %2076 = vmatpush.xpose.msra.mxu0 0.0
      %2077 = vmatpush.xpose.msra.mxu0 0.0
      %2078 = vmatpush.xpose.msra.mxu0 0.0
      %2079 = vmatpush.xpose.msra.mxu0 0.0
      %2080 = vmatpush.xpose.msra.mxu0 0.0
      %2081 = vmatpush.xpose.msra.mxu0 0.0
      %2082 = vmatpush.xpose.msra.mxu0 0.0
      %2083 = vmatpush.xpose.msra.mxu0 0.0
      %2084 = vmatpush.xpose.msra.mxu0 0.0
      %2085 = vmatpush.xpose.msra.mxu0 0.0
      %2086 = vmatpush.xpose.msra.mxu0 0.0
      %2087 = vmatpush.xpose.msra.mxu0 0.0
      %2088 = vmatpush.xpose.msra.mxu0 0.0
      %2089 = vmatpush.xpose.msra.mxu0 0.0
      %2090 = vmatpush.xpose.msra.mxu0 %v2073
      %2091 = vmatmul.f32.gmra.mxu0 %v2069
      %v2092 = vpop.f32.mrf.mxu0
      %v2093 = vadd.f32 0.0, %v2092
      %2094 = vmatmul.f32.gmra.mxu0 %v2071
      %v2095 = vpop.f32.mrf.mxu0
      %v2096 = vadd.f32 0.0, %v2095
      %2097 = vdwg.mxu0
      %v2098 = vsel %vm1863, %v2093, -inf
      %2099 = vmax.xlane.f32.xlu0 %v2098
      %v2100 = vpop.xlane.xlu0 %2099
      %v2101 = vsel %vm1867, %v2096, -inf
      %2102 = vmax.xlane.f32.xlu0 %v2101
      %v2103 = vpop.xlane.xlu0 %2102
      %v2104 = vsub.f32 %v2093, %v2100
      %v2105 = vsub.f32 %v2096, %v2103
      %v2106 = vmul.f32 %v2104, 1.442695
      %v2107 = vpow.pop %v2106
      %v2108 = vmul.f32 %v2105, 1.442695
      %v2109 = vpow.pop %v2108
      %v2110 = vsel %vm1863, %v2107, 0.0
      %2111 = vadd.xlane.f32.xlu0 %v2110
      %v2112 = vpop.xlane.xlu0 %2111
      %v2113 = vsel %vm1867, %v2109, 0.0
      %2114 = vadd.xlane.f32.xlu0 %v2113
      %v2115 = vpop.xlane.xlu0 %2114
      %v2116 = vrcp.pop %v2112
      %v2117 = vmul.f32 %v2112, %v2116
      %v2118 = vsub.f32 1.0, %v2117
      %v2119 = vmul.f32 %v2116, %v2118
      %v2120 = vadd.f32 %v2116, %v2119
      %vm2121 = vweird.f32 %v2112
      %vm2122 = vweird.f32 %v2116
      %vm2123 = vmor %vm2121, %vm2122
      %v2124 = vsel %vm2123, %v2116, %v2120
      %v2125 = vand.u32 2147483647, %v2112
      %vm2126 = vcmp.eq.f32.partialorder %v2125, 8.507059e+37
      %v2127 = vand.u32 %v2112, 2147483648
      %v2128 = vor.u32 1.1754944e-38, %v2127
      %v2129 = vsel %vm2126, %v2128, %v2124
      %v2130 = vmul.f32 %v2107, %v2129
      %v2131 = vrcp.pop %v2115
      %v2132 = vmul.f32 %v2115, %v2131
      %v2133 = vsub.f32 1.0, %v2132
      %v2134 = vmul.f32 %v2131, %v2133
      %v2135 = vadd.f32 %v2131, %v2134
      %vm2136 = vweird.f32 %v2115
      %vm2137 = vweird.f32 %v2131
      %vm2138 = vmor %vm2136, %vm2137
      %v2139 = vsel %vm2138, %v2131, %v2135
      %v2140 = vand.u32 2147483647, %v2115
      %vm2141 = vcmp.eq.f32.partialorder %v2140, 8.507059e+37
      %v2142 = vand.u32 %v2115, 2147483648
      %v2143 = vor.u32 1.1754944e-38, %v2142
      %v2144 = vsel %vm2141, %v2143, %v2139
      %v2145 = vmul.f32 %v2109, %v2144
      %2146 = vrot.lane.b32.xlu0 %v1829, 80
      %v2147 = vpop.permute.xlu0 %2146
      %v2149 = vsel %vm1863, %v2130, 0
      %v2152 = vsel %vm1863, %v2145, 0
      %v2154 = vsel %vm1921, %v2147, 0
      %2156 = vmatpush.msra.mxu0 0.0
      %2157 = vmatpush.msra.mxu0 0.0
      %2158 = vmatpush.msra.mxu0 0.0
      %2159 = vmatpush.msra.mxu0 0.0
      %2160 = vmatpush.msra.mxu0 0.0
      %2161 = vmatpush.msra.mxu0 0.0
      %2162 = vmatpush.msra.mxu0 0.0
      %2163 = vmatpush.msra.mxu0 0.0
      %2164 = vmatpush.msra.mxu0 0.0
      %2165 = vmatpush.msra.mxu0 0.0
      %2166 = vmatpush.msra.mxu0 0.0
      %2167 = vmatpush.msra.mxu0 0.0
      %2168 = vmatpush.msra.mxu0 0.0
      %2169 = vmatpush.msra.mxu0 0.0
      %2170 = vmatpush.msra.mxu0 0.0
      %2171 = vmatpush.msra.mxu0 %v2154
      %2172 = vmatmul.f32.gmra.mxu0 %v2149
      %v2173 = vpop.f32.mrf.mxu0
      %v2174 = vadd.f32 0.0, %v2173
      %2175 = vmatmul.f32.gmra.mxu0 %v2152
      %v2176 = vpop.f32.mrf.mxu0
      %v2177 = vadd.f32 0.0, %v2176
      %2178 = vdwg.mxu0
      %2179 = vrot.lane.b32.xlu0 %v1802, 104
      %v2180 = vpop.permute.xlu0 %2179
      %2181 = vrot.lane.b32.xlu0 %v1805, 104
      %v2182 = vpop.permute.xlu0 %2181
      %2183 = vrot.lane.b32.xlu0 %v1829, 104
      %v2184 = vpop.permute.xlu0 %2183
      %v2185 = vsel %vm495, %v2180, 0
      %v2187 = vsel %vm495, %v2182, 0
      %v2189 = vsel %vm495, %v2184, 0
      %2191 = vmatpush.xpose.msra.mxu0 0.0
      %2192 = vmatpush.xpose.msra.mxu0 0.0
      %2193 = vmatpush.xpose.msra.mxu0 0.0
      %2194 = vmatpush.xpose.msra.mxu0 0.0
      %2195 = vmatpush.xpose.msra.mxu0 0.0
      %2196 = vmatpush.xpose.msra.mxu0 0.0
      %2197 = vmatpush.xpose.msra.mxu0 0.0
      %2198 = vmatpush.xpose.msra.mxu0 0.0
      %2199 = vmatpush.xpose.msra.mxu0 0.0
      %2200 = vmatpush.xpose.msra.mxu0 0.0
      %2201 = vmatpush.xpose.msra.mxu0 0.0
      %2202 = vmatpush.xpose.msra.mxu0 0.0
      %2203 = vmatpush.xpose.msra.mxu0 0.0
      %2204 = vmatpush.xpose.msra.mxu0 0.0
      %2205 = vmatpush.xpose.msra.mxu0 0.0
      %2206 = vmatpush.xpose.msra.mxu0 %v2189
      %2207 = vmatmul.f32.gmra.mxu0 %v2185
      %v2208 = vpop.f32.mrf.mxu0
      %v2209 = vadd.f32 0.0, %v2208
      %2210 = vmatmul.f32.gmra.mxu0 %v2187
      %v2211 = vpop.f32.mrf.mxu0
      %v2212 = vadd.f32 0.0, %v2211
      %2213 = vdwg.mxu0
      %v2214 = vsel %vm1863, %v2209, -inf
      %2215 = vmax.xlane.f32.xlu0 %v2214
      %v2216 = vpop.xlane.xlu0 %2215
      %v2217 = vsel %vm1867, %v2212, -inf
      %2218 = vmax.xlane.f32.xlu0 %v2217
      %v2219 = vpop.xlane.xlu0 %2218
      %v2220 = vsub.f32 %v2209, %v2216
      %v2221 = vsub.f32 %v2212, %v2219
      %v2222 = vmul.f32 %v2220, 1.442695
      %v2223 = vpow.pop %v2222
      %v2224 = vmul.f32 %v2221, 1.442695
      %v2225 = vpow.pop %v2224
      %v2226 = vsel %vm1863, %v2223, 0.0
      %2227 = vadd.xlane.f32.xlu0 %v2226
      %v2228 = vpop.xlane.xlu0 %2227
      %v2229 = vsel %vm1867, %v2225, 0.0
      %2230 = vadd.xlane.f32.xlu0 %v2229
      %v2231 = vpop.xlane.xlu0 %2230
      %v2232 = vrcp.pop %v2228
      %v2233 = vmul.f32 %v2228, %v2232
      %v2234 = vsub.f32 1.0, %v2233
      %v2235 = vmul.f32 %v2232, %v2234
      %v2236 = vadd.f32 %v2232, %v2235
      %vm2237 = vweird.f32 %v2228
      %vm2238 = vweird.f32 %v2232
      %vm2239 = vmor %vm2237, %vm2238
      %v2240 = vsel %vm2239, %v2232, %v2236
      %v2241 = vand.u32 2147483647, %v2228
      %vm2242 = vcmp.eq.f32.partialorder %v2241, 8.507059e+37
      %v2243 = vand.u32 %v2228, 2147483648
      %v2244 = vor.u32 1.1754944e-38, %v2243
      %v2245 = vsel %vm2242, %v2244, %v2240
      %v2246 = vmul.f32 %v2223, %v2245
      %v2247 = vrcp.pop %v2231
      %v2248 = vmul.f32 %v2231, %v2247
      %v2249 = vsub.f32 1.0, %v2248
      %v2250 = vmul.f32 %v2247, %v2249
      %v2251 = vadd.f32 %v2247, %v2250
      %vm2252 = vweird.f32 %v2231
      %vm2253 = vweird.f32 %v2247
      %vm2254 = vmor %vm2252, %vm2253
      %v2255 = vsel %vm2254, %v2247, %v2251
      %v2256 = vand.u32 2147483647, %v2231
      %vm2257 = vcmp.eq.f32.partialorder %v2256, 8.507059e+37
      %v2258 = vand.u32 %v2231, 2147483648
      %v2259 = vor.u32 1.1754944e-38, %v2258
      %v2260 = vsel %vm2257, %v2259, %v2255
      %v2261 = vmul.f32 %v2225, %v2260
      %2262 = vrot.lane.b32.xlu0 %v1829, 72
      %v2263 = vpop.permute.xlu0 %2262
      %v2265 = vsel %vm1863, %v2246, 0
      %v2268 = vsel %vm1863, %v2261, 0
      %v2270 = vsel %vm1921, %v2263, 0
      %2272 = vmatpush.msra.mxu0 0.0
      %2273 = vmatpush.msra.mxu0 0.0
      %2274 = vmatpush.msra.mxu0 0.0
      %2275 = vmatpush.msra.mxu0 0.0
      %2276 = vmatpush.msra.mxu0 0.0
      %2277 = vmatpush.msra.mxu0 0.0
      %2278 = vmatpush.msra.mxu0 0.0
      %2279 = vmatpush.msra.mxu0 0.0
      %2280 = vmatpush.msra.mxu0 0.0
      %2281 = vmatpush.msra.mxu0 0.0
      %2282 = vmatpush.msra.mxu0 0.0
      %2283 = vmatpush.msra.mxu0 0.0
      %2284 = vmatpush.msra.mxu0 0.0
      %2285 = vmatpush.msra.mxu0 0.0
      %2286 = vmatpush.msra.mxu0 0.0
      %2287 = vmatpush.msra.mxu0 %v2270
      %2288 = vmatmul.f32.gmra.mxu0 %v2265
      %v2289 = vpop.f32.mrf.mxu0
      %v2290 = vadd.f32 0.0, %v2289
      %2291 = vmatmul.f32.gmra.mxu0 %v2268
      %v2292 = vpop.f32.mrf.mxu0
      %v2293 = vadd.f32 0.0, %v2292
      %2294 = vdwg.mxu0
      %2297 = vrot.lane.b32.xlu0 %v2058, 8
      %v2298 = vpop.permute.xlu0 %2297
      %2299 = vrot.lane.b32.xlu0 %v2061, 8
      %v2300 = vpop.permute.xlu0 %2299
      %2305 = vrot.lane.b32.xlu0 %v2174, 16
      %v2306 = vpop.permute.xlu0 %2305
      %2307 = vrot.lane.b32.xlu0 %v2177, 16
      %v2308 = vpop.permute.xlu0 %2307
      %2313 = vrot.lane.b32.xlu0 %v2290, 24
      %v2314 = vpop.permute.xlu0 %2313
      %2315 = vrot.lane.b32.xlu0 %v2293, 24
      %v2316 = vpop.permute.xlu0 %2315
      %v2319 = vsel %vm495, %v1942, %v2298
      %v2320 = vsel %vm495, %v1945, %v2300
      %vm2321 = vcmask 130048
      %v2322 = vsel %vm2321, %v2319, %v2306
      %v2323 = vsel %vm2321, %v2320, %v2308
      %vm2324 = vcmask 195584
      %v2325 = vsel %vm2324, %v2322, %v2314
      %v2326 = vsel %vm2324, %v2323, %v2316
      %v2327 = vperm.slane %v1776, 0
      %v2329 = vsel %vm459, %v2325, 0
      %v2332 = vsel %vm459, %v2326, 0
      %2334 = vmatpush.msra.mxu0 0.0
      %2335 = vmatpush.msra.mxu0 0.0
      %2336 = vmatpush.msra.mxu0 0.0
      %2337 = vmatpush.msra.mxu0 0.0
      %2338 = vmatpush.msra.mxu0 0.0
      %2339 = vmatpush.msra.mxu0 0.0
      %2340 = vmatpush.msra.mxu0 0.0
      %2341 = vmatpush.msra.mxu0 0.0
      %2342 = vmatpush.msra.mxu0 0.0
      %2343 = vmatpush.msra.mxu0 0.0
      %2344 = vmatpush.msra.mxu0 0.0
      %2345 = vmatpush.msra.mxu0 0.0
      %2346 = vmatpush.msra.mxu0 %v1775
      %2347 = vmatpush.msra.mxu0 %v1774
      %2348 = vmatpush.msra.mxu0 %v1773
      %2349 = vmatpush.msra.mxu0 %v1772
      %2350 = vmatmul.f32.gmra.mxu0 %v2329
      %v2351 = vpop.f32.mrf.mxu0
      %v2352 = vadd.f32 %v2327, %v2351
      %2353 = vmatmul.f32.gmra.mxu0 %v2332
      %v2354 = vpop.f32.mrf.mxu0
      %v2355 = vadd.f32 %v2327, %v2354
      %2356 = vdwg.mxu0
      %v2357 = vadd.f32 %v1760, %v2352
      %v2358 = vadd.f32 %v1761, %v2355
      %v2359 = vld [vmem:[%s3 + $0xf8] sm:$0x1]
      %v2360 = vld [vmem:[%s3 + $0x100] sm:$0x1]
      %v2361 = vsel %vm459, %v2357, 0.0
      %2362 = vadd.xlane.f32.xlu0 %v2361
      %v2363 = vpop.xlane.xlu0 %2362
      %v2364 = vsel %vm1707, %v2358, 0.0
      %2365 = vadd.xlane.f32.xlu0 %v2364
      %v2366 = vpop.xlane.xlu0 %2365
      %v2367 = vmul.f32 %v2363, %v1717
      %v2368 = vmul.f32 %v2366, %v1717
      %v2369 = vsub.f32 %v2357, %v2367
      %v2370 = vsub.f32 %v2358, %v2368
      %v2371 = vmul.f32 %v2369, %v2369
      %v2372 = vmul.f32 %v2370, %v2370
      %v2373 = vsel %vm459, %v2371, 0.0
      %2374 = vadd.xlane.f32.xlu0 %v2373
      %v2375 = vpop.xlane.xlu0 %2374
      %v2376 = vsel %vm1707, %v2372, 0.0
      %2377 = vadd.xlane.f32.xlu0 %v2376
      %v2378 = vpop.xlane.xlu0 %2377
      %v2379 = vmul.f32 %v2375, %v1717
      %v2380 = vmul.f32 %v2378, %v1717
      %v2381 = vadd.f32 %v2379, 1e-05
      %v2382 = vadd.f32 %v2380, 1e-05
      %v2383 = vrsqrt.pop %v2381
      %v2384 = vmul.f32 %v2383, %v2381
      %v2385 = vmul.f32 %v2384, %v2383
      %v2386 = vmul.f32 0.5, %v2385
      %v2387 = vsub.f32 1.5, %v2386
      %v2388 = vmul.f32 %v2383, %v2387
      %vm2389 = vweird.f32 %v2381
      %vm2390 = vweird.f32 %v2383
      %vm2391 = vmor %vm2389, %vm2390
      %v2392 = vsel %vm2391, %v2383, %v2388
      %v2393 = vrsqrt.pop %v2382
      %v2394 = vmul.f32 %v2393, %v2382
      %v2395 = vmul.f32 %v2394, %v2393
      %v2396 = vmul.f32 0.5, %v2395
      %v2397 = vsub.f32 1.5, %v2396
      %v2398 = vmul.f32 %v2393, %v2397
      %vm2399 = vweird.f32 %v2382
      %vm2400 = vweird.f32 %v2393
      %vm2401 = vmor %vm2399, %vm2400
      %v2402 = vsel %vm2401, %v2393, %v2398
      %v2403 = vmul.f32 %v2369, %v2392
      %v2404 = vmul.f32 %v2370, %v2402
      %v2405 = vperm.slane %v2359, 0
      %v2406 = vmul.f32 %v2403, %v2405
      %v2407 = vmul.f32 %v2404, %v2405
      %v2408 = vperm.slane %v2360, 0
      %v2409 = vadd.f32 %v2406, %v2408
      %v2410 = vadd.f32 %v2407, %v2408
      %v2411 = vld [vmem:[%s3 + $0x108] sm:$0xff]
      %v2412 = vld [vmem:[%s3 + $0x110] sm:$0xff]
      %v2413 = vld [vmem:[%s3 + $0x118] sm:$0xff]
      %v2414 = vld [vmem:[%s3 + $0x120] sm:$0xff]
      %v2415 = vld [vmem:[%s3 + $0x128] sm:$0x1]
      %v2416 = vperm.slane %v2415, 0
      %v2418 = vsel %vm459, %v2409, 0
      %v2421 = vsel %vm459, %v2410, 0
      %2423 = vmatpush.msra.mxu0 0.0
      %2424 = vmatpush.msra.mxu0 0.0
      %2425 = vmatpush.msra.mxu0 0.0
      %2426 = vmatpush.msra.mxu0 0.0
      %2427 = vmatpush.msra.mxu0 0.0
      %2428 = vmatpush.msra.mxu0 0.0
      %2429 = vmatpush.msra.mxu0 0.0
      %2430 = vmatpush.msra.mxu0 0.0
      %2431 = vmatpush.msra.mxu0 0.0
      %2432 = vmatpush.msra.mxu0 0.0
      %2433 = vmatpush.msra.mxu0 0.0
      %2434 = vmatpush.msra.mxu0 0.0
      %2435 = vmatpush.msra.mxu0 %v2414
      %2436 = vmatpush.msra.mxu0 %v2413
      %2437 = vmatpush.msra.mxu0 %v2412
      %2438 = vmatpush.msra.mxu0 %v2411
      %2439 = vmatmul.f32.gmra.mxu0 %v2418
      %v2440 = vpop.f32.mrf.mxu0
      %v2441 = vadd.f32 %v2416, %v2440
      %2442 = vmatmul.f32.gmra.mxu0 %v2421
      %v2443 = vpop.f32.mrf.mxu0
      %v2444 = vadd.f32 %v2416, %v2443
      %2445 = vdwg.mxu0
      %v2446 = vmul.f32 %v2441, 0.5
      %v2447 = vmul.f32 %v2444, 0.5
      %v2448 = vmul.f32 %v2441, 0.70710677
      %v2449 = vmul.f32 %v2444, 0.70710677
      %vm2450 = vcmp.ge.f32.partialorder %v2448, 0.0
      %vm2451 = vcmp.ge.f32.partialorder %v2449, 0.0
      %v2452 = vsel %vm2450, 1.0, -1.0
      %v2453 = vsel %vm2451, 1.0, -1.0
      %v2454 = vand.u32 2147483647, %v2448
      %v2455 = vand.u32 2147483647, %v2449
      %v2456 = vmul.f32 %v2454, 0.3275911
      %v2457 = vmul.f32 %v2455, 0.3275911
      %v2458 = vadd.f32 %v2456, 1.0
      %v2459 = vadd.f32 %v2457, 1.0
      %v2460 = vrcp.pop %v2458
      %v2461 = vmul.f32 %v2458, %v2460
      %v2462 = vsub.f32 1.0, %v2461
      %v2463 = vmul.f32 %v2460, %v2462
      %v2464 = vadd.f32 %v2460, %v2463
      %vm2465 = vweird.f32 %v2458
      %vm2466 = vweird.f32 %v2460
      %vm2467 = vmor %vm2465, %vm2466
      %v2468 = vsel %vm2467, %v2460, %v2464
      %v2469 = vand.u32 2147483647, %v2458
      %vm2470 = vcmp.eq.f32.partialorder %v2469, 8.507059e+37
      %v2471 = vand.u32 %v2458, 2147483648
      %v2472 = vor.u32 1.1754944e-38, %v2471
      %v2473 = vsel %vm2470, %v2472, %v2468
      %v2474 = vmul.f32 1.0, %v2473
      %v2475 = vrcp.pop %v2459
      %v2476 = vmul.f32 %v2459, %v2475
      %v2477 = vsub.f32 1.0, %v2476
      %v2478 = vmul.f32 %v2475, %v2477
      %v2479 = vadd.f32 %v2475, %v2478
      %vm2480 = vweird.f32 %v2459
      %vm2481 = vweird.f32 %v2475
      %vm2482 = vmor %vm2480, %vm2481
      %v2483 = vsel %vm2482, %v2475, %v2479
      %v2484 = vand.u32 2147483647, %v2459
      %vm2485 = vcmp.eq.f32.partialorder %v2484, 8.507059e+37
      %v2486 = vand.u32 %v2459, 2147483648
      %v2487 = vor.u32 1.1754944e-38, %v2486
      %v2488 = vsel %vm2485, %v2487, %v2483
      %v2489 = vmul.f32 1.0, %v2488
      %v2490 = vmul.f32 %v2474, 1.0614054
      %v2491 = vmul.f32 %v2489, 1.0614054
      %v2492 = vadd.f32 %v2490, -1.4531521
      %v2493 = vadd.f32 %v2491, -1.4531521
      %v2494 = vmul.f32 %v2492, %v2474
      %v2495 = vmul.f32 %v2493, %v2489
      %v2496 = vadd.f32 %v2494, 1.4214138
      %v2497 = vadd.f32 %v2495, 1.4214138
      %v2498 = vmul.f32 %v2496, %v2474
      %v2499 = vmul.f32 %v2497, %v2489
      %v2500 = vadd.f32 %v2498, -0.28449672
      %v2501 = vadd.f32 %v2499, -0.28449672
      %v2502 = vmul.f32 %v2500, %v2474
      %v2503 = vmul.f32 %v2501, %v2489
      %v2504 = vadd.f32 %v2502, 0.2548296
      %v2505 = vadd.f32 %v2503, 0.2548296
      %v2506 = vmul.f32 %v2504, %v2474
      %v2507 = vmul.f32 %v2505, %v2489
      %v2508 = vsub.f32 0.0, %v2454
      %v2509 = vsub.f32 0.0, %v2455
      %v2510 = vmul.f32 %v2508, %v2454
      %v2511 = vmul.f32 %v2509, %v2455
      %v2512 = vmul.f32 %v2510, 1.442695
      %v2513 = vpow.pop %v2512
      %v2514 = vmul.f32 %v2511, 1.442695
      %v2515 = vpow.pop %v2514
      %v2516 = vmul.f32 %v2506, %v2513
      %v2517 = vmul.f32 %v2507, %v2515
      %v2518 = vsub.f32 1.0, %v2516
      %v2519 = vsub.f32 1.0, %v2517
      %v2520 = vmul.f32 %v2452, %v2518
      %v2521 = vmul.f32 %v2453, %v2519
      %v2522 = vadd.f32 %v2520, 1.0
      %v2523 = vadd.f32 %v2521, 1.0
      %v2524 = vmul.f32 %v2446, %v2522
      %v2525 = vmul.f32 %v2447, %v2523
      %v2526 = vld [vmem:[%s3 + $0x130] sm:$0xff]
      %v2527 = vld [vmem:[%s3 + $0x138] sm:$0xff]
      %v2528 = vld [vmem:[%s3 + $0x140] sm:$0xff]
      %v2529 = vld [vmem:[%s3 + $0x148] sm:$0xff]
      %v2530 = vld [vmem:[%s3 + $0x150] sm:$0xff]
      %v2531 = vld [vmem:[%s3 + $0x158] sm:$0xff]
      %v2532 = vld [vmem:[%s3 + $0x160] sm:$0xff]
      %v2533 = vld [vmem:[%s3 + $0x168] sm:$0xff]
      %v2534 = vld [vmem:[%s3 + $0x170] sm:$0x1]
      %v2535 = vperm.slane %v2534, 0
      %vm2536 = vcmask 523264
      %v2538 = vsel %vm2536, %v2524, 0
      %v2541 = vsel %vm2536, %v2525, 0
      %2543 = vmatpush.msra.mxu0 0.0
      %2544 = vmatpush.msra.mxu0 0.0
      %2545 = vmatpush.msra.mxu0 0.0
      %2546 = vmatpush.msra.mxu0 0.0
      %2547 = vmatpush.msra.mxu0 0.0
      %2548 = vmatpush.msra.mxu0 0.0
      %2549 = vmatpush.msra.mxu0 0.0
      %2550 = vmatpush.msra.mxu0 0.0
      %2551 = vmatpush.msra.mxu0 %v2533
      %2552 = vmatpush.msra.mxu0 %v2532
      %2553 = vmatpush.msra.mxu0 %v2531
      %2554 = vmatpush.msra.mxu0 %v2530
      %2555 = vmatpush.msra.mxu0 %v2529
      %2556 = vmatpush.msra.mxu0 %v2528
      %2557 = vmatpush.msra.mxu0 %v2527
      %2558 = vmatpush.msra.mxu0 %v2526
      %2559 = vmatmul.f32.gmra.mxu0 %v2538
      %v2560 = vpop.f32.mrf.mxu0
      %v2561 = vadd.f32 %v2535, %v2560
      %2562 = vmatmul.f32.gmra.mxu0 %v2541
      %v2563 = vpop.f32.mrf.mxu0
      %v2564 = vadd.f32 %v2535, %v2563
      %2565 = vdwg.mxu0
      %v2566 = vadd.f32 %v2409, %v2561
      %v2567 = vadd.f32 %v2410, %v2564
      %v2568 = vld [vmem:[%s3 + $0x178] sm:$0x1]
      %v2569 = vld [vmem:[%s3 + $0x180] sm:$0x1]
      %v2570 = vsel %vm459, %v2566, 0.0
      %2571 = vadd.xlane.f32.xlu0 %v2570
      %v2572 = vpop.xlane.xlu0 %2571
      %v2573 = vsel %vm1707, %v2567, 0.0
      %2574 = vadd.xlane.f32.xlu0 %v2573
      %v2575 = vpop.xlane.xlu0 %2574
      %v2576 = vmul.f32 %v2572, %v1717
      %v2577 = vmul.f32 %v2575, %v1717
      %v2578 = vsub.f32 %v2566, %v2576
      %v2579 = vsub.f32 %v2567, %v2577
      %v2580 = vmul.f32 %v2578, %v2578
      %v2581 = vmul.f32 %v2579, %v2579
      %v2582 = vsel %vm459, %v2580, 0.0
      %2583 = vadd.xlane.f32.xlu0 %v2582
      %v2584 = vpop.xlane.xlu0 %2583
      %v2585 = vsel %vm1707, %v2581, 0.0
      %2586 = vadd.xlane.f32.xlu0 %v2585
      %v2587 = vpop.xlane.xlu0 %2586
      %v2588 = vmul.f32 %v2584, %v1717
      %v2589 = vmul.f32 %v2587, %v1717
      %v2590 = vadd.f32 %v2588, 1e-05
      %v2591 = vadd.f32 %v2589, 1e-05
      %v2592 = vrsqrt.pop %v2590
      %v2593 = vmul.f32 %v2592, %v2590
      %v2594 = vmul.f32 %v2593, %v2592
      %v2595 = vmul.f32 0.5, %v2594
      %v2596 = vsub.f32 1.5, %v2595
      %v2597 = vmul.f32 %v2592, %v2596
      %vm2598 = vweird.f32 %v2590
      %vm2599 = vweird.f32 %v2592
      %vm2600 = vmor %vm2598, %vm2599
      %v2601 = vsel %vm2600, %v2592, %v2597
      %v2602 = vrsqrt.pop %v2591
      %v2603 = vmul.f32 %v2602, %v2591
      %v2604 = vmul.f32 %v2603, %v2602
      %v2605 = vmul.f32 0.5, %v2604
      %v2606 = vsub.f32 1.5, %v2605
      %v2607 = vmul.f32 %v2602, %v2606
      %vm2608 = vweird.f32 %v2591
      %vm2609 = vweird.f32 %v2602
      %vm2610 = vmor %vm2608, %vm2609
      %v2611 = vsel %vm2610, %v2602, %v2607
      %v2612 = vmul.f32 %v2578, %v2601
      %v2613 = vmul.f32 %v2579, %v2611
      %v2614 = vperm.slane %v2568, 0
      %v2615 = vmul.f32 %v2612, %v2614
      %v2616 = vmul.f32 %v2613, %v2614
      %v2617 = vperm.slane %v2569, 0
      %v2618 = vadd.f32 %v2615, %v2617
      %v2619 = vadd.f32 %v2616, %v2617
      %v2620 = vld [vmem:[%s3 + $0x188] sm:$0x1]
      %v2621 = vld [vmem:[%s3 + $0x190] sm:$0x1]
      %v2622 = vsel %vm459, %v2618, 0.0
      %2623 = vadd.xlane.f32.xlu0 %v2622
      %v2624 = vpop.xlane.xlu0 %2623
      %v2625 = vsel %vm1707, %v2619, 0.0
      %2626 = vadd.xlane.f32.xlu0 %v2625
      %v2627 = vpop.xlane.xlu0 %2626
      %v2628 = vmul.f32 %v2624, %v1717
      %v2629 = vmul.f32 %v2627, %v1717
      %v2630 = vsub.f32 %v2618, %v2628
      %v2631 = vsub.f32 %v2619, %v2629
      %v2632 = vmul.f32 %v2630, %v2630
      %v2633 = vmul.f32 %v2631, %v2631
      %v2634 = vsel %vm459, %v2632, 0.0
      %2635 = vadd.xlane.f32.xlu0 %v2634
      %v2636 = vpop.xlane.xlu0 %2635
      %v2637 = vsel %vm1707, %v2633, 0.0
      %2638 = vadd.xlane.f32.xlu0 %v2637
      %v2639 = vpop.xlane.xlu0 %2638
      %v2640 = vmul.f32 %v2636, %v1717
      %v2641 = vmul.f32 %v2639, %v1717
      %v2642 = vadd.f32 %v2640, 1e-05
      %v2643 = vadd.f32 %v2641, 1e-05
      %v2644 = vrsqrt.pop %v2642
      %v2645 = vmul.f32 %v2644, %v2642
      %v2646 = vmul.f32 %v2645, %v2644
      %v2647 = vmul.f32 0.5, %v2646
      %v2648 = vsub.f32 1.5, %v2647
      %v2649 = vmul.f32 %v2644, %v2648
      %vm2650 = vweird.f32 %v2642
      %vm2651 = vweird.f32 %v2644
      %vm2652 = vmor %vm2650, %vm2651
      %v2653 = vsel %vm2652, %v2644, %v2649
      %v2654 = vrsqrt.pop %v2643
      %v2655 = vmul.f32 %v2654, %v2643
      %v2656 = vmul.f32 %v2655, %v2654
      %v2657 = vmul.f32 0.5, %v2656
      %v2658 = vsub.f32 1.5, %v2657
      %v2659 = vmul.f32 %v2654, %v2658
      %vm2660 = vweird.f32 %v2643
      %vm2661 = vweird.f32 %v2654
      %vm2662 = vmor %vm2660, %vm2661
      %v2663 = vsel %vm2662, %v2654, %v2659
      %v2664 = vmul.f32 %v2630, %v2653
      %v2665 = vmul.f32 %v2631, %v2663
      %v2666 = vperm.slane %v2620, 0
      %v2667 = vmul.f32 %v2664, %v2666
      %v2668 = vmul.f32 %v2665, %v2666
      %v2669 = vperm.slane %v2621, 0
      %v2670 = vadd.f32 %v2667, %v2669
      %v2671 = vadd.f32 %v2668, %v2669
      %v2672 = vld [vmem:[%s3 + $0x198] sm:$0xff]
      %v2673 = vld [vmem:[%s3 + $0x1a0] sm:$0xff]
      %v2674 = vld [vmem:[%s3 + $0x1a8] sm:$0xff]
      %v2675 = vld [vmem:[%s3 + $0x1b0] sm:$0xff]
      %v2676 = vld [vmem:[%s3 + $0x1b8] sm:$0x1]
      %v2677 = vperm.slane %v2676, 0
      %v2679 = vsel %vm459, %v2670, 0
      %v2682 = vsel %vm459, %v2671, 0
      %2684 = vmatpush.msra.mxu0 0.0
      %2685 = vmatpush.msra.mxu0 0.0
      %2686 = vmatpush.msra.mxu0 0.0
      %2687 = vmatpush.msra.mxu0 0.0
      %2688 = vmatpush.msra.mxu0 0.0
      %2689 = vmatpush.msra.mxu0 0.0
      %2690 = vmatpush.msra.mxu0 0.0
      %2691 = vmatpush.msra.mxu0 0.0
      %2692 = vmatpush.msra.mxu0 0.0
      %2693 = vmatpush.msra.mxu0 0.0
      %2694 = vmatpush.msra.mxu0 0.0
      %2695 = vmatpush.msra.mxu0 0.0
      %2696 = vmatpush.msra.mxu0 %v2675
      %2697 = vmatpush.msra.mxu0 %v2674
      %2698 = vmatpush.msra.mxu0 %v2673
      %2699 = vmatpush.msra.mxu0 %v2672
      %2700 = vmatmul.f32.gmra.mxu0 %v2679
      %v2701 = vpop.f32.mrf.mxu0
      %v2702 = vadd.f32 %v2677, %v2701
      %2703 = vmatmul.f32.gmra.mxu0 %v2682
      %v2704 = vpop.f32.mrf.mxu0
      %v2705 = vadd.f32 %v2677, %v2704
      %2706 = vdwg.mxu0
      %2707 = vst [vmem:[%s234] sm:$0xff] %v2702
      %2708 = vst [vmem:[%s234 + $0x8] sm:$0x3] %v2705
      %p2709 = scmp.lt.s32.totalorder %s15, 1
      %s2710 = scalar_select %p2709, %s15, 1
      %s2711 = smul.addr %s2710, 2
      %s2712 = smul.addr %s2711, 8
      %s2713 = scalar_lea.vmem %s4, %s2712
      // Predicated region
      $region37: #{informer_forward.3} parent=35 // pred_check
        %p2714 = pneg %p132
      $region38: #{informer_forward.3} parent=35 // pred_check_branch
        %2716 = sbr.rel (%p2714) target = $region40
      $region39: #{informer_forward.3} parent=35 // pred_region
        _
      $region40: #{informer_forward.3} parent=35 // pred_fallthru
        _
    $region36: #{informer_forward.3} parent=5 // pred_fallthru
      _
    %p2717 = scmp.le.s32.totalorder 2, %s10
    // Predicated region
    $region41: #{informer_forward.3} parent=5 // pred_check
      %p2718 = pneg %p2717
    $region42: #{informer_forward.3} parent=5 // pred_check_branch
      %2720 = sbr.rel (%p2718) target = $region44
    $region43: #{informer_forward.3} parent=5 // pred_region
      %s2721 = ssub.s32 %s10, 2
      // Predicated region
      $region45: #{informer_forward.3} parent=43 // pred_check
        %p2722 = pneg %p138
      $region46: #{informer_forward.3} parent=43 // pred_check_branch
        %2724 = sbr.rel (%p2722) target = $region48
      $region47: #{informer_forward.3} parent=43 // pred_region
        %p2725 = scmp.lt.s32.totalorder %s16, 1
        %s2726 = scalar_select %p2725, %s16, 1
        %s2727 = smul.addr %s2726, 2
        %s2728 = smul.addr %s2727, 8
        %s2729 = scalar_lea.vmem %s4, %s2728
      $region48: #{informer_forward.3} parent=43 // pred_fallthru
        _
    $region44: #{informer_forward.3} parent=5 // pred_fallthru
      _
  $region6: #{informer_forward.3} parent=0 // loop_footer
    %s14 = sadd.s32 1, %s10
  $region7: #{informer_forward.3} parent=0 // loop_footer_branch
    %9 = sbr.rel target = $region3
  $region8: #{informer_forward.3} parent=0 // loop_exit
    _

// kernel: informer_forward.2
$region0: #{informer_forward.2}
  #allocation0 [shape = 'u32[]', space=smem, size = 0x4, offset = 0x4, fixed_abs, tag = 'smem constant byte address 0x4 - core index']
  #allocation1 [shape = 'u32[72,128]{1,0:T(1,128)}', space=vmem, size = 0x9000, scoped, tag = 'internal scratch']
  %s0 = inlined_call_operand.vmem [shape: f32[2,12,4], index: 0, kind: input, shape index: {}]
  %s1 = inlined_call_operand.vmem [shape: f32[2,12,32], index: 1, kind: input, shape index: {}]
  %s2 = inlined_call_operand.hbm [shape: f32[616,128], index: 2, kind: input, shape index: {}]
  %s3 = inlined_call_operand.vmem [shape: f32[2,6,32], index: 3, kind: output, shape index: {}]
  %s4 = sld [smem:[#allocation0]]
  $region26: #{informer_forward.2} parent=0
    _
  %s6 = ssub.s32 1, %s4
  %s7 = scalar_select 0, %s6, %s4
  $region1: #{informer_forward.2} parent=0
    #allocation2 [shape = 'u8[315392]{0}', space=vmem, size = 0x4d000, scoped, tag = 'input window, operand 2, single buffered']
    #allocation3 [shape = 's32[1]{0}', space=sflag, size = 0x4, scoped, tag = 'scoped memory for informer_forward.2']
    %8 = vsyncpa [#allocation3], 0
    // Predicated region
    $region2: #{informer_forward.2} parent=1 // pred_check
      _
    $region3: #{informer_forward.2} parent=1 // pred_check_branch
      %10 = sbr.rel (0) target = $region5
    $region4: #{informer_forward.2} parent=1 // pred_region
      _
    $region5: #{informer_forward.2} parent=1 // pred_fallthru
      _
    // Predicated region
    $region6: #{informer_forward.2} parent=1 // pred_check
      _
    $region7: #{informer_forward.2} parent=1 // pred_check_branch
      %12 = sbr.rel (0) target = $region9
    $region8: #{informer_forward.2} parent=1 // pred_region
      _
    $region9: #{informer_forward.2} parent=1 // pred_fallthru
      _
    // Predicated region
    $region10: #{informer_forward.2} parent=1 // pred_check
      _
    $region11: #{informer_forward.2} parent=1 // pred_check_branch
      %14 = sbr.rel (0) target = $region13
    $region12: #{informer_forward.2} parent=1 // pred_region
      %16 = vsyncadd [#allocation3], 0
      %s17 = sshll.u32 %s2, 4
      %s18 = int_to_ptr.hbm [resolvable:$true] %s17
      %s19 = sshll.u32 [#allocation2], 4
      %s20 = int_to_ptr.vmem [resolvable:$true] %s19
      %25 = dma.hbm_to_vmem [thread:$0]  %s18, 9856, %s20, [#allocation3], 128, 128, 8
    $region13: #{informer_forward.2} parent=1 // pred_fallthru
      _
    // Predicated region
    $region14: #{informer_forward.2} parent=1 // pred_check
      _
    $region15: #{informer_forward.2} parent=1 // pred_check_branch
      %27 = sbr.rel (0) target = $region17
    $region16: #{informer_forward.2} parent=1 // pred_region
      %29 = dma.done [#allocation3], 9856
    $region17: #{informer_forward.2} parent=1 // pred_fallthru
      _
    %v30 = vld [vmem:[%s0] sm:$0xff]
    %v31 = vld [vmem:[%s0 + $0x8] sm:$0xf]
    %v32 = vld [vmem:[#allocation2] sm:$0xf]
    %v33 = vld [vmem:[#allocation2 + $0x8] sm:$0xf]
    %v34 = vld [vmem:[#allocation2 + $0x10] sm:$0xf]
    %v35 = vld [vmem:[#allocation2 + $0x18] sm:$0x1]
    %v36 = vlaneseq
    %v37 = vshrl.u32 %v36, 7
    %v38 = vadd.s32 %v37, 8
    %v39 = vlaneseq
    %v40 = vand.u32 %v39, 127
    %v41 = vsub.s32 %v40, %v37
    %v42 = vsub.s32 %v40, %v38
    %v43 = vadd.s32 %v41, 1
    %v44 = vadd.s32 %v42, 1
    %vm45 = vcmp.eq.s32.totalorder %v43, 0
    %vm46 = vcmp.eq.s32.totalorder %v44, 0
    %vm47 = vcmp.eq.s32.totalorder %v43, 12
    %vm48 = vcmp.eq.s32.totalorder %v44, 12
    %vm49 = vmor %vm45, %vm47
    %vm50 = vmor %vm46, %vm48
    %vm51 = vcmp.eq.s32.totalorder %v43, 4294967284
    %vm52 = vcmp.eq.s32.totalorder %v44, 4294967284
    %vm53 = vmor %vm49, %vm51
    %vm54 = vmor %vm50, %vm52
    %v55 = vsel %vm53, 1.0, 0.0
    %v56 = vsel %vm54, 1.0, 0.0
    %vm57 = vcmask 97280
    %v59 = vsel %vm57, %v55, 0
    %v62 = vsel %vm57, %v56, 0
    %vm64 = vcmask 1043456
    %v66 = vsel %vm64, %v31, 0
    %68 = vmatpush.msra.mxu0 0.0
    %69 = vmatpush.msra.mxu0 0.0
    %70 = vmatpush.msra.mxu0 0.0
    %71 = vmatpush.msra.mxu0 0.0
    %72 = vmatpush.msra.mxu0 0.0
    %73 = vmatpush.msra.mxu0 0.0
    %74 = vmatpush.msra.mxu0 0.0
    %75 = vmatpush.msra.mxu0 0.0
    %76 = vmatpush.msra.mxu0 0.0
    %77 = vmatpush.msra.mxu0 0.0
    %78 = vmatpush.msra.mxu0 0.0
    %79 = vmatpush.msra.mxu0 0.0
    %80 = vmatpush.msra.mxu0 0.0
    %81 = vmatpush.msra.mxu0 0.0
    %82 = vmatpush.msra.mxu0 %v66
    %83 = vmatpush.msra.mxu0 %v30
    %84 = vmatmul.f32.gmra.mxu0 %v59
    %v85 = vpop.f32.mrf.mxu0
    %v86 = vadd.f32 0.0, %v85
    %87 = vmatmul.f32.gmra.mxu0 %v62
    %v88 = vpop.f32.mrf.mxu0
    %v89 = vadd.f32 0.0, %v88
    %90 = vdwg.mxu0
    %v91 = vadd.s32 %v41, 4294967295
    %v92 = vadd.s32 %v42, 4294967295
    %vm93 = vcmp.eq.s32.totalorder %v91, 0
    %vm94 = vcmp.eq.s32.totalorder %v92, 0
    %vm95 = vcmp.eq.s32.totalorder %v91, 12
    %vm96 = vcmp.eq.s32.totalorder %v92, 12
    %vm97 = vmor %vm93, %vm95
    %vm98 = vmor %vm94, %vm96
    %vm99 = vcmp.eq.s32.totalorder %v91, 4294967284
    %vm100 = vcmp.eq.s32.totalorder %v92, 4294967284
    %vm101 = vmor %vm97, %vm99
    %vm102 = vmor %vm98, %vm100
    %v103 = vsel %vm101, 1.0, 0.0
    %v104 = vsel %vm102, 1.0, 0.0
    %v106 = vsel %vm57, %v103, 0
    %v109 = vsel %vm57, %v104, 0
    %111 = vmatpush.msra.mxu0 0.0
    %112 = vmatpush.msra.mxu0 0.0
    %113 = vmatpush.msra.mxu0 0.0
    %114 = vmatpush.msra.mxu0 0.0
    %115 = vmatpush.msra.mxu0 0.0
    %116 = vmatpush.msra.mxu0 0.0
    %117 = vmatpush.msra.mxu0 0.0
    %118 = vmatpush.msra.mxu0 0.0
    %119 = vmatpush.msra.mxu0 0.0
    %120 = vmatpush.msra.mxu0 0.0
    %121 = vmatpush.msra.mxu0 0.0
    %122 = vmatpush.msra.mxu0 0.0
    %123 = vmatpush.msra.mxu0 0.0
    %124 = vmatpush.msra.mxu0 0.0
    %125 = vmatpush.msra.mxu0 %v66
    %126 = vmatpush.msra.mxu0 %v30
    %127 = vmatmul.f32.gmra.mxu0 %v106
    %v128 = vpop.f32.mrf.mxu0
    %v129 = vadd.f32 0.0, %v128
    %130 = vmatmul.f32.gmra.mxu0 %v109
    %v131 = vpop.f32.mrf.mxu0
    %v132 = vadd.f32 0.0, %v131
    %133 = vdwg.mxu0
    %vm134 = vcmask 31744
    %v136 = vsel %vm134, %v30, 0
    %v138 = vsel %vm134, %v31, 0
    %v141 = vsel %vm64, %v33, 0
    %143 = vmatpush.msra.mxu0 0.0
    %144 = vmatpush.msra.mxu0 0.0
    %145 = vmatpush.msra.mxu0 0.0
    %146 = vmatpush.msra.mxu0 0.0
    %147 = vmatpush.msra.mxu0 0.0
    %148 = vmatpush.msra.mxu0 0.0
    %149 = vmatpush.msra.mxu0 0.0
    %150 = vmatpush.msra.mxu0 0.0
    %151 = vmatpush.msra.mxu0 0.0
    %152 = vmatpush.msra.mxu0 0.0
    %153 = vmatpush.msra.mxu0 0.0
    %154 = vmatpush.msra.mxu0 0.0
    %155 = vmatpush.msra.mxu0 0.0
    %156 = vmatpush.msra.mxu0 0.0
    %157 = vmatpush.msra.mxu0 0.0
    %158 = vmatpush.msra.mxu0 %v141
    %159 = vmatmul.f32.gmra.mxu0 %v136
    %v160 = vpop.f32.mrf.mxu0
    %v161 = vadd.f32 0.0, %v160
    %162 = vmatmul.f32.gmra.mxu0 %v138
    %v163 = vpop.f32.mrf.mxu0
    %v164 = vadd.f32 0.0, %v163
    %165 = vdwg.mxu0
    %v167 = vsel %vm134, %v86, 0
    %v170 = vsel %vm134, %v89, 0
    %v173 = vsel %vm64, %v32, 0
    %175 = vmatpush.msra.mxu0 0.0
    %176 = vmatpush.msra.mxu0 0.0
    %177 = vmatpush.msra.mxu0 0.0
    %178 = vmatpush.msra.mxu0 0.0
    %179 = vmatpush.msra.mxu0 0.0
    %180 = vmatpush.msra.mxu0 0.0
    %181 = vmatpush.msra.mxu0 0.0
    %182 = vmatpush.msra.mxu0 0.0
    %183 = vmatpush.msra.mxu0 0.0
    %184 = vmatpush.msra.mxu0 0.0
    %185 = vmatpush.msra.mxu0 0.0
    %186 = vmatpush.msra.mxu0 0.0
    %187 = vmatpush.msra.mxu0 0.0
    %188 = vmatpush.msra.mxu0 0.0
    %189 = vmatpush.msra.mxu0 0.0
    %190 = vmatpush.msra.mxu0 %v173
    %191 = vmatmul.f32.gmra.mxu0 %v167
    %v192 = vpop.f32.mrf.mxu0
    %v193 = vadd.f32 %v161, %v192
    %194 = vmatmul.f32.gmra.mxu0 %v170
    %v195 = vpop.f32.mrf.mxu0
    %v196 = vadd.f32 %v164, %v195
    %197 = vdwg.mxu0
    %v199 = vsel %vm134, %v129, 0
    %v202 = vsel %vm134, %v132, 0
    %v205 = vsel %vm64, %v34, 0
    %207 = vmatpush.msra.mxu0 0.0
    %208 = vmatpush.msra.mxu0 0.0
    %209 = vmatpush.msra.mxu0 0.0
    %210 = vmatpush.msra.mxu0 0.0
    %211 = vmatpush.msra.mxu0 0.0
    %212 = vmatpush.msra.mxu0 0.0
    %213 = vmatpush.msra.mxu0 0.0
    %214 = vmatpush.msra.mxu0 0.0
    %215 = vmatpush.msra.mxu0 0.0
    %216 = vmatpush.msra.mxu0 0.0
    %217 = vmatpush.msra.mxu0 0.0
    %218 = vmatpush.msra.mxu0 0.0
    %219 = vmatpush.msra.mxu0 0.0
    %220 = vmatpush.msra.mxu0 0.0
    %221 = vmatpush.msra.mxu0 0.0
    %222 = vmatpush.msra.mxu0 %v205
    %223 = vmatmul.f32.gmra.mxu0 %v199
    %v224 = vpop.f32.mrf.mxu0
    %v225 = vadd.f32 0.0, %v224
    %226 = vmatmul.f32.gmra.mxu0 %v202
    %v227 = vpop.f32.mrf.mxu0
    %v228 = vadd.f32 0.0, %v227
    %229 = vdwg.mxu0
    %v230 = vadd.f32 %v193, %v225
    %v231 = vadd.f32 %v196, %v228
    %v232 = vperm.slane %v35, 0
    %v233 = vadd.f32 %v230, %v232
    %v234 = vadd.f32 %v231, %v232
    %v235 = vld [vmem:[%s1] sm:$0xff]
    %v236 = vld [vmem:[%s1 + $0x8] sm:$0xf]
    %v237 = vadd.f32 %v233, %v235
    %v238 = vadd.f32 %v234, %v236
    %s239 = scalar_lea.vmem %s0, 16
    %v240 = vld [vmem:[%s239] sm:$0xff]
    %v241 = vld [vmem:[%s239 + $0x8] sm:$0xf]
    %v243 = vsel %vm64, %v241, 0
    %245 = vmatpush.msra.mxu0 0.0
    %246 = vmatpush.msra.mxu0 0.0
    %247 = vmatpush.msra.mxu0 0.0
    %248 = vmatpush.msra.mxu0 0.0
    %249 = vmatpush.msra.mxu0 0.0
    %250 = vmatpush.msra.mxu0 0.0
    %251 = vmatpush.msra.mxu0 0.0
    %252 = vmatpush.msra.mxu0 0.0
    %253 = vmatpush.msra.mxu0 0.0
    %254 = vmatpush.msra.mxu0 0.0
    %255 = vmatpush.msra.mxu0 0.0
    %256 = vmatpush.msra.mxu0 0.0
    %257 = vmatpush.msra.mxu0 0.0
    %258 = vmatpush.msra.mxu0 0.0
    %259 = vmatpush.msra.mxu0 %v243
    %260 = vmatpush.msra.mxu0 %v240
    %261 = vmatmul.f32.gmra.mxu0 %v59
    %v262 = vpop.f32.mrf.mxu0
    %v263 = vadd.f32 0.0, %v262
    %264 = vmatmul.f32.gmra.mxu0 %v62
    %v265 = vpop.f32.mrf.mxu0
    %v266 = vadd.f32 0.0, %v265
    %267 = vdwg.mxu0
    %268 = vmatpush.msra.mxu0 0.0
    %269 = vmatpush.msra.mxu0 0.0
    %270 = vmatpush.msra.mxu0 0.0
    %271 = vmatpush.msra.mxu0 0.0
    %272 = vmatpush.msra.mxu0 0.0
    %273 = vmatpush.msra.mxu0 0.0
    %274 = vmatpush.msra.mxu0 0.0
    %275 = vmatpush.msra.mxu0 0.0
    %276 = vmatpush.msra.mxu0 0.0
    %277 = vmatpush.msra.mxu0 0.0
    %278 = vmatpush.msra.mxu0 0.0
    %279 = vmatpush.msra.mxu0 0.0
    %280 = vmatpush.msra.mxu0 0.0
    %281 = vmatpush.msra.mxu0 0.0
    %282 = vmatpush.msra.mxu0 %v243
    %283 = vmatpush.msra.mxu0 %v240
    %284 = vmatmul.f32.gmra.mxu0 %v106
    %v285 = vpop.f32.mrf.mxu0
    %v286 = vadd.f32 0.0, %v285
    %287 = vmatmul.f32.gmra.mxu0 %v109
    %v288 = vpop.f32.mrf.mxu0
    %v289 = vadd.f32 0.0, %v288
    %290 = vdwg.mxu0
    %v292 = vsel %vm134, %v240, 0
    %v294 = vsel %vm134, %v241, 0
    %296 = vmatpush.msra.mxu0 0.0
    %297 = vmatpush.msra.mxu0 0.0
    %298 = vmatpush.msra.mxu0 0.0
    %299 = vmatpush.msra.mxu0 0.0
    %300 = vmatpush.msra.mxu0 0.0
    %301 = vmatpush.msra.mxu0 0.0
    %302 = vmatpush.msra.mxu0 0.0
    %303 = vmatpush.msra.mxu0 0.0
    %304 = vmatpush.msra.mxu0 0.0
    %305 = vmatpush.msra.mxu0 0.0
    %306 = vmatpush.msra.mxu0 0.0
    %307 = vmatpush.msra.mxu0 0.0
    %308 = vmatpush.msra.mxu0 0.0
    %309 = vmatpush.msra.mxu0 0.0
    %310 = vmatpush.msra.mxu0 0.0
    %311 = vmatpush.msra.mxu0 %v141
    %312 = vmatmul.f32.gmra.mxu0 %v292
    %v313 = vpop.f32.mrf.mxu0
    %v314 = vadd.f32 0.0, %v313
    %315 = vmatmul.f32.gmra.mxu0 %v294
    %v316 = vpop.f32.mrf.mxu0
    %v317 = vadd.f32 0.0, %v316
    %318 = vdwg.mxu0
    %v320 = vsel %vm134, %v263, 0
    %v323 = vsel %vm134, %v266, 0
    %325 = vmatpush.msra.mxu0 0.0
    %326 = vmatpush.msra.mxu0 0.0
    %327 = vmatpush.msra.mxu0 0.0
    %328 = vmatpush.msra.mxu0 0.0
    %329 = vmatpush.msra.mxu0 0.0
    %330 = vmatpush.msra.mxu0 0.0
    %331 = vmatpush.msra.mxu0 0.0
    %332 = vmatpush.msra.mxu0 0.0
    %333 = vmatpush.msra.mxu0 0.0
    %334 = vmatpush.msra.mxu0 0.0
    %335 = vmatpush.msra.mxu0 0.0
    %336 = vmatpush.msra.mxu0 0.0
    %337 = vmatpush.msra.mxu0 0.0
    %338 = vmatpush.msra.mxu0 0.0
    %339 = vmatpush.msra.mxu0 0.0
    %340 = vmatpush.msra.mxu0 %v173
    %341 = vmatmul.f32.gmra.mxu0 %v320
    %v342 = vpop.f32.mrf.mxu0
    %v343 = vadd.f32 %v314, %v342
    %344 = vmatmul.f32.gmra.mxu0 %v323
    %v345 = vpop.f32.mrf.mxu0
    %v346 = vadd.f32 %v317, %v345
    %347 = vdwg.mxu0
    %v349 = vsel %vm134, %v286, 0
    %v352 = vsel %vm134, %v289, 0
    %354 = vmatpush.msra.mxu0 0.0
    %355 = vmatpush.msra.mxu0 0.0
    %356 = vmatpush.msra.mxu0 0.0
    %357 = vmatpush.msra.mxu0 0.0
    %358 = vmatpush.msra.mxu0 0.0
    %359 = vmatpush.msra.mxu0 0.0
    %360 = vmatpush.msra.mxu0 0.0
    %361 = vmatpush.msra.mxu0 0.0
    %362 = vmatpush.msra.mxu0 0.0
    %363 = vmatpush.msra.mxu0 0.0
    %364 = vmatpush.msra.mxu0 0.0
    %365 = vmatpush.msra.mxu0 0.0
    %366 = vmatpush.msra.mxu0 0.0
    %367 = vmatpush.msra.mxu0 0.0
    %368 = vmatpush.msra.mxu0 0.0
    %369 = vmatpush.msra.mxu0 %v205
    %370 = vmatmul.f32.gmra.mxu0 %v349
    %v371 = vpop.f32.mrf.mxu0
    %v372 = vadd.f32 0.0, %v371
    %373 = vmatmul.f32.gmra.mxu0 %v352
    %v374 = vpop.f32.mrf.mxu0
    %v375 = vadd.f32 0.0, %v374
    %376 = vdwg.mxu0
    %v377 = vadd.f32 %v343, %v372
    %v378 = vadd.f32 %v346, %v375
    %v379 = vadd.f32 %v377, %v232
    %v380 = vadd.f32 %v378, %v232
    %s381 = scalar_lea.vmem %s1, 16
    %v382 = vld [vmem:[%s381] sm:$0xff]
    %v383 = vld [vmem:[%s381 + $0x8] sm:$0xf]
    %v384 = vadd.f32 %v379, %v382
    %v385 = vadd.f32 %v380, %v383
    %v386 = vld [vmem:[#allocation2 + $0x20] sm:$0xff]
    %v387 = vld [vmem:[#allocation2 + $0x28] sm:$0xff]
    %v388 = vld [vmem:[#allocation2 + $0x30] sm:$0xff]
    %v389 = vld [vmem:[#allocation2 + $0x38] sm:$0xff]
    %v390 = vld [vmem:[#allocation2 + $0x40] sm:$0x1]
    %v391 = vld [vmem:[#allocation2 + $0x48] sm:$0xff]
    %v392 = vld [vmem:[#allocation2 + $0x50] sm:$0xff]
    %v393 = vld [vmem:[#allocation2 + $0x58] sm:$0xff]
    %v394 = vld [vmem:[#allocation2 + $0x60] sm:$0xff]
    %v395 = vld [vmem:[#allocation2 + $0x68] sm:$0x1]
    %v396 = vperm.slane %v390, 0
    %vm397 = vcmask 261120
    %v399 = vsel %vm397, %v237, 0
    %v402 = vsel %vm397, %v238, 0
    %404 = vmatpush.msra.mxu0 0.0
    %405 = vmatpush.msra.mxu0 0.0
    %406 = vmatpush.msra.mxu0 0.0
    %407 = vmatpush.msra.mxu0 0.0
    %408 = vmatpush.msra.mxu0 0.0
    %409 = vmatpush.msra.mxu0 0.0
    %410 = vmatpush.msra.mxu0 0.0
    %411 = vmatpush.msra.mxu0 0.0
    %412 = vmatpush.msra.mxu0 0.0
    %413 = vmatpush.msra.mxu0 0.0
    %414 = vmatpush.msra.mxu0 0.0
    %415 = vmatpush.msra.mxu0 0.0
    %416 = vmatpush.msra.mxu0 %v389
    %417 = vmatpush.msra.mxu0 %v388
    %418 = vmatpush.msra.mxu0 %v387
    %419 = vmatpush.msra.mxu0 %v386
    %420 = vmatmul.f32.gmra.mxu0 %v399
    %v421 = vpop.f32.mrf.mxu0
    %v422 = vadd.f32 %v396, %v421
    %423 = vmatmul.f32.gmra.mxu0 %v402
    %v424 = vpop.f32.mrf.mxu0
    %v425 = vadd.f32 %v396, %v424
    %426 = vdwg.mxu0
    %429 = vrot.lane.b32.xlu0 %v422, 96
    %v430 = vpop.permute.xlu0 %429
    %431 = vrot.lane.b32.xlu0 %v425, 96
    %v432 = vpop.permute.xlu0 %431
    %vm433 = vcmask 64512
    %v434 = vsel %vm433, %v422, 0
    %v436 = vsel %vm433, %v425, 0
    %v438 = vsel %vm433, %v430, 0
    %v440 = vsel %vm433, %v432, 0
    %442 = vmatpush.xpose.msra.mxu0 0.0
    %443 = vmatpush.xpose.msra.mxu0 0.0
    %444 = vmatpush.xpose.msra.mxu0 0.0
    %445 = vmatpush.xpose.msra.mxu0 0.0
    %446 = vmatpush.xpose.msra.mxu0 0.0
    %447 = vmatpush.xpose.msra.mxu0 0.0
    %448 = vmatpush.xpose.msra.mxu0 0.0
    %449 = vmatpush.xpose.msra.mxu0 0.0
    %450 = vmatpush.xpose.msra.mxu0 0.0
    %451 = vmatpush.xpose.msra.mxu0 0.0
    %452 = vmatpush.xpose.msra.mxu0 0.0
    %453 = vmatpush.xpose.msra.mxu0 0.0
    %454 = vmatpush.xpose.msra.mxu0 0.0
    %455 = vmatpush.xpose.msra.mxu0 0.0
    %456 = vmatpush.xpose.msra.mxu0 %v440
    %457 = vmatpush.xpose.msra.mxu0 %v438
    %458 = vmatmul.f32.gmra.mxu0 %v434
    %v459 = vpop.f32.mrf.mxu0
    %v460 = vadd.f32 0.0, %v459
    %461 = vmatmul.f32.gmra.mxu0 %v436
    %v462 = vpop.f32.mrf.mxu0
    %v463 = vadd.f32 0.0, %v462
    %464 = vdwg.mxu0
    %v465 = vsel %vm57, %v460, -inf
    %466 = vmax.xlane.f32.xlu0 %v465
    %v467 = vpop.xlane.xlu0 %466
    %vm468 = vcmask 93184
    %v469 = vsel %vm468, %v463, -inf
    %470 = vmax.xlane.f32.xlu0 %v469
    %v471 = vpop.xlane.xlu0 %470
    %v472 = vsub.f32 %v460, %v467
    %v473 = vsub.f32 %v463, %v471
    %v474 = vmul.f32 %v472, 1.442695
    %v475 = vpow.pop %v474
    %v476 = vmul.f32 %v473, 1.442695
    %v477 = vpow.pop %v476
    %v478 = vsel %vm57, %v475, 0.0
    %479 = vadd.xlane.f32.xlu0 %v478
    %v480 = vpop.xlane.xlu0 %479
    %v481 = vsel %vm468, %v477, 0.0
    %482 = vadd.xlane.f32.xlu0 %v481
    %v483 = vpop.xlane.xlu0 %482
    %v484 = vrcp.pop %v480
    %v485 = vmul.f32 %v480, %v484
    %v486 = vsub.f32 1.0, %v485
    %v487 = vmul.f32 %v484, %v486
    %v488 = vadd.f32 %v484, %v487
    %vm489 = vweird.f32 %v480
    %vm490 = vweird.f32 %v484
    %vm491 = vmor %vm489, %vm490
    %v492 = vsel %vm491, %v484, %v488
    %v493 = vand.u32 2147483647, %v480
    %vm494 = vcmp.eq.f32.partialorder %v493, 8.507059e+37
    %v495 = vand.u32 %v480, 2147483648
    %v496 = vor.u32 1.1754944e-38, %v495
    %v497 = vsel %vm494, %v496, %v492
    %v498 = vmul.f32 %v475, %v497
    %v499 = vrcp.pop %v483
    %v500 = vmul.f32 %v483, %v499
    %v501 = vsub.f32 1.0, %v500
    %v502 = vmul.f32 %v499, %v501
    %v503 = vadd.f32 %v499, %v502
    %vm504 = vweird.f32 %v483
    %vm505 = vweird.f32 %v499
    %vm506 = vmor %vm504, %vm505
    %v507 = vsel %vm506, %v499, %v503
    %v508 = vand.u32 2147483647, %v483
    %vm509 = vcmp.eq.f32.partialorder %v508, 8.507059e+37
    %v510 = vand.u32 %v483, 2147483648
    %v511 = vor.u32 1.1754944e-38, %v510
    %v512 = vsel %vm509, %v511, %v507
    %v513 = vmul.f32 %v477, %v512
    %514 = vrot.lane.b32.xlu0 %v422, 64
    %v515 = vpop.permute.xlu0 %514
    %516 = vrot.lane.b32.xlu0 %v425, 64
    %v517 = vpop.permute.xlu0 %516
    %v520 = vsel %vm57, %v498, 0
    %v523 = vsel %vm57, %v513, 0
    %v525 = vsel %vm64, %v517, 0
    %527 = vmatpush.msra.mxu0 0.0
    %528 = vmatpush.msra.mxu0 0.0
    %529 = vmatpush.msra.mxu0 0.0
    %530 = vmatpush.msra.mxu0 0.0
    %531 = vmatpush.msra.mxu0 0.0
    %532 = vmatpush.msra.mxu0 0.0
    %533 = vmatpush.msra.mxu0 0.0
    %534 = vmatpush.msra.mxu0 0.0
    %535 = vmatpush.msra.mxu0 0.0
    %536 = vmatpush.msra.mxu0 0.0
    %537 = vmatpush.msra.mxu0 0.0
    %538 = vmatpush.msra.mxu0 0.0
    %539 = vmatpush.msra.mxu0 0.0
    %540 = vmatpush.msra.mxu0 0.0
    %541 = vmatpush.msra.mxu0 %v525
    %542 = vmatpush.msra.mxu0 %v515
    %543 = vmatmul.f32.gmra.mxu0 %v520
    %v544 = vpop.f32.mrf.mxu0
    %v545 = vadd.f32 0.0, %v544
    %546 = vmatmul.f32.gmra.mxu0 %v523
    %v547 = vpop.f32.mrf.mxu0
    %v548 = vadd.f32 0.0, %v547
    %549 = vdwg.mxu0
    %550 = vrot.lane.b32.xlu0 %v422, 120
    %v551 = vpop.permute.xlu0 %550
    %552 = vrot.lane.b32.xlu0 %v425, 120
    %v553 = vpop.permute.xlu0 %552
    %554 = vrot.lane.b32.xlu0 %v422, 88
    %v555 = vpop.permute.xlu0 %554
    %556 = vrot.lane.b32.xlu0 %v425, 88
    %v557 = vpop.permute.xlu0 %556
    %v558 = vsel %vm433, %v551, 0
    %v560 = vsel %vm433, %v553, 0
    %v562 = vsel %vm433, %v555, 0
    %v564 = vsel %vm433, %v557, 0
    %566 = vmatpush.xpose.msra.mxu0 0.0
    %567 = vmatpush.xpose.msra.mxu0 0.0
    %568 = vmatpush.xpose.msra.mxu0 0.0
    %569 = vmatpush.xpose.msra.mxu0 0.0
    %570 = vmatpush.xpose.msra.mxu0 0.0
    %571 = vmatpush.xpose.msra.mxu0 0.0
    %572 = vmatpush.xpose.msra.mxu0 0.0
    %573 = vmatpush.xpose.msra.mxu0 0.0
    %574 = vmatpush.xpose.msra.mxu0 0.0
    %575 = vmatpush.xpose.msra.mxu0 0.0
    %576 = vmatpush.xpose.msra.mxu0 0.0
    %577 = vmatpush.xpose.msra.mxu0 0.0
    %578 = vmatpush.xpose.msra.mxu0 0.0
    %579 = vmatpush.xpose.msra.mxu0 0.0
    %580 = vmatpush.xpose.msra.mxu0 %v564
    %581 = vmatpush.xpose.msra.mxu0 %v562
    %582 = vmatmul.f32.gmra.mxu0 %v558
    %v583 = vpop.f32.mrf.mxu0
    %v584 = vadd.f32 0.0, %v583
    %585 = vmatmul.f32.gmra.mxu0 %v560
    %v586 = vpop.f32.mrf.mxu0
    %v587 = vadd.f32 0.0, %v586
    %588 = vdwg.mxu0
    %v589 = vsel %vm57, %v584, -inf
    %590 = vmax.xlane.f32.xlu0 %v589
    %v591 = vpop.xlane.xlu0 %590
    %v592 = vsel %vm468, %v587, -inf
    %593 = vmax.xlane.f32.xlu0 %v592
    %v594 = vpop.xlane.xlu0 %593
    %v595 = vsub.f32 %v584, %v591
    %v596 = vsub.f32 %v587, %v594
    %v597 = vmul.f32 %v595, 1.442695
    %v598 = vpow.pop %v597
    %v599 = vmul.f32 %v596, 1.442695
    %v600 = vpow.pop %v599
    %v601 = vsel %vm57, %v598, 0.0
    %602 = vadd.xlane.f32.xlu0 %v601
    %v603 = vpop.xlane.xlu0 %602
    %v604 = vsel %vm468, %v600, 0.0
    %605 = vadd.xlane.f32.xlu0 %v604
    %v606 = vpop.xlane.xlu0 %605
    %v607 = vrcp.pop %v603
    %v608 = vmul.f32 %v603, %v607
    %v609 = vsub.f32 1.0, %v608
    %v610 = vmul.f32 %v607, %v609
    %v611 = vadd.f32 %v607, %v610
    %vm612 = vweird.f32 %v603
    %vm613 = vweird.f32 %v607
    %vm614 = vmor %vm612, %vm613
    %v615 = vsel %vm614, %v607, %v611
    %v616 = vand.u32 2147483647, %v603
    %vm617 = vcmp.eq.f32.partialorder %v616, 8.507059e+37
    %v618 = vand.u32 %v603, 2147483648
    %v619 = vor.u32 1.1754944e-38, %v618
    %v620 = vsel %vm617, %v619, %v615
    %v621 = vmul.f32 %v598, %v620
    %v622 = vrcp.pop %v606
    %v623 = vmul.f32 %v606, %v622
    %v624 = vsub.f32 1.0, %v623
    %v625 = vmul.f32 %v622, %v624
    %v626 = vadd.f32 %v622, %v625
    %vm627 = vweird.f32 %v606
    %vm628 = vweird.f32 %v622
    %vm629 = vmor %vm627, %vm628
    %v630 = vsel %vm629, %v622, %v626
    %v631 = vand.u32 2147483647, %v606
    %vm632 = vcmp.eq.f32.partialorder %v631, 8.507059e+37
    %v633 = vand.u32 %v606, 2147483648
    %v634 = vor.u32 1.1754944e-38, %v633
    %v635 = vsel %vm632, %v634, %v630
    %v636 = vmul.f32 %v600, %v635
    %637 = vrot.lane.b32.xlu0 %v422, 56
    %v638 = vpop.permute.xlu0 %637
    %639 = vrot.lane.b32.xlu0 %v425, 56
    %v640 = vpop.permute.xlu0 %639
    %v643 = vsel %vm57, %v621, 0
    %v646 = vsel %vm57, %v636, 0
    %v648 = vsel %vm64, %v640, 0
    %650 = vmatpush.msra.mxu0 0.0
    %651 = vmatpush.msra.mxu0 0.0
    %652 = vmatpush.msra.mxu0 0.0
    %653 = vmatpush.msra.mxu0 0.0
    %654 = vmatpush.msra.mxu0 0.0
    %655 = vmatpush.msra.mxu0 0.0
    %656 = vmatpush.msra.mxu0 0.0
    %657 = vmatpush.msra.mxu0 0.0
    %658 = vmatpush.msra.mxu0 0.0
    %659 = vmatpush.msra.mxu0 0.0
    %660 = vmatpush.msra.mxu0 0.0
    %661 = vmatpush.msra.mxu0 0.0
    %662 = vmatpush.msra.mxu0 0.0
    %663 = vmatpush.msra.mxu0 0.0
    %664 = vmatpush.msra.mxu0 %v648
    %665 = vmatpush.msra.mxu0 %v638
    %666 = vmatmul.f32.gmra.mxu0 %v643
    %v667 = vpop.f32.mrf.mxu0
    %v668 = vadd.f32 0.0, %v667
    %669 = vmatmul.f32.gmra.mxu0 %v646
    %v670 = vpop.f32.mrf.mxu0
    %v671 = vadd.f32 0.0, %v670
    %672 = vdwg.mxu0
    %673 = vrot.lane.b32.xlu0 %v422, 112
    %v674 = vpop.permute.xlu0 %673
    %675 = vrot.lane.b32.xlu0 %v425, 112
    %v676 = vpop.permute.xlu0 %675
    %677 = vrot.lane.b32.xlu0 %v422, 80
    %v678 = vpop.permute.xlu0 %677
    %679 = vrot.lane.b32.xlu0 %v425, 80
    %v680 = vpop.permute.xlu0 %679
    %v681 = vsel %vm433, %v674, 0
    %v683 = vsel %vm433, %v676, 0
    %v685 = vsel %vm433, %v678, 0
    %v687 = vsel %vm433, %v680, 0
    %689 = vmatpush.xpose.msra.mxu0 0.0
    %690 = vmatpush.xpose.msra.mxu0 0.0
    %691 = vmatpush.xpose.msra.mxu0 0.0
    %692 = vmatpush.xpose.msra.mxu0 0.0
    %693 = vmatpush.xpose.msra.mxu0 0.0
    %694 = vmatpush.xpose.msra.mxu0 0.0
    %695 = vmatpush.xpose.msra.mxu0 0.0
    %696 = vmatpush.xpose.msra.mxu0 0.0
    %697 = vmatpush.xpose.msra.mxu0 0.0
    %698 = vmatpush.xpose.msra.mxu0 0.0
    %699 = vmatpush.xpose.msra.mxu0 0.0
    %700 = vmatpush.xpose.msra.mxu0 0.0
    %701 = vmatpush.xpose.msra.mxu0 0.0
    %702 = vmatpush.xpose.msra.mxu0 0.0
    %703 = vmatpush.xpose.msra.mxu0 %v687
    %704 = vmatpush.xpose.msra.mxu0 %v685
    %705 = vmatmul.f32.gmra.mxu0 %v681
    %v706 = vpop.f32.mrf.mxu0
    %v707 = vadd.f32 0.0, %v706
    %708 = vmatmul.f32.gmra.mxu0 %v683
    %v709 = vpop.f32.mrf.mxu0
    %v710 = vadd.f32 0.0, %v709
    %711 = vdwg.mxu0
    %v712 = vsel %vm57, %v707, -inf
    %713 = vmax.xlane.f32.xlu0 %v712
    %v714 = vpop.xlane.xlu0 %713
    %v715 = vsel %vm468, %v710, -inf
    %716 = vmax.xlane.f32.xlu0 %v715
    %v717 = vpop.xlane.xlu0 %716
    %v718 = vsub.f32 %v707, %v714
    %v719 = vsub.f32 %v710, %v717
    %v720 = vmul.f32 %v718, 1.442695
    %v721 = vpow.pop %v720
    %v722 = vmul.f32 %v719, 1.442695
    %v723 = vpow.pop %v722
    %v724 = vsel %vm57, %v721, 0.0
    %725 = vadd.xlane.f32.xlu0 %v724
    %v726 = vpop.xlane.xlu0 %725
    %v727 = vsel %vm468, %v723, 0.0
    %728 = vadd.xlane.f32.xlu0 %v727
    %v729 = vpop.xlane.xlu0 %728
    %v730 = vrcp.pop %v726
    %v731 = vmul.f32 %v726, %v730
    %v732 = vsub.f32 1.0, %v731
    %v733 = vmul.f32 %v730, %v732
    %v734 = vadd.f32 %v730, %v733
    %vm735 = vweird.f32 %v726
    %vm736 = vweird.f32 %v730
    %vm737 = vmor %vm735, %vm736
    %v738 = vsel %vm737, %v730, %v734
    %v739 = vand.u32 2147483647, %v726
    %vm740 = vcmp.eq.f32.partialorder %v739, 8.507059e+37
    %v741 = vand.u32 %v726, 2147483648
    %v742 = vor.u32 1.1754944e-38, %v741
    %v743 = vsel %vm740, %v742, %v738
    %v744 = vmul.f32 %v721, %v743
    %v745 = vrcp.pop %v729
    %v746 = vmul.f32 %v729, %v745
    %v747 = vsub.f32 1.0, %v746
    %v748 = vmul.f32 %v745, %v747
    %v749 = vadd.f32 %v745, %v748
    %vm750 = vweird.f32 %v729
    %vm751 = vweird.f32 %v745
    %vm752 = vmor %vm750, %vm751
    %v753 = vsel %vm752, %v745, %v749
    %v754 = vand.u32 2147483647, %v729
    %vm755 = vcmp.eq.f32.partialorder %v754, 8.507059e+37
    %v756 = vand.u32 %v729, 2147483648
    %v757 = vor.u32 1.1754944e-38, %v756
    %v758 = vsel %vm755, %v757, %v753
    %v759 = vmul.f32 %v723, %v758
    %760 = vrot.lane.b32.xlu0 %v422, 48
    %v761 = vpop.permute.xlu0 %760
    %762 = vrot.lane.b32.xlu0 %v425, 48
    %v763 = vpop.permute.xlu0 %762
    %v766 = vsel %vm57, %v744, 0
    %v769 = vsel %vm57, %v759, 0
    %v771 = vsel %vm64, %v763, 0
    %773 = vmatpush.msra.mxu0 0.0
    %774 = vmatpush.msra.mxu0 0.0
    %775 = vmatpush.msra.mxu0 0.0
    %776 = vmatpush.msra.mxu0 0.0
    %777 = vmatpush.msra.mxu0 0.0
    %778 = vmatpush.msra.mxu0 0.0
    %779 = vmatpush.msra.mxu0 0.0
    %780 = vmatpush.msra.mxu0 0.0
    %781 = vmatpush.msra.mxu0 0.0
    %782 = vmatpush.msra.mxu0 0.0
    %783 = vmatpush.msra.mxu0 0.0
    %784 = vmatpush.msra.mxu0 0.0
    %785 = vmatpush.msra.mxu0 0.0
    %786 = vmatpush.msra.mxu0 0.0
    %787 = vmatpush.msra.mxu0 %v771
    %788 = vmatpush.msra.mxu0 %v761
    %789 = vmatmul.f32.gmra.mxu0 %v766
    %v790 = vpop.f32.mrf.mxu0
    %v791 = vadd.f32 0.0, %v790
    %792 = vmatmul.f32.gmra.mxu0 %v769
    %v793 = vpop.f32.mrf.mxu0
    %v794 = vadd.f32 0.0, %v793
    %795 = vdwg.mxu0
    %796 = vrot.lane.b32.xlu0 %v422, 104
    %v797 = vpop.permute.xlu0 %796
    %798 = vrot.lane.b32.xlu0 %v425, 104
    %v799 = vpop.permute.xlu0 %798
    %800 = vrot.lane.b32.xlu0 %v422, 72
    %v801 = vpop.permute.xlu0 %800
    %802 = vrot.lane.b32.xlu0 %v425, 72
    %v803 = vpop.permute.xlu0 %802
    %v804 = vsel %vm433, %v797, 0
    %v806 = vsel %vm433, %v799, 0
    %v808 = vsel %vm433, %v801, 0
    %v810 = vsel %vm433, %v803, 0
    %812 = vmatpush.xpose.msra.mxu0 0.0
    %813 = vmatpush.xpose.msra.mxu0 0.0
    %814 = vmatpush.xpose.msra.mxu0 0.0
    %815 = vmatpush.xpose.msra.mxu0 0.0
    %816 = vmatpush.xpose.msra.mxu0 0.0
    %817 = vmatpush.xpose.msra.mxu0 0.0
    %818 = vmatpush.xpose.msra.mxu0 0.0
    %819 = vmatpush.xpose.msra.mxu0 0.0
    %820 = vmatpush.xpose.msra.mxu0 0.0
    %821 = vmatpush.xpose.msra.mxu0 0.0
    %822 = vmatpush.xpose.msra.mxu0 0.0
    %823 = vmatpush.xpose.msra.mxu0 0.0
    %824 = vmatpush.xpose.msra.mxu0 0.0
    %825 = vmatpush.xpose.msra.mxu0 0.0
    %826 = vmatpush.xpose.msra.mxu0 %v810
    %827 = vmatpush.xpose.msra.mxu0 %v808
    %828 = vmatmul.f32.gmra.mxu0 %v804
    %v829 = vpop.f32.mrf.mxu0
    %v830 = vadd.f32 0.0, %v829
    %831 = vmatmul.f32.gmra.mxu0 %v806
    %v832 = vpop.f32.mrf.mxu0
    %v833 = vadd.f32 0.0, %v832
    %834 = vdwg.mxu0
    %v835 = vsel %vm57, %v830, -inf
    %836 = vmax.xlane.f32.xlu0 %v835
    %v837 = vpop.xlane.xlu0 %836
    %v838 = vsel %vm468, %v833, -inf
    %839 = vmax.xlane.f32.xlu0 %v838
    %v840 = vpop.xlane.xlu0 %839
    %v841 = vsub.f32 %v830, %v837
    %v842 = vsub.f32 %v833, %v840
    %v843 = vmul.f32 %v841, 1.442695
    %v844 = vpow.pop %v843
    %v845 = vmul.f32 %v842, 1.442695
    %v846 = vpow.pop %v845
    %v847 = vsel %vm57, %v844, 0.0
    %848 = vadd.xlane.f32.xlu0 %v847
    %v849 = vpop.xlane.xlu0 %848
    %v850 = vsel %vm468, %v846, 0.0
    %851 = vadd.xlane.f32.xlu0 %v850
    %v852 = vpop.xlane.xlu0 %851
    %v853 = vrcp.pop %v849
    %v854 = vmul.f32 %v849, %v853
    %v855 = vsub.f32 1.0, %v854
    %v856 = vmul.f32 %v853, %v855
    %v857 = vadd.f32 %v853, %v856
    %vm858 = vweird.f32 %v849
    %vm859 = vweird.f32 %v853
    %vm860 = vmor %vm858, %vm859
    %v861 = vsel %vm860, %v853, %v857
    %v862 = vand.u32 2147483647, %v849
    %vm863 = vcmp.eq.f32.partialorder %v862, 8.507059e+37
    %v864 = vand.u32 %v849, 2147483648
    %v865 = vor.u32 1.1754944e-38, %v864
    %v866 = vsel %vm863, %v865, %v861
    %v867 = vmul.f32 %v844, %v866
    %v868 = vrcp.pop %v852
    %v869 = vmul.f32 %v852, %v868
    %v870 = vsub.f32 1.0, %v869
    %v871 = vmul.f32 %v868, %v870
    %v872 = vadd.f32 %v868, %v871
    %vm873 = vweird.f32 %v852
    %vm874 = vweird.f32 %v868
    %vm875 = vmor %vm873, %vm874
    %v876 = vsel %vm875, %v868, %v872
    %v877 = vand.u32 2147483647, %v852
    %vm878 = vcmp.eq.f32.partialorder %v877, 8.507059e+37
    %v879 = vand.u32 %v852, 2147483648
    %v880 = vor.u32 1.1754944e-38, %v879
    %v881 = vsel %vm878, %v880, %v876
    %v882 = vmul.f32 %v846, %v881
    %883 = vrot.lane.b32.xlu0 %v422, 40
    %v884 = vpop.permute.xlu0 %883
    %885 = vrot.lane.b32.xlu0 %v425, 40
    %v886 = vpop.permute.xlu0 %885
    %v889 = vsel %vm57, %v867, 0
    %v892 = vsel %vm57, %v882, 0
    %v894 = vsel %vm64, %v886, 0
    %896 = vmatpush.msra.mxu0 0.0
    %897 = vmatpush.msra.mxu0 0.0
    %898 = vmatpush.msra.mxu0 0.0
    %899 = vmatpush.msra.mxu0 0.0
    %900 = vmatpush.msra.mxu0 0.0
    %901 = vmatpush.msra.mxu0 0.0
    %902 = vmatpush.msra.mxu0 0.0
    %903 = vmatpush.msra.mxu0 0.0
    %904 = vmatpush.msra.mxu0 0.0
    %905 = vmatpush.msra.mxu0 0.0
    %906 = vmatpush.msra.mxu0 0.0
    %907 = vmatpush.msra.mxu0 0.0
    %908 = vmatpush.msra.mxu0 0.0
    %909 = vmatpush.msra.mxu0 0.0
    %910 = vmatpush.msra.mxu0 %v894
    %911 = vmatpush.msra.mxu0 %v884
    %912 = vmatmul.f32.gmra.mxu0 %v889
    %v913 = vpop.f32.mrf.mxu0
    %v914 = vadd.f32 0.0, %v913
    %915 = vmatmul.f32.gmra.mxu0 %v892
    %v916 = vpop.f32.mrf.mxu0
    %v917 = vadd.f32 0.0, %v916
    %918 = vdwg.mxu0
    %921 = vrot.lane.b32.xlu0 %v668, 8
    %v922 = vpop.permute.xlu0 %921
    %923 = vrot.lane.b32.xlu0 %v671, 8
    %v924 = vpop.permute.xlu0 %923
    %929 = vrot.lane.b32.xlu0 %v791, 16
    %v930 = vpop.permute.xlu0 %929
    %931 = vrot.lane.b32.xlu0 %v794, 16
    %v932 = vpop.permute.xlu0 %931
    %937 = vrot.lane.b32.xlu0 %v914, 24
    %v938 = vpop.permute.xlu0 %937
    %939 = vrot.lane.b32.xlu0 %v917, 24
    %v940 = vpop.permute.xlu0 %939
    %v943 = vsel %vm433, %v545, %v922
    %v944 = vsel %vm433, %v548, %v924
    %vm945 = vcmask 130048
    %v946 = vsel %vm945, %v943, %v930
    %v947 = vsel %vm945, %v944, %v932
    %vm948 = vcmask 195584
    %v949 = vsel %vm948, %v946, %v938
    %v950 = vsel %vm948, %v947, %v940
    %v951 = vperm.slane %v395, 0
    %v953 = vsel %vm397, %v949, 0
    %v956 = vsel %vm397, %v950, 0
    %958 = vmatpush.msra.mxu0 0.0
    %959 = vmatpush.msra.mxu0 0.0
    %960 = vmatpush.msra.mxu0 0.0
    %961 = vmatpush.msra.mxu0 0.0
    %962 = vmatpush.msra.mxu0 0.0
    %963 = vmatpush.msra.mxu0 0.0
    %964 = vmatpush.msra.mxu0 0.0
    %965 = vmatpush.msra.mxu0 0.0
    %966 = vmatpush.msra.mxu0 0.0
    %967 = vmatpush.msra.mxu0 0.0
    %968 = vmatpush.msra.mxu0 0.0
    %969 = vmatpush.msra.mxu0 0.0
    %970 = vmatpush.msra.mxu0 %v394
    %971 = vmatpush.msra.mxu0 %v393
    %972 = vmatpush.msra.mxu0 %v392
    %973 = vmatpush.msra.mxu0 %v391
    %974 = vmatmul.f32.gmra.mxu0 %v953
    %v975 = vpop.f32.mrf.mxu0
    %v976 = vadd.f32 %v951, %v975
    %977 = vmatmul.f32.gmra.mxu0 %v956
    %v978 = vpop.f32.mrf.mxu0
    %v979 = vadd.f32 %v951, %v978
    %980 = vdwg.mxu0
    %v981 = vadd.f32 %v237, %v976
    %v982 = vadd.f32 %v238, %v979
    %v983 = vld [vmem:[#allocation2 + $0x70] sm:$0x1]
    %v984 = vld [vmem:[#allocation2 + $0x78] sm:$0x1]
    %v985 = vsel %vm397, %v981, 0.0
    %986 = vadd.xlane.f32.xlu0 %v985
    %v987 = vpop.xlane.xlu0 %986
    %vm988 = vcmask 257024
    %v989 = vsel %vm988, %v982, 0.0
    %990 = vadd.xlane.f32.xlu0 %v989
    %v991 = vpop.xlane.xlu0 %990
    %v992 = vrcp.pop 32.0
    %v993 = vmul.f32 32.0, %v992
    %v994 = vsub.f32 1.0, %v993
    %v995 = vmul.f32 %v992, %v994
    %v996 = vadd.f32 %v992, %v995
    %vm997 = vweird.f32 %v992
    %v998 = vsel %vm997, %v992, %v996
    %v999 = vmul.f32 %v987, %v998
    %v1000 = vmul.f32 %v991, %v998
    %v1001 = vsub.f32 %v981, %v999
    %v1002 = vsub.f32 %v982, %v1000
    %v1003 = vmul.f32 %v1001, %v1001
    %v1004 = vmul.f32 %v1002, %v1002
    %v1005 = vsel %vm397, %v1003, 0.0
    %1006 = vadd.xlane.f32.xlu0 %v1005
    %v1007 = vpop.xlane.xlu0 %1006
    %v1008 = vsel %vm988, %v1004, 0.0
    %1009 = vadd.xlane.f32.xlu0 %v1008
    %v1010 = vpop.xlane.xlu0 %1009
    %v1011 = vmul.f32 %v1007, %v998
    %v1012 = vmul.f32 %v1010, %v998
    %v1013 = vadd.f32 %v1011, 1e-05
    %v1014 = vadd.f32 %v1012, 1e-05
    %v1015 = vrsqrt.pop %v1013
    %v1016 = vmul.f32 %v1015, %v1013
    %v1017 = vmul.f32 %v1016, %v1015
    %v1018 = vmul.f32 0.5, %v1017
    %v1019 = vsub.f32 1.5, %v1018
    %v1020 = vmul.f32 %v1015, %v1019
    %vm1021 = vweird.f32 %v1013
    %vm1022 = vweird.f32 %v1015
    %vm1023 = vmor %vm1021, %vm1022
    %v1024 = vsel %vm1023, %v1015, %v1020
    %v1025 = vrsqrt.pop %v1014
    %v1026 = vmul.f32 %v1025, %v1014
    %v1027 = vmul.f32 %v1026, %v1025
    %v1028 = vmul.f32 0.5, %v1027
    %v1029 = vsub.f32 1.5, %v1028
    %v1030 = vmul.f32 %v1025, %v1029
    %vm1031 = vweird.f32 %v1014
    %vm1032 = vweird.f32 %v1025
    %vm1033 = vmor %vm1031, %vm1032
    %v1034 = vsel %vm1033, %v1025, %v1030
    %v1035 = vmul.f32 %v1001, %v1024
    %v1036 = vmul.f32 %v1002, %v1034
    %v1037 = vperm.slane %v983, 0
    %v1038 = vmul.f32 %v1035, %v1037
    %v1039 = vmul.f32 %v1036, %v1037
    %v1040 = vperm.slane %v984, 0
    %v1041 = vadd.f32 %v1038, %v1040
    %v1042 = vadd.f32 %v1039, %v1040
    %v1043 = vld [vmem:[#allocation2 + $0x80] sm:$0xff]
    %v1044 = vld [vmem:[#allocation2 + $0x88] sm:$0xff]
    %v1045 = vld [vmem:[#allocation2 + $0x90] sm:$0xff]
    %v1046 = vld [vmem:[#allocation2 + $0x98] sm:$0xff]
    %v1047 = vld [vmem:[#allocation2 + $0xa0] sm:$0x1]
    %v1048 = vperm.slane %v1047, 0
    %v1050 = vsel %vm397, %v1041, 0
    %v1053 = vsel %vm397, %v1042, 0
    %1055 = vmatpush.msra.mxu0 0.0
    %1056 = vmatpush.msra.mxu0 0.0
    %1057 = vmatpush.msra.mxu0 0.0
    %1058 = vmatpush.msra.mxu0 0.0
    %1059 = vmatpush.msra.mxu0 0.0
    %1060 = vmatpush.msra.mxu0 0.0
    %1061 = vmatpush.msra.mxu0 0.0
    %1062 = vmatpush.msra.mxu0 0.0
    %1063 = vmatpush.msra.mxu0 0.0
    %1064 = vmatpush.msra.mxu0 0.0
    %1065 = vmatpush.msra.mxu0 0.0
    %1066 = vmatpush.msra.mxu0 0.0
    %1067 = vmatpush.msra.mxu0 %v1046
    %1068 = vmatpush.msra.mxu0 %v1045
    %1069 = vmatpush.msra.mxu0 %v1044
    %1070 = vmatpush.msra.mxu0 %v1043
    %1071 = vmatmul.f32.gmra.mxu0 %v1050
    %v1072 = vpop.f32.mrf.mxu0
    %v1073 = vadd.f32 %v1048, %v1072
    %1074 = vmatmul.f32.gmra.mxu0 %v1053
    %v1075 = vpop.f32.mrf.mxu0
    %v1076 = vadd.f32 %v1048, %v1075
    %1077 = vdwg.mxu0
    %v1078 = vmul.f32 %v1073, 0.5
    %v1079 = vmul.f32 %v1076, 0.5
    %v1080 = vmul.f32 %v1073, 0.70710677
    %v1081 = vmul.f32 %v1076, 0.70710677
    %vm1082 = vcmp.ge.f32.partialorder %v1080, 0.0
    %vm1083 = vcmp.ge.f32.partialorder %v1081, 0.0
    %v1084 = vsel %vm1082, 1.0, -1.0
    %v1085 = vsel %vm1083, 1.0, -1.0
    %v1086 = vand.u32 2147483647, %v1080
    %v1087 = vand.u32 2147483647, %v1081
    %v1088 = vmul.f32 %v1086, 0.3275911
    %v1089 = vmul.f32 %v1087, 0.3275911
    %v1090 = vadd.f32 %v1088, 1.0
    %v1091 = vadd.f32 %v1089, 1.0
    %v1092 = vrcp.pop %v1090
    %v1093 = vmul.f32 %v1090, %v1092
    %v1094 = vsub.f32 1.0, %v1093
    %v1095 = vmul.f32 %v1092, %v1094
    %v1096 = vadd.f32 %v1092, %v1095
    %vm1097 = vweird.f32 %v1090
    %vm1098 = vweird.f32 %v1092
    %vm1099 = vmor %vm1097, %vm1098
    %v1100 = vsel %vm1099, %v1092, %v1096
    %v1101 = vand.u32 2147483647, %v1090
    %vm1102 = vcmp.eq.f32.partialorder %v1101, 8.507059e+37
    %v1103 = vand.u32 %v1090, 2147483648
    %v1104 = vor.u32 1.1754944e-38, %v1103
    %v1105 = vsel %vm1102, %v1104, %v1100
    %v1106 = vmul.f32 1.0, %v1105
    %v1107 = vrcp.pop %v1091
    %v1108 = vmul.f32 %v1091, %v1107
    %v1109 = vsub.f32 1.0, %v1108
    %v1110 = vmul.f32 %v1107, %v1109
    %v1111 = vadd.f32 %v1107, %v1110
    %vm1112 = vweird.f32 %v1091
    %vm1113 = vweird.f32 %v1107
    %vm1114 = vmor %vm1112, %vm1113
    %v1115 = vsel %vm1114, %v1107, %v1111
    %v1116 = vand.u32 2147483647, %v1091
    %vm1117 = vcmp.eq.f32.partialorder %v1116, 8.507059e+37
    %v1118 = vand.u32 %v1091, 2147483648
    %v1119 = vor.u32 1.1754944e-38, %v1118
    %v1120 = vsel %vm1117, %v1119, %v1115
    %v1121 = vmul.f32 1.0, %v1120
    %v1122 = vmul.f32 %v1106, 1.0614054
    %v1123 = vmul.f32 %v1121, 1.0614054
    %v1124 = vadd.f32 %v1122, -1.4531521
    %v1125 = vadd.f32 %v1123, -1.4531521
    %v1126 = vmul.f32 %v1124, %v1106
    %v1127 = vmul.f32 %v1125, %v1121
    %v1128 = vadd.f32 %v1126, 1.4214138
    %v1129 = vadd.f32 %v1127, 1.4214138
    %v1130 = vmul.f32 %v1128, %v1106
    %v1131 = vmul.f32 %v1129, %v1121
    %v1132 = vadd.f32 %v1130, -0.28449672
    %v1133 = vadd.f32 %v1131, -0.28449672
    %v1134 = vmul.f32 %v1132, %v1106
    %v1135 = vmul.f32 %v1133, %v1121
    %v1136 = vadd.f32 %v1134, 0.2548296
    %v1137 = vadd.f32 %v1135, 0.2548296
    %v1138 = vmul.f32 %v1136, %v1106
    %v1139 = vmul.f32 %v1137, %v1121
    %v1140 = vsub.f32 0.0, %v1086
    %v1141 = vsub.f32 0.0, %v1087
    %v1142 = vmul.f32 %v1140, %v1086
    %v1143 = vmul.f32 %v1141, %v1087
    %v1144 = vmul.f32 %v1142, 1.442695
    %v1145 = vpow.pop %v1144
    %v1146 = vmul.f32 %v1143, 1.442695
    %v1147 = vpow.pop %v1146
    %v1148 = vmul.f32 %v1138, %v1145
    %v1149 = vmul.f32 %v1139, %v1147
    %v1150 = vsub.f32 1.0, %v1148
    %v1151 = vsub.f32 1.0, %v1149
    %v1152 = vmul.f32 %v1084, %v1150
    %v1153 = vmul.f32 %v1085, %v1151
    %v1154 = vadd.f32 %v1152, 1.0
    %v1155 = vadd.f32 %v1153, 1.0
    %v1156 = vmul.f32 %v1078, %v1154
    %v1157 = vmul.f32 %v1079, %v1155
    %v1158 = vld [vmem:[#allocation2 + $0xa8] sm:$0xff]
    %v1159 = vld [vmem:[#allocation2 + $0xb0] sm:$0xff]
    %v1160 = vld [vmem:[#allocation2 + $0xb8] sm:$0xff]
    %v1161 = vld [vmem:[#allocation2 + $0xc0] sm:$0xff]
    %v1162 = vld [vmem:[#allocation2 + $0xc8] sm:$0xff]
    %v1163 = vld [vmem:[#allocation2 + $0xd0] sm:$0xff]
    %v1164 = vld [vmem:[#allocation2 + $0xd8] sm:$0xff]
    %v1165 = vld [vmem:[#allocation2 + $0xe0] sm:$0xff]
    %v1166 = vld [vmem:[#allocation2 + $0xe8] sm:$0x1]
    %v1167 = vperm.slane %v1166, 0
    %vm1168 = vcmask 523264
    %v1170 = vsel %vm1168, %v1156, 0
    %v1173 = vsel %vm1168, %v1157, 0
    %1175 = vmatpush.msra.mxu0 0.0
    %1176 = vmatpush.msra.mxu0 0.0
    %1177 = vmatpush.msra.mxu0 0.0
    %1178 = vmatpush.msra.mxu0 0.0
    %1179 = vmatpush.msra.mxu0 0.0
    %1180 = vmatpush.msra.mxu0 0.0
    %1181 = vmatpush.msra.mxu0 0.0
    %1182 = vmatpush.msra.mxu0 0.0
    %1183 = vmatpush.msra.mxu0 %v1165
    %1184 = vmatpush.msra.mxu0 %v1164
    %1185 = vmatpush.msra.mxu0 %v1163
    %1186 = vmatpush.msra.mxu0 %v1162
    %1187 = vmatpush.msra.mxu0 %v1161
    %1188 = vmatpush.msra.mxu0 %v1160
    %1189 = vmatpush.msra.mxu0 %v1159
    %1190 = vmatpush.msra.mxu0 %v1158
    %1191 = vmatmul.f32.gmra.mxu0 %v1170
    %v1192 = vpop.f32.mrf.mxu0
    %v1193 = vadd.f32 %v1167, %v1192
    %1194 = vmatmul.f32.gmra.mxu0 %v1173
    %v1195 = vpop.f32.mrf.mxu0
    %v1196 = vadd.f32 %v1167, %v1195
    %1197 = vdwg.mxu0
    %v1198 = vadd.f32 %v1041, %v1193
    %v1199 = vadd.f32 %v1042, %v1196
    %v1200 = vld [vmem:[#allocation2 + $0xf0] sm:$0x1]
    %v1201 = vld [vmem:[#allocation2 + $0xf8] sm:$0x1]
    %v1202 = vsel %vm397, %v1198, 0.0
    %1203 = vadd.xlane.f32.xlu0 %v1202
    %v1204 = vpop.xlane.xlu0 %1203
    %v1205 = vsel %vm988, %v1199, 0.0
    %1206 = vadd.xlane.f32.xlu0 %v1205
    %v1207 = vpop.xlane.xlu0 %1206
    %v1208 = vmul.f32 %v1204, %v998
    %v1209 = vmul.f32 %v1207, %v998
    %v1210 = vsub.f32 %v1198, %v1208
    %v1211 = vsub.f32 %v1199, %v1209
    %v1212 = vmul.f32 %v1210, %v1210
    %v1213 = vmul.f32 %v1211, %v1211
    %v1214 = vsel %vm397, %v1212, 0.0
    %1215 = vadd.xlane.f32.xlu0 %v1214
    %v1216 = vpop.xlane.xlu0 %1215
    %v1217 = vsel %vm988, %v1213, 0.0
    %1218 = vadd.xlane.f32.xlu0 %v1217
    %v1219 = vpop.xlane.xlu0 %1218
    %v1220 = vmul.f32 %v1216, %v998
    %v1221 = vmul.f32 %v1219, %v998
    %v1222 = vadd.f32 %v1220, 1e-05
    %v1223 = vadd.f32 %v1221, 1e-05
    %v1224 = vrsqrt.pop %v1222
    %v1225 = vmul.f32 %v1224, %v1222
    %v1226 = vmul.f32 %v1225, %v1224
    %v1227 = vmul.f32 0.5, %v1226
    %v1228 = vsub.f32 1.5, %v1227
    %v1229 = vmul.f32 %v1224, %v1228
    %vm1230 = vweird.f32 %v1222
    %vm1231 = vweird.f32 %v1224
    %vm1232 = vmor %vm1230, %vm1231
    %v1233 = vsel %vm1232, %v1224, %v1229
    %v1234 = vrsqrt.pop %v1223
    %v1235 = vmul.f32 %v1234, %v1223
    %v1236 = vmul.f32 %v1235, %v1234
    %v1237 = vmul.f32 0.5, %v1236
    %v1238 = vsub.f32 1.5, %v1237
    %v1239 = vmul.f32 %v1234, %v1238
    %vm1240 = vweird.f32 %v1223
    %vm1241 = vweird.f32 %v1234
    %vm1242 = vmor %vm1240, %vm1241
    %v1243 = vsel %vm1242, %v1234, %v1239
    %v1244 = vmul.f32 %v1210, %v1233
    %v1245 = vmul.f32 %v1211, %v1243
    %v1246 = vperm.slane %v1200, 0
    %v1247 = vmul.f32 %v1244, %v1246
    %v1248 = vmul.f32 %v1245, %v1246
    %v1249 = vperm.slane %v1201, 0
    %v1250 = vadd.f32 %v1247, %v1249
    %v1251 = vadd.f32 %v1248, %v1249
    %v1253 = vsel %vm397, %v384, 0
    %v1256 = vsel %vm397, %v385, 0
    %1258 = vmatpush.msra.mxu0 0.0
    %1259 = vmatpush.msra.mxu0 0.0
    %1260 = vmatpush.msra.mxu0 0.0
    %1261 = vmatpush.msra.mxu0 0.0
    %1262 = vmatpush.msra.mxu0 0.0
    %1263 = vmatpush.msra.mxu0 0.0
    %1264 = vmatpush.msra.mxu0 0.0
    %1265 = vmatpush.msra.mxu0 0.0
    %1266 = vmatpush.msra.mxu0 0.0
    %1267 = vmatpush.msra.mxu0 0.0
    %1268 = vmatpush.msra.mxu0 0.0
    %1269 = vmatpush.msra.mxu0 0.0
    %1270 = vmatpush.msra.mxu0 %v389
    %1271 = vmatpush.msra.mxu0 %v388
    %1272 = vmatpush.msra.mxu0 %v387
    %1273 = vmatpush.msra.mxu0 %v386
    %1274 = vmatmul.f32.gmra.mxu0 %v1253
    %v1275 = vpop.f32.mrf.mxu0
    %v1276 = vadd.f32 %v396, %v1275
    %1277 = vmatmul.f32.gmra.mxu0 %v1256
    %v1278 = vpop.f32.mrf.mxu0
    %v1279 = vadd.f32 %v396, %v1278
    %1280 = vdwg.mxu0
    %1283 = vrot.lane.b32.xlu0 %v1276, 96
    %v1284 = vpop.permute.xlu0 %1283
    %1285 = vrot.lane.b32.xlu0 %v1279, 96
    %v1286 = vpop.permute.xlu0 %1285
    %v1287 = vsel %vm433, %v1276, 0
    %v1289 = vsel %vm433, %v1279, 0
    %v1291 = vsel %vm433, %v1284, 0
    %v1293 = vsel %vm433, %v1286, 0
    %1295 = vmatpush.xpose.msra.mxu0 0.0
    %1296 = vmatpush.xpose.msra.mxu0 0.0
    %1297 = vmatpush.xpose.msra.mxu0 0.0
    %1298 = vmatpush.xpose.msra.mxu0 0.0
    %1299 = vmatpush.xpose.msra.mxu0 0.0
    %1300 = vmatpush.xpose.msra.mxu0 0.0
    %1301 = vmatpush.xpose.msra.mxu0 0.0
    %1302 = vmatpush.xpose.msra.mxu0 0.0
    %1303 = vmatpush.xpose.msra.mxu0 0.0
    %1304 = vmatpush.xpose.msra.mxu0 0.0
    %1305 = vmatpush.xpose.msra.mxu0 0.0
    %1306 = vmatpush.xpose.msra.mxu0 0.0
    %1307 = vmatpush.xpose.msra.mxu0 0.0
    %1308 = vmatpush.xpose.msra.mxu0 0.0
    %1309 = vmatpush.xpose.msra.mxu0 %v1293
    %1310 = vmatpush.xpose.msra.mxu0 %v1291
    %1311 = vmatmul.f32.gmra.mxu0 %v1287
    %v1312 = vpop.f32.mrf.mxu0
    %v1313 = vadd.f32 0.0, %v1312
    %1314 = vmatmul.f32.gmra.mxu0 %v1289
    %v1315 = vpop.f32.mrf.mxu0
    %v1316 = vadd.f32 0.0, %v1315
    %1317 = vdwg.mxu0
    %v1318 = vsel %vm57, %v1313, -inf
    %1319 = vmax.xlane.f32.xlu0 %v1318
    %v1320 = vpop.xlane.xlu0 %1319
    %v1321 = vsel %vm468, %v1316, -inf
    %1322 = vmax.xlane.f32.xlu0 %v1321
    %v1323 = vpop.xlane.xlu0 %1322
    %v1324 = vsub.f32 %v1313, %v1320
    %v1325 = vsub.f32 %v1316, %v1323
    %v1326 = vmul.f32 %v1324, 1.442695
    %v1327 = vpow.pop %v1326
    %v1328 = vmul.f32 %v1325, 1.442695
    %v1329 = vpow.pop %v1328
    %v1330 = vsel %vm57, %v1327, 0.0
    %1331 = vadd.xlane.f32.xlu0 %v1330
    %v1332 = vpop.xlane.xlu0 %1331
    %v1333 = vsel %vm468, %v1329, 0.0
    %1334 = vadd.xlane.f32.xlu0 %v1333
    %v1335 = vpop.xlane.xlu0 %1334
    %v1336 = vrcp.pop %v1332
    %v1337 = vmul.f32 %v1332, %v1336
    %v1338 = vsub.f32 1.0, %v1337
    %v1339 = vmul.f32 %v1336, %v1338
    %v1340 = vadd.f32 %v1336, %v1339
    %vm1341 = vweird.f32 %v1332
    %vm1342 = vweird.f32 %v1336
    %vm1343 = vmor %vm1341, %vm1342
    %v1344 = vsel %vm1343, %v1336, %v1340
    %v1345 = vand.u32 2147483647, %v1332
    %vm1346 = vcmp.eq.f32.partialorder %v1345, 8.507059e+37
    %v1347 = vand.u32 %v1332, 2147483648
    %v1348 = vor.u32 1.1754944e-38, %v1347
    %v1349 = vsel %vm1346, %v1348, %v1344
    %v1350 = vmul.f32 %v1327, %v1349
    %v1351 = vrcp.pop %v1335
    %v1352 = vmul.f32 %v1335, %v1351
    %v1353 = vsub.f32 1.0, %v1352
    %v1354 = vmul.f32 %v1351, %v1353
    %v1355 = vadd.f32 %v1351, %v1354
    %vm1356 = vweird.f32 %v1335
    %vm1357 = vweird.f32 %v1351
    %vm1358 = vmor %vm1356, %vm1357
    %v1359 = vsel %vm1358, %v1351, %v1355
    %v1360 = vand.u32 2147483647, %v1335
    %vm1361 = vcmp.eq.f32.partialorder %v1360, 8.507059e+37
    %v1362 = vand.u32 %v1335, 2147483648
    %v1363 = vor.u32 1.1754944e-38, %v1362
    %v1364 = vsel %vm1361, %v1363, %v1359
    %v1365 = vmul.f32 %v1329, %v1364
    %1366 = vrot.lane.b32.xlu0 %v1276, 64
    %v1367 = vpop.permute.xlu0 %1366
    %1368 = vrot.lane.b32.xlu0 %v1279, 64
    %v1369 = vpop.permute.xlu0 %1368
    %v1372 = vsel %vm57, %v1350, 0
    %v1375 = vsel %vm57, %v1365, 0
    %v1377 = vsel %vm64, %v1369, 0
    %1379 = vmatpush.msra.mxu0 0.0
    %1380 = vmatpush.msra.mxu0 0.0
    %1381 = vmatpush.msra.mxu0 0.0
    %1382 = vmatpush.msra.mxu0 0.0
    %1383 = vmatpush.msra.mxu0 0.0
    %1384 = vmatpush.msra.mxu0 0.0
    %1385 = vmatpush.msra.mxu0 0.0
    %1386 = vmatpush.msra.mxu0 0.0
    %1387 = vmatpush.msra.mxu0 0.0
    %1388 = vmatpush.msra.mxu0 0.0
    %1389 = vmatpush.msra.mxu0 0.0
    %1390 = vmatpush.msra.mxu0 0.0
    %1391 = vmatpush.msra.mxu0 0.0
    %1392 = vmatpush.msra.mxu0 0.0
    %1393 = vmatpush.msra.mxu0 %v1377
    %1394 = vmatpush.msra.mxu0 %v1367
    %1395 = vmatmul.f32.gmra.mxu0 %v1372
    %v1396 = vpop.f32.mrf.mxu0
    %v1397 = vadd.f32 0.0, %v1396
    %1398 = vmatmul.f32.gmra.mxu0 %v1375
    %v1399 = vpop.f32.mrf.mxu0
    %v1400 = vadd.f32 0.0, %v1399
    %1401 = vdwg.mxu0
    %1402 = vrot.lane.b32.xlu0 %v1276, 120
    %v1403 = vpop.permute.xlu0 %1402
    %1404 = vrot.lane.b32.xlu0 %v1279, 120
    %v1405 = vpop.permute.xlu0 %1404
    %1406 = vrot.lane.b32.xlu0 %v1276, 88
    %v1407 = vpop.permute.xlu0 %1406
    %1408 = vrot.lane.b32.xlu0 %v1279, 88
    %v1409 = vpop.permute.xlu0 %1408
    %v1410 = vsel %vm433, %v1403, 0
    %v1412 = vsel %vm433, %v1405, 0
    %v1414 = vsel %vm433, %v1407, 0
    %v1416 = vsel %vm433, %v1409, 0
    %1418 = vmatpush.xpose.msra.mxu0 0.0
    %1419 = vmatpush.xpose.msra.mxu0 0.0
    %1420 = vmatpush.xpose.msra.mxu0 0.0
    %1421 = vmatpush.xpose.msra.mxu0 0.0
    %1422 = vmatpush.xpose.msra.mxu0 0.0
    %1423 = vmatpush.xpose.msra.mxu0 0.0
    %1424 = vmatpush.xpose.msra.mxu0 0.0
    %1425 = vmatpush.xpose.msra.mxu0 0.0
    %1426 = vmatpush.xpose.msra.mxu0 0.0
    %1427 = vmatpush.xpose.msra.mxu0 0.0
    %1428 = vmatpush.xpose.msra.mxu0 0.0
    %1429 = vmatpush.xpose.msra.mxu0 0.0
    %1430 = vmatpush.xpose.msra.mxu0 0.0
    %1431 = vmatpush.xpose.msra.mxu0 0.0
    %1432 = vmatpush.xpose.msra.mxu0 %v1416
    %1433 = vmatpush.xpose.msra.mxu0 %v1414
    %1434 = vmatmul.f32.gmra.mxu0 %v1410
    %v1435 = vpop.f32.mrf.mxu0
    %v1436 = vadd.f32 0.0, %v1435
    %1437 = vmatmul.f32.gmra.mxu0 %v1412
    %v1438 = vpop.f32.mrf.mxu0
    %v1439 = vadd.f32 0.0, %v1438
    %1440 = vdwg.mxu0
    %v1441 = vsel %vm57, %v1436, -inf
    %1442 = vmax.xlane.f32.xlu0 %v1441
    %v1443 = vpop.xlane.xlu0 %1442
    %v1444 = vsel %vm468, %v1439, -inf
    %1445 = vmax.xlane.f32.xlu0 %v1444
    %v1446 = vpop.xlane.xlu0 %1445
    %v1447 = vsub.f32 %v1436, %v1443
    %v1448 = vsub.f32 %v1439, %v1446
    %v1449 = vmul.f32 %v1447, 1.442695
    %v1450 = vpow.pop %v1449
    %v1451 = vmul.f32 %v1448, 1.442695
    %v1452 = vpow.pop %v1451
    %v1453 = vsel %vm57, %v1450, 0.0
    %1454 = vadd.xlane.f32.xlu0 %v1453
    %v1455 = vpop.xlane.xlu0 %1454
    %v1456 = vsel %vm468, %v1452, 0.0
    %1457 = vadd.xlane.f32.xlu0 %v1456
    %v1458 = vpop.xlane.xlu0 %1457
    %v1459 = vrcp.pop %v1455
    %v1460 = vmul.f32 %v1455, %v1459
    %v1461 = vsub.f32 1.0, %v1460
    %v1462 = vmul.f32 %v1459, %v1461
    %v1463 = vadd.f32 %v1459, %v1462
    %vm1464 = vweird.f32 %v1455
    %vm1465 = vweird.f32 %v1459
    %vm1466 = vmor %vm1464, %vm1465
    %v1467 = vsel %vm1466, %v1459, %v1463
    %v1468 = vand.u32 2147483647, %v1455
    %vm1469 = vcmp.eq.f32.partialorder %v1468, 8.507059e+37
    %v1470 = vand.u32 %v1455, 2147483648
    %v1471 = vor.u32 1.1754944e-38, %v1470
    %v1472 = vsel %vm1469, %v1471, %v1467
    %v1473 = vmul.f32 %v1450, %v1472
    %v1474 = vrcp.pop %v1458
    %v1475 = vmul.f32 %v1458, %v1474
    %v1476 = vsub.f32 1.0, %v1475
    %v1477 = vmul.f32 %v1474, %v1476
    %v1478 = vadd.f32 %v1474, %v1477
    %vm1479 = vweird.f32 %v1458
    %vm1480 = vweird.f32 %v1474
    %vm1481 = vmor %vm1479, %vm1480
    %v1482 = vsel %vm1481, %v1474, %v1478
    %v1483 = vand.u32 2147483647, %v1458
    %vm1484 = vcmp.eq.f32.partialorder %v1483, 8.507059e+37
    %v1485 = vand.u32 %v1458, 2147483648
    %v1486 = vor.u32 1.1754944e-38, %v1485
    %v1487 = vsel %vm1484, %v1486, %v1482
    %v1488 = vmul.f32 %v1452, %v1487
    %1489 = vrot.lane.b32.xlu0 %v1276, 56
    %v1490 = vpop.permute.xlu0 %1489
    %1491 = vrot.lane.b32.xlu0 %v1279, 56
    %v1492 = vpop.permute.xlu0 %1491
    %v1495 = vsel %vm57, %v1473, 0
    %v1498 = vsel %vm57, %v1488, 0
    %v1500 = vsel %vm64, %v1492, 0
    %1502 = vmatpush.msra.mxu0 0.0
    %1503 = vmatpush.msra.mxu0 0.0
    %1504 = vmatpush.msra.mxu0 0.0
    %1505 = vmatpush.msra.mxu0 0.0
    %1506 = vmatpush.msra.mxu0 0.0
    %1507 = vmatpush.msra.mxu0 0.0
    %1508 = vmatpush.msra.mxu0 0.0
    %1509 = vmatpush.msra.mxu0 0.0
    %1510 = vmatpush.msra.mxu0 0.0
    %1511 = vmatpush.msra.mxu0 0.0
    %1512 = vmatpush.msra.mxu0 0.0
    %1513 = vmatpush.msra.mxu0 0.0
    %1514 = vmatpush.msra.mxu0 0.0
    %1515 = vmatpush.msra.mxu0 0.0
    %1516 = vmatpush.msra.mxu0 %v1500
    %1517 = vmatpush.msra.mxu0 %v1490
    %1518 = vmatmul.f32.gmra.mxu0 %v1495
    %v1519 = vpop.f32.mrf.mxu0
    %v1520 = vadd.f32 0.0, %v1519
    %1521 = vmatmul.f32.gmra.mxu0 %v1498
    %v1522 = vpop.f32.mrf.mxu0
    %v1523 = vadd.f32 0.0, %v1522
    %1524 = vdwg.mxu0
    %1525 = vrot.lane.b32.xlu0 %v1276, 112
    %v1526 = vpop.permute.xlu0 %1525
    %1527 = vrot.lane.b32.xlu0 %v1279, 112
    %v1528 = vpop.permute.xlu0 %1527
    %1529 = vrot.lane.b32.xlu0 %v1276, 80
    %v1530 = vpop.permute.xlu0 %1529
    %1531 = vrot.lane.b32.xlu0 %v1279, 80
    %v1532 = vpop.permute.xlu0 %1531
    %v1533 = vsel %vm433, %v1526, 0
    %v1535 = vsel %vm433, %v1528, 0
    %v1537 = vsel %vm433, %v1530, 0
    %v1539 = vsel %vm433, %v1532, 0
    %1541 = vmatpush.xpose.msra.mxu0 0.0
    %1542 = vmatpush.xpose.msra.mxu0 0.0
    %1543 = vmatpush.xpose.msra.mxu0 0.0
    %1544 = vmatpush.xpose.msra.mxu0 0.0
    %1545 = vmatpush.xpose.msra.mxu0 0.0
    %1546 = vmatpush.xpose.msra.mxu0 0.0
    %1547 = vmatpush.xpose.msra.mxu0 0.0
    %1548 = vmatpush.xpose.msra.mxu0 0.0
    %1549 = vmatpush.xpose.msra.mxu0 0.0
    %1550 = vmatpush.xpose.msra.mxu0 0.0
    %1551 = vmatpush.xpose.msra.mxu0 0.0
    %1552 = vmatpush.xpose.msra.mxu0 0.0
    %1553 = vmatpush.xpose.msra.mxu0 0.0
    %1554 = vmatpush.xpose.msra.mxu0 0.0
    %1555 = vmatpush.xpose.msra.mxu0 %v1539
    %1556 = vmatpush.xpose.msra.mxu0 %v1537
    %1557 = vmatmul.f32.gmra.mxu0 %v1533
    %v1558 = vpop.f32.mrf.mxu0
    %v1559 = vadd.f32 0.0, %v1558
    %1560 = vmatmul.f32.gmra.mxu0 %v1535
    %v1561 = vpop.f32.mrf.mxu0
    %v1562 = vadd.f32 0.0, %v1561
    %1563 = vdwg.mxu0
    %v1564 = vsel %vm57, %v1559, -inf
    %1565 = vmax.xlane.f32.xlu0 %v1564
    %v1566 = vpop.xlane.xlu0 %1565
    %v1567 = vsel %vm468, %v1562, -inf
    %1568 = vmax.xlane.f32.xlu0 %v1567
    %v1569 = vpop.xlane.xlu0 %1568
    %v1570 = vsub.f32 %v1559, %v1566
    %v1571 = vsub.f32 %v1562, %v1569
    %v1572 = vmul.f32 %v1570, 1.442695
    %v1573 = vpow.pop %v1572
    %v1574 = vmul.f32 %v1571, 1.442695
    %v1575 = vpow.pop %v1574
    %v1576 = vsel %vm57, %v1573, 0.0
    %1577 = vadd.xlane.f32.xlu0 %v1576
    %v1578 = vpop.xlane.xlu0 %1577
    %v1579 = vsel %vm468, %v1575, 0.0
    %1580 = vadd.xlane.f32.xlu0 %v1579
    %v1581 = vpop.xlane.xlu0 %1580
    %v1582 = vrcp.pop %v1578
    %v1583 = vmul.f32 %v1578, %v1582
    %v1584 = vsub.f32 1.0, %v1583
    %v1585 = vmul.f32 %v1582, %v1584
    %v1586 = vadd.f32 %v1582, %v1585
    %vm1587 = vweird.f32 %v1578
    %vm1588 = vweird.f32 %v1582
    %vm1589 = vmor %vm1587, %vm1588
    %v1590 = vsel %vm1589, %v1582, %v1586
    %v1591 = vand.u32 2147483647, %v1578
    %vm1592 = vcmp.eq.f32.partialorder %v1591, 8.507059e+37
    %v1593 = vand.u32 %v1578, 2147483648
    %v1594 = vor.u32 1.1754944e-38, %v1593
    %v1595 = vsel %vm1592, %v1594, %v1590
    %v1596 = vmul.f32 %v1573, %v1595
    %v1597 = vrcp.pop %v1581
    %v1598 = vmul.f32 %v1581, %v1597
    %v1599 = vsub.f32 1.0, %v1598
    %v1600 = vmul.f32 %v1597, %v1599
    %v1601 = vadd.f32 %v1597, %v1600
    %vm1602 = vweird.f32 %v1581
    %vm1603 = vweird.f32 %v1597
    %vm1604 = vmor %vm1602, %vm1603
    %v1605 = vsel %vm1604, %v1597, %v1601
    %v1606 = vand.u32 2147483647, %v1581
    %vm1607 = vcmp.eq.f32.partialorder %v1606, 8.507059e+37
    %v1608 = vand.u32 %v1581, 2147483648
    %v1609 = vor.u32 1.1754944e-38, %v1608
    %v1610 = vsel %vm1607, %v1609, %v1605
    %v1611 = vmul.f32 %v1575, %v1610
    %1612 = vrot.lane.b32.xlu0 %v1276, 48
    %v1613 = vpop.permute.xlu0 %1612
    %1614 = vrot.lane.b32.xlu0 %v1279, 48
    %v1615 = vpop.permute.xlu0 %1614
    %v1618 = vsel %vm57, %v1596, 0
    %v1621 = vsel %vm57, %v1611, 0
    %v1623 = vsel %vm64, %v1615, 0
    %1625 = vmatpush.msra.mxu0 0.0
    %1626 = vmatpush.msra.mxu0 0.0
    %1627 = vmatpush.msra.mxu0 0.0
    %1628 = vmatpush.msra.mxu0 0.0
    %1629 = vmatpush.msra.mxu0 0.0
    %1630 = vmatpush.msra.mxu0 0.0
    %1631 = vmatpush.msra.mxu0 0.0
    %1632 = vmatpush.msra.mxu0 0.0
    %1633 = vmatpush.msra.mxu0 0.0
    %1634 = vmatpush.msra.mxu0 0.0
    %1635 = vmatpush.msra.mxu0 0.0
    %1636 = vmatpush.msra.mxu0 0.0
    %1637 = vmatpush.msra.mxu0 0.0
    %1638 = vmatpush.msra.mxu0 0.0
    %1639 = vmatpush.msra.mxu0 %v1623
    %1640 = vmatpush.msra.mxu0 %v1613
    %1641 = vmatmul.f32.gmra.mxu0 %v1618
    %v1642 = vpop.f32.mrf.mxu0
    %v1643 = vadd.f32 0.0, %v1642
    %1644 = vmatmul.f32.gmra.mxu0 %v1621
    %v1645 = vpop.f32.mrf.mxu0
    %v1646 = vadd.f32 0.0, %v1645
    %1647 = vdwg.mxu0
    %1648 = vrot.lane.b32.xlu0 %v1276, 104
    %v1649 = vpop.permute.xlu0 %1648
    %1650 = vrot.lane.b32.xlu0 %v1279, 104
    %v1651 = vpop.permute.xlu0 %1650
    %1652 = vrot.lane.b32.xlu0 %v1276, 72
    %v1653 = vpop.permute.xlu0 %1652
    %1654 = vrot.lane.b32.xlu0 %v1279, 72
    %v1655 = vpop.permute.xlu0 %1654
    %v1656 = vsel %vm433, %v1649, 0
    %v1658 = vsel %vm433, %v1651, 0
    %v1660 = vsel %vm433, %v1653, 0
    %v1662 = vsel %vm433, %v1655, 0
    %1664 = vmatpush.xpose.msra.mxu0 0.0
    %1665 = vmatpush.xpose.msra.mxu0 0.0
    %1666 = vmatpush.xpose.msra.mxu0 0.0
    %1667 = vmatpush.xpose.msra.mxu0 0.0
    %1668 = vmatpush.xpose.msra.mxu0 0.0
    %1669 = vmatpush.xpose.msra.mxu0 0.0
    %1670 = vmatpush.xpose.msra.mxu0 0.0
    %1671 = vmatpush.xpose.msra.mxu0 0.0
    %1672 = vmatpush.xpose.msra.mxu0 0.0
    %1673 = vmatpush.xpose.msra.mxu0 0.0
    %1674 = vmatpush.xpose.msra.mxu0 0.0
    %1675 = vmatpush.xpose.msra.mxu0 0.0
    %1676 = vmatpush.xpose.msra.mxu0 0.0
    %1677 = vmatpush.xpose.msra.mxu0 0.0
    %1678 = vmatpush.xpose.msra.mxu0 %v1662
    %1679 = vmatpush.xpose.msra.mxu0 %v1660
    %1680 = vmatmul.f32.gmra.mxu0 %v1656
    %v1681 = vpop.f32.mrf.mxu0
    %v1682 = vadd.f32 0.0, %v1681
    %1683 = vmatmul.f32.gmra.mxu0 %v1658
    %v1684 = vpop.f32.mrf.mxu0
    %v1685 = vadd.f32 0.0, %v1684
    %1686 = vdwg.mxu0
    %v1687 = vsel %vm57, %v1682, -inf
    %1688 = vmax.xlane.f32.xlu0 %v1687
    %v1689 = vpop.xlane.xlu0 %1688
    %v1690 = vsel %vm468, %v1685, -inf
    %1691 = vmax.xlane.f32.xlu0 %v1690
    %v1692 = vpop.xlane.xlu0 %1691
    %v1693 = vsub.f32 %v1682, %v1689
    %v1694 = vsub.f32 %v1685, %v1692
    %v1695 = vmul.f32 %v1693, 1.442695
    %v1696 = vpow.pop %v1695
    %v1697 = vmul.f32 %v1694, 1.442695
    %v1698 = vpow.pop %v1697
    %v1699 = vsel %vm57, %v1696, 0.0
    %1700 = vadd.xlane.f32.xlu0 %v1699
    %v1701 = vpop.xlane.xlu0 %1700
    %v1702 = vsel %vm468, %v1698, 0.0
    %1703 = vadd.xlane.f32.xlu0 %v1702
    %v1704 = vpop.xlane.xlu0 %1703
    %v1705 = vrcp.pop %v1701
    %v1706 = vmul.f32 %v1701, %v1705
    %v1707 = vsub.f32 1.0, %v1706
    %v1708 = vmul.f32 %v1705, %v1707
    %v1709 = vadd.f32 %v1705, %v1708
    %vm1710 = vweird.f32 %v1701
    %vm1711 = vweird.f32 %v1705
    %vm1712 = vmor %vm1710, %vm1711
    %v1713 = vsel %vm1712, %v1705, %v1709
    %v1714 = vand.u32 2147483647, %v1701
    %vm1715 = vcmp.eq.f32.partialorder %v1714, 8.507059e+37
    %v1716 = vand.u32 %v1701, 2147483648
    %v1717 = vor.u32 1.1754944e-38, %v1716
    %v1718 = vsel %vm1715, %v1717, %v1713
    %v1719 = vmul.f32 %v1696, %v1718
    %v1720 = vrcp.pop %v1704
    %v1721 = vmul.f32 %v1704, %v1720
    %v1722 = vsub.f32 1.0, %v1721
    %v1723 = vmul.f32 %v1720, %v1722
    %v1724 = vadd.f32 %v1720, %v1723
    %vm1725 = vweird.f32 %v1704
    %vm1726 = vweird.f32 %v1720
    %vm1727 = vmor %vm1725, %vm1726
    %v1728 = vsel %vm1727, %v1720, %v1724
    %v1729 = vand.u32 2147483647, %v1704
    %vm1730 = vcmp.eq.f32.partialorder %v1729, 8.507059e+37
    %v1731 = vand.u32 %v1704, 2147483648
    %v1732 = vor.u32 1.1754944e-38, %v1731
    %v1733 = vsel %vm1730, %v1732, %v1728
    %v1734 = vmul.f32 %v1698, %v1733
    %1735 = vrot.lane.b32.xlu0 %v1276, 40
    %v1736 = vpop.permute.xlu0 %1735
    %1737 = vrot.lane.b32.xlu0 %v1279, 40
    %v1738 = vpop.permute.xlu0 %1737
    %v1741 = vsel %vm57, %v1719, 0
    %v1744 = vsel %vm57, %v1734, 0
    %v1746 = vsel %vm64, %v1738, 0
    %1748 = vmatpush.msra.mxu0 0.0
    %1749 = vmatpush.msra.mxu0 0.0
    %1750 = vmatpush.msra.mxu0 0.0
    %1751 = vmatpush.msra.mxu0 0.0
    %1752 = vmatpush.msra.mxu0 0.0
    %1753 = vmatpush.msra.mxu0 0.0
    %1754 = vmatpush.msra.mxu0 0.0
    %1755 = vmatpush.msra.mxu0 0.0
    %1756 = vmatpush.msra.mxu0 0.0
    %1757 = vmatpush.msra.mxu0 0.0
    %1758 = vmatpush.msra.mxu0 0.0
    %1759 = vmatpush.msra.mxu0 0.0
    %1760 = vmatpush.msra.mxu0 0.0
    %1761 = vmatpush.msra.mxu0 0.0
    %1762 = vmatpush.msra.mxu0 %v1746
    %1763 = vmatpush.msra.mxu0 %v1736
    %1764 = vmatmul.f32.gmra.mxu0 %v1741
    %v1765 = vpop.f32.mrf.mxu0
    %v1766 = vadd.f32 0.0, %v1765
    %1767 = vmatmul.f32.gmra.mxu0 %v1744
    %v1768 = vpop.f32.mrf.mxu0
    %v1769 = vadd.f32 0.0, %v1768
    %1770 = vdwg.mxu0
    %1773 = vrot.lane.b32.xlu0 %v1520, 8
    %v1774 = vpop.permute.xlu0 %1773
    %1775 = vrot.lane.b32.xlu0 %v1523, 8
    %v1776 = vpop.permute.xlu0 %1775
    %1781 = vrot.lane.b32.xlu0 %v1643, 16
    %v1782 = vpop.permute.xlu0 %1781
    %1783 = vrot.lane.b32.xlu0 %v1646, 16
    %v1784 = vpop.permute.xlu0 %1783
    %1789 = vrot.lane.b32.xlu0 %v1766, 24
    %v1790 = vpop.permute.xlu0 %1789
    %1791 = vrot.lane.b32.xlu0 %v1769, 24
    %v1792 = vpop.permute.xlu0 %1791
    %v1795 = vsel %vm433, %v1397, %v1774
    %v1796 = vsel %vm433, %v1400, %v1776
    %v1797 = vsel %vm945, %v1795, %v1782
    %v1798 = vsel %vm945, %v1796, %v1784
    %v1799 = vsel %vm948, %v1797, %v1790
    %v1800 = vsel %vm948, %v1798, %v1792
    %v1802 = vsel %vm397, %v1799, 0
    %v1805 = vsel %vm397, %v1800, 0
    %1807 = vmatpush.msra.mxu0 0.0
    %1808 = vmatpush.msra.mxu0 0.0
    %1809 = vmatpush.msra.mxu0 0.0
    %1810 = vmatpush.msra.mxu0 0.0
    %1811 = vmatpush.msra.mxu0 0.0
    %1812 = vmatpush.msra.mxu0 0.0
    %1813 = vmatpush.msra.mxu0 0.0
    %1814 = vmatpush.msra.mxu0 0.0
    %1815 = vmatpush.msra.mxu0 0.0
    %1816 = vmatpush.msra.mxu0 0.0
    %1817 = vmatpush.msra.mxu0 0.0
    %1818 = vmatpush.msra.mxu0 0.0
    %1819 = vmatpush.msra.mxu0 %v394
    %1820 = vmatpush.msra.mxu0 %v393
    %1821 = vmatpush.msra.mxu0 %v392
    %1822 = vmatpush.msra.mxu0 %v391
    %1823 = vmatmul.f32.gmra.mxu0 %v1802
    %v1824 = vpop.f32.mrf.mxu0
    %v1825 = vadd.f32 %v951, %v1824
    %1826 = vmatmul.f32.gmra.mxu0 %v1805
    %v1827 = vpop.f32.mrf.mxu0
    %v1828 = vadd.f32 %v951, %v1827
    %1829 = vdwg.mxu0
    %v1830 = vadd.f32 %v384, %v1825
    %v1831 = vadd.f32 %v385, %v1828
    %v1832 = vsel %vm397, %v1830, 0.0
    %1833 = vadd.xlane.f32.xlu0 %v1832
    %v1834 = vpop.xlane.xlu0 %1833
    %v1835 = vsel %vm988, %v1831, 0.0
    %1836 = vadd.xlane.f32.xlu0 %v1835
    %v1837 = vpop.xlane.xlu0 %1836
    %v1838 = vmul.f32 %v1834, %v998
    %v1839 = vmul.f32 %v1837, %v998
    %v1840 = vsub.f32 %v1830, %v1838
    %v1841 = vsub.f32 %v1831, %v1839
    %v1842 = vmul.f32 %v1840, %v1840
    %v1843 = vmul.f32 %v1841, %v1841
    %v1844 = vsel %vm397, %v1842, 0.0
    %1845 = vadd.xlane.f32.xlu0 %v1844
    %v1846 = vpop.xlane.xlu0 %1845
    %v1847 = vsel %vm988, %v1843, 0.0
    %1848 = vadd.xlane.f32.xlu0 %v1847
    %v1849 = vpop.xlane.xlu0 %1848
    %v1850 = vmul.f32 %v1846, %v998
    %v1851 = vmul.f32 %v1849, %v998
    %v1852 = vadd.f32 %v1850, 1e-05
    %v1853 = vadd.f32 %v1851, 1e-05
    %v1854 = vrsqrt.pop %v1852
    %v1855 = vmul.f32 %v1854, %v1852
    %v1856 = vmul.f32 %v1855, %v1854
    %v1857 = vmul.f32 0.5, %v1856
    %v1858 = vsub.f32 1.5, %v1857
    %v1859 = vmul.f32 %v1854, %v1858
    %vm1860 = vweird.f32 %v1852
    %vm1861 = vweird.f32 %v1854
    %vm1862 = vmor %vm1860, %vm1861
    %v1863 = vsel %vm1862, %v1854, %v1859
    %v1864 = vrsqrt.pop %v1853
    %v1865 = vmul.f32 %v1864, %v1853
    %v1866 = vmul.f32 %v1865, %v1864
    %v1867 = vmul.f32 0.5, %v1866
    %v1868 = vsub.f32 1.5, %v1867
    %v1869 = vmul.f32 %v1864, %v1868
    %vm1870 = vweird.f32 %v1853
    %vm1871 = vweird.f32 %v1864
    %vm1872 = vmor %vm1870, %vm1871
    %v1873 = vsel %vm1872, %v1864, %v1869
    %v1874 = vmul.f32 %v1840, %v1863
    %v1875 = vmul.f32 %v1841, %v1873
    %v1876 = vmul.f32 %v1874, %v1037
    %v1877 = vmul.f32 %v1875, %v1037
    %v1878 = vadd.f32 %v1876, %v1040
    %v1879 = vadd.f32 %v1877, %v1040
    %v1881 = vsel %vm397, %v1878, 0
    %v1884 = vsel %vm397, %v1879, 0
    %1886 = vmatpush.msra.mxu0 0.0
    %1887 = vmatpush.msra.mxu0 0.0
    %1888 = vmatpush.msra.mxu0 0.0
    %1889 = vmatpush.msra.mxu0 0.0
    %1890 = vmatpush.msra.mxu0 0.0
    %1891 = vmatpush.msra.mxu0 0.0
    %1892 = vmatpush.msra.mxu0 0.0
    %1893 = vmatpush.msra.mxu0 0.0
    %1894 = vmatpush.msra.mxu0 0.0
    %1895 = vmatpush.msra.mxu0 0.0
    %1896 = vmatpush.msra.mxu0 0.0
    %1897 = vmatpush.msra.mxu0 0.0
    %1898 = vmatpush.msra.mxu0 %v1046
    %1899 = vmatpush.msra.mxu0 %v1045
    %1900 = vmatpush.msra.mxu0 %v1044
    %1901 = vmatpush.msra.mxu0 %v1043
    %1902 = vmatmul.f32.gmra.mxu0 %v1881
    %v1903 = vpop.f32.mrf.mxu0
    %v1904 = vadd.f32 %v1048, %v1903
    %1905 = vmatmul.f32.gmra.mxu0 %v1884
    %v1906 = vpop.f32.mrf.mxu0
    %v1907 = vadd.f32 %v1048, %v1906
    %1908 = vdwg.mxu0
    %v1909 = vmul.f32 %v1904, 0.5
    %v1910 = vmul.f32 %v1907, 0.5
    %v1911 = vmul.f32 %v1904, 0.70710677
    %v1912 = vmul.f32 %v1907, 0.70710677
    %vm1913 = vcmp.ge.f32.partialorder %v1911, 0.0
    %vm1914 = vcmp.ge.f32.partialorder %v1912, 0.0
    %v1915 = vsel %vm1913, 1.0, -1.0
    %v1916 = vsel %vm1914, 1.0, -1.0
    %v1917 = vand.u32 2147483647, %v1911
    %v1918 = vand.u32 2147483647, %v1912
    %v1919 = vmul.f32 %v1917, 0.3275911
    %v1920 = vmul.f32 %v1918, 0.3275911
    %v1921 = vadd.f32 %v1919, 1.0
    %v1922 = vadd.f32 %v1920, 1.0
    %v1923 = vrcp.pop %v1921
    %v1924 = vmul.f32 %v1921, %v1923
    %v1925 = vsub.f32 1.0, %v1924
    %v1926 = vmul.f32 %v1923, %v1925
    %v1927 = vadd.f32 %v1923, %v1926
    %vm1928 = vweird.f32 %v1921
    %vm1929 = vweird.f32 %v1923
    %vm1930 = vmor %vm1928, %vm1929
    %v1931 = vsel %vm1930, %v1923, %v1927
    %v1932 = vand.u32 2147483647, %v1921
    %vm1933 = vcmp.eq.f32.partialorder %v1932, 8.507059e+37
    %v1934 = vand.u32 %v1921, 2147483648
    %v1935 = vor.u32 1.1754944e-38, %v1934
    %v1936 = vsel %vm1933, %v1935, %v1931
    %v1937 = vmul.f32 1.0, %v1936
    %v1938 = vrcp.pop %v1922
    %v1939 = vmul.f32 %v1922, %v1938
    %v1940 = vsub.f32 1.0, %v1939
    %v1941 = vmul.f32 %v1938, %v1940
    %v1942 = vadd.f32 %v1938, %v1941
    %vm1943 = vweird.f32 %v1922
    %vm1944 = vweird.f32 %v1938
    %vm1945 = vmor %vm1943, %vm1944
    %v1946 = vsel %vm1945, %v1938, %v1942
    %v1947 = vand.u32 2147483647, %v1922
    %vm1948 = vcmp.eq.f32.partialorder %v1947, 8.507059e+37
    %v1949 = vand.u32 %v1922, 2147483648
    %v1950 = vor.u32 1.1754944e-38, %v1949
    %v1951 = vsel %vm1948, %v1950, %v1946
    %v1952 = vmul.f32 1.0, %v1951
    %v1953 = vmul.f32 %v1937, 1.0614054
    %v1954 = vmul.f32 %v1952, 1.0614054
    %v1955 = vadd.f32 %v1953, -1.4531521
    %v1956 = vadd.f32 %v1954, -1.4531521
    %v1957 = vmul.f32 %v1955, %v1937
    %v1958 = vmul.f32 %v1956, %v1952
    %v1959 = vadd.f32 %v1957, 1.4214138
    %v1960 = vadd.f32 %v1958, 1.4214138
    %v1961 = vmul.f32 %v1959, %v1937
    %v1962 = vmul.f32 %v1960, %v1952
    %v1963 = vadd.f32 %v1961, -0.28449672
    %v1964 = vadd.f32 %v1962, -0.28449672
    %v1965 = vmul.f32 %v1963, %v1937
    %v1966 = vmul.f32 %v1964, %v1952
    %v1967 = vadd.f32 %v1965, 0.2548296
    %v1968 = vadd.f32 %v1966, 0.2548296
    %v1969 = vmul.f32 %v1967, %v1937
    %v1970 = vmul.f32 %v1968, %v1952
    %v1971 = vsub.f32 0.0, %v1917
    %v1972 = vsub.f32 0.0, %v1918
    %v1973 = vmul.f32 %v1971, %v1917
    %v1974 = vmul.f32 %v1972, %v1918
    %v1975 = vmul.f32 %v1973, 1.442695
    %v1976 = vpow.pop %v1975
    %v1977 = vmul.f32 %v1974, 1.442695
    %v1978 = vpow.pop %v1977
    %v1979 = vmul.f32 %v1969, %v1976
    %v1980 = vmul.f32 %v1970, %v1978
    %v1981 = vsub.f32 1.0, %v1979
    %v1982 = vsub.f32 1.0, %v1980
    %v1983 = vmul.f32 %v1915, %v1981
    %v1984 = vmul.f32 %v1916, %v1982
    %v1985 = vadd.f32 %v1983, 1.0
    %v1986 = vadd.f32 %v1984, 1.0
    %v1987 = vmul.f32 %v1909, %v1985
    %v1988 = vmul.f32 %v1910, %v1986
    %v1990 = vsel %vm1168, %v1987, 0
    %v1993 = vsel %vm1168, %v1988, 0
    %1995 = vmatpush.msra.mxu0 0.0
    %1996 = vmatpush.msra.mxu0 0.0
    %1997 = vmatpush.msra.mxu0 0.0
    %1998 = vmatpush.msra.mxu0 0.0
    %1999 = vmatpush.msra.mxu0 0.0
    %2000 = vmatpush.msra.mxu0 0.0
    %2001 = vmatpush.msra.mxu0 0.0
    %2002 = vmatpush.msra.mxu0 0.0
    %2003 = vmatpush.msra.mxu0 %v1165
    %2004 = vmatpush.msra.mxu0 %v1164
    %2005 = vmatpush.msra.mxu0 %v1163
    %2006 = vmatpush.msra.mxu0 %v1162
    %2007 = vmatpush.msra.mxu0 %v1161
    %2008 = vmatpush.msra.mxu0 %v1160
    %2009 = vmatpush.msra.mxu0 %v1159
    %2010 = vmatpush.msra.mxu0 %v1158
    %2011 = vmatmul.f32.gmra.mxu0 %v1990
    %v2012 = vpop.f32.mrf.mxu0
    %v2013 = vadd.f32 %v1167, %v2012
    %2014 = vmatmul.f32.gmra.mxu0 %v1993
    %v2015 = vpop.f32.mrf.mxu0
    %v2016 = vadd.f32 %v1167, %v2015
    %2017 = vdwg.mxu0
    %v2018 = vadd.f32 %v1878, %v2013
    %v2019 = vadd.f32 %v1879, %v2016
    %v2020 = vsel %vm397, %v2018, 0.0
    %2021 = vadd.xlane.f32.xlu0 %v2020
    %v2022 = vpop.xlane.xlu0 %2021
    %v2023 = vsel %vm988, %v2019, 0.0
    %2024 = vadd.xlane.f32.xlu0 %v2023
    %v2025 = vpop.xlane.xlu0 %2024
    %v2026 = vmul.f32 %v2022, %v998
    %v2027 = vmul.f32 %v2025, %v998
    %v2028 = vsub.f32 %v2018, %v2026
    %v2029 = vsub.f32 %v2019, %v2027
    %v2030 = vmul.f32 %v2028, %v2028
    %v2031 = vmul.f32 %v2029, %v2029
    %v2032 = vsel %vm397, %v2030, 0.0
    %2033 = vadd.xlane.f32.xlu0 %v2032
    %v2034 = vpop.xlane.xlu0 %2033
    %v2035 = vsel %vm988, %v2031, 0.0
    %2036 = vadd.xlane.f32.xlu0 %v2035
    %v2037 = vpop.xlane.xlu0 %2036
    %v2038 = vmul.f32 %v2034, %v998
    %v2039 = vmul.f32 %v2037, %v998
    %v2040 = vadd.f32 %v2038, 1e-05
    %v2041 = vadd.f32 %v2039, 1e-05
    %v2042 = vrsqrt.pop %v2040
    %v2043 = vmul.f32 %v2042, %v2040
    %v2044 = vmul.f32 %v2043, %v2042
    %v2045 = vmul.f32 0.5, %v2044
    %v2046 = vsub.f32 1.5, %v2045
    %v2047 = vmul.f32 %v2042, %v2046
    %vm2048 = vweird.f32 %v2040
    %vm2049 = vweird.f32 %v2042
    %vm2050 = vmor %vm2048, %vm2049
    %v2051 = vsel %vm2050, %v2042, %v2047
    %v2052 = vrsqrt.pop %v2041
    %v2053 = vmul.f32 %v2052, %v2041
    %v2054 = vmul.f32 %v2053, %v2052
    %v2055 = vmul.f32 0.5, %v2054
    %v2056 = vsub.f32 1.5, %v2055
    %v2057 = vmul.f32 %v2052, %v2056
    %vm2058 = vweird.f32 %v2041
    %vm2059 = vweird.f32 %v2052
    %vm2060 = vmor %vm2058, %vm2059
    %v2061 = vsel %vm2060, %v2052, %v2057
    %v2062 = vmul.f32 %v2028, %v2051
    %v2063 = vmul.f32 %v2029, %v2061
    %v2064 = vmul.f32 %v2062, %v1246
    %v2065 = vmul.f32 %v2063, %v1246
    %v2066 = vadd.f32 %v2064, %v1249
    %v2067 = vadd.f32 %v2065, %v1249
    %v2068 = vld [vmem:[#allocation2 + $0x100] sm:$0xff]
    %v2069 = vld [vmem:[#allocation2 + $0x108] sm:$0xff]
    %v2070 = vld [vmem:[#allocation2 + $0x110] sm:$0xff]
    %v2071 = vld [vmem:[#allocation2 + $0x118] sm:$0xff]
    %v2072 = vld [vmem:[#allocation2 + $0x120] sm:$0xff]
    %v2073 = vld [vmem:[#allocation2 + $0x128] sm:$0xff]
    %v2074 = vld [vmem:[#allocation2 + $0x130] sm:$0xff]
    %v2075 = vld [vmem:[#allocation2 + $0x138] sm:$0xff]
    %v2076 = vld [vmem:[#allocation2 + $0x140] sm:$0xff]
    %v2077 = vld [vmem:[#allocation2 + $0x148] sm:$0xff]
    %v2078 = vld [vmem:[#allocation2 + $0x150] sm:$0xff]
    %v2079 = vld [vmem:[#allocation2 + $0x158] sm:$0xff]
    %v2080 = vld [vmem:[#allocation2 + $0x160] sm:$0x1]
    %v2082 = vsel %vm64, %v1251, 0
    %2084 = vmatpush.msra.mxu0 0.0
    %2085 = vmatpush.msra.mxu0 0.0
    %2086 = vmatpush.msra.mxu0 0.0
    %2087 = vmatpush.msra.mxu0 0.0
    %2088 = vmatpush.msra.mxu0 0.0
    %2089 = vmatpush.msra.mxu0 0.0
    %2090 = vmatpush.msra.mxu0 0.0
    %2091 = vmatpush.msra.mxu0 0.0
    %2092 = vmatpush.msra.mxu0 0.0
    %2093 = vmatpush.msra.mxu0 0.0
    %2094 = vmatpush.msra.mxu0 0.0
    %2095 = vmatpush.msra.mxu0 0.0
    %2096 = vmatpush.msra.mxu0 0.0
    %2097 = vmatpush.msra.mxu0 0.0
    %2098 = vmatpush.msra.mxu0 %v2082
    %2099 = vmatpush.msra.mxu0 %v1250
    %2100 = vmatmul.f32.gmra.mxu0 %v59
    %v2101 = vpop.f32.mrf.mxu0
    %v2102 = vadd.f32 0.0, %v2101
    %2103 = vmatmul.f32.gmra.mxu0 %v62
    %v2104 = vpop.f32.mrf.mxu0
    %v2105 = vadd.f32 0.0, %v2104
    %2106 = vdwg.mxu0
    %2107 = vmatpush.msra.mxu0 0.0
    %2108 = vmatpush.msra.mxu0 0.0
    %2109 = vmatpush.msra.mxu0 0.0
    %2110 = vmatpush.msra.mxu0 0.0
    %2111 = vmatpush.msra.mxu0 0.0
    %2112 = vmatpush.msra.mxu0 0.0
    %2113 = vmatpush.msra.mxu0 0.0
    %2114 = vmatpush.msra.mxu0 0.0
    %2115 = vmatpush.msra.mxu0 0.0
    %2116 = vmatpush.msra.mxu0 0.0
    %2117 = vmatpush.msra.mxu0 0.0
    %2118 = vmatpush.msra.mxu0 0.0
    %2119 = vmatpush.msra.mxu0 0.0
    %2120 = vmatpush.msra.mxu0 0.0
    %2121 = vmatpush.msra.mxu0 %v2082
    %2122 = vmatpush.msra.mxu0 %v1250
    %2123 = vmatmul.f32.gmra.mxu0 %v106
    %v2124 = vpop.f32.mrf.mxu0
    %v2125 = vadd.f32 0.0, %v2124
    %2126 = vmatmul.f32.gmra.mxu0 %v109
    %v2127 = vpop.f32.mrf.mxu0
    %v2128 = vadd.f32 0.0, %v2127
    %2129 = vdwg.mxu0
    %v2131 = vsel %vm397, %v1250, 0
    %v2133 = vsel %vm397, %v1251, 0
    %2135 = vmatpush.msra.mxu0 0.0
    %2136 = vmatpush.msra.mxu0 0.0
    %2137 = vmatpush.msra.mxu0 0.0
    %2138 = vmatpush.msra.mxu0 0.0
    %2139 = vmatpush.msra.mxu0 0.0
    %2140 = vmatpush.msra.mxu0 0.0
    %2141 = vmatpush.msra.mxu0 0.0
    %2142 = vmatpush.msra.mxu0 0.0
    %2143 = vmatpush.msra.mxu0 0.0
    %2144 = vmatpush.msra.mxu0 0.0
    %2145 = vmatpush.msra.mxu0 0.0
    %2146 = vmatpush.msra.mxu0 0.0
    %2147 = vmatpush.msra.mxu0 %v2075
    %2148 = vmatpush.msra.mxu0 %v2074
    %2149 = vmatpush.msra.mxu0 %v2073
    %2150 = vmatpush.msra.mxu0 %v2072
    %2151 = vmatmul.f32.gmra.mxu0 %v2131
    %v2152 = vpop.f32.mrf.mxu0
    %v2153 = vadd.f32 0.0, %v2152
    %2154 = vmatmul.f32.gmra.mxu0 %v2133
    %v2155 = vpop.f32.mrf.mxu0
    %v2156 = vadd.f32 0.0, %v2155
    %2157 = vdwg.mxu0
    %v2159 = vsel %vm397, %v2102, 0
    %v2162 = vsel %vm397, %v2105, 0
    %2164 = vmatpush.msra.mxu0 0.0
    %2165 = vmatpush.msra.mxu0 0.0
    %2166 = vmatpush.msra.mxu0 0.0
    %2167 = vmatpush.msra.mxu0 0.0
    %2168 = vmatpush.msra.mxu0 0.0
    %2169 = vmatpush.msra.mxu0 0.0
    %2170 = vmatpush.msra.mxu0 0.0
    %2171 = vmatpush.msra.mxu0 0.0
    %2172 = vmatpush.msra.mxu0 0.0
    %2173 = vmatpush.msra.mxu0 0.0
    %2174 = vmatpush.msra.mxu0 0.0
    %2175 = vmatpush.msra.mxu0 0.0
    %2176 = vmatpush.msra.mxu0 %v2071
    %2177 = vmatpush.msra.mxu0 %v2070
    %2178 = vmatpush.msra.mxu0 %v2069
    %2179 = vmatpush.msra.mxu0 %v2068
    %2180 = vmatmul.f32.gmra.mxu0 %v2159
    %v2181 = vpop.f32.mrf.mxu0
    %v2182 = vadd.f32 %v2153, %v2181
    %2183 = vmatmul.f32.gmra.mxu0 %v2162
    %v2184 = vpop.f32.mrf.mxu0
    %v2185 = vadd.f32 %v2156, %v2184
    %2186 = vdwg.mxu0
    %v2188 = vsel %vm397, %v2125, 0
    %v2191 = vsel %vm397, %v2128, 0
    %2193 = vmatpush.msra.mxu0 0.0
    %2194 = vmatpush.msra.mxu0 0.0
    %2195 = vmatpush.msra.mxu0 0.0
    %2196 = vmatpush.msra.mxu0 0.0
    %2197 = vmatpush.msra.mxu0 0.0
    %2198 = vmatpush.msra.mxu0 0.0
    %2199 = vmatpush.msra.mxu0 0.0
    %2200 = vmatpush.msra.mxu0 0.0
    %2201 = vmatpush.msra.mxu0 0.0
    %2202 = vmatpush.msra.mxu0 0.0
    %2203 = vmatpush.msra.mxu0 0.0
    %2204 = vmatpush.msra.mxu0 0.0
    %2205 = vmatpush.msra.mxu0 %v2079
    %2206 = vmatpush.msra.mxu0 %v2078
    %2207 = vmatpush.msra.mxu0 %v2077
    %2208 = vmatpush.msra.mxu0 %v2076
    %2209 = vmatmul.f32.gmra.mxu0 %v2188
    %v2210 = vpop.f32.mrf.mxu0
    %v2211 = vadd.f32 0.0, %v2210
    %2212 = vmatmul.f32.gmra.mxu0 %v2191
    %v2213 = vpop.f32.mrf.mxu0
    %v2214 = vadd.f32 0.0, %v2213
    %2215 = vdwg.mxu0
    %v2216 = vadd.f32 %v2182, %v2211
    %v2217 = vadd.f32 %v2185, %v2214
    %v2218 = vperm.slane %v2080, 0
    %v2219 = vadd.f32 %v2216, %v2218
    %v2220 = vadd.f32 %v2217, %v2218
    %v2222 = vsel %vm64, %v2067, 0
    %2224 = vmatpush.msra.mxu0 0.0
    %2225 = vmatpush.msra.mxu0 0.0
    %2226 = vmatpush.msra.mxu0 0.0
    %2227 = vmatpush.msra.mxu0 0.0
    %2228 = vmatpush.msra.mxu0 0.0
    %2229 = vmatpush.msra.mxu0 0.0
    %2230 = vmatpush.msra.mxu0 0.0
    %2231 = vmatpush.msra.mxu0 0.0
    %2232 = vmatpush.msra.mxu0 0.0
    %2233 = vmatpush.msra.mxu0 0.0
    %2234 = vmatpush.msra.mxu0 0.0
    %2235 = vmatpush.msra.mxu0 0.0
    %2236 = vmatpush.msra.mxu0 0.0
    %2237 = vmatpush.msra.mxu0 0.0
    %2238 = vmatpush.msra.mxu0 %v2222
    %2239 = vmatpush.msra.mxu0 %v2066
    %2240 = vmatmul.f32.gmra.mxu0 %v59
    %v2241 = vpop.f32.mrf.mxu0
    %v2242 = vadd.f32 0.0, %v2241
    %2243 = vmatmul.f32.gmra.mxu0 %v62
    %v2244 = vpop.f32.mrf.mxu0
    %v2245 = vadd.f32 0.0, %v2244
    %2246 = vdwg.mxu0
    %2247 = vmatpush.msra.mxu0 0.0
    %2248 = vmatpush.msra.mxu0 0.0
    %2249 = vmatpush.msra.mxu0 0.0
    %2250 = vmatpush.msra.mxu0 0.0
    %2251 = vmatpush.msra.mxu0 0.0
    %2252 = vmatpush.msra.mxu0 0.0
    %2253 = vmatpush.msra.mxu0 0.0
    %2254 = vmatpush.msra.mxu0 0.0
    %2255 = vmatpush.msra.mxu0 0.0
    %2256 = vmatpush.msra.mxu0 0.0
    %2257 = vmatpush.msra.mxu0 0.0
    %2258 = vmatpush.msra.mxu0 0.0
    %2259 = vmatpush.msra.mxu0 0.0
    %2260 = vmatpush.msra.mxu0 0.0
    %2261 = vmatpush.msra.mxu0 %v2222
    %2262 = vmatpush.msra.mxu0 %v2066
    %2263 = vmatmul.f32.gmra.mxu0 %v106
    %v2264 = vpop.f32.mrf.mxu0
    %v2265 = vadd.f32 0.0, %v2264
    %2266 = vmatmul.f32.gmra.mxu0 %v109
    %v2267 = vpop.f32.mrf.mxu0
    %v2268 = vadd.f32 0.0, %v2267
    %2269 = vdwg.mxu0
    %v2271 = vsel %vm397, %v2066, 0
    %v2273 = vsel %vm397, %v2067, 0
    %2275 = vmatpush.msra.mxu0 0.0
    %2276 = vmatpush.msra.mxu0 0.0
    %2277 = vmatpush.msra.mxu0 0.0
    %2278 = vmatpush.msra.mxu0 0.0
    %2279 = vmatpush.msra.mxu0 0.0
    %2280 = vmatpush.msra.mxu0 0.0
    %2281 = vmatpush.msra.mxu0 0.0
    %2282 = vmatpush.msra.mxu0 0.0
    %2283 = vmatpush.msra.mxu0 0.0
    %2284 = vmatpush.msra.mxu0 0.0
    %2285 = vmatpush.msra.mxu0 0.0
    %2286 = vmatpush.msra.mxu0 0.0
    %2287 = vmatpush.msra.mxu0 %v2075
    %2288 = vmatpush.msra.mxu0 %v2074
    %2289 = vmatpush.msra.mxu0 %v2073
    %2290 = vmatpush.msra.mxu0 %v2072
    %2291 = vmatmul.f32.gmra.mxu0 %v2271
    %v2292 = vpop.f32.mrf.mxu0
    %v2293 = vadd.f32 0.0, %v2292
    %2294 = vmatmul.f32.gmra.mxu0 %v2273
    %v2295 = vpop.f32.mrf.mxu0
    %v2296 = vadd.f32 0.0, %v2295
    %2297 = vdwg.mxu0
    %v2299 = vsel %vm397, %v2242, 0
    %v2302 = vsel %vm397, %v2245, 0
    %2304 = vmatpush.msra.mxu0 0.0
    %2305 = vmatpush.msra.mxu0 0.0
    %2306 = vmatpush.msra.mxu0 0.0
    %2307 = vmatpush.msra.mxu0 0.0
    %2308 = vmatpush.msra.mxu0 0.0
    %2309 = vmatpush.msra.mxu0 0.0
    %2310 = vmatpush.msra.mxu0 0.0
    %2311 = vmatpush.msra.mxu0 0.0
    %2312 = vmatpush.msra.mxu0 0.0
    %2313 = vmatpush.msra.mxu0 0.0
    %2314 = vmatpush.msra.mxu0 0.0
    %2315 = vmatpush.msra.mxu0 0.0
    %2316 = vmatpush.msra.mxu0 %v2071
    %2317 = vmatpush.msra.mxu0 %v2070
    %2318 = vmatpush.msra.mxu0 %v2069
    %2319 = vmatpush.msra.mxu0 %v2068
    %2320 = vmatmul.f32.gmra.mxu0 %v2299
    %v2321 = vpop.f32.mrf.mxu0
    %v2322 = vadd.f32 %v2293, %v2321
    %2323 = vmatmul.f32.gmra.mxu0 %v2302
    %v2324 = vpop.f32.mrf.mxu0
    %v2325 = vadd.f32 %v2296, %v2324
    %2326 = vdwg.mxu0
    %v2328 = vsel %vm397, %v2265, 0
    %v2331 = vsel %vm397, %v2268, 0
    %2333 = vmatpush.msra.mxu0 0.0
    %2334 = vmatpush.msra.mxu0 0.0
    %2335 = vmatpush.msra.mxu0 0.0
    %2336 = vmatpush.msra.mxu0 0.0
    %2337 = vmatpush.msra.mxu0 0.0
    %2338 = vmatpush.msra.mxu0 0.0
    %2339 = vmatpush.msra.mxu0 0.0
    %2340 = vmatpush.msra.mxu0 0.0
    %2341 = vmatpush.msra.mxu0 0.0
    %2342 = vmatpush.msra.mxu0 0.0
    %2343 = vmatpush.msra.mxu0 0.0
    %2344 = vmatpush.msra.mxu0 0.0
    %2345 = vmatpush.msra.mxu0 %v2079
    %2346 = vmatpush.msra.mxu0 %v2078
    %2347 = vmatpush.msra.mxu0 %v2077
    %2348 = vmatpush.msra.mxu0 %v2076
    %2349 = vmatmul.f32.gmra.mxu0 %v2328
    %v2350 = vpop.f32.mrf.mxu0
    %v2351 = vadd.f32 0.0, %v2350
    %2352 = vmatmul.f32.gmra.mxu0 %v2331
    %v2353 = vpop.f32.mrf.mxu0
    %v2354 = vadd.f32 0.0, %v2353
    %2355 = vdwg.mxu0
    %v2356 = vadd.f32 %v2322, %v2351
    %v2357 = vadd.f32 %v2325, %v2354
    %v2358 = vadd.f32 %v2356, %v2218
    %v2359 = vadd.f32 %v2357, %v2218
    %v2360 = vsel %vm397, %v2219, 0.0
    %v2361 = vsel %vm988, %v2220, 0.0
    %v2362 = vadd.f32 %v2360, %v2361
    %v2363 = vrot.slane %v2362, 4
    %v2364 = vadd.f32 %v2362, %v2363
    %v2365 = vrot.slane %v2364, 2
    %v2366 = vadd.f32 %v2364, %v2365
    %v2367 = vrot.slane %v2366, 1
    %v2368 = vadd.f32 %v2366, %v2367
    %v2369 = vadd.f32 %v2368, 0.0
    %v2370 = vsel %vm397, %v2358, 0.0
    %v2371 = vsel %vm988, %v2359, 0.0
    %v2372 = vadd.f32 %v2370, %v2371
    %v2373 = vrot.slane %v2372, 4
    %v2374 = vadd.f32 %v2372, %v2373
    %v2375 = vrot.slane %v2374, 2
    %v2376 = vadd.f32 %v2374, %v2375
    %v2377 = vrot.slane %v2376, 1
    %v2378 = vadd.f32 %v2376, %v2377
    %v2379 = vadd.f32 %v2369, %v2378
    %v2380 = vrcp.pop 24.0
    %v2381 = vmul.f32 24.0, %v2380
    %v2382 = vsub.f32 1.0, %v2381
    %v2383 = vmul.f32 %v2380, %v2382
    %v2384 = vadd.f32 %v2380, %v2383
    %vm2385 = vweird.f32 %v2380
    %v2386 = vsel %vm2385, %v2380, %v2384
    %v2387 = vmul.f32 %v2379, %v2386
    %v2388 = vsub.f32 %v2219, %v2387
    %v2389 = vsub.f32 %v2220, %v2387
    %v2390 = vmul.f32 %v2388, %v2388
    %v2391 = vmul.f32 %v2389, %v2389
    %v2392 = vsel %vm397, %v2390, 0.0
    %v2393 = vsel %vm988, %v2391, 0.0
    %v2394 = vadd.f32 %v2392, %v2393
    %v2395 = vrot.slane %v2394, 4
    %v2396 = vadd.f32 %v2394, %v2395
    %v2397 = vrot.slane %v2396, 2
    %v2398 = vadd.f32 %v2396, %v2397
    %v2399 = vrot.slane %v2398, 1
    %v2400 = vadd.f32 %v2398, %v2399
    %v2401 = vadd.f32 %v2400, 0.0
    %v2402 = vsub.f32 %v2358, %v2387
    %v2403 = vsub.f32 %v2359, %v2387
    %v2404 = vmul.f32 %v2402, %v2402
    %v2405 = vmul.f32 %v2403, %v2403
    %v2406 = vsel %vm397, %v2404, 0.0
    %v2407 = vsel %vm988, %v2405, 0.0
    %v2408 = vadd.f32 %v2406, %v2407
    %v2409 = vrot.slane %v2408, 4
    %v2410 = vadd.f32 %v2408, %v2409
    %v2411 = vrot.slane %v2410, 2
    %v2412 = vadd.f32 %v2410, %v2411
    %v2413 = vrot.slane %v2412, 1
    %v2414 = vadd.f32 %v2412, %v2413
    %v2415 = vadd.f32 %v2401, %v2414
    %v2416 = vmul.f32 %v2415, %v2386
    %v2417 = vadd.f32 %v2416, 1e-05
    %v2418 = vrsqrt.pop %v2417
    %v2419 = vmul.f32 %v2418, %v2417
    %v2420 = vmul.f32 %v2419, %v2418
    %v2421 = vmul.f32 0.5, %v2420
    %v2422 = vsub.f32 1.5, %v2421
    %v2423 = vmul.f32 %v2418, %v2422
    %vm2424 = vweird.f32 %v2417
    %vm2425 = vweird.f32 %v2418
    %vm2426 = vmor %vm2424, %vm2425
    %v2427 = vsel %vm2426, %v2418, %v2423
    %v2428 = vld [vmem:[#allocation2 + $0x168] sm:$0x1]
    %v2429 = vmul.f32 %v2427, %v2428
    %v2430 = vld [vmem:[#allocation2 + $0x170] sm:$0x1]
    %v2431 = vperm.slane %v2429, 0
    %v2432 = vmul.f32 %v2388, %v2431
    %v2433 = vmul.f32 %v2389, %v2431
    %v2434 = vperm.slane %v2430, 0
    %v2435 = vadd.f32 %v2432, %v2434
    %v2436 = vadd.f32 %v2433, %v2434
    %vm2437 = vcmp.gt.f32.partialorder %v2435, 0.0
    %vm2438 = vcmp.gt.f32.partialorder %v2436, 0.0
    %v2439 = vmin.f32 %v2435, 0.0
    %v2440 = vmin.f32 %v2436, 0.0
    %v2441 = vmul.f32 %v2439, 1.442695
    %v2442 = vpow.pop %v2441
    %v2443 = vmul.f32 %v2440, 1.442695
    %v2444 = vpow.pop %v2443
    %v2445 = vsub.f32 %v2442, 1.0
    %v2446 = vsub.f32 %v2444, 1.0
    %v2447 = vsel %vm2437, %v2435, %v2445
    %v2448 = vsel %vm2438, %v2436, %v2446
    %v2449 = vmul.u32 %v37, 2
    %v2450 = vadd.s32 %v2449, 4294967295
    %vm2451 = vcmp.eq.s32.totalorder %v40, %v2450
    %v2452 = vsel %vm2451, 1.0, 0.0
    %v2454 = vsel %vm57, %v2452, 0
    %v2457 = vsel %vm64, %v2448, 0
    %2459 = vmatpush.msra.mxu0 0.0
    %2460 = vmatpush.msra.mxu0 0.0
    %2461 = vmatpush.msra.mxu0 0.0
    %2462 = vmatpush.msra.mxu0 0.0
    %2463 = vmatpush.msra.mxu0 0.0
    %2464 = vmatpush.msra.mxu0 0.0
    %2465 = vmatpush.msra.mxu0 0.0
    %2466 = vmatpush.msra.mxu0 0.0
    %2467 = vmatpush.msra.mxu0 0.0
    %2468 = vmatpush.msra.mxu0 0.0
    %2469 = vmatpush.msra.mxu0 0.0
    %2470 = vmatpush.msra.mxu0 0.0
    %2471 = vmatpush.msra.mxu0 0.0
    %2472 = vmatpush.msra.mxu0 0.0
    %2473 = vmatpush.msra.mxu0 %v2457
    %2474 = vmatpush.msra.mxu0 %v2447
    %2475 = vmatmul.f32.gmra.mxu0 %v2454
    %v2476 = vpop.f32.mrf.mxu0
    %v2477 = vadd.f32 0.0, %v2476
    %2478 = vdwg.mxu0
    %vm2479 = vcmp.ge.s32.totalorder %v2450, 0
    %vm2480 = vcmp.lt.s32.totalorder %v2450, 12
    %vm2481 = vmand %vm2479, %vm2480
    %v2482 = vsel %vm2481, %v2477, -3e+38
    %vm2483 = vcmp.eq.s32.totalorder %v40, %v2449
    %v2484 = vsel %vm2483, 1.0, 0.0
    %v2486 = vsel %vm57, %v2484, 0
    %2488 = vmatpush.msra.mxu0 0.0
    %2489 = vmatpush.msra.mxu0 0.0
    %2490 = vmatpush.msra.mxu0 0.0
    %2491 = vmatpush.msra.mxu0 0.0
    %2492 = vmatpush.msra.mxu0 0.0
    %2493 = vmatpush.msra.mxu0 0.0
    %2494 = vmatpush.msra.mxu0 0.0
    %2495 = vmatpush.msra.mxu0 0.0
    %2496 = vmatpush.msra.mxu0 0.0
    %2497 = vmatpush.msra.mxu0 0.0
    %2498 = vmatpush.msra.mxu0 0.0
    %2499 = vmatpush.msra.mxu0 0.0
    %2500 = vmatpush.msra.mxu0 0.0
    %2501 = vmatpush.msra.mxu0 0.0
    %2502 = vmatpush.msra.mxu0 %v2457
    %2503 = vmatpush.msra.mxu0 %v2447
    %2504 = vmatmul.f32.gmra.mxu0 %v2486
    %v2505 = vpop.f32.mrf.mxu0
    %v2506 = vadd.f32 0.0, %v2505
    %2507 = vdwg.mxu0
    %vm2508 = vcmp.ge.s32.totalorder %v2449, 0
    %vm2509 = vcmp.lt.s32.totalorder %v2449, 12
    %vm2510 = vmand %vm2508, %vm2509
    %v2511 = vsel %vm2510, %v2506, -3e+38
    %v2512 = vmax.f32 %v2482, %v2511
    %v2513 = vadd.s32 %v2449, 1
    %vm2514 = vcmp.eq.s32.totalorder %v40, %v2513
    %v2515 = vsel %vm2514, 1.0, 0.0
    %v2517 = vsel %vm57, %v2515, 0
    %2519 = vmatpush.msra.mxu0 0.0
    %2520 = vmatpush.msra.mxu0 0.0
    %2521 = vmatpush.msra.mxu0 0.0
    %2522 = vmatpush.msra.mxu0 0.0
    %2523 = vmatpush.msra.mxu0 0.0
    %2524 = vmatpush.msra.mxu0 0.0
    %2525 = vmatpush.msra.mxu0 0.0
    %2526 = vmatpush.msra.mxu0 0.0
    %2527 = vmatpush.msra.mxu0 0.0
    %2528 = vmatpush.msra.mxu0 0.0
    %2529 = vmatpush.msra.mxu0 0.0
    %2530 = vmatpush.msra.mxu0 0.0
    %2531 = vmatpush.msra.mxu0 0.0
    %2532 = vmatpush.msra.mxu0 0.0
    %2533 = vmatpush.msra.mxu0 %v2457
    %2534 = vmatpush.msra.mxu0 %v2447
    %2535 = vmatmul.f32.gmra.mxu0 %v2517
    %v2536 = vpop.f32.mrf.mxu0
    %v2537 = vadd.f32 0.0, %v2536
    %2538 = vdwg.mxu0
    %vm2539 = vcmp.ge.s32.totalorder %v2513, 0
    %vm2540 = vcmp.lt.s32.totalorder %v2513, 12
    %vm2541 = vmand %vm2539, %vm2540
    %v2542 = vsel %vm2541, %v2537, -3e+38
    %v2543 = vmax.f32 %v2512, %v2542
    %v2544 = vmul.f32 %v2402, %v2431
    %v2545 = vmul.f32 %v2403, %v2431
    %v2546 = vadd.f32 %v2544, %v2434
    %v2547 = vadd.f32 %v2545, %v2434
    %vm2548 = vcmp.gt.f32.partialorder %v2546, 0.0
    %vm2549 = vcmp.gt.f32.partialorder %v2547, 0.0
    %v2550 = vmin.f32 %v2546, 0.0
    %v2551 = vmin.f32 %v2547, 0.0
    %v2552 = vmul.f32 %v2550, 1.442695
    %v2553 = vpow.pop %v2552
    %v2554 = vmul.f32 %v2551, 1.442695
    %v2555 = vpow.pop %v2554
    %v2556 = vsub.f32 %v2553, 1.0
    %v2557 = vsub.f32 %v2555, 1.0
    %v2558 = vsel %vm2548, %v2546, %v2556
    %v2559 = vsel %vm2549, %v2547, %v2557
    %v2561 = vsel %vm64, %v2559, 0
    %2563 = vmatpush.msra.mxu0 0.0
    %2564 = vmatpush.msra.mxu0 0.0
    %2565 = vmatpush.msra.mxu0 0.0
    %2566 = vmatpush.msra.mxu0 0.0
    %2567 = vmatpush.msra.mxu0 0.0
    %2568 = vmatpush.msra.mxu0 0.0
    %2569 = vmatpush.msra.mxu0 0.0
    %2570 = vmatpush.msra.mxu0 0.0
    %2571 = vmatpush.msra.mxu0 0.0
    %2572 = vmatpush.msra.mxu0 0.0
    %2573 = vmatpush.msra.mxu0 0.0
    %2574 = vmatpush.msra.mxu0 0.0
    %2575 = vmatpush.msra.mxu0 0.0
    %2576 = vmatpush.msra.mxu0 0.0
    %2577 = vmatpush.msra.mxu0 %v2561
    %2578 = vmatpush.msra.mxu0 %v2558
    %2579 = vmatmul.f32.gmra.mxu0 %v2454
    %v2580 = vpop.f32.mrf.mxu0
    %v2581 = vadd.f32 0.0, %v2580
    %2582 = vdwg.mxu0
    %v2583 = vsel %vm2481, %v2581, -3e+38
    %2584 = vmatpush.msra.mxu0 0.0
    %2585 = vmatpush.msra.mxu0 0.0
    %2586 = vmatpush.msra.mxu0 0.0
    %2587 = vmatpush.msra.mxu0 0.0
    %2588 = vmatpush.msra.mxu0 0.0
    %2589 = vmatpush.msra.mxu0 0.0
    %2590 = vmatpush.msra.mxu0 0.0
    %2591 = vmatpush.msra.mxu0 0.0
    %2592 = vmatpush.msra.mxu0 0.0
    %2593 = vmatpush.msra.mxu0 0.0
    %2594 = vmatpush.msra.mxu0 0.0
    %2595 = vmatpush.msra.mxu0 0.0
    %2596 = vmatpush.msra.mxu0 0.0
    %2597 = vmatpush.msra.mxu0 0.0
    %2598 = vmatpush.msra.mxu0 %v2561
    %2599 = vmatpush.msra.mxu0 %v2558
    %2600 = vmatmul.f32.gmra.mxu0 %v2486
    %v2601 = vpop.f32.mrf.mxu0
    %v2602 = vadd.f32 0.0, %v2601
    %2603 = vdwg.mxu0
    %v2604 = vsel %vm2510, %v2602, -3e+38
    %v2605 = vmax.f32 %v2583, %v2604
    %2606 = vmatpush.msra.mxu0 0.0
    %2607 = vmatpush.msra.mxu0 0.0
    %2608 = vmatpush.msra.mxu0 0.0
    %2609 = vmatpush.msra.mxu0 0.0
    %2610 = vmatpush.msra.mxu0 0.0
    %2611 = vmatpush.msra.mxu0 0.0
    %2612 = vmatpush.msra.mxu0 0.0
    %2613 = vmatpush.msra.mxu0 0.0
    %2614 = vmatpush.msra.mxu0 0.0
    %2615 = vmatpush.msra.mxu0 0.0
    %2616 = vmatpush.msra.mxu0 0.0
    %2617 = vmatpush.msra.mxu0 0.0
    %2618 = vmatpush.msra.mxu0 0.0
    %2619 = vmatpush.msra.mxu0 0.0
    %2620 = vmatpush.msra.mxu0 %v2561
    %2621 = vmatpush.msra.mxu0 %v2558
    %2622 = vmatmul.f32.gmra.mxu0 %v2517
    %v2623 = vpop.f32.mrf.mxu0
    %v2624 = vadd.f32 0.0, %v2623
    %2625 = vdwg.mxu0
    %v2626 = vsel %vm2541, %v2624, -3e+38
    %v2627 = vmax.f32 %v2605, %v2626
    %v2628 = vld [vmem:[#allocation2 + $0x178] sm:$0xff]
    %v2629 = vld [vmem:[#allocation2 + $0x180] sm:$0xff]
    %v2630 = vld [vmem:[#allocation2 + $0x188] sm:$0xff]
    %v2631 = vld [vmem:[#allocation2 + $0x190] sm:$0xff]
    %v2632 = vld [vmem:[#allocation2 + $0x198] sm:$0x1]
    %v2633 = vld [vmem:[#allocation2 + $0x1a0] sm:$0xff]
    %v2634 = vld [vmem:[#allocation2 + $0x1a8] sm:$0xff]
    %v2635 = vld [vmem:[#allocation2 + $0x1b0] sm:$0xff]
    %v2636 = vld [vmem:[#allocation2 + $0x1b8] sm:$0xff]
    %v2637 = vld [vmem:[#allocation2 + $0x1c0] sm:$0x1]
    %v2638 = vperm.slane %v2632, 0
    %v2640 = vsel %vm397, %v2543, 0
    %2642 = vmatpush.msra.mxu0 0.0
    %2643 = vmatpush.msra.mxu0 0.0
    %2644 = vmatpush.msra.mxu0 0.0
    %2645 = vmatpush.msra.mxu0 0.0
    %2646 = vmatpush.msra.mxu0 0.0
    %2647 = vmatpush.msra.mxu0 0.0
    %2648 = vmatpush.msra.mxu0 0.0
    %2649 = vmatpush.msra.mxu0 0.0
    %2650 = vmatpush.msra.mxu0 0.0
    %2651 = vmatpush.msra.mxu0 0.0
    %2652 = vmatpush.msra.mxu0 0.0
    %2653 = vmatpush.msra.mxu0 0.0
    %2654 = vmatpush.msra.mxu0 %v2631
    %2655 = vmatpush.msra.mxu0 %v2630
    %2656 = vmatpush.msra.mxu0 %v2629
    %2657 = vmatpush.msra.mxu0 %v2628
    %2658 = vmatmul.f32.gmra.mxu0 %v2640
    %v2659 = vpop.f32.mrf.mxu0
    %v2660 = vadd.f32 %v2638, %v2659
    %2661 = vdwg.mxu0
    %2663 = vrot.lane.b32.xlu0 %v2660, 96
    %v2664 = vpop.permute.xlu0 %2663
    %v2665 = vsel %vm433, %v2660, 0
    %v2667 = vsel %vm433, %v2664, 0
    %2669 = vmatpush.xpose.msra.mxu0 0.0
    %2670 = vmatpush.xpose.msra.mxu0 0.0
    %2671 = vmatpush.xpose.msra.mxu0 0.0
    %2672 = vmatpush.xpose.msra.mxu0 0.0
    %2673 = vmatpush.xpose.msra.mxu0 0.0
    %2674 = vmatpush.xpose.msra.mxu0 0.0
    %2675 = vmatpush.xpose.msra.mxu0 0.0
    %2676 = vmatpush.xpose.msra.mxu0 0.0
    %2677 = vmatpush.xpose.msra.mxu0 0.0
    %2678 = vmatpush.xpose.msra.mxu0 0.0
    %2679 = vmatpush.xpose.msra.mxu0 0.0
    %2680 = vmatpush.xpose.msra.mxu0 0.0
    %2681 = vmatpush.xpose.msra.mxu0 0.0
    %2682 = vmatpush.xpose.msra.mxu0 0.0
    %2683 = vmatpush.xpose.msra.mxu0 0.0
    %2684 = vmatpush.xpose.msra.mxu0 %v2667
    %2685 = vmatmul.f32.gmra.mxu0 %v2665
    %v2686 = vpop.f32.mrf.mxu0
    %v2687 = vadd.f32 0.0, %v2686
    %2688 = vdwg.mxu0
    %vm2689 = vcmask 46080
    %v2690 = vsel %vm2689, %v2687, -inf
    %2691 = vmax.xlane.f32.xlu0 %v2690
    %v2692 = vpop.xlane.xlu0 %2691
    %v2693 = vsub.f32 %v2687, %v2692
    %v2694 = vmul.f32 %v2693, 1.442695
    %v2695 = vpow.pop %v2694
    %v2696 = vsel %vm2689, %v2695, 0.0
    %2697 = vadd.xlane.f32.xlu0 %v2696
    %v2698 = vpop.xlane.xlu0 %2697
    %v2699 = vrcp.pop %v2698
    %v2700 = vmul.f32 %v2698, %v2699
    %v2701 = vsub.f32 1.0, %v2700
    %v2702 = vmul.f32 %v2699, %v2701
    %v2703 = vadd.f32 %v2699, %v2702
    %vm2704 = vweird.f32 %v2698
    %vm2705 = vweird.f32 %v2699
    %vm2706 = vmor %vm2704, %vm2705
    %v2707 = vsel %vm2706, %v2699, %v2703
    %v2708 = vand.u32 2147483647, %v2698
    %vm2709 = vcmp.eq.f32.partialorder %v2708, 8.507059e+37
    %v2710 = vand.u32 %v2698, 2147483648
    %v2711 = vor.u32 1.1754944e-38, %v2710
    %v2712 = vsel %vm2709, %v2711, %v2707
    %v2713 = vmul.f32 %v2695, %v2712
    %2714 = vrot.lane.b32.xlu0 %v2660, 64
    %v2715 = vpop.permute.xlu0 %2714
    %vm2716 = vcmask 48128
    %v2718 = vsel %vm2716, %v2713, 0
    %vm2720 = vcmask 1045504
    %v2721 = vsel %vm2720, %v2715, 0
    %2723 = vmatpush.msra.mxu0 0.0
    %2724 = vmatpush.msra.mxu0 0.0
    %2725 = vmatpush.msra.mxu0 0.0
    %2726 = vmatpush.msra.mxu0 0.0
    %2727 = vmatpush.msra.mxu0 0.0
    %2728 = vmatpush.msra.mxu0 0.0
    %2729 = vmatpush.msra.mxu0 0.0
    %2730 = vmatpush.msra.mxu0 0.0
    %2731 = vmatpush.msra.mxu0 0.0
    %2732 = vmatpush.msra.mxu0 0.0
    %2733 = vmatpush.msra.mxu0 0.0
    %2734 = vmatpush.msra.mxu0 0.0
    %2735 = vmatpush.msra.mxu0 0.0
    %2736 = vmatpush.msra.mxu0 0.0
    %2737 = vmatpush.msra.mxu0 0.0
    %2738 = vmatpush.msra.mxu0 %v2721
    %2739 = vmatmul.f32.gmra.mxu0 %v2718
    %v2740 = vpop.f32.mrf.mxu0
    %v2741 = vadd.f32 0.0, %v2740
    %2742 = vdwg.mxu0
    %2743 = vrot.lane.b32.xlu0 %v2660, 120
    %v2744 = vpop.permute.xlu0 %2743
    %2745 = vrot.lane.b32.xlu0 %v2660, 88
    %v2746 = vpop.permute.xlu0 %2745
    %v2747 = vsel %vm433, %v2744, 0
    %v2749 = vsel %vm433, %v2746, 0
    %2751 = vmatpush.xpose.msra.mxu0 0.0
    %2752 = vmatpush.xpose.msra.mxu0 0.0
    %2753 = vmatpush.xpose.msra.mxu0 0.0
    %2754 = vmatpush.xpose.msra.mxu0 0.0
    %2755 = vmatpush.xpose.msra.mxu0 0.0
    %2756 = vmatpush.xpose.msra.mxu0 0.0
    %2757 = vmatpush.xpose.msra.mxu0 0.0
    %2758 = vmatpush.xpose.msra.mxu0 0.0
    %2759 = vmatpush.xpose.msra.mxu0 0.0
    %2760 = vmatpush.xpose.msra.mxu0 0.0
    %2761 = vmatpush.xpose.msra.mxu0 0.0
    %2762 = vmatpush.xpose.msra.mxu0 0.0
    %2763 = vmatpush.xpose.msra.mxu0 0.0
    %2764 = vmatpush.xpose.msra.mxu0 0.0
    %2765 = vmatpush.xpose.msra.mxu0 0.0
    %2766 = vmatpush.xpose.msra.mxu0 %v2749
    %2767 = vmatmul.f32.gmra.mxu0 %v2747
    %v2768 = vpop.f32.mrf.mxu0
    %v2769 = vadd.f32 0.0, %v2768
    %2770 = vdwg.mxu0
    %v2771 = vsel %vm2689, %v2769, -inf
    %2772 = vmax.xlane.f32.xlu0 %v2771
    %v2773 = vpop.xlane.xlu0 %2772
    %v2774 = vsub.f32 %v2769, %v2773
    %v2775 = vmul.f32 %v2774, 1.442695
    %v2776 = vpow.pop %v2775
    %v2777 = vsel %vm2689, %v2776, 0.0
    %2778 = vadd.xlane.f32.xlu0 %v2777
    %v2779 = vpop.xlane.xlu0 %2778
    %v2780 = vrcp.pop %v2779
    %v2781 = vmul.f32 %v2779, %v2780
    %v2782 = vsub.f32 1.0, %v2781
    %v2783 = vmul.f32 %v2780, %v2782
    %v2784 = vadd.f32 %v2780, %v2783
    %vm2785 = vweird.f32 %v2779
    %vm2786 = vweird.f32 %v2780
    %vm2787 = vmor %vm2785, %vm2786
    %v2788 = vsel %vm2787, %v2780, %v2784
    %v2789 = vand.u32 2147483647, %v2779
    %vm2790 = vcmp.eq.f32.partialorder %v2789, 8.507059e+37
    %v2791 = vand.u32 %v2779, 2147483648
    %v2792 = vor.u32 1.1754944e-38, %v2791
    %v2793 = vsel %vm2790, %v2792, %v2788
    %v2794 = vmul.f32 %v2776, %v2793
    %2795 = vrot.lane.b32.xlu0 %v2660, 56
    %v2796 = vpop.permute.xlu0 %2795
    %v2798 = vsel %vm2716, %v2794, 0
    %v2800 = vsel %vm2720, %v2796, 0
    %2802 = vmatpush.msra.mxu0 0.0
    %2803 = vmatpush.msra.mxu0 0.0
    %2804 = vmatpush.msra.mxu0 0.0
    %2805 = vmatpush.msra.mxu0 0.0
    %2806 = vmatpush.msra.mxu0 0.0
    %2807 = vmatpush.msra.mxu0 0.0
    %2808 = vmatpush.msra.mxu0 0.0
    %2809 = vmatpush.msra.mxu0 0.0
    %2810 = vmatpush.msra.mxu0 0.0
    %2811 = vmatpush.msra.mxu0 0.0
    %2812 = vmatpush.msra.mxu0 0.0
    %2813 = vmatpush.msra.mxu0 0.0
    %2814 = vmatpush.msra.mxu0 0.0
    %2815 = vmatpush.msra.mxu0 0.0
    %2816 = vmatpush.msra.mxu0 0.0
    %2817 = vmatpush.msra.mxu0 %v2800
    %2818 = vmatmul.f32.gmra.mxu0 %v2798
    %v2819 = vpop.f32.mrf.mxu0
    %v2820 = vadd.f32 0.0, %v2819
    %2821 = vdwg.mxu0
    %2822 = vrot.lane.b32.xlu0 %v2660, 112
    %v2823 = vpop.permute.xlu0 %2822
    %2824 = vrot.lane.b32.xlu0 %v2660, 80
    %v2825 = vpop.permute.xlu0 %2824
    %v2826 = vsel %vm433, %v2823, 0
    %v2828 = vsel %vm433, %v2825, 0
    %2830 = vmatpush.xpose.msra.mxu0 0.0
    %2831 = vmatpush.xpose.msra.mxu0 0.0
    %2832 = vmatpush.xpose.msra.mxu0 0.0
    %2833 = vmatpush.xpose.msra.mxu0 0.0
    %2834 = vmatpush.xpose.msra.mxu0 0.0
    %2835 = vmatpush.xpose.msra.mxu0 0.0
    %2836 = vmatpush.xpose.msra.mxu0 0.0
    %2837 = vmatpush.xpose.msra.mxu0 0.0
    %2838 = vmatpush.xpose.msra.mxu0 0.0
    %2839 = vmatpush.xpose.msra.mxu0 0.0
    %2840 = vmatpush.xpose.msra.mxu0 0.0
    %2841 = vmatpush.xpose.msra.mxu0 0.0
    %2842 = vmatpush.xpose.msra.mxu0 0.0
    %2843 = vmatpush.xpose.msra.mxu0 0.0
    %2844 = vmatpush.xpose.msra.mxu0 0.0
    %2845 = vmatpush.xpose.msra.mxu0 %v2828
    %2846 = vmatmul.f32.gmra.mxu0 %v2826
    %v2847 = vpop.f32.mrf.mxu0
    %v2848 = vadd.f32 0.0, %v2847
    %2849 = vdwg.mxu0
    %v2850 = vsel %vm2689, %v2848, -inf
    %2851 = vmax.xlane.f32.xlu0 %v2850
    %v2852 = vpop.xlane.xlu0 %2851
    %v2853 = vsub.f32 %v2848, %v2852
    %v2854 = vmul.f32 %v2853, 1.442695
    %v2855 = vpow.pop %v2854
    %v2856 = vsel %vm2689, %v2855, 0.0
    %2857 = vadd.xlane.f32.xlu0 %v2856
    %v2858 = vpop.xlane.xlu0 %2857
    %v2859 = vrcp.pop %v2858
    %v2860 = vmul.f32 %v2858, %v2859
    %v2861 = vsub.f32 1.0, %v2860
    %v2862 = vmul.f32 %v2859, %v2861
    %v2863 = vadd.f32 %v2859, %v2862
    %vm2864 = vweird.f32 %v2858
    %vm2865 = vweird.f32 %v2859
    %vm2866 = vmor %vm2864, %vm2865
    %v2867 = vsel %vm2866, %v2859, %v2863
    %v2868 = vand.u32 2147483647, %v2858
    %vm2869 = vcmp.eq.f32.partialorder %v2868, 8.507059e+37
    %v2870 = vand.u32 %v2858, 2147483648
    %v2871 = vor.u32 1.1754944e-38, %v2870
    %v2872 = vsel %vm2869, %v2871, %v2867
    %v2873 = vmul.f32 %v2855, %v2872
    %2874 = vrot.lane.b32.xlu0 %v2660, 48
    %v2875 = vpop.permute.xlu0 %2874
    %v2877 = vsel %vm2716, %v2873, 0
    %v2879 = vsel %vm2720, %v2875, 0
    %2881 = vmatpush.msra.mxu0 0.0
    %2882 = vmatpush.msra.mxu0 0.0
    %2883 = vmatpush.msra.mxu0 0.0
    %2884 = vmatpush.msra.mxu0 0.0
    %2885 = vmatpush.msra.mxu0 0.0
    %2886 = vmatpush.msra.mxu0 0.0
    %2887 = vmatpush.msra.mxu0 0.0
    %2888 = vmatpush.msra.mxu0 0.0
    %2889 = vmatpush.msra.mxu0 0.0
    %2890 = vmatpush.msra.mxu0 0.0
    %2891 = vmatpush.msra.mxu0 0.0
    %2892 = vmatpush.msra.mxu0 0.0
    %2893 = vmatpush.msra.mxu0 0.0
    %2894 = vmatpush.msra.mxu0 0.0
    %2895 = vmatpush.msra.mxu0 0.0
    %2896 = vmatpush.msra.mxu0 %v2879
    %2897 = vmatmul.f32.gmra.mxu0 %v2877
    %v2898 = vpop.f32.mrf.mxu0
    %v2899 = vadd.f32 0.0, %v2898
    %2900 = vdwg.mxu0
    %2901 = vrot.lane.b32.xlu0 %v2660, 104
    %v2902 = vpop.permute.xlu0 %2901
    %2903 = vrot.lane.b32.xlu0 %v2660, 72
    %v2904 = vpop.permute.xlu0 %2903
    %v2905 = vsel %vm433, %v2902, 0
    %v2907 = vsel %vm433, %v2904, 0
    %2909 = vmatpush.xpose.msra.mxu0 0.0
    %2910 = vmatpush.xpose.msra.mxu0 0.0
    %2911 = vmatpush.xpose.msra.mxu0 0.0
    %2912 = vmatpush.xpose.msra.mxu0 0.0
    %2913 = vmatpush.xpose.msra.mxu0 0.0
    %2914 = vmatpush.xpose.msra.mxu0 0.0
    %2915 = vmatpush.xpose.msra.mxu0 0.0
    %2916 = vmatpush.xpose.msra.mxu0 0.0
    %2917 = vmatpush.xpose.msra.mxu0 0.0
    %2918 = vmatpush.xpose.msra.mxu0 0.0
    %2919 = vmatpush.xpose.msra.mxu0 0.0
    %2920 = vmatpush.xpose.msra.mxu0 0.0
    %2921 = vmatpush.xpose.msra.mxu0 0.0
    %2922 = vmatpush.xpose.msra.mxu0 0.0
    %2923 = vmatpush.xpose.msra.mxu0 0.0
    %2924 = vmatpush.xpose.msra.mxu0 %v2907
    %2925 = vmatmul.f32.gmra.mxu0 %v2905
    %v2926 = vpop.f32.mrf.mxu0
    %v2927 = vadd.f32 0.0, %v2926
    %2928 = vdwg.mxu0
    %v2929 = vsel %vm2689, %v2927, -inf
    %2930 = vmax.xlane.f32.xlu0 %v2929
    %v2931 = vpop.xlane.xlu0 %2930
    %v2932 = vsub.f32 %v2927, %v2931
    %v2933 = vmul.f32 %v2932, 1.442695
    %v2934 = vpow.pop %v2933
    %v2935 = vsel %vm2689, %v2934, 0.0
    %2936 = vadd.xlane.f32.xlu0 %v2935
    %v2937 = vpop.xlane.xlu0 %2936
    %v2938 = vrcp.pop %v2937
    %v2939 = vmul.f32 %v2937, %v2938
    %v2940 = vsub.f32 1.0, %v2939
    %v2941 = vmul.f32 %v2938, %v2940
    %v2942 = vadd.f32 %v2938, %v2941
    %vm2943 = vweird.f32 %v2937
    %vm2944 = vweird.f32 %v2938
    %vm2945 = vmor %vm2943, %vm2944
    %v2946 = vsel %vm2945, %v2938, %v2942
    %v2947 = vand.u32 2147483647, %v2937
    %vm2948 = vcmp.eq.f32.partialorder %v2947, 8.507059e+37
    %v2949 = vand.u32 %v2937, 2147483648
    %v2950 = vor.u32 1.1754944e-38, %v2949
    %v2951 = vsel %vm2948, %v2950, %v2946
    %v2952 = vmul.f32 %v2934, %v2951
    %2953 = vrot.lane.b32.xlu0 %v2660, 40
    %v2954 = vpop.permute.xlu0 %2953
    %v2956 = vsel %vm2716, %v2952, 0
    %v2958 = vsel %vm2720, %v2954, 0
    %2960 = vmatpush.msra.mxu0 0.0
    %2961 = vmatpush.msra.mxu0 0.0
    %2962 = vmatpush.msra.mxu0 0.0
    %2963 = vmatpush.msra.mxu0 0.0
    %2964 = vmatpush.msra.mxu0 0.0
    %2965 = vmatpush.msra.mxu0 0.0
    %2966 = vmatpush.msra.mxu0 0.0
    %2967 = vmatpush.msra.mxu0 0.0
    %2968 = vmatpush.msra.mxu0 0.0
    %2969 = vmatpush.msra.mxu0 0.0
    %2970 = vmatpush.msra.mxu0 0.0
    %2971 = vmatpush.msra.mxu0 0.0
    %2972 = vmatpush.msra.mxu0 0.0
    %2973 = vmatpush.msra.mxu0 0.0
    %2974 = vmatpush.msra.mxu0 0.0
    %2975 = vmatpush.msra.mxu0 %v2958
    %2976 = vmatmul.f32.gmra.mxu0 %v2956
    %v2977 = vpop.f32.mrf.mxu0
    %v2978 = vadd.f32 0.0, %v2977
    %2979 = vdwg.mxu0
    %2981 = vrot.lane.b32.xlu0 %v2820, 8
    %v2982 = vpop.permute.xlu0 %2981
    %2985 = vrot.lane.b32.xlu0 %v2899, 16
    %v2986 = vpop.permute.xlu0 %2985
    %2989 = vrot.lane.b32.xlu0 %v2978, 24
    %v2990 = vpop.permute.xlu0 %2989
    %v2992 = vsel %vm433, %v2741, %v2982
    %v2993 = vsel %vm945, %v2992, %v2986
    %v2994 = vsel %vm948, %v2993, %v2990
    %v2995 = vperm.slane %v2637, 0
    %v2997 = vsel %vm397, %v2994, 0
    %2999 = vmatpush.msra.mxu0 0.0
    %3000 = vmatpush.msra.mxu0 0.0
    %3001 = vmatpush.msra.mxu0 0.0
    %3002 = vmatpush.msra.mxu0 0.0
    %3003 = vmatpush.msra.mxu0 0.0
    %3004 = vmatpush.msra.mxu0 0.0
    %3005 = vmatpush.msra.mxu0 0.0
    %3006 = vmatpush.msra.mxu0 0.0
    %3007 = vmatpush.msra.mxu0 0.0
    %3008 = vmatpush.msra.mxu0 0.0
    %3009 = vmatpush.msra.mxu0 0.0
    %3010 = vmatpush.msra.mxu0 0.0
    %3011 = vmatpush.msra.mxu0 %v2636
    %3012 = vmatpush.msra.mxu0 %v2635
    %3013 = vmatpush.msra.mxu0 %v2634
    %3014 = vmatpush.msra.mxu0 %v2633
    %3015 = vmatmul.f32.gmra.mxu0 %v2997
    %v3016 = vpop.f32.mrf.mxu0
    %v3017 = vadd.f32 %v2995, %v3016
    %3018 = vdwg.mxu0
    %v3019 = vadd.f32 %v2543, %v3017
    %v3020 = vld [vmem:[#allocation2 + $0x1c8] sm:$0x1]
    %v3021 = vld [vmem:[#allocation2 + $0x1d0] sm:$0x1]
    %vm3022 = vcmask 259072
    %v3023 = vsel %vm3022, %v3019, 0.0
    %3024 = vadd.xlane.f32.xlu0 %v3023
    %v3025 = vpop.xlane.xlu0 %3024
    %v3026 = vmul.f32 %v3025, %v998
    %v3027 = vsub.f32 %v3019, %v3026
    %v3028 = vmul.f32 %v3027, %v3027
    %v3029 = vsel %vm3022, %v3028, 0.0
    %3030 = vadd.xlane.f32.xlu0 %v3029
    %v3031 = vpop.xlane.xlu0 %3030
    %v3032 = vmul.f32 %v3031, %v998
    %v3033 = vadd.f32 %v3032, 1e-05
    %v3034 = vrsqrt.pop %v3033
    %v3035 = vmul.f32 %v3034, %v3033
    %v3036 = vmul.f32 %v3035, %v3034
    %v3037 = vmul.f32 0.5, %v3036
    %v3038 = vsub.f32 1.5, %v3037
    %v3039 = vmul.f32 %v3034, %v3038
    %vm3040 = vweird.f32 %v3033
    %vm3041 = vweird.f32 %v3034
    %vm3042 = vmor %vm3040, %vm3041
    %v3043 = vsel %vm3042, %v3034, %v3039
    %v3044 = vmul.f32 %v3027, %v3043
    %v3045 = vperm.slane %v3020, 0
    %v3046 = vmul.f32 %v3044, %v3045
    %v3047 = vperm.slane %v3021, 0
    %v3048 = vadd.f32 %v3046, %v3047
    %v3049 = vld [vmem:[#allocation2 + $0x1d8] sm:$0xff]
    %v3050 = vld [vmem:[#allocation2 + $0x1e0] sm:$0xff]
    %v3051 = vld [vmem:[#allocation2 + $0x1e8] sm:$0xff]
    %v3052 = vld [vmem:[#allocation2 + $0x1f0] sm:$0xff]
    %v3053 = vld [vmem:[#allocation2 + $0x1f8] sm:$0x1]
    %v3054 = vperm.slane %v3053, 0
    %v3056 = vsel %vm397, %v3048, 0
    %3058 = vmatpush.msra.mxu0 0.0
    %3059 = vmatpush.msra.mxu0 0.0
    %3060 = vmatpush.msra.mxu0 0.0
    %3061 = vmatpush.msra.mxu0 0.0
    %3062 = vmatpush.msra.mxu0 0.0
    %3063 = vmatpush.msra.mxu0 0.0
    %3064 = vmatpush.msra.mxu0 0.0
    %3065 = vmatpush.msra.mxu0 0.0
    %3066 = vmatpush.msra.mxu0 0.0
    %3067 = vmatpush.msra.mxu0 0.0
    %3068 = vmatpush.msra.mxu0 0.0
    %3069 = vmatpush.msra.mxu0 0.0
    %3070 = vmatpush.msra.mxu0 %v3052
    %3071 = vmatpush.msra.mxu0 %v3051
    %3072 = vmatpush.msra.mxu0 %v3050
    %3073 = vmatpush.msra.mxu0 %v3049
    %3074 = vmatmul.f32.gmra.mxu0 %v3056
    %v3075 = vpop.f32.mrf.mxu0
    %v3076 = vadd.f32 %v3054, %v3075
    %3077 = vdwg.mxu0
    %v3078 = vmul.f32 %v3076, 0.5
    %v3079 = vmul.f32 %v3076, 0.70710677
    %vm3080 = vcmp.ge.f32.partialorder %v3079, 0.0
    %v3081 = vsel %vm3080, 1.0, -1.0
    %v3082 = vand.u32 2147483647, %v3079
    %v3083 = vmul.f32 %v3082, 0.3275911
    %v3084 = vadd.f32 %v3083, 1.0
    %v3085 = vrcp.pop %v3084
    %v3086 = vmul.f32 %v3084, %v3085
    %v3087 = vsub.f32 1.0, %v3086
    %v3088 = vmul.f32 %v3085, %v3087
    %v3089 = vadd.f32 %v3085, %v3088
    %vm3090 = vweird.f32 %v3084
    %vm3091 = vweird.f32 %v3085
    %vm3092 = vmor %vm3090, %vm3091
    %v3093 = vsel %vm3092, %v3085, %v3089
    %v3094 = vand.u32 2147483647, %v3084
    %vm3095 = vcmp.eq.f32.partialorder %v3094, 8.507059e+37
    %v3096 = vand.u32 %v3084, 2147483648
    %v3097 = vor.u32 1.1754944e-38, %v3096
    %v3098 = vsel %vm3095, %v3097, %v3093
    %v3099 = vmul.f32 1.0, %v3098
    %v3100 = vmul.f32 %v3099, 1.0614054
    %v3101 = vadd.f32 %v3100, -1.4531521
    %v3102 = vmul.f32 %v3101, %v3099
    %v3103 = vadd.f32 %v3102, 1.4214138
    %v3104 = vmul.f32 %v3103, %v3099
    %v3105 = vadd.f32 %v3104, -0.28449672
    %v3106 = vmul.f32 %v3105, %v3099
    %v3107 = vadd.f32 %v3106, 0.2548296
    %v3108 = vmul.f32 %v3107, %v3099
    %v3109 = vsub.f32 0.0, %v3082
    %v3110 = vmul.f32 %v3109, %v3082
    %v3111 = vmul.f32 %v3110, 1.442695
    %v3112 = vpow.pop %v3111
    %v3113 = vmul.f32 %v3108, %v3112
    %v3114 = vsub.f32 1.0, %v3113
    %v3115 = vmul.f32 %v3081, %v3114
    %v3116 = vadd.f32 %v3115, 1.0
    %v3117 = vmul.f32 %v3078, %v3116
    %v3118 = vld [vmem:[#allocation2 + $0x200] sm:$0xff]
    %v3119 = vld [vmem:[#allocation2 + $0x208] sm:$0xff]
    %v3120 = vld [vmem:[#allocation2 + $0x210] sm:$0xff]
    %v3121 = vld [vmem:[#allocation2 + $0x218] sm:$0xff]
    %v3122 = vld [vmem:[#allocation2 + $0x220] sm:$0xff]
    %v3123 = vld [vmem:[#allocation2 + $0x228] sm:$0xff]
    %v3124 = vld [vmem:[#allocation2 + $0x230] sm:$0xff]
    %v3125 = vld [vmem:[#allocation2 + $0x238] sm:$0xff]
    %v3126 = vld [vmem:[#allocation2 + $0x240] sm:$0x1]
    %v3127 = vperm.slane %v3126, 0
    %v3129 = vsel %vm1168, %v3117, 0
    %3131 = vmatpush.msra.mxu0 0.0
    %3132 = vmatpush.msra.mxu0 0.0
    %3133 = vmatpush.msra.mxu0 0.0
    %3134 = vmatpush.msra.mxu0 0.0
    %3135 = vmatpush.msra.mxu0 0.0
    %3136 = vmatpush.msra.mxu0 0.0
    %3137 = vmatpush.msra.mxu0 0.0
    %3138 = vmatpush.msra.mxu0 0.0
    %3139 = vmatpush.msra.mxu0 %v3125
    %3140 = vmatpush.msra.mxu0 %v3124
    %3141 = vmatpush.msra.mxu0 %v3123
    %3142 = vmatpush.msra.mxu0 %v3122
    %3143 = vmatpush.msra.mxu0 %v3121
    %3144 = vmatpush.msra.mxu0 %v3120
    %3145 = vmatpush.msra.mxu0 %v3119
    %3146 = vmatpush.msra.mxu0 %v3118
    %3147 = vmatmul.f32.gmra.mxu0 %v3129
    %v3148 = vpop.f32.mrf.mxu0
    %v3149 = vadd.f32 %v3127, %v3148
    %3150 = vdwg.mxu0
    %v3151 = vadd.f32 %v3048, %v3149
    %v3152 = vld [vmem:[#allocation2 + $0x248] sm:$0x1]
    %v3153 = vld [vmem:[#allocation2 + $0x250] sm:$0x1]
    %v3154 = vsel %vm3022, %v3151, 0.0
    %3155 = vadd.xlane.f32.xlu0 %v3154
    %v3156 = vpop.xlane.xlu0 %3155
    %v3157 = vmul.f32 %v3156, %v998
    %v3158 = vsub.f32 %v3151, %v3157
    %v3159 = vmul.f32 %v3158, %v3158
    %v3160 = vsel %vm3022, %v3159, 0.0
    %3161 = vadd.xlane.f32.xlu0 %v3160
    %v3162 = vpop.xlane.xlu0 %3161
    %v3163 = vmul.f32 %v3162, %v998
    %v3164 = vadd.f32 %v3163, 1e-05
    %v3165 = vrsqrt.pop %v3164
    %v3166 = vmul.f32 %v3165, %v3164
    %v3167 = vmul.f32 %v3166, %v3165
    %v3168 = vmul.f32 0.5, %v3167
    %v3169 = vsub.f32 1.5, %v3168
    %v3170 = vmul.f32 %v3165, %v3169
    %vm3171 = vweird.f32 %v3164
    %vm3172 = vweird.f32 %v3165
    %vm3173 = vmor %vm3171, %vm3172
    %v3174 = vsel %vm3173, %v3165, %v3170
    %v3175 = vmul.f32 %v3158, %v3174
    %v3176 = vperm.slane %v3152, 0
    %v3177 = vmul.f32 %v3175, %v3176
    %v3178 = vperm.slane %v3153, 0
    %v3179 = vadd.f32 %v3177, %v3178
    %v3181 = vsel %vm397, %v2627, 0
    %3183 = vmatpush.msra.mxu0 0.0
    %3184 = vmatpush.msra.mxu0 0.0
    %3185 = vmatpush.msra.mxu0 0.0
    %3186 = vmatpush.msra.mxu0 0.0
    %3187 = vmatpush.msra.mxu0 0.0
    %3188 = vmatpush.msra.mxu0 0.0
    %3189 = vmatpush.msra.mxu0 0.0
    %3190 = vmatpush.msra.mxu0 0.0
    %3191 = vmatpush.msra.mxu0 0.0
    %3192 = vmatpush.msra.mxu0 0.0
    %3193 = vmatpush.msra.mxu0 0.0
    %3194 = vmatpush.msra.mxu0 0.0
    %3195 = vmatpush.msra.mxu0 %v2631
    %3196 = vmatpush.msra.mxu0 %v2630
    %3197 = vmatpush.msra.mxu0 %v2629
    %3198 = vmatpush.msra.mxu0 %v2628
    %3199 = vmatmul.f32.gmra.mxu0 %v3181
    %v3200 = vpop.f32.mrf.mxu0
    %v3201 = vadd.f32 %v2638, %v3200
    %3202 = vdwg.mxu0
    %3204 = vrot.lane.b32.xlu0 %v3201, 96
    %v3205 = vpop.permute.xlu0 %3204
    %v3206 = vsel %vm433, %v3201, 0
    %v3208 = vsel %vm433, %v3205, 0
    %3210 = vmatpush.xpose.msra.mxu0 0.0
    %3211 = vmatpush.xpose.msra.mxu0 0.0
    %3212 = vmatpush.xpose.msra.mxu0 0.0
    %3213 = vmatpush.xpose.msra.mxu0 0.0
    %3214 = vmatpush.xpose.msra.mxu0 0.0
    %3215 = vmatpush.xpose.msra.mxu0 0.0
    %3216 = vmatpush.xpose.msra.mxu0 0.0
    %3217 = vmatpush.xpose.msra.mxu0 0.0
    %3218 = vmatpush.xpose.msra.mxu0 0.0
    %3219 = vmatpush.xpose.msra.mxu0 0.0
    %3220 = vmatpush.xpose.msra.mxu0 0.0
    %3221 = vmatpush.xpose.msra.mxu0 0.0
    %3222 = vmatpush.xpose.msra.mxu0 0.0
    %3223 = vmatpush.xpose.msra.mxu0 0.0
    %3224 = vmatpush.xpose.msra.mxu0 0.0
    %3225 = vmatpush.xpose.msra.mxu0 %v3208
    %3226 = vmatmul.f32.gmra.mxu0 %v3206
    %v3227 = vpop.f32.mrf.mxu0
    %v3228 = vadd.f32 0.0, %v3227
    %3229 = vdwg.mxu0
    %v3230 = vsel %vm2689, %v3228, -inf
    %3231 = vmax.xlane.f32.xlu0 %v3230
    %v3232 = vpop.xlane.xlu0 %3231
    %v3233 = vsub.f32 %v3228, %v3232
    %v3234 = vmul.f32 %v3233, 1.442695
    %v3235 = vpow.pop %v3234
    %v3236 = vsel %vm2689, %v3235, 0.0
    %3237 = vadd.xlane.f32.xlu0 %v3236
    %v3238 = vpop.xlane.xlu0 %3237
    %v3239 = vrcp.pop %v3238
    %v3240 = vmul.f32 %v3238, %v3239
    %v3241 = vsub.f32 1.0, %v3240
    %v3242 = vmul.f32 %v3239, %v3241
    %v3243 = vadd.f32 %v3239, %v3242
    %vm3244 = vweird.f32 %v3238
    %vm3245 = vweird.f32 %v3239
    %vm3246 = vmor %vm3244, %vm3245
    %v3247 = vsel %vm3246, %v3239, %v3243
    %v3248 = vand.u32 2147483647, %v3238
    %vm3249 = vcmp.eq.f32.partialorder %v3248, 8.507059e+37
    %v3250 = vand.u32 %v3238, 2147483648
    %v3251 = vor.u32 1.1754944e-38, %v3250
    %v3252 = vsel %vm3249, %v3251, %v3247
    %v3253 = vmul.f32 %v3235, %v3252
    %3254 = vrot.lane.b32.xlu0 %v3201, 64
    %v3255 = vpop.permute.xlu0 %3254
    %v3257 = vsel %vm2716, %v3253, 0
    %v3259 = vsel %vm2720, %v3255, 0
    %3261 = vmatpush.msra.mxu0 0.0
    %3262 = vmatpush.msra.mxu0 0.0
    %3263 = vmatpush.msra.mxu0 0.0
    %3264 = vmatpush.msra.mxu0 0.0
    %3265 = vmatpush.msra.mxu0 0.0
    %3266 = vmatpush.msra.mxu0 0.0
    %3267 = vmatpush.msra.mxu0 0.0
    %3268 = vmatpush.msra.mxu0 0.0
    %3269 = vmatpush.msra.mxu0 0.0
    %3270 = vmatpush.msra.mxu0 0.0
    %3271 = vmatpush.msra.mxu0 0.0
    %3272 = vmatpush.msra.mxu0 0.0
    %3273 = vmatpush.msra.mxu0 0.0
    %3274 = vmatpush.msra.mxu0 0.0
    %3275 = vmatpush.msra.mxu0 0.0
    %3276 = vmatpush.msra.mxu0 %v3259
    %3277 = vmatmul.f32.gmra.mxu0 %v3257
    %v3278 = vpop.f32.mrf.mxu0
    %v3279 = vadd.f32 0.0, %v3278
    %3280 = vdwg.mxu0
    %3281 = vrot.lane.b32.xlu0 %v3201, 120
    %v3282 = vpop.permute.xlu0 %3281
    %3283 = vrot.lane.b32.xlu0 %v3201, 88
    %v3284 = vpop.permute.xlu0 %3283
    %v3285 = vsel %vm433, %v3282, 0
    %v3287 = vsel %vm433, %v3284, 0
    %3289 = vmatpush.xpose.msra.mxu0 0.0
    %3290 = vmatpush.xpose.msra.mxu0 0.0
    %3291 = vmatpush.xpose.msra.mxu0 0.0
    %3292 = vmatpush.xpose.msra.mxu0 0.0
    %3293 = vmatpush.xpose.msra.mxu0 0.0
    %3294 = vmatpush.xpose.msra.mxu0 0.0
    %3295 = vmatpush.xpose.msra.mxu0 0.0
    %3296 = vmatpush.xpose.msra.mxu0 0.0
    %3297 = vmatpush.xpose.msra.mxu0 0.0
    %3298 = vmatpush.xpose.msra.mxu0 0.0
    %3299 = vmatpush.xpose.msra.mxu0 0.0
    %3300 = vmatpush.xpose.msra.mxu0 0.0
    %3301 = vmatpush.xpose.msra.mxu0 0.0
    %3302 = vmatpush.xpose.msra.mxu0 0.0
    %3303 = vmatpush.xpose.msra.mxu0 0.0
    %3304 = vmatpush.xpose.msra.mxu0 %v3287
    %3305 = vmatmul.f32.gmra.mxu0 %v3285
    %v3306 = vpop.f32.mrf.mxu0
    %v3307 = vadd.f32 0.0, %v3306
    %3308 = vdwg.mxu0
    %v3309 = vsel %vm2689, %v3307, -inf
    %3310 = vmax.xlane.f32.xlu0 %v3309
    %v3311 = vpop.xlane.xlu0 %3310
    %v3312 = vsub.f32 %v3307, %v3311
    %v3313 = vmul.f32 %v3312, 1.442695
    %v3314 = vpow.pop %v3313
    %v3315 = vsel %vm2689, %v3314, 0.0
    %3316 = vadd.xlane.f32.xlu0 %v3315
    %v3317 = vpop.xlane.xlu0 %3316
    %v3318 = vrcp.pop %v3317
    %v3319 = vmul.f32 %v3317, %v3318
    %v3320 = vsub.f32 1.0, %v3319
    %v3321 = vmul.f32 %v3318, %v3320
    %v3322 = vadd.f32 %v3318, %v3321
    %vm3323 = vweird.f32 %v3317
    %vm3324 = vweird.f32 %v3318
    %vm3325 = vmor %vm3323, %vm3324
    %v3326 = vsel %vm3325, %v3318, %v3322
    %v3327 = vand.u32 2147483647, %v3317
    %vm3328 = vcmp.eq.f32.partialorder %v3327, 8.507059e+37
    %v3329 = vand.u32 %v3317, 2147483648
    %v3330 = vor.u32 1.1754944e-38, %v3329
    %v3331 = vsel %vm3328, %v3330, %v3326
    %v3332 = vmul.f32 %v3314, %v3331
    %3333 = vrot.lane.b32.xlu0 %v3201, 56
    %v3334 = vpop.permute.xlu0 %3333
    %v3336 = vsel %vm2716, %v3332, 0
    %v3338 = vsel %vm2720, %v3334, 0
    %3340 = vmatpush.msra.mxu0 0.0
    %3341 = vmatpush.msra.mxu0 0.0
    %3342 = vmatpush.msra.mxu0 0.0
    %3343 = vmatpush.msra.mxu0 0.0
    %3344 = vmatpush.msra.mxu0 0.0
    %3345 = vmatpush.msra.mxu0 0.0
    %3346 = vmatpush.msra.mxu0 0.0
    %3347 = vmatpush.msra.mxu0 0.0
    %3348 = vmatpush.msra.mxu0 0.0
    %3349 = vmatpush.msra.mxu0 0.0
    %3350 = vmatpush.msra.mxu0 0.0
    %3351 = vmatpush.msra.mxu0 0.0
    %3352 = vmatpush.msra.mxu0 0.0
    %3353 = vmatpush.msra.mxu0 0.0
    %3354 = vmatpush.msra.mxu0 0.0
    %3355 = vmatpush.msra.mxu0 %v3338
    %3356 = vmatmul.f32.gmra.mxu0 %v3336
    %v3357 = vpop.f32.mrf.mxu0
    %v3358 = vadd.f32 0.0, %v3357
    %3359 = vdwg.mxu0
    %3360 = vrot.lane.b32.xlu0 %v3201, 112
    %v3361 = vpop.permute.xlu0 %3360
    %3362 = vrot.lane.b32.xlu0 %v3201, 80
    %v3363 = vpop.permute.xlu0 %3362
    %v3364 = vsel %vm433, %v3361, 0
    %v3366 = vsel %vm433, %v3363, 0
    %3368 = vmatpush.xpose.msra.mxu0 0.0
    %3369 = vmatpush.xpose.msra.mxu0 0.0
    %3370 = vmatpush.xpose.msra.mxu0 0.0
    %3371 = vmatpush.xpose.msra.mxu0 0.0
    %3372 = vmatpush.xpose.msra.mxu0 0.0
    %3373 = vmatpush.xpose.msra.mxu0 0.0
    %3374 = vmatpush.xpose.msra.mxu0 0.0
    %3375 = vmatpush.xpose.msra.mxu0 0.0
    %3376 = vmatpush.xpose.msra.mxu0 0.0
    %3377 = vmatpush.xpose.msra.mxu0 0.0
    %3378 = vmatpush.xpose.msra.mxu0 0.0
    %3379 = vmatpush.xpose.msra.mxu0 0.0
    %3380 = vmatpush.xpose.msra.mxu0 0.0
    %3381 = vmatpush.xpose.msra.mxu0 0.0
    %3382 = vmatpush.xpose.msra.mxu0 0.0
    %3383 = vmatpush.xpose.msra.mxu0 %v3366
    %3384 = vmatmul.f32.gmra.mxu0 %v3364
    %v3385 = vpop.f32.mrf.mxu0
    %v3386 = vadd.f32 0.0, %v3385
    %3387 = vdwg.mxu0
    %v3388 = vsel %vm2689, %v3386, -inf
    %3389 = vmax.xlane.f32.xlu0 %v3388
    %v3390 = vpop.xlane.xlu0 %3389
    %v3391 = vsub.f32 %v3386, %v3390
    %v3392 = vmul.f32 %v3391, 1.442695
    %v3393 = vpow.pop %v3392
    %v3394 = vsel %vm2689, %v3393, 0.0
    %3395 = vadd.xlane.f32.xlu0 %v3394
    %v3396 = vpop.xlane.xlu0 %3395
    %v3397 = vrcp.pop %v3396
    %v3398 = vmul.f32 %v3396, %v3397
    %v3399 = vsub.f32 1.0, %v3398
    %v3400 = vmul.f32 %v3397, %v3399
    %v3401 = vadd.f32 %v3397, %v3400
    %vm3402 = vweird.f32 %v3396
    %vm3403 = vweird.f32 %v3397
    %vm3404 = vmor %vm3402, %vm3403
    %v3405 = vsel %vm3404, %v3397, %v3401
    %v3406 = vand.u32 2147483647, %v3396
    %vm3407 = vcmp.eq.f32.partialorder %v3406, 8.507059e+37
    %v3408 = vand.u32 %v3396, 2147483648
    %v3409 = vor.u32 1.1754944e-38, %v3408
    %v3410 = vsel %vm3407, %v3409, %v3405
    %v3411 = vmul.f32 %v3393, %v3410
    %3412 = vrot.lane.b32.xlu0 %v3201, 48
    %v3413 = vpop.permute.xlu0 %3412
    %v3415 = vsel %vm2716, %v3411, 0
    %v3417 = vsel %vm2720, %v3413, 0
    %3419 = vmatpush.msra.mxu0 0.0
    %3420 = vmatpush.msra.mxu0 0.0
    %3421 = vmatpush.msra.mxu0 0.0
    %3422 = vmatpush.msra.mxu0 0.0
    %3423 = vmatpush.msra.mxu0 0.0
    %3424 = vmatpush.msra.mxu0 0.0
    %3425 = vmatpush.msra.mxu0 0.0
    %3426 = vmatpush.msra.mxu0 0.0
    %3427 = vmatpush.msra.mxu0 0.0
    %3428 = vmatpush.msra.mxu0 0.0
    %3429 = vmatpush.msra.mxu0 0.0
    %3430 = vmatpush.msra.mxu0 0.0
    %3431 = vmatpush.msra.mxu0 0.0
    %3432 = vmatpush.msra.mxu0 0.0
    %3433 = vmatpush.msra.mxu0 0.0
    %3434 = vmatpush.msra.mxu0 %v3417
    %3435 = vmatmul.f32.gmra.mxu0 %v3415
    %v3436 = vpop.f32.mrf.mxu0
    %v3437 = vadd.f32 0.0, %v3436
    %3438 = vdwg.mxu0
    %3439 = vrot.lane.b32.xlu0 %v3201, 104
    %v3440 = vpop.permute.xlu0 %3439
    %3441 = vrot.lane.b32.xlu0 %v3201, 72
    %v3442 = vpop.permute.xlu0 %3441
    %v3443 = vsel %vm433, %v3440, 0
    %v3445 = vsel %vm433, %v3442, 0
    %3447 = vmatpush.xpose.msra.mxu0 0.0
    %3448 = vmatpush.xpose.msra.mxu0 0.0
    %3449 = vmatpush.xpose.msra.mxu0 0.0
    %3450 = vmatpush.xpose.msra.mxu0 0.0
    %3451 = vmatpush.xpose.msra.mxu0 0.0
    %3452 = vmatpush.xpose.msra.mxu0 0.0
    %3453 = vmatpush.xpose.msra.mxu0 0.0
    %3454 = vmatpush.xpose.msra.mxu0 0.0
    %3455 = vmatpush.xpose.msra.mxu0 0.0
    %3456 = vmatpush.xpose.msra.mxu0 0.0
    %3457 = vmatpush.xpose.msra.mxu0 0.0
    %3458 = vmatpush.xpose.msra.mxu0 0.0
    %3459 = vmatpush.xpose.msra.mxu0 0.0
    %3460 = vmatpush.xpose.msra.mxu0 0.0
    %3461 = vmatpush.xpose.msra.mxu0 0.0
    %3462 = vmatpush.xpose.msra.mxu0 %v3445
    %3463 = vmatmul.f32.gmra.mxu0 %v3443
    %v3464 = vpop.f32.mrf.mxu0
    %v3465 = vadd.f32 0.0, %v3464
    %3466 = vdwg.mxu0
    %v3467 = vsel %vm2689, %v3465, -inf
    %3468 = vmax.xlane.f32.xlu0 %v3467
    %v3469 = vpop.xlane.xlu0 %3468
    %v3470 = vsub.f32 %v3465, %v3469
    %v3471 = vmul.f32 %v3470, 1.442695
    %v3472 = vpow.pop %v3471
    %v3473 = vsel %vm2689, %v3472, 0.0
    %3474 = vadd.xlane.f32.xlu0 %v3473
    %v3475 = vpop.xlane.xlu0 %3474
    %v3476 = vrcp.pop %v3475
    %v3477 = vmul.f32 %v3475, %v3476
    %v3478 = vsub.f32 1.0, %v3477
    %v3479 = vmul.f32 %v3476, %v3478
    %v3480 = vadd.f32 %v3476, %v3479
    %vm3481 = vweird.f32 %v3475
    %vm3482 = vweird.f32 %v3476
    %vm3483 = vmor %vm3481, %vm3482
    %v3484 = vsel %vm3483, %v3476, %v3480
    %v3485 = vand.u32 2147483647, %v3475
    %vm3486 = vcmp.eq.f32.partialorder %v3485, 8.507059e+37
    %v3487 = vand.u32 %v3475, 2147483648
    %v3488 = vor.u32 1.1754944e-38, %v3487
    %v3489 = vsel %vm3486, %v3488, %v3484
    %v3490 = vmul.f32 %v3472, %v3489
    %3491 = vrot.lane.b32.xlu0 %v3201, 40
    %v3492 = vpop.permute.xlu0 %3491
    %v3494 = vsel %vm2716, %v3490, 0
    %v3496 = vsel %vm2720, %v3492, 0
    %3498 = vmatpush.msra.mxu0 0.0
    %3499 = vmatpush.msra.mxu0 0.0
    %3500 = vmatpush.msra.mxu0 0.0
    %3501 = vmatpush.msra.mxu0 0.0
    %3502 = vmatpush.msra.mxu0 0.0
    %3503 = vmatpush.msra.mxu0 0.0
    %3504 = vmatpush.msra.mxu0 0.0
    %3505 = vmatpush.msra.mxu0 0.0
    %3506 = vmatpush.msra.mxu0 0.0
    %3507 = vmatpush.msra.mxu0 0.0
    %3508 = vmatpush.msra.mxu0 0.0
    %3509 = vmatpush.msra.mxu0 0.0
    %3510 = vmatpush.msra.mxu0 0.0
    %3511 = vmatpush.msra.mxu0 0.0
    %3512 = vmatpush.msra.mxu0 0.0
    %3513 = vmatpush.msra.mxu0 %v3496
    %3514 = vmatmul.f32.gmra.mxu0 %v3494
    %v3515 = vpop.f32.mrf.mxu0
    %v3516 = vadd.f32 0.0, %v3515
    %3517 = vdwg.mxu0
    %3519 = vrot.lane.b32.xlu0 %v3358, 8
    %v3520 = vpop.permute.xlu0 %3519
    %3523 = vrot.lane.b32.xlu0 %v3437, 16
    %v3524 = vpop.permute.xlu0 %3523
    %3527 = vrot.lane.b32.xlu0 %v3516, 24
    %v3528 = vpop.permute.xlu0 %3527
    %v3530 = vsel %vm433, %v3279, %v3520
    %v3531 = vsel %vm945, %v3530, %v3524
    %v3532 = vsel %vm948, %v3531, %v3528
    %v3534 = vsel %vm397, %v3532, 0
    %3536 = vmatpush.msra.mxu0 0.0
    %3537 = vmatpush.msra.mxu0 0.0
    %3538 = vmatpush.msra.mxu0 0.0
    %3539 = vmatpush.msra.mxu0 0.0
    %3540 = vmatpush.msra.mxu0 0.0
    %3541 = vmatpush.msra.mxu0 0.0
    %3542 = vmatpush.msra.mxu0 0.0
    %3543 = vmatpush.msra.mxu0 0.0
    %3544 = vmatpush.msra.mxu0 0.0
    %3545 = vmatpush.msra.mxu0 0.0
    %3546 = vmatpush.msra.mxu0 0.0
    %3547 = vmatpush.msra.mxu0 0.0
    %3548 = vmatpush.msra.mxu0 %v2636
    %3549 = vmatpush.msra.mxu0 %v2635
    %3550 = vmatpush.msra.mxu0 %v2634
    %3551 = vmatpush.msra.mxu0 %v2633
    %3552 = vmatmul.f32.gmra.mxu0 %v3534
    %v3553 = vpop.f32.mrf.mxu0
    %v3554 = vadd.f32 %v2995, %v3553
    %3555 = vdwg.mxu0
    %v3556 = vadd.f32 %v2627, %v3554
    %v3557 = vsel %vm3022, %v3556, 0.0
    %3558 = vadd.xlane.f32.xlu0 %v3557
    %v3559 = vpop.xlane.xlu0 %3558
    %v3560 = vmul.f32 %v3559, %v998
    %v3561 = vsub.f32 %v3556, %v3560
    %v3562 = vmul.f32 %v3561, %v3561
    %v3563 = vsel %vm3022, %v3562, 0.0
    %3564 = vadd.xlane.f32.xlu0 %v3563
    %v3565 = vpop.xlane.xlu0 %3564
    %v3566 = vmul.f32 %v3565, %v998
    %v3567 = vadd.f32 %v3566, 1e-05
    %v3568 = vrsqrt.pop %v3567
    %v3569 = vmul.f32 %v3568, %v3567
    %v3570 = vmul.f32 %v3569, %v3568
    %v3571 = vmul.f32 0.5, %v3570
    %v3572 = vsub.f32 1.5, %v3571
    %v3573 = vmul.f32 %v3568, %v3572
    %vm3574 = vweird.f32 %v3567
    %vm3575 = vweird.f32 %v3568
    %vm3576 = vmor %vm3574, %vm3575
    %v3577 = vsel %vm3576, %v3568, %v3573
    %v3578 = vmul.f32 %v3561, %v3577
    %v3579 = vmul.f32 %v3578, %v3045
    %v3580 = vadd.f32 %v3579, %v3047
    %v3582 = vsel %vm397, %v3580, 0
    %3584 = vmatpush.msra.mxu0 0.0
    %3585 = vmatpush.msra.mxu0 0.0
    %3586 = vmatpush.msra.mxu0 0.0
    %3587 = vmatpush.msra.mxu0 0.0
    %3588 = vmatpush.msra.mxu0 0.0
    %3589 = vmatpush.msra.mxu0 0.0
    %3590 = vmatpush.msra.mxu0 0.0
    %3591 = vmatpush.msra.mxu0 0.0
    %3592 = vmatpush.msra.mxu0 0.0
    %3593 = vmatpush.msra.mxu0 0.0
    %3594 = vmatpush.msra.mxu0 0.0
    %3595 = vmatpush.msra.mxu0 0.0
    %3596 = vmatpush.msra.mxu0 %v3052
    %3597 = vmatpush.msra.mxu0 %v3051
    %3598 = vmatpush.msra.mxu0 %v3050
    %3599 = vmatpush.msra.mxu0 %v3049
    %3600 = vmatmul.f32.gmra.mxu0 %v3582
    %v3601 = vpop.f32.mrf.mxu0
    %v3602 = vadd.f32 %v3054, %v3601
    %3603 = vdwg.mxu0
    %v3604 = vmul.f32 %v3602, 0.5
    %v3605 = vmul.f32 %v3602, 0.70710677
    %vm3606 = vcmp.ge.f32.partialorder %v3605, 0.0
    %v3607 = vsel %vm3606, 1.0, -1.0
    %v3608 = vand.u32 2147483647, %v3605
    %v3609 = vmul.f32 %v3608, 0.3275911
    %v3610 = vadd.f32 %v3609, 1.0
    %v3611 = vrcp.pop %v3610
    %v3612 = vmul.f32 %v3610, %v3611
    %v3613 = vsub.f32 1.0, %v3612
    %v3614 = vmul.f32 %v3611, %v3613
    %v3615 = vadd.f32 %v3611, %v3614
    %vm3616 = vweird.f32 %v3610
    %vm3617 = vweird.f32 %v3611
    %vm3618 = vmor %vm3616, %vm3617
    %v3619 = vsel %vm3618, %v3611, %v3615
    %v3620 = vand.u32 2147483647, %v3610
    %vm3621 = vcmp.eq.f32.partialorder %v3620, 8.507059e+37
    %v3622 = vand.u32 %v3610, 2147483648
    %v3623 = vor.u32 1.1754944e-38, %v3622
    %v3624 = vsel %vm3621, %v3623, %v3619
    %v3625 = vmul.f32 1.0, %v3624
    %v3626 = vmul.f32 %v3625, 1.0614054
    %v3627 = vadd.f32 %v3626, -1.4531521
    %v3628 = vmul.f32 %v3627, %v3625
    %v3629 = vadd.f32 %v3628, 1.4214138
    %v3630 = vmul.f32 %v3629, %v3625
    %v3631 = vadd.f32 %v3630, -0.28449672
    %v3632 = vmul.f32 %v3631, %v3625
    %v3633 = vadd.f32 %v3632, 0.2548296
    %v3634 = vmul.f32 %v3633, %v3625
    %v3635 = vsub.f32 0.0, %v3608
    %v3636 = vmul.f32 %v3635, %v3608
    %v3637 = vmul.f32 %v3636, 1.442695
    %v3638 = vpow.pop %v3637
    %v3639 = vmul.f32 %v3634, %v3638
    %v3640 = vsub.f32 1.0, %v3639
    %v3641 = vmul.f32 %v3607, %v3640
    %v3642 = vadd.f32 %v3641, 1.0
    %v3643 = vmul.f32 %v3604, %v3642
    %v3645 = vsel %vm1168, %v3643, 0
    %3647 = vmatpush.msra.mxu0 0.0
    %3648 = vmatpush.msra.mxu0 0.0
    %3649 = vmatpush.msra.mxu0 0.0
    %3650 = vmatpush.msra.mxu0 0.0
    %3651 = vmatpush.msra.mxu0 0.0
    %3652 = vmatpush.msra.mxu0 0.0
    %3653 = vmatpush.msra.mxu0 0.0
    %3654 = vmatpush.msra.mxu0 0.0
    %3655 = vmatpush.msra.mxu0 %v3125
    %3656 = vmatpush.msra.mxu0 %v3124
    %3657 = vmatpush.msra.mxu0 %v3123
    %3658 = vmatpush.msra.mxu0 %v3122
    %3659 = vmatpush.msra.mxu0 %v3121
    %3660 = vmatpush.msra.mxu0 %v3120
    %3661 = vmatpush.msra.mxu0 %v3119
    %3662 = vmatpush.msra.mxu0 %v3118
    %3663 = vmatmul.f32.gmra.mxu0 %v3645
    %v3664 = vpop.f32.mrf.mxu0
    %v3665 = vadd.f32 %v3127, %v3664
    %3666 = vdwg.mxu0
    %v3667 = vadd.f32 %v3580, %v3665
    %v3668 = vsel %vm3022, %v3667, 0.0
    %3669 = vadd.xlane.f32.xlu0 %v3668
    %v3670 = vpop.xlane.xlu0 %3669
    %v3671 = vmul.f32 %v3670, %v998
    %v3672 = vsub.f32 %v3667, %v3671
    %v3673 = vmul.f32 %v3672, %v3672
    %v3674 = vsel %vm3022, %v3673, 0.0
    %3675 = vadd.xlane.f32.xlu0 %v3674
    %v3676 = vpop.xlane.xlu0 %3675
    %v3677 = vmul.f32 %v3676, %v998
    %v3678 = vadd.f32 %v3677, 1e-05
    %v3679 = vrsqrt.pop %v3678
    %v3680 = vmul.f32 %v3679, %v3678
    %v3681 = vmul.f32 %v3680, %v3679
    %v3682 = vmul.f32 0.5, %v3681
    %v3683 = vsub.f32 1.5, %v3682
    %v3684 = vmul.f32 %v3679, %v3683
    %vm3685 = vweird.f32 %v3678
    %vm3686 = vweird.f32 %v3679
    %vm3687 = vmor %vm3685, %vm3686
    %v3688 = vsel %vm3687, %v3679, %v3684
    %v3689 = vmul.f32 %v3672, %v3688
    %v3690 = vmul.f32 %v3689, %v3176
    %v3691 = vadd.f32 %v3690, %v3178
    %v3692 = vld [vmem:[#allocation2 + $0x258] sm:$0x1]
    %v3693 = vld [vmem:[#allocation2 + $0x260] sm:$0x1]
    %v3694 = vsel %vm3022, %v3179, 0.0
    %3695 = vadd.xlane.f32.xlu0 %v3694
    %v3696 = vpop.xlane.xlu0 %3695
    %v3697 = vmul.f32 %v3696, %v998
    %v3698 = vsub.f32 %v3179, %v3697
    %v3699 = vmul.f32 %v3698, %v3698
    %v3700 = vsel %vm3022, %v3699, 0.0
    %3701 = vadd.xlane.f32.xlu0 %v3700
    %v3702 = vpop.xlane.xlu0 %3701
    %v3703 = vmul.f32 %v3702, %v998
    %v3704 = vadd.f32 %v3703, 1e-05
    %v3705 = vrsqrt.pop %v3704
    %v3706 = vmul.f32 %v3705, %v3704
    %v3707 = vmul.f32 %v3706, %v3705
    %v3708 = vmul.f32 0.5, %v3707
    %v3709 = vsub.f32 1.5, %v3708
    %v3710 = vmul.f32 %v3705, %v3709
    %vm3711 = vweird.f32 %v3704
    %vm3712 = vweird.f32 %v3705
    %vm3713 = vmor %vm3711, %vm3712
    %v3714 = vsel %vm3713, %v3705, %v3710
    %v3715 = vmul.f32 %v3698, %v3714
    %v3716 = vperm.slane %v3692, 0
    %v3717 = vmul.f32 %v3715, %v3716
    %v3718 = vperm.slane %v3693, 0
    %v3719 = vadd.f32 %v3717, %v3718
    %3720 = vst.msk [vmem:[%s3] sm:$0x3f] %vm3022, %v3719
    %v3721 = vld [vmem:[#allocation2 + $0x258] sm:$0x1]
    %v3722 = vld [vmem:[#allocation2 + $0x260] sm:$0x1]
    %v3723 = vsel %vm3022, %v3691, 0.0
    %3724 = vadd.xlane.f32.xlu0 %v3723
    %v3725 = vpop.xlane.xlu0 %3724
    %v3726 = vmul.f32 %v3725, %v998
    %v3727 = vsub.f32 %v3691, %v3726
    %v3728 = vmul.f32 %v3727, %v3727
    %v3729 = vsel %vm3022, %v3728, 0.0
    %3730 = vadd.xlane.f32.xlu0 %v3729
    %v3731 = vpop.xlane.xlu0 %3730
    %v3732 = vmul.f32 %v3731, %v998
    %v3733 = vadd.f32 %v3732, 1e-05
    %v3734 = vrsqrt.pop %v3733
    %v3735 = vmul.f32 %v3734, %v3733
    %v3736 = vmul.f32 %v3735, %v3734
    %v3737 = vmul.f32 0.5, %v3736
    %v3738 = vsub.f32 1.5, %v3737
    %v3739 = vmul.f32 %v3734, %v3738
    %vm3740 = vweird.f32 %v3733
    %vm3741 = vweird.f32 %v3734
    %vm3742 = vmor %vm3740, %vm3741
    %v3743 = vsel %vm3742, %v3734, %v3739
    %v3744 = vmul.f32 %v3727, %v3743
    %v3745 = vperm.slane %v3721, 0
    %v3746 = vmul.f32 %v3744, %v3745
    %v3747 = vperm.slane %v3722, 0
    %v3748 = vadd.f32 %v3746, %v3747
    %s3749 = scalar_lea.vmem %s3, 8
    %3750 = vst.msk [vmem:[%s3749] sm:$0x3f] %vm3022, %v3748
    // Predicated region
    $region18: #{informer_forward.2} parent=1 // pred_check
      _
    $region19: #{informer_forward.2} parent=1 // pred_check_branch
      %3752 = sbr.rel (0) target = $region21
    $region20: #{informer_forward.2} parent=1 // pred_region
      _
    $region21: #{informer_forward.2} parent=1 // pred_fallthru
      _
    // Predicated region
    $region22: #{informer_forward.2} parent=1 // pred_check
      _
    $region23: #{informer_forward.2} parent=1 // pred_check_branch
      %3754 = sbr.rel (0) target = $region25
    $region24: #{informer_forward.2} parent=1 // pred_region
      _
    $region25: #{informer_forward.2} parent=1 // pred_fallthru
      _
    %3755 = vsyncpa [#allocation3], 1

</llo_original>
